<compile_context>
chip_gen: v7x
topology: tpu7x:2x2x1
jax: 0.10.0
libtpu: 0.0.40
codegen_flags: <defaults>
</compile_context>

<pallas_src>
import functools

import jax
import jax.numpy as jnp
from jax import lax
from jax.experimental import pallas as pl
from jax.experimental.pallas import tpu as pltpu

TM = 256                       # row tile for the fused 1x1-conv matmul
VMEM_LIMIT = 32 * 1024 * 1024  # explicit scoped-VMEM budget (safe on v5e/v6e/v7x)


def _cparams():
    return pltpu.CompilerParams(
        dimension_semantics=("parallel",),
        vmem_limit_bytes=VMEM_LIMIT,
    )


# ---------------------------------------------------------------------------
# Kernel A: fused 1x1x1 conv (+folded BN bias, +ReLU) as a tiled matmul
# ---------------------------------------------------------------------------
def _matmul_bias_relu_kernel(x_ref, w_ref, b_ref, o_ref):
    acc = jnp.dot(x_ref[...], w_ref[...], preferred_element_type=jnp.float32)
    o_ref[...] = jnp.maximum(acc + b_ref[...], 0.0).astype(o_ref.dtype)


def matmul_bias_relu(x2d, w, bias, out_dtype=jnp.bfloat16):
    """x2d: (M, K) bf16; w: (K, N) bf16 (BN scale folded); bias: (1, N) f32."""
    M, K = x2d.shape
    N = w.shape[1]
    Mp = pl.cdiv(M, TM) * TM
    if Mp != M:
        x2d = jnp.pad(x2d, ((0, Mp - M), (0, 0)))
    out = pl.pallas_call(
        _matmul_bias_relu_kernel,
        out_shape=jax.ShapeDtypeStruct((Mp, N), out_dtype),
        grid_spec=pltpu.PrefetchScalarGridSpec(
            num_scalar_prefetch=0,
            grid=(Mp // TM,),
            in_specs=[
                pl.BlockSpec((TM, K), lambda i: (i, 0)),   # activation tile
                pl.BlockSpec((K, N), lambda i: (0, 0)),    # resident weight
                pl.BlockSpec((1, N), lambda i: (0, 0)),    # folded BN bias
            ],
            out_specs=pl.BlockSpec((TM, N), lambda i: (i, 0)),
        ),
        compiler_params=_cparams(),
    )(x2d, w, bias)
    if Mp != M:
        out = out[:M]
    return out


# ---------------------------------------------------------------------------
# Kernel B: fully fused SepConv3d
#   (1,3,3) conv + BN + ReLU  ->  (3,1,1) conv + BN + ReLU
#   9 + 3 shifted matmuls accumulated in f32; spatial intermediate stays in VMEM.
# ---------------------------------------------------------------------------
def _sepconv_kernel(x_ref, ws_ref, bs_ref, wt_ref, bt_ref, o_ref):
    # x_ref : (1, T, H+2, W+2, Cin)   zero-padded H/W
    # ws_ref: (3, 3, Cin, Cmid)   wt_ref: (3, Cmid, Cout)
    # o_ref : (1, T, H, W, Cout)
    T, H, W, Cout = o_ref.shape[1], o_ref.shape[2], o_ref.shape[3], o_ref.shape[4]
    Cmid = ws_ref.shape[-1]
    x = x_ref[0]                                           # (T, H+2, W+2, Cin)

    # --- spatial (1,3,3) conv over all T frames at once ---
    acc_s = jnp.zeros((T * H * W, Cmid), jnp.float32)
    for dh in range(3):
        for dw in range(3):
            patch = x[:, dh:dh + H, dw:dw + W, :].reshape(T * H * W, -1)
            acc_s = acc_s + jnp.dot(patch, ws_ref[dh, dw],
                                    preferred_element_type=jnp.float32)
    s = jnp.maximum(acc_s + bs_ref[...], 0.0).astype(jnp.bfloat16)
    s = s.reshape(T, H * W, Cmid)

    # --- temporal (3,1,1) conv, zero padding in T done in-register ---
    zpad = jnp.zeros((1, H * W, Cmid), jnp.bfloat16)
    sp = jnp.concatenate([zpad, s, zpad], axis=0)          # (T+2, H*W, Cmid)
    acc_t = jnp.zeros((T * H * W, Cout), jnp.float32)
    for dt in range(3):
        acc_t = acc_t + jnp.dot(sp[dt:dt + T].reshape(T * H * W, Cmid),
                                wt_ref[dt], preferred_element_type=jnp.float32)
    y = jnp.maximum(acc_t + bt_ref[...], 0.0)
    o_ref[...] = y.reshape(1, T, H, W, Cout).astype(o_ref.dtype)


def sepconv3d_bn_relu(x, ws, bs, wt, bt, out_dtype=jnp.float32):
    """SepConv3d(k=3,s=1,p=1) with folded BN + ReLU. x: (B,T,H,W,Cin) bf16."""
    B, T, H, W, Cin = x.shape
    Cmid = ws.shape[-1]
    Cout = wt.shape[-1]
    xp = jnp.pad(x, ((0, 0), (0, 0), (1, 1), (1, 1), (0, 0)))
    return pl.pallas_call(
        _sepconv_kernel,
        out_shape=jax.ShapeDtypeStruct((B, T, H, W, Cout), out_dtype),
        grid_spec=pltpu.PrefetchScalarGridSpec(
            num_scalar_prefetch=0,
            grid=(B,),
            in_specs=[
                pl.BlockSpec((1, T, H + 2, W + 2, Cin), lambda i: (i, 0, 0, 0, 0)),
                pl.BlockSpec((3, 3, Cin, Cmid), lambda i: (0, 0, 0, 0)),
                pl.BlockSpec((1, Cmid), lambda i: (0, 0)),
                pl.BlockSpec((3, Cmid, Cout), lambda i: (0, 0, 0)),
                pl.BlockSpec((1, Cout), lambda i: (0, 0)),
            ],
            out_specs=pl.BlockSpec((1, T, H, W, Cout), lambda i: (i, 0, 0, 0, 0)),
        ),
        compiler_params=_cparams(),
    )(xp, ws, bs, wt, bt)


# ---------------------------------------------------------------------------
# Kernel C: fused MaxPool3d(3,1,1) + 1x1 conv + folded BN + ReLU  (branch 3)
# ---------------------------------------------------------------------------
def _maxpool3d_conv_kernel(x_ref, w_ref, b_ref, o_ref):
    # x_ref: (1, T+2, H+2, W+2, Cin) padded with -inf;  w_ref: (Cin, Cout)
    T, H, W, Cout = o_ref.shape[1], o_ref.shape[2], o_ref.shape[3], o_ref.shape[4]
    x = x_ref[0]                                           # (T+2, H+2, W+2, Cin)
    mw = jnp.maximum(jnp.maximum(x[:, :, 0:W], x[:, :, 1:W + 1]), x[:, :, 2:W + 2])
    mh = jnp.maximum(jnp.maximum(mw[:, 0:H], mw[:, 1:H + 1]), mw[:, 2:H + 2])
    mt = jnp.maximum(jnp.maximum(mh[0:T], mh[1:T + 1]), mh[2:T + 2])  # (T,H,W,Cin)
    acc = jnp.dot(mt.reshape(T * H * W, -1), w_ref[...],
                  preferred_element_type=jnp.float32)
    y = jnp.maximum(acc + b_ref[...], 0.0)
    o_ref[...] = y.reshape(1, T, H, W, Cout).astype(o_ref.dtype)


def maxpool3d_conv_bn_relu(x, w, bias, out_dtype=jnp.float32):
    """MaxPool3d(k=3,s=1,p=1) then 1x1x1 conv + folded BN + ReLU. x bf16."""
    B, T, H, W, C = x.shape
    Cout = w.shape[-1]
    xp = jnp.pad(x, ((0, 0), (1, 1), (1, 1), (1, 1), (0, 0)),
                 constant_values=-jnp.inf)
    return pl.pallas_call(
        _maxpool3d_conv_kernel,
        out_shape=jax.ShapeDtypeStruct((B, T, H, W, Cout), out_dtype),
        grid_spec=pltpu.PrefetchScalarGridSpec(
            num_scalar_prefetch=0,
            grid=(B,),
            in_specs=[
                pl.BlockSpec((1, T + 2, H + 2, W + 2, C), lambda i: (i, 0, 0, 0, 0)),
                pl.BlockSpec((C, Cout), lambda i: (0, 0)),
                pl.BlockSpec((1, Cout), lambda i: (0, 0)),
            ],
            out_specs=pl.BlockSpec((1, T, H, W, Cout), lambda i: (i, 0, 0, 0, 0)),
        ),
        compiler_params=_cparams(),
    )(xp, w, bias)


# ---------------------------------------------------------------------------
# Deterministic synthetic parameters (Conv weight with eval-mode BN folded in)
# ---------------------------------------------------------------------------
def _make_conv_bn_params(key, k_shape, c_out, wscale=0.05, eps=1e-3):
    """k_shape: tap/input dims, e.g. (192,), (3,3,96), (3,128).

    NOTE: real PyTorch weights (Cout, Cin, kt, kh, kw) must be permuted so taps
    come first and Cin is the contraction (last-but-one) dim.
    """
    k1, k2, k3, k4, k5 = jax.random.split(key, 5)
    w = jax.random.normal(k1, tuple(k_shape) + (c_out,), jnp.float32) * wscale
    gamma = 1.0 + 0.1 * jax.random.normal(k2, (c_out,), jnp.float32)
    beta = 0.1 * jax.random.normal(k3, (c_out,), jnp.float32)
    running_mean = 0.1 * jax.random.normal(k4, (c_out,), jnp.float32)
    running_var = jnp.abs(1.0 + 0.1 * jax.random.normal(k5, (c_out,), jnp.float32))
    scale = gamma / jnp.sqrt(running_var + eps)
    bias = beta - running_mean * scale
    w_folded = (w * scale).astype(jnp.bfloat16)        # fold BN scale into W
    return w_folded, bias.reshape(1, -1).astype(jnp.float32)


def init_mixed_3b_params(key):
    keys = jax.random.split(key, 8)
    b0_w, b0_b = _make_conv_bn_params(keys[0], (192,), 64)    # branch0 1x1x1
    b1_w, b1_b = _make_conv_bn_params(keys[1], (192,), 96)    # branch1 1x1x1
    b2_w, b2_b = _make_conv_bn_params(keys[4], (192,), 16)    # branch2 1x1x1
    # Fuse the three 1x1 convs that share the same input (lane-dense N=176).
    pw_w = jnp.concatenate([b0_w, b1_w, b2_w], axis=-1)       # (192, 176)
    pw_b = jnp.concatenate([b0_b, b1_b, b2_b], axis=-1)       # (1, 176)
    return {
        "pw_w": pw_w, "pw_b": pw_b,
        "b1_s": _make_conv_bn_params(keys[2], (3, 3, 96), 128),   # (1,3,3)
        "b1_t": _make_conv_bn_params(keys[3], (3, 128), 128),     # (3,1,1)
        "b2_s": _make_conv_bn_params(keys[5], (3, 3, 16), 32),    # (1,3,3)
        "b2_t": _make_conv_bn_params(keys[6], (3, 32), 32),       # (3,1,1)
        "b3":   _make_conv_bn_params(keys[7], (192,), 32),        # branch3 1x1x1
    }


# ---------------------------------------------------------------------------
# Mixed_3b forward (NCDHW in / NCDHW out, like the PyTorch module)
# ---------------------------------------------------------------------------
def mixed_3b_forward(x_ncthw, params):
    B, C, T, H, W = x_ncthw.shape
    # NCDHW -> NDHWC, bf16 for the MXU / HBM-bound layers.  (In a full S3D
    # stack you would keep channels-last end-to-end and drop these transposes.)
    x = jnp.transpose(x_ncthw, (0, 2, 3, 4, 1)).astype(jnp.bfloat16)
    M = B * T * H * W

    # Branches 0/1/2 pointwise convs fused into one matmul over the 192-ch input.
    y = matmul_bias_relu(x.reshape(M, C), params["pw_w"], params["pw_b"])
    x0 = y[:, 0:64].reshape(B, T, H, W, 64)
    x1 = y[:, 64:160].reshape(B, T, H, W, 96)
    x2 = y[:, 160:176].reshape(B, T, H, W, 16)

    # branch1: SepConv3d(96 -> 128, k=3, s=1, p=1) fully fused
    x1 = sepconv3d_bn_relu(x1, *params["b1_s"], *params["b1_t"])

    # branch2: SepConv3d(16 -> 32, k=3, s=1, p=1) fully fused
    x2 = sepconv3d_bn_relu(x2, *params["b2_s"], *params["b2_t"])

    # branch3: MaxPool3d(3,1,1) + 1x1 conv + BN + ReLU, fully fused
    x3 = maxpool3d_conv_bn_relu(x, *params["b3"])

    out = jnp.concatenate(
        [x0.astype(jnp.float32), x1, x2, x3], axis=-1)          # (B,T,H,W,256)
    return jnp.transpose(out, (0, 4, 1, 2, 3))                  # -> (B,256,T,H,W)


# ---------------------------------------------------------------------------
# Pure-JAX reference (same bf16 hand-offs) for a correctness check
# ---------------------------------------------------------------------------
def _ref_forward(x_ncthw, params):
    f32 = jnp.float32
    hi = lax.Precision.HIGHEST
    dn = ('NDHWC', 'DHWIO', 'NDHWC')

    def bf(a):  # simulate the bf16 hand-off between kernels
        return a.astype(jnp.bfloat16).astype(f32)

    def conv(a, w, pad):
        return lax.conv_general_dilated(a, w.astype(f32), (1, 1, 1), pad,
                                        dimension_numbers=dn, precision=hi)

    x = jnp.transpose(x_ncthw, (0, 2, 3, 4, 1)).astype(jnp.bfloat16).astype(f32)

    y = jnp.maximum(
        jnp.einsum('bthwc,cn->bthwn', x, params["pw_w"].astype(f32),
                   precision=hi) + params["pw_b"].reshape(-1), 0.0)
    y = bf(y)
    x0, x1, x2 = y[..., :64], y[..., 64:160], y[..., 160:176]

    def sep(a, ws, bs, wt, bt):
        s = conv(a, ws[None], [(0, 0), (1, 1), (1, 1)])
        s = bf(jnp.maximum(s + bs.reshape(-1), 0.0))
        t = conv(s, wt[:, None, None], [(1, 1), (0, 0), (0, 0)])
        return jnp.maximum(t + bt.reshape(-1), 0.0)

    x1 = sep(x1, *params["b1_s"], *params["b1_t"])
    x2 = sep(x2, *params["b2_s"], *params["b2_t"])

    mp = lax.reduce_window(x, jnp.array(-jnp.inf, x.dtype), lax.max,
                           (1, 3, 3, 3, 1), (1, 1, 1, 1, 1),
                           [(0, 0), (1, 1), (1, 1), (1, 1), (0, 0)])
    b3_w, b3_b = params["b3"]
    x3 = jnp.maximum(
        jnp.einsum('bthwc,cn->bthwn', mp, b3_w.astype(f32), precision=hi)
        + b3_b.reshape(-1), 0.0)

    out = jnp.concatenate([x0, x1, x2, x3], axis=-1)
    return jnp.transpose(out, (0, 4, 1, 2, 3))


if __name__ == "__main__":
    key = jax.random.PRNGKey(0)
    kx, kp = jax.random.split(key)

    B, C, T, H, W = 2, 192, 4, 8, 8          # B*T*H*W = 512 rows (two TM=256 tiles)
    x = jax.random.normal(kx, (B, C, T, H, W), jnp.float32)
    params = init_mixed_3b_params(kp)

    fwd = jax.jit(functools.partial(mixed_3b_forward, params=params))
    out = jax.block_until_ready(fwd(x))

    assert out.shape == (B, 256, T, H, W), out.shape
    assert bool(jnp.all(jnp.isfinite(out)))

    ref = jax.block_until_ready(
        jax.jit(functools.partial(_ref_forward, params=params))(x))
    err = float(jnp.max(jnp.abs(out - ref.astype(jnp.float32))))
    assert err < 2e-2, f"max abs err vs reference: {err}"
    print("KERNEL_OK")
</pallas_src>

<mosaic_0001>
module attributes {stable_mosaic.version = 11 : i64} {
  func.func @_maxpool3d_conv_kernel(%arg0: i32, %arg1: memref<1x6x10x10x192xbf16, #tpu.memory_space<vmem>>, %arg2: memref<192x32xbf16, #tpu.memory_space<vmem>>, %arg3: memref<1x32xf32, #tpu.memory_space<vmem>>, %arg4: memref<1x4x8x8x32xf32, #tpu.memory_space<vmem>>) attributes {dimension_semantics = [#tpu.dimension_semantics<parallel>], iteration_bounds = array<i64: 2>, scalar_prefetch = 0 : i64, scratch_operands = 0 : i64, tpu.core_type = #tpu.core_type<tc>, window_params = [{transform_indices = @transform_0, window_bounds = array<i64: 1, 6, 10, 10, 192>}, {pipeline_mode = #tpu.pipeline_mode<synchronous>, transform_indices = @transform_1, window_bounds = array<i64: 192, 32>}, {pipeline_mode = #tpu.pipeline_mode<synchronous>, transform_indices = @transform_2, window_bounds = array<i64: 1, 32>}, {transform_indices = @transform_3, window_bounds = array<i64: 1, 4, 8, 8, 32>}]} {
    %c0 = arith.constant 0 : index
    %c0_0 = arith.constant 0 : index
    %c0_1 = arith.constant 0 : index
    %c0_2 = arith.constant 0 : index
    %c0_3 = arith.constant 0 : index
    %0 = vector.load %arg1[%c0, %c0_0, %c0_1, %c0_2, %c0_3] : memref<1x6x10x10x192xbf16, #tpu.memory_space<vmem>>, vector<1x6x10x10x192xbf16>
    %1 = vector.shape_cast %0 : vector<1x6x10x10x192xbf16> to vector<6x10x10x192xbf16>
    %2 = vector.extract_strided_slice %1 {offsets = [0, 0, 0, 0], sizes = [6, 10, 8, 192], strides = [1, 1, 1, 1]} : vector<6x10x10x192xbf16> to vector<6x10x8x192xbf16>
    %3 = vector.extract_strided_slice %1 {offsets = [0, 0, 1, 0], sizes = [6, 10, 8, 192], strides = [1, 1, 1, 1]} : vector<6x10x10x192xbf16> to vector<6x10x8x192xbf16>
    %4 = arith.maximumf %2, %3 : vector<6x10x8x192xbf16>
    %5 = vector.extract_strided_slice %1 {offsets = [0, 0, 2, 0], sizes = [6, 10, 8, 192], strides = [1, 1, 1, 1]} : vector<6x10x10x192xbf16> to vector<6x10x8x192xbf16>
    %6 = arith.maximumf %4, %5 : vector<6x10x8x192xbf16>
    %7 = vector.extract_strided_slice %6 {offsets = [0, 0, 0, 0], sizes = [6, 8, 8, 192], strides = [1, 1, 1, 1]} : vector<6x10x8x192xbf16> to vector<6x8x8x192xbf16>
    %8 = vector.extract_strided_slice %6 {offsets = [0, 1, 0, 0], sizes = [6, 8, 8, 192], strides = [1, 1, 1, 1]} : vector<6x10x8x192xbf16> to vector<6x8x8x192xbf16>
    %9 = arith.maximumf %7, %8 : vector<6x8x8x192xbf16>
    %10 = vector.extract_strided_slice %6 {offsets = [0, 2, 0, 0], sizes = [6, 8, 8, 192], strides = [1, 1, 1, 1]} : vector<6x10x8x192xbf16> to vector<6x8x8x192xbf16>
    %11 = arith.maximumf %9, %10 : vector<6x8x8x192xbf16>
    %12 = vector.extract_strided_slice %11 {offsets = [0, 0, 0, 0], sizes = [4, 8, 8, 192], strides = [1, 1, 1, 1]} : vector<6x8x8x192xbf16> to vector<4x8x8x192xbf16>
    %13 = vector.extract_strided_slice %11 {offsets = [1, 0, 0, 0], sizes = [4, 8, 8, 192], strides = [1, 1, 1, 1]} : vector<6x8x8x192xbf16> to vector<4x8x8x192xbf16>
    %14 = arith.maximumf %12, %13 : vector<4x8x8x192xbf16>
    %15 = vector.extract_strided_slice %11 {offsets = [2, 0, 0, 0], sizes = [4, 8, 8, 192], strides = [1, 1, 1, 1]} : vector<6x8x8x192xbf16> to vector<4x8x8x192xbf16>
    %16 = arith.maximumf %14, %15 : vector<4x8x8x192xbf16>
    %17 = vector.shape_cast %16 : vector<4x8x8x192xbf16> to vector<256x192xbf16>
    %c0_4 = arith.constant 0 : index
    %c0_5 = arith.constant 0 : index
    %18 = vector.load %arg2[%c0_4, %c0_5] : memref<192x32xbf16, #tpu.memory_space<vmem>>, vector<192x32xbf16>
    %cst = arith.constant dense<0.000000e+00> : vector<256x32xf32>
    %19 = tpu.matmul %17, %18, %cst {dimension_numbers = #tpu.dot_dimension_numbers<[1], [0], [0], [1], [0, 0, 1, 1], [], []>} : vector<256x192xbf16>, vector<192x32xbf16>, vector<256x32xf32> -> vector<256x32xf32>
    %c0_6 = arith.constant 0 : index
    %c0_7 = arith.constant 0 : index
    %20 = vector.load %arg3[%c0_6, %c0_7] : memref<1x32xf32, #tpu.memory_space<vmem>>, vector<1x32xf32>
    %21 = vector.broadcast %20 : vector<1x32xf32> to vector<256x32xf32>
    %22 = arith.addf %19, %21 : vector<256x32xf32>
    %cst_8 = arith.constant 0.000000e+00 : f32
    %23 = vector.broadcast %cst_8 : f32 to vector<256x32xf32>
    %24 = arith.maximumf %22, %23 : vector<256x32xf32>
    %25 = vector.shape_cast %24 : vector<256x32xf32> to vector<1x4x8x8x32xf32>
    %c0_9 = arith.constant 0 : index
    %c0_10 = arith.constant 0 : index
    %c0_11 = arith.constant 0 : index
    %c0_12 = arith.constant 0 : index
    %c0_13 = arith.constant 0 : index
    %26 = vector.load %arg4[%c0_9, %c0_10, %c0_11, %c0_12, %c0_13] : memref<1x4x8x8x32xf32, #tpu.memory_space<vmem>>, vector<1x4x8x8x32xf32>
    tpu.vector_store %arg4[%c0_9, %c0_10, %c0_11, %c0_12, %c0_13], %25 {strides = array<i32>} : memref<1x4x8x8x32xf32, #tpu.memory_space<vmem>>, vector<1x4x8x8x32xf32>,
    return
  }
  func.func @transform_0(%arg0: i32) -> (i32, i32, i32, i32, i32) {
    %c0_i32 = arith.constant 0 : i32
    %c0_i32_0 = arith.constant 0 : i32
    %c0_i32_1 = arith.constant 0 : i32
    %c0_i32_2 = arith.constant 0 : i32
    %c0_i32_3 = arith.constant 0 : i32
    return %arg0, %c0_i32, %c0_i32_0, %c0_i32_1, %c0_i32_2 : i32, i32, i32, i32, i32
  }
  func.func @transform_1(%arg0: i32) -> (i32, i32) {
    %c0_i32 = arith.constant 0 : i32
    %c0_i32_0 = arith.constant 0 : i32
    %c0_i32_1 = arith.constant 0 : i32
    return %c0_i32, %c0_i32_0 : i32, i32
  }
  func.func @transform_2(%arg0: i32) -> (i32, i32) {
    %c0_i32 = arith.constant 0 : i32
    %c0_i32_0 = arith.constant 0 : i32
    %c0_i32_1 = arith.constant 0 : i32
    return %c0_i32, %c0_i32_0 : i32, i32
  }
  func.func @transform_3(%arg0: i32) -> (i32, i32, i32, i32, i32) {
    %c0_i32 = arith.constant 0 : i32
    %c0_i32_0 = arith.constant 0 : i32
    %c0_i32_1 = arith.constant 0 : i32
    %c0_i32_2 = arith.constant 0 : i32
    %c0_i32_3 = arith.constant 0 : i32
    return %arg0, %c0_i32, %c0_i32_0, %c0_i32_1, %c0_i32_2 : i32, i32, i32, i32, i32
  }
}

module attributes {stable_mosaic.version = 11 : i64} {
  func.func @_matmul_bias_relu_kernel(%arg0: i32, %arg1: memref<256x192xbf16, #tpu.memory_space<vmem>>, %arg2: memref<192x176xbf16, #tpu.memory_space<vmem>>, %arg3: memref<1x176xf32, #tpu.memory_space<vmem>>, %arg4: memref<256x176xbf16, #tpu.memory_space<vmem>>) attributes {dimension_semantics = [#tpu.dimension_semantics<parallel>], iteration_bounds = array<i64: 2>, scalar_prefetch = 0 : i64, scratch_operands = 0 : i64, tpu.core_type = #tpu.core_type<tc>, window_params = [{transform_indices = @transform_0, window_bounds = array<i64: 256, 192>}, {pipeline_mode = #tpu.pipeline_mode<synchronous>, transform_indices = @transform_1, window_bounds = array<i64: 192, 176>}, {pipeline_mode = #tpu.pipeline_mode<synchronous>, transform_indices = @transform_2, window_bounds = array<i64: 1, 176>}, {transform_indices = @transform_3, window_bounds = array<i64: 256, 176>}]} {
    %c0 = arith.constant 0 : index
    %c0_0 = arith.constant 0 : index
    %0 = vector.load %arg1[%c0, %c0_0] : memref<256x192xbf16, #tpu.memory_space<vmem>>, vector<256x192xbf16>
    %c0_1 = arith.constant 0 : index
    %c0_2 = arith.constant 0 : index
    %1 = vector.load %arg2[%c0_1, %c0_2] : memref<192x176xbf16, #tpu.memory_space<vmem>>, vector<192x176xbf16>
    %cst = arith.constant dense<0.000000e+00> : vector<256x176xf32>
    %2 = tpu.matmul %0, %1, %cst {dimension_numbers = #tpu.dot_dimension_numbers<[1], [0], [0], [1], [0, 0, 1, 1], [], []>} : vector<256x192xbf16>, vector<192x176xbf16>, vector<256x176xf32> -> vector<256x176xf32>
    %c0_3 = arith.constant 0 : index
    %c0_4 = arith.constant 0 : index
    %3 = vector.load %arg3[%c0_3, %c0_4] : memref<1x176xf32, #tpu.memory_space<vmem>>, vector<1x176xf32>
    %4 = vector.broadcast %3 : vector<1x176xf32> to vector<256x176xf32>
    %5 = arith.addf %2, %4 : vector<256x176xf32>
    %cst_5 = arith.constant 0.000000e+00 : f32
    %6 = vector.broadcast %cst_5 : f32 to vector<256x176xf32>
    %7 = arith.maximumf %5, %6 : vector<256x176xf32>
    %8 = arith.truncf %7 : vector<256x176xf32> to vector<256x176xbf16>
    %c0_6 = arith.constant 0 : index
    %c0_7 = arith.constant 0 : index
    %9 = vector.load %arg4[%c0_6, %c0_7] : memref<256x176xbf16, #tpu.memory_space<vmem>>, vector<256x176xbf16>
    tpu.vector_store %arg4[%c0_6, %c0_7], %8 {strides = array<i32>} : memref<256x176xbf16, #tpu.memory_space<vmem>>, vector<256x176xbf16>,
    return
  }
  func.func @transform_0(%arg0: i32) -> (i32, i32) {
    %c0_i32 = arith.constant 0 : i32
    %c0_i32_0 = arith.constant 0 : i32
    return %arg0, %c0_i32 : i32, i32
  }
  func.func @transform_1(%arg0: i32) -> (i32, i32) {
    %c0_i32 = arith.constant 0 : i32
    %c0_i32_0 = arith.constant 0 : i32
    %c0_i32_1 = arith.constant 0 : i32
    return %c0_i32, %c0_i32_0 : i32, i32
  }
  func.func @transform_2(%arg0: i32) -> (i32, i32) {
    %c0_i32 = arith.constant 0 : i32
    %c0_i32_0 = arith.constant 0 : i32
    %c0_i32_1 = arith.constant 0 : i32
    return %c0_i32, %c0_i32_0 : i32, i32
  }
  func.func @transform_3(%arg0: i32) -> (i32, i32) {
    %c0_i32 = arith.constant 0 : i32
    %c0_i32_0 = arith.constant 0 : i32
    return %arg0, %c0_i32 : i32, i32
  }
}

module attributes {stable_mosaic.version = 11 : i64} {
  func.func @_sepconv_kernel(%arg0: i32, %arg1: memref<1x4x10x10x16xbf16, #tpu.memory_space<vmem>>, %arg2: memref<3x3x16x32xbf16, #tpu.memory_space<vmem>>, %arg3: memref<1x32xf32, #tpu.memory_space<vmem>>, %arg4: memref<3x32x32xbf16, #tpu.memory_space<vmem>>, %arg5: memref<1x32xf32, #tpu.memory_space<vmem>>, %arg6: memref<1x4x8x8x32xf32, #tpu.memory_space<vmem>>) attributes {dimension_semantics = [#tpu.dimension_semantics<parallel>], iteration_bounds = array<i64: 2>, scalar_prefetch = 0 : i64, scratch_operands = 0 : i64, tpu.core_type = #tpu.core_type<tc>, window_params = [{transform_indices = @transform_0, window_bounds = array<i64: 1, 4, 10, 10, 16>}, {pipeline_mode = #tpu.pipeline_mode<synchronous>, transform_indices = @transform_1, window_bounds = array<i64: 3, 3, 16, 32>}, {pipeline_mode = #tpu.pipeline_mode<synchronous>, transform_indices = @transform_2, window_bounds = array<i64: 1, 32>}, {pipeline_mode = #tpu.pipeline_mode<synchronous>, transform_indices = @transform_3, window_bounds = array<i64: 3, 32, 32>}, {pipeline_mode = #tpu.pipeline_mode<synchronous>, transform_indices = @transform_4, window_bounds = array<i64: 1, 32>}, {transform_indices = @transform_5, window_bounds = array<i64: 1, 4, 8, 8, 32>}]} {
    %c0 = arith.constant 0 : index
    %c0_0 = arith.constant 0 : index
    %c0_1 = arith.constant 0 : index
    %c0_2 = arith.constant 0 : index
    %c0_3 = arith.constant 0 : index
    %0 = vector.load %arg1[%c0, %c0_0, %c0_1, %c0_2, %c0_3] : memref<1x4x10x10x16xbf16, #tpu.memory_space<vmem>>, vector<1x4x10x10x16xbf16>
    %1 = vector.shape_cast %0 : vector<1x4x10x10x16xbf16> to vector<4x10x10x16xbf16>
    %cst = arith.constant 0.000000e+00 : f32
    %2 = vector.broadcast %cst : f32 to vector<256x32xf32>
    %3 = vector.extract_strided_slice %1 {offsets = [0, 0, 0, 0], sizes = [4, 8, 8, 16], strides = [1, 1, 1, 1]} : vector<4x10x10x16xbf16> to vector<4x8x8x16xbf16>
    %4 = vector.shape_cast %3 : vector<4x8x8x16xbf16> to vector<256x16xbf16>
    %c0_4 = arith.constant 0 : index
    %c0_5 = arith.constant 0 : index
    %c0_6 = arith.constant 0 : index
    %c0_7 = arith.constant 0 : index
    %5 = vector.load %arg2[%c0_4, %c0_5, %c0_6, %c0_7] : memref<3x3x16x32xbf16, #tpu.memory_space<vmem>>, vector<1x1x16x32xbf16>
    %6 = vector.shape_cast %5 : vector<1x1x16x32xbf16> to vector<16x32xbf16>
    %cst_8 = arith.constant dense<0.000000e+00> : vector<256x32xf32>
    %7 = tpu.matmul %4, %6, %cst_8 {dimension_numbers = #tpu.dot_dimension_numbers<[1], [0], [0], [1], [0, 0, 1, 1], [], []>} : vector<256x16xbf16>, vector<16x32xbf16>, vector<256x32xf32> -> vector<256x32xf32>
    %8 = arith.addf %2, %7 : vector<256x32xf32>
    %9 = vector.extract_strided_slice %1 {offsets = [0, 0, 1, 0], sizes = [4, 8, 8, 16], strides = [1, 1, 1, 1]} : vector<4x10x10x16xbf16> to vector<4x8x8x16xbf16>
    %10 = vector.shape_cast %9 : vector<4x8x8x16xbf16> to vector<256x16xbf16>
    %c0_9 = arith.constant 0 : index
    %c1 = arith.constant 1 : index
    %c0_10 = arith.constant 0 : index
    %c0_11 = arith.constant 0 : index
    %11 = vector.load %arg2[%c0_9, %c1, %c0_10, %c0_11] : memref<3x3x16x32xbf16, #tpu.memory_space<vmem>>, vector<1x1x16x32xbf16>
    %12 = vector.shape_cast %11 : vector<1x1x16x32xbf16> to vector<16x32xbf16>
    %cst_12 = arith.constant dense<0.000000e+00> : vector<256x32xf32>
    %13 = tpu.matmul %10, %12, %cst_12 {dimension_numbers = #tpu.dot_dimension_numbers<[1], [0], [0], [1], [0, 0, 1, 1], [], []>} : vector<256x16xbf16>, vector<16x32xbf16>, vector<256x32xf32> -> vector<256x32xf32>
    %14 = arith.addf %8, %13 : vector<256x32xf32>
    %15 = vector.extract_strided_slice %1 {offsets = [0, 0, 2, 0], sizes = [4, 8, 8, 16], strides = [1, 1, 1, 1]} : vector<4x10x10x16xbf16> to vector<4x8x8x16xbf16>
    %16 = vector.shape_cast %15 : vector<4x8x8x16xbf16> to vector<256x16xbf16>
    %c0_13 = arith.constant 0 : index
    %c2 = arith.constant 2 : index
    %c0_14 = arith.constant 0 : index
    %c0_15 = arith.constant 0 : index
    %17 = vector.load %arg2[%c0_13, %c2, %c0_14, %c0_15] : memref<3x3x16x32xbf16, #tpu.memory_space<vmem>>, vector<1x1x16x32xbf16>
    %18 = vector.shape_cast %17 : vector<1x1x16x32xbf16> to vector<16x32xbf16>
    %cst_16 = arith.constant dense<0.000000e+00> : vector<256x32xf32>
    %19 = tpu.matmul %16, %18, %cst_16 {dimension_numbers = #tpu.dot_dimension_numbers<[1], [0], [0], [1], [0, 0, 1, 1], [], []>} : vector<256x16xbf16>, vector<16x32xbf16>, vector<256x32xf32> -> vector<256x32xf32>
    %20 = arith.addf %14, %19 : vector<256x32xf32>
    %21 = vector.extract_strided_slice %1 {offsets = [0, 1, 0, 0], sizes = [4, 8, 8, 16], strides = [1, 1, 1, 1]} : vector<4x10x10x16xbf16> to vector<4x8x8x16xbf16>
    %22 = vector.shape_cast %21 : vector<4x8x8x16xbf16> to vector<256x16xbf16>
    %c1_17 = arith.constant 1 : index
    %c0_18 = arith.constant 0 : index
    %c0_19 = arith.constant 0 : index
    %c0_20 = arith.constant 0 : index
    %23 = vector.load %arg2[%c1_17, %c0_18, %c0_19, %c0_20] : memref<3x3x16x32xbf16, #tpu.memory_space<vmem>>, vector<1x1x16x32xbf16>
    %24 = vector.shape_cast %23 : vector<1x1x16x32xbf16> to vector<16x32xbf16>
    %cst_21 = arith.constant dense<0.000000e+00> : vector<256x32xf32>
    %25 = tpu.matmul %22, %24, %cst_21 {dimension_numbers = #tpu.dot_dimension_numbers<[1], [0], [0], [1], [0, 0, 1, 1], [], []>} : vector<256x16xbf16>, vector<16x32xbf16>, vector<256x32xf32> -> vector<256x32xf32>
    %26 = arith.addf %20, %25 : vector<256x32xf32>
    %27 = vector.extract_strided_slice %1 {offsets = [0, 1, 1, 0], sizes = [4, 8, 8, 16], strides = [1, 1, 1, 1]} : vector<4x10x10x16xbf16> to vector<4x8x8x16xbf16>
    %28 = vector.shape_cast %27 : vector<4x8x8x16xbf16> to vector<256x16xbf16>
    %c1_22 = arith.constant 1 : index
    %c1_23 = arith.constant 1 : index
    %c0_24 = arith.constant 0 : index
    %c0_25 = arith.constant 0 : index
    %29 = vector.load %arg2[%c1_22, %c1_23, %c0_24, %c0_25] : memref<3x3x16x32xbf16, #tpu.memory_space<vmem>>, vector<1x1x16x32xbf16>
    %30 = vector.shape_cast %29 : vector<1x1x16x32xbf16> to vector<16x32xbf16>
    %cst_26 = arith.constant dense<0.000000e+00> : vector<256x32xf32>
    %31 = tpu.matmul %28, %30, %cst_26 {dimension_numbers = #tpu.dot_dimension_numbers<[1], [0], [0], [1], [0, 0, 1, 1], [], []>} : vector<256x16xbf16>, vector<16x32xbf16>, vector<256x32xf32> -> vector<256x32xf32>
    %32 = arith.addf %26, %31 : vector<256x32xf32>
    %33 = vector.extract_strided_slice %1 {offsets = [0, 1, 2, 0], sizes = [4, 8, 8, 16], strides = [1, 1, 1, 1]} : vector<4x10x10x16xbf16> to vector<4x8x8x16xbf16>
    %34 = vector.shape_cast %33 : vector<4x8x8x16xbf16> to vector<256x16xbf16>
    %c1_27 = arith.constant 1 : index
    %c2_28 = arith.constant 2 : index
    %c0_29 = arith.constant 0 : index
    %c0_30 = arith.constant 0 : index
    %35 = vector.load %arg2[%c1_27, %c2_28, %c0_29, %c0_30] : memref<3x3x16x32xbf16, #tpu.memory_space<vmem>>, vector<1x1x16x32xbf16>
    %36 = vector.shape_cast %35 : vector<1x1x16x32xbf16> to vector<16x32xbf16>
    %cst_31 = arith.constant dense<0.000000e+00> : vector<256x32xf32>
    %37 = tpu.matmul %34, %36, %cst_31 {dimension_numbers = #tpu.dot_dimension_numbers<[1], [0], [0], [1], [0, 0, 1, 1], [], []>} : vector<256x16xbf16>, vector<16x32xbf16>, vector<256x32xf32> -> vector<256x32xf32>
    %38 = arith.addf %32, %37 : vector<256x32xf32>
    %39 = vector.extract_strided_slice %1 {offsets = [0, 2, 0, 0], sizes = [4, 8, 8, 16], strides = [1, 1, 1, 1]} : vector<4x10x10x16xbf16> to vector<4x8x8x16xbf16>
    %40 = vector.shape_cast %39 : vector<4x8x8x16xbf16> to vector<256x16xbf16>
    %c2_32 = arith.constant 2 : index
    %c0_33 = arith.constant 0 : index
    %c0_34 = arith.constant 0 : index
    %c0_35 = arith.constant 0 : index
    %41 = vector.load %arg2[%c2_32, %c0_33, %c0_34, %c0_35] : memref<3x3x16x32xbf16, #tpu.memory_space<vmem>>, vector<1x1x16x32xbf16>
    %42 = vector.shape_cast %41 : vector<1x1x16x32xbf16> to vector<16x32xbf16>
    %cst_36 = arith.constant dense<0.000000e+00> : vector<256x32xf32>
    %43 = tpu.matmul %40, %42, %cst_36 {dimension_numbers = #tpu.dot_dimension_numbers<[1], [0], [0], [1], [0, 0, 1, 1], [], []>} : vector<256x16xbf16>, vector<16x32xbf16>, vector<256x32xf32> -> vector<256x32xf32>
    %44 = arith.addf %38, %43 : vector<256x32xf32>
    %45 = vector.extract_strided_slice %1 {offsets = [0, 2, 1, 0], sizes = [4, 8, 8, 16], strides = [1, 1, 1, 1]} : vector<4x10x10x16xbf16> to vector<4x8x8x16xbf16>
    %46 = vector.shape_cast %45 : vector<4x8x8x16xbf16> to vector<256x16xbf16>
    %c2_37 = arith.constant 2 : index
    %c1_38 = arith.constant 1 : index
    %c0_39 = arith.constant 0 : index
    %c0_40 = arith.constant 0 : index
    %47 = vector.load %arg2[%c2_37, %c1_38, %c0_39, %c0_40] : memref<3x3x16x32xbf16, #tpu.memory_space<vmem>>, vector<1x1x16x32xbf16>
    %48 = vector.shape_cast %47 : vector<1x1x16x32xbf16> to vector<16x32xbf16>
    %cst_41 = arith.constant dense<0.000000e+00> : vector<256x32xf32>
    %49 = tpu.matmul %46, %48, %cst_41 {dimension_numbers = #tpu.dot_dimension_numbers<[1], [0], [0], [1], [0, 0, 1, 1], [], []>} : vector<256x16xbf16>, vector<16x32xbf16>, vector<256x32xf32> -> vector<256x32xf32>
    %50 = arith.addf %44, %49 : vector<256x32xf32>
    %51 = vector.extract_strided_slice %1 {offsets = [0, 2, 2, 0], sizes = [4, 8, 8, 16], strides = [1, 1, 1, 1]} : vector<4x10x10x16xbf16> to vector<4x8x8x16xbf16>
    %52 = vector.shape_cast %51 : vector<4x8x8x16xbf16> to vector<256x16xbf16>
    %c2_42 = arith.constant 2 : index
    %c2_43 = arith.constant 2 : index
    %c0_44 = arith.constant 0 : index
    %c0_45 = arith.constant 0 : index
    %53 = vector.load %arg2[%c2_42, %c2_43, %c0_44, %c0_45] : memref<3x3x16x32xbf16, #tpu.memory_space<vmem>>, vector<1x1x16x32xbf16>
    %54 = vector.shape_cast %53 : vector<1x1x16x32xbf16> to vector<16x32xbf16>
    %cst_46 = arith.constant dense<0.000000e+00> : vector<256x32xf32>
    %55 = tpu.matmul %52, %54, %cst_46 {dimension_numbers = #tpu.dot_dimension_numbers<[1], [0], [0], [1], [0, 0, 1, 1], [], []>} : vector<256x16xbf16>, vector<16x32xbf16>, vector<256x32xf32> -> vector<256x32xf32>
    %56 = arith.addf %50, %55 : vector<256x32xf32>
    %c0_47 = arith.constant 0 : index
    %c0_48 = arith.constant 0 : index
    %57 = vector.load %arg3[%c0_47, %c0_48] : memref<1x32xf32, #tpu.memory_space<vmem>>, vector<1x32xf32>
    %58 = vector.broadcast %57 : vector<1x32xf32> to vector<256x32xf32>
    %59 = arith.addf %56, %58 : vector<256x32xf32>
    %cst_49 = arith.constant 0.000000e+00 : f32
    %60 = vector.broadcast %cst_49 : f32 to vector<256x32xf32>
    %61 = arith.maximumf %59, %60 : vector<256x32xf32>
    %62 = arith.truncf %61 : vector<256x32xf32> to vector<256x32xbf16>
    %63 = vector.shape_cast %62 : vector<256x32xbf16> to vector<4x64x32xbf16>
    %cst_50 = arith.constant 0.000000e+00 : bf16
    %64 = vector.broadcast %cst_50 : bf16 to vector<1x64x32xbf16>
    %65 = tpu.concatenate %64, %63, %64 in 0 : vector<1x64x32xbf16>, vector<4x64x32xbf16>, vector<1x64x32xbf16> -> vector<6x64x32xbf16>
    %cst_51 = arith.constant 0.000000e+00 : f32
    %66 = vector.broadcast %cst_51 : f32 to vector<256x32xf32>
    %67 = vector.extract_strided_slice %65 {offsets = [0, 0, 0], sizes = [4, 64, 32], strides = [1, 1, 1]} : vector<6x64x32xbf16> to vector<4x64x32xbf16>
    %68 = vector.shape_cast %67 : vector<4x64x32xbf16> to vector<256x32xbf16>
    %c0_52 = arith.constant 0 : index
    %c0_53 = arith.constant 0 : index
    %c0_54 = arith.constant 0 : index
    %69 = vector.load %arg4[%c0_52, %c0_53, %c0_54] : memref<3x32x32xbf16, #tpu.memory_space<vmem>>, vector<1x32x32xbf16>
    %70 = vector.shape_cast %69 : vector<1x32x32xbf16> to vector<32x32xbf16>
    %cst_55 = arith.constant dense<0.000000e+00> : vector<256x32xf32>
    %71 = tpu.matmul %68, %70, %cst_55 {dimension_numbers = #tpu.dot_dimension_numbers<[1], [0], [0], [1], [0, 0, 1, 1], [], []>} : vector<256x32xbf16>, vector<32x32xbf16>, vector<256x32xf32> -> vector<256x32xf32>
    %72 = arith.addf %66, %71 : vector<256x32xf32>
    %73 = vector.extract_strided_slice %65 {offsets = [1, 0, 0], sizes = [4, 64, 32], strides = [1, 1, 1]} : vector<6x64x32xbf16> to vector<4x64x32xbf16>
    %74 = vector.shape_cast %73 : vector<4x64x32xbf16> to vector<256x32xbf16>
    %c1_56 = arith.constant 1 : index
    %c0_57 = arith.constant 0 : index
    %c0_58 = arith.constant 0 : index
    %75 = vector.load %arg4[%c1_56, %c0_57, %c0_58] : memref<3x32x32xbf16, #tpu.memory_space<vmem>>, vector<1x32x32xbf16>
    %76 = vector.shape_cast %75 : vector<1x32x32xbf16> to vector<32x32xbf16>
    %cst_59 = arith.constant dense<0.000000e+00> : vector<256x32xf32>
    %77 = tpu.matmul %74, %76, %cst_59 {dimension_numbers = #tpu.dot_dimension_numbers<[1], [0], [0], [1], [0, 0, 1, 1], [], []>} : vector<256x32xbf16>, vector<32x32xbf16>, vector<256x32xf32> -> vector<256x32xf32>
    %78 = arith.addf %72, %77 : vector<256x32xf32>
    %79 = vector.extract_strided_slice %65 {offsets = [2, 0, 0], sizes = [4, 64, 32], strides = [1, 1, 1]} : vector<6x64x32xbf16> to vector<4x64x32xbf16>
    %80 = vector.shape_cast %79 : vector<4x64x32xbf16> to vector<256x32xbf16>
    %c2_60 = arith.constant 2 : index
    %c0_61 = arith.constant 0 : index
    %c0_62 = arith.constant 0 : index
    %81 = vector.load %arg4[%c2_60, %c0_61, %c0_62] : memref<3x32x32xbf16, #tpu.memory_space<vmem>>, vector<1x32x32xbf16>
    %82 = vector.shape_cast %81 : vector<1x32x32xbf16> to vector<32x32xbf16>
    %cst_63 = arith.constant dense<0.000000e+00> : vector<256x32xf32>
    %83 = tpu.matmul %80, %82, %cst_63 {dimension_numbers = #tpu.dot_dimension_numbers<[1], [0], [0], [1], [0, 0, 1, 1], [], []>} : vector<256x32xbf16>, vector<32x32xbf16>, vector<256x32xf32> -> vector<256x32xf32>
    %84 = arith.addf %78, %83 : vector<256x32xf32>
    %c0_64 = arith.constant 0 : index
    %c0_65 = arith.constant 0 : index
    %85 = vector.load %arg5[%c0_64, %c0_65] : memref<1x32xf32, #tpu.memory_space<vmem>>, vector<1x32xf32>
    %86 = vector.broadcast %85 : vector<1x32xf32> to vector<256x32xf32>
    %87 = arith.addf %84, %86 : vector<256x32xf32>
    %cst_66 = arith.constant 0.000000e+00 : f32
    %88 = vector.broadcast %cst_66 : f32 to vector<256x32xf32>
    %89 = arith.maximumf %87, %88 : vector<256x32xf32>
    %90 = vector.shape_cast %89 : vector<256x32xf32> to vector<1x4x8x8x32xf32>
    %c0_67 = arith.constant 0 : index
    %c0_68 = arith.constant 0 : index
    %c0_69 = arith.constant 0 : index
    %c0_70 = arith.constant 0 : index
    %c0_71 = arith.constant 0 : index
    %91 = vector.load %arg6[%c0_67, %c0_68, %c0_69, %c0_70, %c0_71] : memref<1x4x8x8x32xf32, #tpu.memory_space<vmem>>, vector<1x4x8x8x32xf32>
    tpu.vector_store %arg6[%c0_67, %c0_68, %c0_69, %c0_70, %c0_71], %90 {strides = array<i32>} : memref<1x4x8x8x32xf32, #tpu.memory_space<vmem>>, vector<1x4x8x8x32xf32>,
    return
  }
  func.func @transform_0(%arg0: i32) -> (i32, i32, i32, i32, i32) {
    %c0_i32 = arith.constant 0 : i32
    %c0_i32_0 = arith.constant 0 : i32
    %c0_i32_1 = arith.constant 0 : i32
    %c0_i32_2 = arith.constant 0 : i32
    %c0_i32_3 = arith.constant 0 : i32
    return %arg0, %c0_i32, %c0_i32_0, %c0_i32_1, %c0_i32_2 : i32, i32, i32, i32, i32
  }
  func.func @transform_1(%arg0: i32) -> (i32, i32, i32, i32) {
    %c0_i32 = arith.constant 0 : i32
    %c0_i32_0 = arith.constant 0 : i32
    %c0_i32_1 = arith.constant 0 : i32
    %c0_i32_2 = arith.constant 0 : i32
    %c0_i32_3 = arith.constant 0 : i32
    return %c0_i32, %c0_i32_0, %c0_i32_1, %c0_i32_2 : i32, i32, i32, i32
  }
  func.func @transform_2(%arg0: i32) -> (i32, i32) {
    %c0_i32 = arith.constant 0 : i32
    %c0_i32_0 = arith.constant 0 : i32
    %c0_i32_1 = arith.constant 0 : i32
    return %c0_i32, %c0_i32_0 : i32, i32
  }
  func.func @transform_3(%arg0: i32) -> (i32, i32, i32) {
    %c0_i32 = arith.constant 0 : i32
    %c0_i32_0 = arith.constant 0 : i32
    %c0_i32_1 = arith.constant 0 : i32
    %c0_i32_2 = arith.constant 0 : i32
    return %c0_i32, %c0_i32_0, %c0_i32_1 : i32, i32, i32
  }
  func.func @transform_4(%arg0: i32) -> (i32, i32) {
    %c0_i32 = arith.constant 0 : i32
    %c0_i32_0 = arith.constant 0 : i32
    %c0_i32_1 = arith.constant 0 : i32
    return %c0_i32, %c0_i32_0 : i32, i32
  }
  func.func @transform_5(%arg0: i32) -> (i32, i32, i32, i32, i32) {
    %c0_i32 = arith.constant 0 : i32
    %c0_i32_0 = arith.constant 0 : i32
    %c0_i32_1 = arith.constant 0 : i32
    %c0_i32_2 = arith.constant 0 : i32
    %c0_i32_3 = arith.constant 0 : i32
    return %arg0, %c0_i32, %c0_i32_0, %c0_i32_1, %c0_i32_2 : i32, i32, i32, i32, i32
  }
}

module attributes {stable_mosaic.version = 11 : i64} {
  func.func @_sepconv_kernel(%arg0: i32, %arg1: memref<1x4x10x10x96xbf16, #tpu.memory_space<vmem>>, %arg2: memref<3x3x96x128xbf16, #tpu.memory_space<vmem>>, %arg3: memref<1x128xf32, #tpu.memory_space<vmem>>, %arg4: memref<3x128x128xbf16, #tpu.memory_space<vmem>>, %arg5: memref<1x128xf32, #tpu.memory_space<vmem>>, %arg6: memref<1x4x8x8x128xf32, #tpu.memory_space<vmem>>) attributes {dimension_semantics = [#tpu.dimension_semantics<parallel>], iteration_bounds = array<i64: 2>, scalar_prefetch = 0 : i64, scratch_operands = 0 : i64, tpu.core_type = #tpu.core_type<tc>, window_params = [{transform_indices = @transform_0, window_bounds = array<i64: 1, 4, 10, 10, 96>}, {pipeline_mode = #tpu.pipeline_mode<synchronous>, transform_indices = @transform_1, window_bounds = array<i64: 3, 3, 96, 128>}, {pipeline_mode = #tpu.pipeline_mode<synchronous>, transform_indices = @transform_2, window_bounds = array<i64: 1, 128>}, {pipeline_mode = #tpu.pipeline_mode<synchronous>, transform_indices = @transform_3, window_bounds = array<i64: 3, 128, 128>}, {pipeline_mode = #tpu.pipeline_mode<synchronous>, transform_indices = @transform_4, window_bounds = array<i64: 1, 128>}, {transform_indices = @transform_5, window_bounds = array<i64: 1, 4, 8, 8, 128>}]} {
    %c0 = arith.constant 0 : index
    %c0_0 = arith.constant 0 : index
    %c0_1 = arith.constant 0 : index
    %c0_2 = arith.constant 0 : index
    %c0_3 = arith.constant 0 : index
    %0 = vector.load %arg1[%c0, %c0_0, %c0_1, %c0_2, %c0_3] : memref<1x4x10x10x96xbf16, #tpu.memory_space<vmem>>, vector<1x4x10x10x96xbf16>
    %1 = vector.shape_cast %0 : vector<1x4x10x10x96xbf16> to vector<4x10x10x96xbf16>
    %cst = arith.constant 0.000000e+00 : f32
    %2 = vector.broadcast %cst : f32 to vector<256x128xf32>
    %3 = vector.extract_strided_slice %1 {offsets = [0, 0, 0, 0], sizes = [4, 8, 8, 96], strides = [1, 1, 1, 1]} : vector<4x10x10x96xbf16> to vector<4x8x8x96xbf16>
    %4 = vector.shape_cast %3 : vector<4x8x8x96xbf16> to vector<256x96xbf16>
    %c0_4 = arith.constant 0 : index
    %c0_5 = arith.constant 0 : index
    %c0_6 = arith.constant 0 : index
    %c0_7 = arith.constant 0 : index
    %5 = vector.load %arg2[%c0_4, %c0_5, %c0_6, %c0_7] : memref<3x3x96x128xbf16, #tpu.memory_space<vmem>>, vector<1x1x96x128xbf16>
    %6 = vector.shape_cast %5 : vector<1x1x96x128xbf16> to vector<96x128xbf16>
    %cst_8 = arith.constant dense<0.000000e+00> : vector<256x128xf32>
    %7 = tpu.matmul %4, %6, %cst_8 {dimension_numbers = #tpu.dot_dimension_numbers<[1], [0], [0], [1], [0, 0, 1, 1], [], []>} : vector<256x96xbf16>, vector<96x128xbf16>, vector<256x128xf32> -> vector<256x128xf32>
    %8 = arith.addf %2, %7 : vector<256x128xf32>
    %9 = vector.extract_strided_slice %1 {offsets = [0, 0, 1, 0], sizes = [4, 8, 8, 96], strides = [1, 1, 1, 1]} : vector<4x10x10x96xbf16> to vector<4x8x8x96xbf16>
    %10 = vector.shape_cast %9 : vector<4x8x8x96xbf16> to vector<256x96xbf16>
    %c0_9 = arith.constant 0 : index
    %c1 = arith.constant 1 : index
    %c0_10 = arith.constant 0 : index
    %c0_11 = arith.constant 0 : index
    %11 = vector.load %arg2[%c0_9, %c1, %c0_10, %c0_11] : memref<3x3x96x128xbf16, #tpu.memory_space<vmem>>, vector<1x1x96x128xbf16>
    %12 = vector.shape_cast %11 : vector<1x1x96x128xbf16> to vector<96x128xbf16>
    %cst_12 = arith.constant dense<0.000000e+00> : vector<256x128xf32>
    %13 = tpu.matmul %10, %12, %cst_12 {dimension_numbers = #tpu.dot_dimension_numbers<[1], [0], [0], [1], [0, 0, 1, 1], [], []>} : vector<256x96xbf16>, vector<96x128xbf16>, vector<256x128xf32> -> vector<256x128xf32>
    %14 = arith.addf %8, %13 : vector<256x128xf32>
    %15 = vector.extract_strided_slice %1 {offsets = [0, 0, 2, 0], sizes = [4, 8, 8, 96], strides = [1, 1, 1, 1]} : vector<4x10x10x96xbf16> to vector<4x8x8x96xbf16>
    %16 = vector.shape_cast %15 : vector<4x8x8x96xbf16> to vector<256x96xbf16>
    %c0_13 = arith.constant 0 : index
    %c2 = arith.constant 2 : index
    %c0_14 = arith.constant 0 : index
    %c0_15 = arith.constant 0 : index
    %17 = vector.load %arg2[%c0_13, %c2, %c0_14, %c0_15] : memref<3x3x96x128xbf16, #tpu.memory_space<vmem>>, vector<1x1x96x128xbf16>
    %18 = vector.shape_cast %17 : vector<1x1x96x128xbf16> to vector<96x128xbf16>
    %cst_16 = arith.constant dense<0.000000e+00> : vector<256x128xf32>
    %19 = tpu.matmul %16, %18, %cst_16 {dimension_numbers = #tpu.dot_dimension_numbers<[1], [0], [0], [1], [0, 0, 1, 1], [], []>} : vector<256x96xbf16>, vector<96x128xbf16>, vector<256x128xf32> -> vector<256x128xf32>
    %20 = arith.addf %14, %19 : vector<256x128xf32>
    %21 = vector.extract_strided_slice %1 {offsets = [0, 1, 0, 0], sizes = [4, 8, 8, 96], strides = [1, 1, 1, 1]} : vector<4x10x10x96xbf16> to vector<4x8x8x96xbf16>
    %22 = vector.shape_cast %21 : vector<4x8x8x96xbf16> to vector<256x96xbf16>
    %c1_17 = arith.constant 1 : index
    %c0_18 = arith.constant 0 : index
    %c0_19 = arith.constant 0 : index
    %c0_20 = arith.constant 0 : index
    %23 = vector.load %arg2[%c1_17, %c0_18, %c0_19, %c0_20] : memref<3x3x96x128xbf16, #tpu.memory_space<vmem>>, vector<1x1x96x128xbf16>
    %24 = vector.shape_cast %23 : vector<1x1x96x128xbf16> to vector<96x128xbf16>
    %cst_21 = arith.constant dense<0.000000e+00> : vector<256x128xf32>
    %25 = tpu.matmul %22, %24, %cst_21 {dimension_numbers = #tpu.dot_dimension_numbers<[1], [0], [0], [1], [0, 0, 1, 1], [], []>} : vector<256x96xbf16>, vector<96x128xbf16>, vector<256x128xf32> -> vector<256x128xf32>
    %26 = arith.addf %20, %25 : vector<256x128xf32>
    %27 = vector.extract_strided_slice %1 {offsets = [0, 1, 1, 0], sizes = [4, 8, 8, 96], strides = [1, 1, 1, 1]} : vector<4x10x10x96xbf16> to vector<4x8x8x96xbf16>
    %28 = vector.shape_cast %27 : vector<4x8x8x96xbf16> to vector<256x96xbf16>
    %c1_22 = arith.constant 1 : index
    %c1_23 = arith.constant 1 : index
    %c0_24 = arith.constant 0 : index
    %c0_25 = arith.constant 0 : index
    %29 = vector.load %arg2[%c1_22, %c1_23, %c0_24, %c0_25] : memref<3x3x96x128xbf16, #tpu.memory_space<vmem>>, vector<1x1x96x128xbf16>
    %30 = vector.shape_cast %29 : vector<1x1x96x128xbf16> to vector<96x128xbf16>
    %cst_26 = arith.constant dense<0.000000e+00> : vector<256x128xf32>
    %31 = tpu.matmul %28, %30, %cst_26 {dimension_numbers = #tpu.dot_dimension_numbers<[1], [0], [0], [1], [0, 0, 1, 1], [], []>} : vector<256x96xbf16>, vector<96x128xbf16>, vector<256x128xf32> -> vector<256x128xf32>
    %32 = arith.addf %26, %31 : vector<256x128xf32>
    %33 = vector.extract_strided_slice %1 {offsets = [0, 1, 2, 0], sizes = [4, 8, 8, 96], strides = [1, 1, 1, 1]} : vector<4x10x10x96xbf16> to vector<4x8x8x96xbf16>
    %34 = vector.shape_cast %33 : vector<4x8x8x96xbf16> to vector<256x96xbf16>
    %c1_27 = arith.constant 1 : index
    %c2_28 = arith.constant 2 : index
    %c0_29 = arith.constant 0 : index
    %c0_30 = arith.constant 0 : index
    %35 = vector.load %arg2[%c1_27, %c2_28, %c0_29, %c0_30] : memref<3x3x96x128xbf16, #tpu.memory_space<vmem>>, vector<1x1x96x128xbf16>
    %36 = vector.shape_cast %35 : vector<1x1x96x128xbf16> to vector<96x128xbf16>
    %cst_31 = arith.constant dense<0.000000e+00> : vector<256x128xf32>
    %37 = tpu.matmul %34, %36, %cst_31 {dimension_numbers = #tpu.dot_dimension_numbers<[1], [0], [0], [1], [0, 0, 1, 1], [], []>} : vector<256x96xbf16>, vector<96x128xbf16>, vector<256x128xf32> -> vector<256x128xf32>
    %38 = arith.addf %32, %37 : vector<256x128xf32>
    %39 = vector.extract_strided_slice %1 {offsets = [0, 2, 0, 0], sizes = [4, 8, 8, 96], strides = [1, 1, 1, 1]} : vector<4x10x10x96xbf16> to vector<4x8x8x96xbf16>
    %40 = vector.shape_cast %39 : vector<4x8x8x96xbf16> to vector<256x96xbf16>
    %c2_32 = arith.constant 2 : index
    %c0_33 = arith.constant 0 : index
    %c0_34 = arith.constant 0 : index
    %c0_35 = arith.constant 0 : index
    %41 = vector.load %arg2[%c2_32, %c0_33, %c0_34, %c0_35] : memref<3x3x96x128xbf16, #tpu.memory_space<vmem>>, vector<1x1x96x128xbf16>
    %42 = vector.shape_cast %41 : vector<1x1x96x128xbf16> to vector<96x128xbf16>
    %cst_36 = arith.constant dense<0.000000e+00> : vector<256x128xf32>
    %43 = tpu.matmul %40, %42, %cst_36 {dimension_numbers = #tpu.dot_dimension_numbers<[1], [0], [0], [1], [0, 0, 1, 1], [], []>} : vector<256x96xbf16>, vector<96x128xbf16>, vector<256x128xf32> -> vector<256x128xf32>
    %44 = arith.addf %38, %43 : vector<256x128xf32>
    %45 = vector.extract_strided_slice %1 {offsets = [0, 2, 1, 0], sizes = [4, 8, 8, 96], strides = [1, 1, 1, 1]} : vector<4x10x10x96xbf16> to vector<4x8x8x96xbf16>
    %46 = vector.shape_cast %45 : vector<4x8x8x96xbf16> to vector<256x96xbf16>
    %c2_37 = arith.constant 2 : index
    %c1_38 = arith.constant 1 : index
    %c0_39 = arith.constant 0 : index
    %c0_40 = arith.constant 0 : index
    %47 = vector.load %arg2[%c2_37, %c1_38, %c0_39, %c0_40] : memref<3x3x96x128xbf16, #tpu.memory_space<vmem>>, vector<1x1x96x128xbf16>
    %48 = vector.shape_cast %47 : vector<1x1x96x128xbf16> to vector<96x128xbf16>
    %cst_41 = arith.constant dense<0.000000e+00> : vector<256x128xf32>
    %49 = tpu.matmul %46, %48, %cst_41 {dimension_numbers = #tpu.dot_dimension_numbers<[1], [0], [0], [1], [0, 0, 1, 1], [], []>} : vector<256x96xbf16>, vector<96x128xbf16>, vector<256x128xf32> -> vector<256x128xf32>
    %50 = arith.addf %44, %49 : vector<256x128xf32>
    %51 = vector.extract_strided_slice %1 {offsets = [0, 2, 2, 0], sizes = [4, 8, 8, 96], strides = [1, 1, 1, 1]} : vector<4x10x10x96xbf16> to vector<4x8x8x96xbf16>
    %52 = vector.shape_cast %51 : vector<4x8x8x96xbf16> to vector<256x96xbf16>
    %c2_42 = arith.constant 2 : index
    %c2_43 = arith.constant 2 : index
    %c0_44 = arith.constant 0 : index
    %c0_45 = arith.constant 0 : index
    %53 = vector.load %arg2[%c2_42, %c2_43, %c0_44, %c0_45] : memref<3x3x96x128xbf16, #tpu.memory_space<vmem>>, vector<1x1x96x128xbf16>
    %54 = vector.shape_cast %53 : vector<1x1x96x128xbf16> to vector<96x128xbf16>
    %cst_46 = arith.constant dense<0.000000e+00> : vector<256x128xf32>
    %55 = tpu.matmul %52, %54, %cst_46 {dimension_numbers = #tpu.dot_dimension_numbers<[1], [0], [0], [1], [0, 0, 1, 1], [], []>} : vector<256x96xbf16>, vector<96x128xbf16>, vector<256x128xf32> -> vector<256x128xf32>
    %56 = arith.addf %50, %55 : vector<256x128xf32>
    %c0_47 = arith.constant 0 : index
    %c0_48 = arith.constant 0 : index
    %57 = vector.load %arg3[%c0_47, %c0_48] : memref<1x128xf32, #tpu.memory_space<vmem>>, vector<1x128xf32>
    %58 = vector.broadcast %57 : vector<1x128xf32> to vector<256x128xf32>
    %59 = arith.addf %56, %58 : vector<256x128xf32>
    %cst_49 = arith.constant 0.000000e+00 : f32
    %60 = vector.broadcast %cst_49 : f32 to vector<256x128xf32>
    %61 = arith.maximumf %59, %60 : vector<256x128xf32>
    %62 = arith.truncf %61 : vector<256x128xf32> to vector<256x128xbf16>
    %63 = vector.shape_cast %62 : vector<256x128xbf16> to vector<4x64x128xbf16>
    %cst_50 = arith.constant 0.000000e+00 : bf16
    %64 = vector.broadcast %cst_50 : bf16 to vector<1x64x128xbf16>
    %65 = tpu.concatenate %64, %63, %64 in 0 : vector<1x64x128xbf16>, vector<4x64x128xbf16>, vector<1x64x128xbf16> -> vector<6x64x128xbf16>
    %cst_51 = arith.constant 0.000000e+00 : f32
    %66 = vector.broadcast %cst_51 : f32 to vector<256x128xf32>
    %67 = vector.extract_strided_slice %65 {offsets = [0, 0, 0], sizes = [4, 64, 128], strides = [1, 1, 1]} : vector<6x64x128xbf16> to vector<4x64x128xbf16>
    %68 = vector.shape_cast %67 : vector<4x64x128xbf16> to vector<256x128xbf16>
    %c0_52 = arith.constant 0 : index
    %c0_53 = arith.constant 0 : index
    %c0_54 = arith.constant 0 : index
    %69 = vector.load %arg4[%c0_52, %c0_53, %c0_54] : memref<3x128x128xbf16, #tpu.memory_space<vmem>>, vector<1x128x128xbf16>
    %70 = vector.shape_cast %69 : vector<1x128x128xbf16> to vector<128x128xbf16>
    %cst_55 = arith.constant dense<0.000000e+00> : vector<256x128xf32>
    %71 = tpu.matmul %68, %70, %cst_55 {dimension_numbers = #tpu.dot_dimension_numbers<[1], [0], [0], [1], [0, 0, 1, 1], [], []>} : vector<256x128xbf16>, vector<128x128xbf16>, vector<256x128xf32> -> vector<256x128xf32>
    %72 = arith.addf %66, %71 : vector<256x128xf32>
    %73 = vector.extract_strided_slice %65 {offsets = [1, 0, 0], sizes = [4, 64, 128], strides = [1, 1, 1]} : vector<6x64x128xbf16> to vector<4x64x128xbf16>
    %74 = vector.shape_cast %73 : vector<4x64x128xbf16> to vector<256x128xbf16>
    %c1_56 = arith.constant 1 : index
    %c0_57 = arith.constant 0 : index
    %c0_58 = arith.constant 0 : index
    %75 = vector.load %arg4[%c1_56, %c0_57, %c0_58] : memref<3x128x128xbf16, #tpu.memory_space<vmem>>, vector<1x128x128xbf16>
    %76 = vector.shape_cast %75 : vector<1x128x128xbf16> to vector<128x128xbf16>
    %cst_59 = arith.constant dense<0.000000e+00> : vector<256x128xf32>
    %77 = tpu.matmul %74, %76, %cst_59 {dimension_numbers = #tpu.dot_dimension_numbers<[1], [0], [0], [1], [0, 0, 1, 1], [], []>} : vector<256x128xbf16>, vector<128x128xbf16>, vector<256x128xf32> -> vector<256x128xf32>
    %78 = arith.addf %72, %77 : vector<256x128xf32>
    %79 = vector.extract_strided_slice %65 {offsets = [2, 0, 0], sizes = [4, 64, 128], strides = [1, 1, 1]} : vector<6x64x128xbf16> to vector<4x64x128xbf16>
    %80 = vector.shape_cast %79 : vector<4x64x128xbf16> to vector<256x128xbf16>
    %c2_60 = arith.constant 2 : index
    %c0_61 = arith.constant 0 : index
    %c0_62 = arith.constant 0 : index
    %81 = vector.load %arg4[%c2_60, %c0_61, %c0_62] : memref<3x128x128xbf16, #tpu.memory_space<vmem>>, vector<1x128x128xbf16>
    %82 = vector.shape_cast %81 : vector<1x128x128xbf16> to vector<128x128xbf16>
    %cst_63 = arith.constant dense<0.000000e+00> : vector<256x128xf32>
    %83 = tpu.matmul %80, %82, %cst_63 {dimension_numbers = #tpu.dot_dimension_numbers<[1], [0], [0], [1], [0, 0, 1, 1], [], []>} : vector<256x128xbf16>, vector<128x128xbf16>, vector<256x128xf32> -> vector<256x128xf32>
    %84 = arith.addf %78, %83 : vector<256x128xf32>
    %c0_64 = arith.constant 0 : index
    %c0_65 = arith.constant 0 : index
    %85 = vector.load %arg5[%c0_64, %c0_65] : memref<1x128xf32, #tpu.memory_space<vmem>>, vector<1x128xf32>
    %86 = vector.broadcast %85 : vector<1x128xf32> to vector<256x128xf32>
    %87 = arith.addf %84, %86 : vector<256x128xf32>
    %cst_66 = arith.constant 0.000000e+00 : f32
    %88 = vector.broadcast %cst_66 : f32 to vector<256x128xf32>
    %89 = arith.maximumf %87, %88 : vector<256x128xf32>
    %90 = vector.shape_cast %89 : vector<256x128xf32> to vector<1x4x8x8x128xf32>
    %c0_67 = arith.constant 0 : index
    %c0_68 = arith.constant 0 : index
    %c0_69 = arith.constant 0 : index
    %c0_70 = arith.constant 0 : index
    %c0_71 = arith.constant 0 : index
    %91 = vector.load %arg6[%c0_67, %c0_68, %c0_69, %c0_70, %c0_71] : memref<1x4x8x8x128xf32, #tpu.memory_space<vmem>>, vector<1x4x8x8x128xf32>
    tpu.vector_store %arg6[%c0_67, %c0_68, %c0_69, %c0_70, %c0_71], %90 {strides = array<i32>} : memref<1x4x8x8x128xf32, #tpu.memory_space<vmem>>, vector<1x4x8x8x128xf32>,
    return
  }
  func.func @transform_0(%arg0: i32) -> (i32, i32, i32, i32, i32) {
    %c0_i32 = arith.constant 0 : i32
    %c0_i32_0 = arith.constant 0 : i32
    %c0_i32_1 = arith.constant 0 : i32
    %c0_i32_2 = arith.constant 0 : i32
    %c0_i32_3 = arith.constant 0 : i32
    return %arg0, %c0_i32, %c0_i32_0, %c0_i32_1, %c0_i32_2 : i32, i32, i32, i32, i32
  }
  func.func @transform_1(%arg0: i32) -> (i32, i32, i32, i32) {
    %c0_i32 = arith.constant 0 : i32
    %c0_i32_0 = arith.constant 0 : i32
    %c0_i32_1 = arith.constant 0 : i32
    %c0_i32_2 = arith.constant 0 : i32
    %c0_i32_3 = arith.constant 0 : i32
    return %c0_i32, %c0_i32_0, %c0_i32_1, %c0_i32_2 : i32, i32, i32, i32
  }
  func.func @transform_2(%arg0: i32) -> (i32, i32) {
    %c0_i32 = arith.constant 0 : i32
    %c0_i32_0 = arith.constant 0 : i32
    %c0_i32_1 = arith.constant 0 : i32
    return %c0_i32, %c0_i32_0 : i32, i32
  }
  func.func @transform_3(%arg0: i32) -> (i32, i32, i32) {
    %c0_i32 = arith.constant 0 : i32
    %c0_i32_0 = arith.constant 0 : i32
    %c0_i32_1 = arith.constant 0 : i32
    %c0_i32_2 = arith.constant 0 : i32
    return %c0_i32, %c0_i32_0, %c0_i32_1 : i32, i32, i32
  }
  func.func @transform_4(%arg0: i32) -> (i32, i32) {
    %c0_i32 = arith.constant 0 : i32
    %c0_i32_0 = arith.constant 0 : i32
    %c0_i32_1 = arith.constant 0 : i32
    return %c0_i32, %c0_i32_0 : i32, i32
  }
  func.func @transform_5(%arg0: i32) -> (i32, i32, i32, i32, i32) {
    %c0_i32 = arith.constant 0 : i32
    %c0_i32_0 = arith.constant 0 : i32
    %c0_i32_1 = arith.constant 0 : i32
    %c0_i32_2 = arith.constant 0 : i32
    %c0_i32_3 = arith.constant 0 : i32
    return %arg0, %c0_i32, %c0_i32_0, %c0_i32_1, %c0_i32_2 : i32, i32, i32, i32, i32
  }
}

</mosaic_0001>

<llo_original>
// kernel: mixed_3b_forward.4
$region0: #{mixed_3b_forward.4}
  #allocation0 [shape = 'u32[]', space=smem, size = 0x4, offset = 0x4, fixed_abs, tag = 'smem constant byte address 0x4 - core index']
  #allocation1 [shape = 'u32[144,128]{1,0:T(1,128)}', space=vmem, size = 0x12000, scoped, tag = 'internal scratch']
  %s0 = inlined_call_operand.vmem [shape: bf16[512,192], index: 0, kind: input, shape index: {}]
  %s1 = inlined_call_operand.vmem [shape: bf16[192,176], index: 1, kind: input, shape index: {}]
  %s2 = inlined_call_operand.vmem [shape: f32[1,176], index: 2, kind: input, shape index: {}]
  %s3 = inlined_call_operand.vmem [shape: bf16[512,176], index: 3, kind: output, shape index: {}]
  %s4 = sld [smem:[#allocation0]]
  $region45: #{mixed_3b_forward.4} parent=0
    _
  %s6 = ssub.s32 1, %s4
  %s7 = scalar_select 0, %s6, %s4
  loop: start=0, step=1, limit=4
  $region2: #{mixed_3b_forward.4} parent=0 // loop_pre_header
    _
  $region3: #{mixed_3b_forward.4} parent=0 // loop_header
    %s9 = sphi 0, %s13
    %p10 = scmp.ge.s32.totalorder %s9, 4
    %s19 = sphi 0, %s21
    %s22 = sphi 0, %s19
    %s23 = sphi 0, %s22
    %s39 = sphi 0, %s23
    %s43 = sphi 0, %s43
    %s45 = sphi 0, %s43
    %s46 = sphi 0, %s45
    %s60 = sphi 0, %s46
    %s64 = sphi 0, %s64
    %s66 = sphi 0, %s64
    %s67 = sphi 0, %s66
    %s81 = sphi 0, %s67
    %s87 = sphi 0, %s89
    %s90 = sphi 0, %s87
    %s91 = sphi 0, %s90
    %s107 = sphi 0, %s91
  $region4: #{mixed_3b_forward.4} parent=0 // loop_header_branch
    %12 = sbr.rel (%p10) target = $region8
  $region5: #{mixed_3b_forward.4} parent=0 // loop_body
    %s14 = ssub.s32 %s9, 1
    %s15 = ssub.s32 %s9, 2
    %s16 = sadd.s32 %s9, 1
    %s17 = ssub.s32 %s9, %s16
    %p18 = scmp.eq.s32.totalorder %s17, 0
    %s20 = sadd.s32 %s19, 1
    %s21 = scalar_select %p18, %s19, %s20
    %p24 = pneg %p18
    %p25 = scmp.eq.s32.totalorder %s9, 1
    %p26 = por %p24, %p25
    %p27 = scmp.ne.s32.totalorder %s19, %s22
    %p28 = scmp.eq.s32.totalorder %s9, 0
    %p29 = por %p27, %p28
    %p30 = scmp.ne.s32.totalorder %s19, %s22
    %p31 = scmp.eq.s32.totalorder %s14, 1
    %p32 = por %p30, %p31
    %p33 = scmp.ne.s32.totalorder %s22, %s23
    %p34 = scmp.eq.s32.totalorder %s14, 0
    %p35 = por %p33, %p34
    %p36 = scmp.ne.s32.totalorder %s22, %s23
    %p37 = scmp.eq.s32.totalorder %s15, 1
    %p38 = por %p36, %p37
    %p40 = scmp.ne.s32.totalorder %s23, %s39
    %p41 = scmp.eq.s32.totalorder %s15, 0
    %p42 = por %p40, %p41
    %s44 = sadd.s32 %s43, 1
    %p47 = scmp.eq.s32.totalorder %s9, 1
    %p48 = scmp.ne.s32.totalorder %s43, %s45
    %p49 = scmp.eq.s32.totalorder %s9, 0
    %p50 = por %p48, %p49
    %p51 = scmp.ne.s32.totalorder %s43, %s45
    %p52 = scmp.eq.s32.totalorder %s14, 1
    %p53 = por %p51, %p52
    %p54 = scmp.ne.s32.totalorder %s45, %s46
    %p55 = scmp.eq.s32.totalorder %s14, 0
    %p56 = por %p54, %p55
    %p57 = scmp.ne.s32.totalorder %s45, %s46
    %p58 = scmp.eq.s32.totalorder %s15, 1
    %p59 = por %p57, %p58
    %p61 = scmp.ne.s32.totalorder %s46, %s60
    %p62 = scmp.eq.s32.totalorder %s15, 0
    %p63 = por %p61, %p62
    %s65 = sadd.s32 %s64, 1
    %p68 = scmp.eq.s32.totalorder %s9, 1
    %p69 = scmp.ne.s32.totalorder %s64, %s66
    %p70 = scmp.eq.s32.totalorder %s9, 0
    %p71 = por %p69, %p70
    %p72 = scmp.ne.s32.totalorder %s64, %s66
    %p73 = scmp.eq.s32.totalorder %s14, 1
    %p74 = por %p72, %p73
    %p75 = scmp.ne.s32.totalorder %s66, %s67
    %p76 = scmp.eq.s32.totalorder %s14, 0
    %p77 = por %p75, %p76
    %p78 = scmp.ne.s32.totalorder %s66, %s67
    %p79 = scmp.eq.s32.totalorder %s15, 1
    %p80 = por %p78, %p79
    %p82 = scmp.ne.s32.totalorder %s67, %s81
    %p83 = scmp.eq.s32.totalorder %s15, 0
    %p84 = por %p82, %p83
    %s85 = ssub.s32 %s9, %s16
    %p86 = scmp.eq.s32.totalorder %s85, 0
    %s88 = sadd.s32 %s87, 1
    %s89 = scalar_select %p86, %s87, %s88
    %p92 = pneg %p86
    %p93 = scmp.eq.s32.totalorder %s9, 1
    %p94 = por %p92, %p93
    %p95 = scmp.ne.s32.totalorder %s87, %s90
    %p96 = scmp.eq.s32.totalorder %s9, 0
    %p97 = por %p95, %p96
    %p98 = scmp.ne.s32.totalorder %s87, %s90
    %p99 = scmp.eq.s32.totalorder %s14, 1
    %p100 = por %p98, %p99
    %p101 = scmp.ne.s32.totalorder %s90, %s91
    %p102 = scmp.eq.s32.totalorder %s14, 0
    %p103 = por %p101, %p102
    %p104 = scmp.ne.s32.totalorder %s90, %s91
    %p105 = scmp.eq.s32.totalorder %s15, 1
    %p106 = por %p104, %p105
    %p108 = scmp.ne.s32.totalorder %s91, %s107
    %p109 = scmp.eq.s32.totalorder %s15, 0
    %p110 = por %p108, %p109
    %p111 = scmp.le.s32.totalorder 1, %s9
    %p112 = scmp.lt.s32.totalorder %s9, 3
    %p113 = pnand %p111, %p112
    %p114 = pneg %p113
    // Predicated region
    $region9: #{mixed_3b_forward.4} parent=5 // pred_check
      _
    $region10: #{mixed_3b_forward.4} parent=5 // pred_check_branch
      %116 = sbr.rel (%p113) target = $region12
    $region11: #{mixed_3b_forward.4} parent=5 // pred_region
      %s117 = ssub.s32 %s9, 1
      // Predicated region
      $region13: #{mixed_3b_forward.4} parent=11 // pred_check
        %p118 = pneg %p56
      $region14: #{mixed_3b_forward.4} parent=11 // pred_check_branch
        %120 = sbr.rel (%p118) target = $region16
      $region15: #{mixed_3b_forward.4} parent=11 // pred_region
        _
      $region16: #{mixed_3b_forward.4} parent=11 // pred_fallthru
        _
      // Predicated region
      $region17: #{mixed_3b_forward.4} parent=11 // pred_check
        %p121 = pneg %p77
      $region18: #{mixed_3b_forward.4} parent=11 // pred_check_branch
        %123 = sbr.rel (%p121) target = $region20
      $region19: #{mixed_3b_forward.4} parent=11 // pred_region
        _
      $region20: #{mixed_3b_forward.4} parent=11 // pred_fallthru
        _
    $region12: #{mixed_3b_forward.4} parent=5 // pred_fallthru
      _
    %p124 = scmp.lt.s32.totalorder %s9, 2
    // Predicated region
    $region21: #{mixed_3b_forward.4} parent=5 // pred_check
      %p125 = pneg %p124
    $region22: #{mixed_3b_forward.4} parent=5 // pred_check_branch
      %127 = sbr.rel (%p125) target = $region24
    $region23: #{mixed_3b_forward.4} parent=5 // pred_region
      // Predicated region
      $region25: #{mixed_3b_forward.4} parent=23 // pred_check
        %p128 = pneg %p29
      $region26: #{mixed_3b_forward.4} parent=23 // pred_check_branch
        %130 = sbr.rel (%p128) target = $region28
      $region27: #{mixed_3b_forward.4} parent=23 // pred_region
        %s131 = smul.u32 32, %s9
        %p132 = scmp.lt.s32.totalorder %s131, 63
        %s133 = scalar_select %p132, %s131, 63
        %s134 = smul.addr %s133, 2
        %s135 = smul.addr %s134, 4
        %s136 = scalar_lea.vmem %s0, %s135
        %s137 = smul.u32 32, %s9
      $region28: #{mixed_3b_forward.4} parent=23 // pred_fallthru
        _
    $region24: #{mixed_3b_forward.4} parent=5 // pred_fallthru
      _
    %p138 = scmp.le.s32.totalorder 1, %s9
    %p139 = scmp.lt.s32.totalorder %s9, 3
    %p140 = pnand %p138, %p139
    %p141 = pneg %p140
    // Predicated region
    $region29: #{mixed_3b_forward.4} parent=5 // pred_check
      _
    $region30: #{mixed_3b_forward.4} parent=5 // pred_check_branch
      %143 = sbr.rel (%p140) target = $region32
    $region31: #{mixed_3b_forward.4} parent=5 // pred_region
      %s144 = ssub.s32 %s9, 1
      %s145 = smul.u32 32, %s14
      %p146 = scmp.lt.s32.totalorder %s145, 63
      %s147 = scalar_select %p146, %s145, 63
      %s148 = smul.addr %s147, 2
      %s149 = smul.addr %s148, 4
      %s150 = scalar_lea.vmem %s0, %s149
      %p151 = pneg %p35
      %p152 = pneg %p32
      %p153 = pneg %p56
      %p154 = pneg %p53
      %p155 = pneg %p77
      %p156 = pneg %p74
      %p157 = pneg %p103
      %p158 = pneg %p100
      %s159 = smul.u32 32, %s14
      %p160 = scmp.lt.s32.totalorder %s159, 63
      %s161 = scalar_select %p160, %s159, 63
      %s162 = smul.addr %s161, 2
      %s163 = smul.addr %s162, 4
      %s164 = scalar_lea.vmem %s3, %s163
      %s165 = smul.u32 32, %s14
      %p166 = scmp.lt.s32.totalorder %s165, 63
      %s167 = scalar_select %p166, %s165, 63
      %s168 = smul.addr %s167, 2
      %s169 = smul.addr %s168, 4
      %s170 = scalar_lea.vmem %s0, %s169
      %s171 = smul.u32 32, %s14
      %s172 = smul.u32 32, %s14
      %p173 = scmp.lt.s32.totalorder %s172, 63
      %s174 = scalar_select %p173, %s172, 63
      %s175 = smul.addr %s174, 2
      %s176 = smul.addr %s175, 4
      %s177 = scalar_lea.vmem %s3, %s176
      %s178 = smul.u32 32, %s14
      %v180 = vld [vmem:[%s170] sm:$0xff]
      %v181 = vld [vmem:[%s170 + $0x8] sm:$0xff]
      %v182 = vld [vmem:[%s170 + $0x10] sm:$0xff]
      %v183 = vld [vmem:[%s170 + $0x18] sm:$0xff]
      %v184 = vld [vmem:[%s170 + $0x20] sm:$0xff]
      %v185 = vld [vmem:[%s170 + $0x28] sm:$0xff]
      %v186 = vld [vmem:[%s170 + $0x30] sm:$0xff]
      %v187 = vld [vmem:[%s170 + $0x38] sm:$0xff]
      %v188 = vld [vmem:[%s170 + $0x40] sm:$0xff]
      %v189 = vld [vmem:[%s170 + $0x48] sm:$0xff]
      %v190 = vld [vmem:[%s170 + $0x50] sm:$0xff]
      %v191 = vld [vmem:[%s170 + $0x58] sm:$0xff]
      %v192 = vld [vmem:[%s170 + $0x60] sm:$0xff]
      %v193 = vld [vmem:[%s170 + $0x68] sm:$0xff]
      %v194 = vld [vmem:[%s170 + $0x70] sm:$0xff]
      %v195 = vld [vmem:[%s170 + $0x78] sm:$0xff]
      %v196 = vld [vmem:[%s170 + $0x80] sm:$0xff]
      %v197 = vld [vmem:[%s170 + $0x88] sm:$0xff]
      %v198 = vld [vmem:[%s170 + $0x90] sm:$0xff]
      %v199 = vld [vmem:[%s170 + $0x98] sm:$0xff]
      %v200 = vld [vmem:[%s170 + $0xa0] sm:$0xff]
      %v201 = vld [vmem:[%s170 + $0xa8] sm:$0xff]
      %v202 = vld [vmem:[%s170 + $0xb0] sm:$0xff]
      %v203 = vld [vmem:[%s170 + $0xb8] sm:$0xff]
      %v204 = vld [vmem:[%s170 + $0xc0] sm:$0xff]
      %v205 = vld [vmem:[%s170 + $0xc8] sm:$0xff]
      %v206 = vld [vmem:[%s170 + $0xd0] sm:$0xff]
      %v207 = vld [vmem:[%s170 + $0xd8] sm:$0xff]
      %v208 = vld [vmem:[%s170 + $0xe0] sm:$0xff]
      %v209 = vld [vmem:[%s170 + $0xe8] sm:$0xff]
      %v210 = vld [vmem:[%s170 + $0xf0] sm:$0xff]
      %v211 = vld [vmem:[%s170 + $0xf8] sm:$0xff]
      %v212 = vld [vmem:[%s1] sm:$0xff]
      %v213 = vld [vmem:[%s1 + $0x8] sm:$0xff]
      %v214 = vld [vmem:[%s1 + $0x10] sm:$0xff]
      %v215 = vld [vmem:[%s1 + $0x18] sm:$0xff]
      %v216 = vld [vmem:[%s1 + $0x20] sm:$0xff]
      %v217 = vld [vmem:[%s1 + $0x28] sm:$0xff]
      %v218 = vld [vmem:[%s1 + $0x30] sm:$0xff]
      %v219 = vld [vmem:[%s1 + $0x38] sm:$0xff]
      %v220 = vld [vmem:[%s1 + $0x40] sm:$0xff]
      %v221 = vld [vmem:[%s1 + $0x48] sm:$0xff]
      %v222 = vld [vmem:[%s1 + $0x50] sm:$0xff]
      %v223 = vld [vmem:[%s1 + $0x58] sm:$0xff]
      %v224 = vld [vmem:[%s1 + $0x60] sm:$0xff]
      %v225 = vld [vmem:[%s1 + $0x68] sm:$0xff]
      %v226 = vld [vmem:[%s1 + $0x70] sm:$0xff]
      %v227 = vld [vmem:[%s1 + $0x78] sm:$0xff]
      %v228 = vld [vmem:[%s1 + $0x80] sm:$0xff]
      %v229 = vld [vmem:[%s1 + $0x88] sm:$0xff]
      %v230 = vld [vmem:[%s1 + $0x90] sm:$0xff]
      %v231 = vld [vmem:[%s1 + $0x98] sm:$0xff]
      %v232 = vld [vmem:[%s1 + $0xa0] sm:$0xff]
      %v233 = vld [vmem:[%s1 + $0xa8] sm:$0xff]
      %v234 = vld [vmem:[%s1 + $0xb0] sm:$0xff]
      %v235 = vld [vmem:[%s1 + $0xb8] sm:$0xff]
      %v236 = vld [vmem:[%s2] sm:$0x3]
      %v238 = vlaneseq
      %v239 = vshrl.u32 %v238, 7
      %v240 = vsub.s32 0, %v239
      %v241 = vrot.slane %v236, %v240
      %v242 = vlaneseq
      %v243 = vshrl.u32 %v242, 7
      %v244 = vsub.s32 1, %v243
      %v245 = vrot.slane %v236, %v244
      %v280 = vunpack.c.l.b16 %v180
      %v281 = vunpack.c.h.b16 %v180
      %v282 = vunpack.c.l.b16 %v181
      %v283 = vunpack.c.h.b16 %v181
      %v284 = vunpack.c.l.b16 %v182
      %v285 = vunpack.c.h.b16 %v182
      %v286 = vunpack.c.l.b16 %v183
      %v287 = vunpack.c.h.b16 %v183
      %v288 = vunpack.c.l.b16 %v184
      %v289 = vunpack.c.h.b16 %v184
      %v290 = vunpack.c.l.b16 %v185
      %v291 = vunpack.c.h.b16 %v185
      %v292 = vunpack.c.l.b16 %v186
      %v293 = vunpack.c.h.b16 %v186
      %v294 = vunpack.c.l.b16 %v187
      %v295 = vunpack.c.h.b16 %v187
      %v296 = vunpack.c.l.b16 %v188
      %v297 = vunpack.c.h.b16 %v188
      %v298 = vunpack.c.l.b16 %v189
      %v299 = vunpack.c.h.b16 %v189
      %v300 = vunpack.c.l.b16 %v190
      %v301 = vunpack.c.h.b16 %v190
      %v302 = vunpack.c.l.b16 %v191
      %v303 = vunpack.c.h.b16 %v191
      %v304 = vunpack.c.l.b16 %v192
      %v305 = vunpack.c.h.b16 %v192
      %v306 = vunpack.c.l.b16 %v193
      %v307 = vunpack.c.h.b16 %v193
      %v308 = vunpack.c.l.b16 %v194
      %v309 = vunpack.c.h.b16 %v194
      %v310 = vunpack.c.l.b16 %v195
      %v311 = vunpack.c.h.b16 %v195
      %v312 = vunpack.c.l.b16 %v196
      %v313 = vunpack.c.h.b16 %v196
      %v314 = vunpack.c.l.b16 %v197
      %v315 = vunpack.c.h.b16 %v197
      %v316 = vunpack.c.l.b16 %v198
      %v317 = vunpack.c.h.b16 %v198
      %v318 = vunpack.c.l.b16 %v199
      %v319 = vunpack.c.h.b16 %v199
      %v320 = vunpack.c.l.b16 %v200
      %v321 = vunpack.c.h.b16 %v200
      %v322 = vunpack.c.l.b16 %v201
      %v323 = vunpack.c.h.b16 %v201
      %v324 = vunpack.c.l.b16 %v202
      %v325 = vunpack.c.h.b16 %v202
      %v326 = vunpack.c.l.b16 %v203
      %v327 = vunpack.c.h.b16 %v203
      %v328 = vunpack.c.l.b16 %v204
      %v329 = vunpack.c.h.b16 %v204
      %v330 = vunpack.c.l.b16 %v205
      %v331 = vunpack.c.h.b16 %v205
      %v332 = vunpack.c.l.b16 %v206
      %v333 = vunpack.c.h.b16 %v206
      %v334 = vunpack.c.l.b16 %v207
      %v335 = vunpack.c.h.b16 %v207
      %v336 = vunpack.c.l.b16 %v208
      %v337 = vunpack.c.h.b16 %v208
      %v338 = vunpack.c.l.b16 %v209
      %v339 = vunpack.c.h.b16 %v209
      %v340 = vunpack.c.l.b16 %v210
      %v341 = vunpack.c.h.b16 %v210
      %v342 = vunpack.c.l.b16 %v211
      %v343 = vunpack.c.h.b16 %v211
      %v344 = vpack.c.b16 %v282, %v280
      %v345 = vpack.c.b16 %v283, %v281
      %v346 = vpack.c.b16 %v286, %v284
      %v347 = vpack.c.b16 %v287, %v285
      %v348 = vpack.c.b16 %v290, %v288
      %v349 = vpack.c.b16 %v291, %v289
      %v350 = vpack.c.b16 %v294, %v292
      %v351 = vpack.c.b16 %v295, %v293
      %v352 = vpack.c.b16 %v298, %v296
      %v353 = vpack.c.b16 %v299, %v297
      %v354 = vpack.c.b16 %v302, %v300
      %v355 = vpack.c.b16 %v303, %v301
      %v356 = vpack.c.b16 %v306, %v304
      %v357 = vpack.c.b16 %v307, %v305
      %v358 = vpack.c.b16 %v310, %v308
      %v359 = vpack.c.b16 %v311, %v309
      %v360 = vpack.c.b16 %v314, %v312
      %v361 = vpack.c.b16 %v315, %v313
      %v362 = vpack.c.b16 %v318, %v316
      %v363 = vpack.c.b16 %v319, %v317
      %v364 = vpack.c.b16 %v322, %v320
      %v365 = vpack.c.b16 %v323, %v321
      %v366 = vpack.c.b16 %v326, %v324
      %v367 = vpack.c.b16 %v327, %v325
      %v368 = vpack.c.b16 %v330, %v328
      %v369 = vpack.c.b16 %v331, %v329
      %v370 = vpack.c.b16 %v334, %v332
      %v371 = vpack.c.b16 %v335, %v333
      %v372 = vpack.c.b16 %v338, %v336
      %v373 = vpack.c.b16 %v339, %v337
      %v374 = vpack.c.b16 %v342, %v340
      %v375 = vpack.c.b16 %v343, %v341
      %v416 = vunpack.c.l.b16 %v212
      %v417 = vunpack.c.h.b16 %v212
      %v418 = vunpack.c.l.b16 %v213
      %v419 = vunpack.c.h.b16 %v213
      %v420 = vunpack.c.l.b16 %v214
      %v421 = vunpack.c.h.b16 %v214
      %v422 = vunpack.c.l.b16 %v215
      %v423 = vunpack.c.h.b16 %v215
      %v424 = vunpack.c.l.b16 %v216
      %v425 = vunpack.c.h.b16 %v216
      %v426 = vunpack.c.l.b16 %v217
      %v427 = vunpack.c.h.b16 %v217
      %v428 = vunpack.c.l.b16 %v218
      %v429 = vunpack.c.h.b16 %v218
      %v430 = vunpack.c.l.b16 %v219
      %v431 = vunpack.c.h.b16 %v219
      %v432 = vunpack.c.l.b16 %v220
      %v433 = vunpack.c.h.b16 %v220
      %v434 = vunpack.c.l.b16 %v221
      %v435 = vunpack.c.h.b16 %v221
      %v436 = vunpack.c.l.b16 %v222
      %v437 = vunpack.c.h.b16 %v222
      %v438 = vunpack.c.l.b16 %v223
      %v439 = vunpack.c.h.b16 %v223
      %v440 = vunpack.c.l.b16 %v224
      %v441 = vunpack.c.h.b16 %v224
      %v442 = vunpack.c.l.b16 %v225
      %v443 = vunpack.c.h.b16 %v225
      %v444 = vunpack.c.l.b16 %v226
      %v445 = vunpack.c.h.b16 %v226
      %v446 = vunpack.c.l.b16 %v227
      %v447 = vunpack.c.h.b16 %v227
      %v448 = vunpack.c.l.b16 %v228
      %v449 = vunpack.c.h.b16 %v228
      %v450 = vunpack.c.l.b16 %v229
      %v451 = vunpack.c.h.b16 %v229
      %v452 = vunpack.c.l.b16 %v230
      %v453 = vunpack.c.h.b16 %v230
      %v454 = vunpack.c.l.b16 %v231
      %v455 = vunpack.c.h.b16 %v231
      %v456 = vunpack.c.l.b16 %v232
      %v457 = vunpack.c.h.b16 %v232
      %v458 = vunpack.c.l.b16 %v233
      %v459 = vunpack.c.h.b16 %v233
      %v460 = vunpack.c.l.b16 %v234
      %v461 = vunpack.c.h.b16 %v234
      %v462 = vunpack.c.l.b16 %v235
      %v463 = vunpack.c.h.b16 %v235
      %v464 = vpack.c.b16 %v418, %v416
      %v465 = vpack.c.b16 %v419, %v417
      %v466 = vpack.c.b16 %v422, %v420
      %v467 = vpack.c.b16 %v423, %v421
      %v468 = vpack.c.b16 %v426, %v424
      %v469 = vpack.c.b16 %v427, %v425
      %v470 = vpack.c.b16 %v430, %v428
      %v471 = vpack.c.b16 %v431, %v429
      %v472 = vpack.c.b16 %v434, %v432
      %v473 = vpack.c.b16 %v435, %v433
      %v474 = vpack.c.b16 %v438, %v436
      %v475 = vpack.c.b16 %v439, %v437
      %v476 = vpack.c.b16 %v442, %v440
      %v477 = vpack.c.b16 %v443, %v441
      %v478 = vpack.c.b16 %v446, %v444
      %v479 = vpack.c.b16 %v447, %v445
      %v480 = vpack.c.b16 %v450, %v448
      %v481 = vpack.c.b16 %v451, %v449
      %v482 = vpack.c.b16 %v454, %v452
      %v483 = vpack.c.b16 %v455, %v453
      %v484 = vpack.c.b16 %v458, %v456
      %v485 = vpack.c.b16 %v459, %v457
      %v486 = vpack.c.b16 %v462, %v460
      %v487 = vpack.c.b16 %v463, %v461
      %vm512 = vcmask 523264
      %v514 = vsel %vm512, %v345, 0
      %v517 = vsel %vm512, %v347, 0
      %v520 = vsel %vm512, %v349, 0
      %v523 = vsel %vm512, %v351, 0
      %v526 = vsel %vm512, %v353, 0
      %v529 = vsel %vm512, %v355, 0
      %v532 = vsel %vm512, %v357, 0
      %v535 = vsel %vm512, %v359, 0
      %v538 = vsel %vm512, %v361, 0
      %v541 = vsel %vm512, %v363, 0
      %v544 = vsel %vm512, %v365, 0
      %v547 = vsel %vm512, %v367, 0
      %v550 = vsel %vm512, %v369, 0
      %v553 = vsel %vm512, %v371, 0
      %v556 = vsel %vm512, %v373, 0
      %v559 = vsel %vm512, %v375, 0
      %561 = vmatprep.subr.bf16.mxu0 %v465
      %562 = vmatpush1.bf16.msra.mxu0 %v464
      %563 = vmatprep.subr.bf16.mxu0 %v467
      %564 = vmatpush1.bf16.msra.mxu0 %v466
      %565 = vmatprep.subr.bf16.mxu0 %v469
      %566 = vmatpush1.bf16.msra.mxu0 %v468
      %567 = vmatprep.subr.bf16.mxu0 %v471
      %568 = vmatpush1.bf16.msra.mxu0 %v470
      %569 = vmatprep.subr.bf16.mxu0 %v473
      %570 = vmatpush1.bf16.msra.mxu0 %v472
      %571 = vmatprep.subr.bf16.mxu0 %v475
      %572 = vmatpush1.bf16.msra.mxu0 %v474
      %573 = vmatprep.subr.bf16.mxu0 %v477
      %574 = vmatpush1.bf16.msra.mxu0 %v476
      %575 = vmatprep.subr.bf16.mxu0 %v479
      %576 = vmatpush1.bf16.msra.mxu0 %v478
      %577 = vmatprep.subr.bf16.mxu0 %v481
      %578 = vmatpush1.bf16.msra.mxu0 %v480
      %579 = vmatprep.subr.bf16.mxu0 %v483
      %580 = vmatpush1.bf16.msra.mxu0 %v482
      %581 = vmatprep.subr.bf16.mxu0 %v485
      %582 = vmatpush1.bf16.msra.mxu0 %v484
      %583 = vmatprep.subr.bf16.mxu0 %v487
      %584 = vmatpush1.bf16.msra.mxu0 %v486
      %585 = vmatprep.subr.bf16.mxu0 0
      %586 = vmatpush1.bf16.msra.mxu0 0
      %587 = vmatprep.subr.bf16.mxu0 0
      %588 = vmatpush1.bf16.msra.mxu0 0
      %589 = vmatprep.subr.bf16.mxu0 0
      %590 = vmatpush1.bf16.msra.mxu0 0
      %591 = vmatprep.subr.bf16.mxu0 0
      %592 = vmatpush1.bf16.msra.mxu0 0
      %593 = vmatprep.mubr.bf16.mxu0 %v514
      %594 = vmatmul.mubr.bf16.gmra.mrb[0].mxu0 %v344
      %v595 = vpop.f32.mrb[0].mxu0
      %v596 = vadd.f32 %v241, %v595
      %v597 = vpop.f32.mrb[0].mxu0
      %v598 = vadd.f32 %v245, %v597
      %v599 = vpop.f32.mrb[0].mxu0
      %v600 = vadd.f32 %v241, %v599
      %v601 = vpop.f32.mrb[0].mxu0
      %v602 = vadd.f32 %v245, %v601
      %603 = vmatprep.mubr.bf16.mxu0 %v517
      %604 = vmatmul.mubr.bf16.gmra.mrb[0].mxu0 %v346
      %v605 = vpop.f32.mrb[0].mxu0
      %v606 = vadd.f32 %v241, %v605
      %v607 = vpop.f32.mrb[0].mxu0
      %v608 = vadd.f32 %v245, %v607
      %v609 = vpop.f32.mrb[0].mxu0
      %v610 = vadd.f32 %v241, %v609
      %v611 = vpop.f32.mrb[0].mxu0
      %v612 = vadd.f32 %v245, %v611
      %613 = vmatprep.mubr.bf16.mxu0 %v520
      %614 = vmatmul.mubr.bf16.gmra.mrb[0].mxu0 %v348
      %v615 = vpop.f32.mrb[0].mxu0
      %v616 = vadd.f32 %v241, %v615
      %v617 = vpop.f32.mrb[0].mxu0
      %v618 = vadd.f32 %v245, %v617
      %v619 = vpop.f32.mrb[0].mxu0
      %v620 = vadd.f32 %v241, %v619
      %v621 = vpop.f32.mrb[0].mxu0
      %v622 = vadd.f32 %v245, %v621
      %623 = vmatprep.mubr.bf16.mxu0 %v523
      %624 = vmatmul.mubr.bf16.gmra.mrb[0].mxu0 %v350
      %v625 = vpop.f32.mrb[0].mxu0
      %v626 = vadd.f32 %v241, %v625
      %v627 = vpop.f32.mrb[0].mxu0
      %v628 = vadd.f32 %v245, %v627
      %v629 = vpop.f32.mrb[0].mxu0
      %v630 = vadd.f32 %v241, %v629
      %v631 = vpop.f32.mrb[0].mxu0
      %v632 = vadd.f32 %v245, %v631
      %633 = vmatprep.mubr.bf16.mxu0 %v526
      %634 = vmatmul.mubr.bf16.gmra.mrb[0].mxu0 %v352
      %v635 = vpop.f32.mrb[0].mxu0
      %v636 = vadd.f32 %v241, %v635
      %v637 = vpop.f32.mrb[0].mxu0
      %v638 = vadd.f32 %v245, %v637
      %v639 = vpop.f32.mrb[0].mxu0
      %v640 = vadd.f32 %v241, %v639
      %v641 = vpop.f32.mrb[0].mxu0
      %v642 = vadd.f32 %v245, %v641
      %643 = vmatprep.mubr.bf16.mxu0 %v529
      %644 = vmatmul.mubr.bf16.gmra.mrb[0].mxu0 %v354
      %v645 = vpop.f32.mrb[0].mxu0
      %v646 = vadd.f32 %v241, %v645
      %v647 = vpop.f32.mrb[0].mxu0
      %v648 = vadd.f32 %v245, %v647
      %v649 = vpop.f32.mrb[0].mxu0
      %v650 = vadd.f32 %v241, %v649
      %v651 = vpop.f32.mrb[0].mxu0
      %v652 = vadd.f32 %v245, %v651
      %653 = vmatprep.mubr.bf16.mxu0 %v532
      %654 = vmatmul.mubr.bf16.gmra.mrb[0].mxu0 %v356
      %v655 = vpop.f32.mrb[0].mxu0
      %v656 = vadd.f32 %v241, %v655
      %v657 = vpop.f32.mrb[0].mxu0
      %v658 = vadd.f32 %v245, %v657
      %v659 = vpop.f32.mrb[0].mxu0
      %v660 = vadd.f32 %v241, %v659
      %v661 = vpop.f32.mrb[0].mxu0
      %v662 = vadd.f32 %v245, %v661
      %663 = vmatprep.mubr.bf16.mxu0 %v535
      %664 = vmatmul.mubr.bf16.gmra.mrb[0].mxu0 %v358
      %v665 = vpop.f32.mrb[0].mxu0
      %v666 = vadd.f32 %v241, %v665
      %v667 = vpop.f32.mrb[0].mxu0
      %v668 = vadd.f32 %v245, %v667
      %v669 = vpop.f32.mrb[0].mxu0
      %v670 = vadd.f32 %v241, %v669
      %v671 = vpop.f32.mrb[0].mxu0
      %v672 = vadd.f32 %v245, %v671
      %673 = vmatprep.mubr.bf16.mxu0 %v538
      %674 = vmatmul.mubr.bf16.gmra.mrb[0].mxu0 %v360
      %v675 = vpop.f32.mrb[0].mxu0
      %v676 = vadd.f32 %v241, %v675
      %v677 = vpop.f32.mrb[0].mxu0
      %v678 = vadd.f32 %v245, %v677
      %v679 = vpop.f32.mrb[0].mxu0
      %v680 = vadd.f32 %v241, %v679
      %v681 = vpop.f32.mrb[0].mxu0
      %v682 = vadd.f32 %v245, %v681
      %683 = vmatprep.mubr.bf16.mxu0 %v541
      %684 = vmatmul.mubr.bf16.gmra.mrb[0].mxu0 %v362
      %v685 = vpop.f32.mrb[0].mxu0
      %v686 = vadd.f32 %v241, %v685
      %v687 = vpop.f32.mrb[0].mxu0
      %v688 = vadd.f32 %v245, %v687
      %v689 = vpop.f32.mrb[0].mxu0
      %v690 = vadd.f32 %v241, %v689
      %v691 = vpop.f32.mrb[0].mxu0
      %v692 = vadd.f32 %v245, %v691
      %693 = vmatprep.mubr.bf16.mxu0 %v544
      %694 = vmatmul.mubr.bf16.gmra.mrb[0].mxu0 %v364
      %v695 = vpop.f32.mrb[0].mxu0
      %v696 = vadd.f32 %v241, %v695
      %v697 = vpop.f32.mrb[0].mxu0
      %v698 = vadd.f32 %v245, %v697
      %v699 = vpop.f32.mrb[0].mxu0
      %v700 = vadd.f32 %v241, %v699
      %v701 = vpop.f32.mrb[0].mxu0
      %v702 = vadd.f32 %v245, %v701
      %703 = vmatprep.mubr.bf16.mxu0 %v547
      %704 = vmatmul.mubr.bf16.gmra.mrb[0].mxu0 %v366
      %v705 = vpop.f32.mrb[0].mxu0
      %v706 = vadd.f32 %v241, %v705
      %v707 = vpop.f32.mrb[0].mxu0
      %v708 = vadd.f32 %v245, %v707
      %v709 = vpop.f32.mrb[0].mxu0
      %v710 = vadd.f32 %v241, %v709
      %v711 = vpop.f32.mrb[0].mxu0
      %v712 = vadd.f32 %v245, %v711
      %713 = vmatprep.mubr.bf16.mxu0 %v550
      %714 = vmatmul.mubr.bf16.gmra.mrb[0].mxu0 %v368
      %v715 = vpop.f32.mrb[0].mxu0
      %v716 = vadd.f32 %v241, %v715
      %v717 = vpop.f32.mrb[0].mxu0
      %v718 = vadd.f32 %v245, %v717
      %v719 = vpop.f32.mrb[0].mxu0
      %v720 = vadd.f32 %v241, %v719
      %v721 = vpop.f32.mrb[0].mxu0
      %v722 = vadd.f32 %v245, %v721
      %723 = vmatprep.mubr.bf16.mxu0 %v553
      %724 = vmatmul.mubr.bf16.gmra.mrb[0].mxu0 %v370
      %v725 = vpop.f32.mrb[0].mxu0
      %v726 = vadd.f32 %v241, %v725
      %v727 = vpop.f32.mrb[0].mxu0
      %v728 = vadd.f32 %v245, %v727
      %v729 = vpop.f32.mrb[0].mxu0
      %v730 = vadd.f32 %v241, %v729
      %v731 = vpop.f32.mrb[0].mxu0
      %v732 = vadd.f32 %v245, %v731
      %733 = vmatprep.mubr.bf16.mxu0 %v556
      %734 = vmatmul.mubr.bf16.gmra.mrb[0].mxu0 %v372
      %v735 = vpop.f32.mrb[0].mxu0
      %v736 = vadd.f32 %v241, %v735
      %v737 = vpop.f32.mrb[0].mxu0
      %v738 = vadd.f32 %v245, %v737
      %v739 = vpop.f32.mrb[0].mxu0
      %v740 = vadd.f32 %v241, %v739
      %v741 = vpop.f32.mrb[0].mxu0
      %v742 = vadd.f32 %v245, %v741
      %743 = vmatprep.mubr.bf16.mxu0 %v559
      %744 = vmatmul.mubr.bf16.gmra.mrb[0].mxu0 %v374
      %v745 = vpop.f32.mrb[0].mxu0
      %v746 = vadd.f32 %v241, %v745
      %v747 = vpop.f32.mrb[0].mxu0
      %v748 = vadd.f32 %v245, %v747
      %v749 = vpop.f32.mrb[0].mxu0
      %v750 = vadd.f32 %v241, %v749
      %v751 = vpop.f32.mrb[0].mxu0
      %v752 = vadd.f32 %v245, %v751
      %753 = vdwg.mxu0
      %v754 = vmax.f32 %v596, 0.0
      %v755 = vmax.f32 %v598, 0.0
      %v756 = vmax.f32 %v600, 0.0
      %v757 = vmax.f32 %v602, 0.0
      %v758 = vmax.f32 %v606, 0.0
      %v759 = vmax.f32 %v608, 0.0
      %v760 = vmax.f32 %v610, 0.0
      %v761 = vmax.f32 %v612, 0.0
      %v762 = vmax.f32 %v616, 0.0
      %v763 = vmax.f32 %v618, 0.0
      %v764 = vmax.f32 %v620, 0.0
      %v765 = vmax.f32 %v622, 0.0
      %v766 = vmax.f32 %v626, 0.0
      %v767 = vmax.f32 %v628, 0.0
      %v768 = vmax.f32 %v630, 0.0
      %v769 = vmax.f32 %v632, 0.0
      %v770 = vmax.f32 %v636, 0.0
      %v771 = vmax.f32 %v638, 0.0
      %v772 = vmax.f32 %v640, 0.0
      %v773 = vmax.f32 %v642, 0.0
      %v774 = vmax.f32 %v646, 0.0
      %v775 = vmax.f32 %v648, 0.0
      %v776 = vmax.f32 %v650, 0.0
      %v777 = vmax.f32 %v652, 0.0
      %v778 = vmax.f32 %v656, 0.0
      %v779 = vmax.f32 %v658, 0.0
      %v780 = vmax.f32 %v660, 0.0
      %v781 = vmax.f32 %v662, 0.0
      %v782 = vmax.f32 %v666, 0.0
      %v783 = vmax.f32 %v668, 0.0
      %v784 = vmax.f32 %v670, 0.0
      %v785 = vmax.f32 %v672, 0.0
      %v786 = vmax.f32 %v676, 0.0
      %v787 = vmax.f32 %v678, 0.0
      %v788 = vmax.f32 %v680, 0.0
      %v789 = vmax.f32 %v682, 0.0
      %v790 = vmax.f32 %v686, 0.0
      %v791 = vmax.f32 %v688, 0.0
      %v792 = vmax.f32 %v690, 0.0
      %v793 = vmax.f32 %v692, 0.0
      %v794 = vmax.f32 %v696, 0.0
      %v795 = vmax.f32 %v698, 0.0
      %v796 = vmax.f32 %v700, 0.0
      %v797 = vmax.f32 %v702, 0.0
      %v798 = vmax.f32 %v706, 0.0
      %v799 = vmax.f32 %v708, 0.0
      %v800 = vmax.f32 %v710, 0.0
      %v801 = vmax.f32 %v712, 0.0
      %v802 = vmax.f32 %v716, 0.0
      %v803 = vmax.f32 %v718, 0.0
      %v804 = vmax.f32 %v720, 0.0
      %v805 = vmax.f32 %v722, 0.0
      %v806 = vmax.f32 %v726, 0.0
      %v807 = vmax.f32 %v728, 0.0
      %v808 = vmax.f32 %v730, 0.0
      %v809 = vmax.f32 %v732, 0.0
      %v810 = vmax.f32 %v736, 0.0
      %v811 = vmax.f32 %v738, 0.0
      %v812 = vmax.f32 %v740, 0.0
      %v813 = vmax.f32 %v742, 0.0
      %v814 = vmax.f32 %v746, 0.0
      %v815 = vmax.f32 %v748, 0.0
      %v816 = vmax.f32 %v750, 0.0
      %v817 = vmax.f32 %v752, 0.0
      %v818 = vpack.c.bf16 %v756, %v754
      %v819 = vpack.c.bf16 %v757, %v755
      %v820 = vpack.c.bf16 %v760, %v758
      %v821 = vpack.c.bf16 %v761, %v759
      %v822 = vpack.c.bf16 %v764, %v762
      %v823 = vpack.c.bf16 %v765, %v763
      %v824 = vpack.c.bf16 %v768, %v766
      %v825 = vpack.c.bf16 %v769, %v767
      %v826 = vpack.c.bf16 %v772, %v770
      %v827 = vpack.c.bf16 %v773, %v771
      %v828 = vpack.c.bf16 %v776, %v774
      %v829 = vpack.c.bf16 %v777, %v775
      %v830 = vpack.c.bf16 %v780, %v778
      %v831 = vpack.c.bf16 %v781, %v779
      %v832 = vpack.c.bf16 %v784, %v782
      %v833 = vpack.c.bf16 %v785, %v783
      %v834 = vpack.c.bf16 %v788, %v786
      %v835 = vpack.c.bf16 %v789, %v787
      %v836 = vpack.c.bf16 %v792, %v790
      %v837 = vpack.c.bf16 %v793, %v791
      %v838 = vpack.c.bf16 %v796, %v794
      %v839 = vpack.c.bf16 %v797, %v795
      %v840 = vpack.c.bf16 %v800, %v798
      %v841 = vpack.c.bf16 %v801, %v799
      %v842 = vpack.c.bf16 %v804, %v802
      %v843 = vpack.c.bf16 %v805, %v803
      %v844 = vpack.c.bf16 %v808, %v806
      %v845 = vpack.c.bf16 %v809, %v807
      %v846 = vpack.c.bf16 %v812, %v810
      %v847 = vpack.c.bf16 %v813, %v811
      %v848 = vpack.c.bf16 %v816, %v814
      %v849 = vpack.c.bf16 %v817, %v815
      %v882 = vunpack.c.l.b16 %v818
      %v883 = vunpack.c.l.b16 %v819
      %v884 = vunpack.c.h.b16 %v818
      %v885 = vunpack.c.h.b16 %v819
      %v886 = vunpack.c.l.b16 %v820
      %v887 = vunpack.c.l.b16 %v821
      %v888 = vunpack.c.h.b16 %v820
      %v889 = vunpack.c.h.b16 %v821
      %v890 = vunpack.c.l.b16 %v822
      %v891 = vunpack.c.l.b16 %v823
      %v892 = vunpack.c.h.b16 %v822
      %v893 = vunpack.c.h.b16 %v823
      %v894 = vunpack.c.l.b16 %v824
      %v895 = vunpack.c.l.b16 %v825
      %v896 = vunpack.c.h.b16 %v824
      %v897 = vunpack.c.h.b16 %v825
      %v898 = vunpack.c.l.b16 %v826
      %v899 = vunpack.c.l.b16 %v827
      %v900 = vunpack.c.h.b16 %v826
      %v901 = vunpack.c.h.b16 %v827
      %v902 = vunpack.c.l.b16 %v828
      %v903 = vunpack.c.l.b16 %v829
      %v904 = vunpack.c.h.b16 %v828
      %v905 = vunpack.c.h.b16 %v829
      %v906 = vunpack.c.l.b16 %v830
      %v907 = vunpack.c.l.b16 %v831
      %v908 = vunpack.c.h.b16 %v830
      %v909 = vunpack.c.h.b16 %v831
      %v910 = vunpack.c.l.b16 %v832
      %v911 = vunpack.c.l.b16 %v833
      %v912 = vunpack.c.h.b16 %v832
      %v913 = vunpack.c.h.b16 %v833
      %v914 = vunpack.c.l.b16 %v834
      %v915 = vunpack.c.l.b16 %v835
      %v916 = vunpack.c.h.b16 %v834
      %v917 = vunpack.c.h.b16 %v835
      %v918 = vunpack.c.l.b16 %v836
      %v919 = vunpack.c.l.b16 %v837
      %v920 = vunpack.c.h.b16 %v836
      %v921 = vunpack.c.h.b16 %v837
      %v922 = vunpack.c.l.b16 %v838
      %v923 = vunpack.c.l.b16 %v839
      %v924 = vunpack.c.h.b16 %v838
      %v925 = vunpack.c.h.b16 %v839
      %v926 = vunpack.c.l.b16 %v840
      %v927 = vunpack.c.l.b16 %v841
      %v928 = vunpack.c.h.b16 %v840
      %v929 = vunpack.c.h.b16 %v841
      %v930 = vunpack.c.l.b16 %v842
      %v931 = vunpack.c.l.b16 %v843
      %v932 = vunpack.c.h.b16 %v842
      %v933 = vunpack.c.h.b16 %v843
      %v934 = vunpack.c.l.b16 %v844
      %v935 = vunpack.c.l.b16 %v845
      %v936 = vunpack.c.h.b16 %v844
      %v937 = vunpack.c.h.b16 %v845
      %v938 = vunpack.c.l.b16 %v846
      %v939 = vunpack.c.l.b16 %v847
      %v940 = vunpack.c.h.b16 %v846
      %v941 = vunpack.c.h.b16 %v847
      %v942 = vunpack.c.l.b16 %v848
      %v943 = vunpack.c.l.b16 %v849
      %v944 = vunpack.c.h.b16 %v848
      %v945 = vunpack.c.h.b16 %v849
      %v946 = vpack.c.b16 %v883, %v882
      %v947 = vpack.c.b16 %v885, %v884
      %v948 = vpack.c.b16 %v887, %v886
      %v949 = vpack.c.b16 %v889, %v888
      %v950 = vpack.c.b16 %v891, %v890
      %v951 = vpack.c.b16 %v893, %v892
      %v952 = vpack.c.b16 %v895, %v894
      %v953 = vpack.c.b16 %v897, %v896
      %v954 = vpack.c.b16 %v899, %v898
      %v955 = vpack.c.b16 %v901, %v900
      %v956 = vpack.c.b16 %v903, %v902
      %v957 = vpack.c.b16 %v905, %v904
      %v958 = vpack.c.b16 %v907, %v906
      %v959 = vpack.c.b16 %v909, %v908
      %v960 = vpack.c.b16 %v911, %v910
      %v961 = vpack.c.b16 %v913, %v912
      %v962 = vpack.c.b16 %v915, %v914
      %v963 = vpack.c.b16 %v917, %v916
      %v964 = vpack.c.b16 %v919, %v918
      %v965 = vpack.c.b16 %v921, %v920
      %v966 = vpack.c.b16 %v923, %v922
      %v967 = vpack.c.b16 %v925, %v924
      %v968 = vpack.c.b16 %v927, %v926
      %v969 = vpack.c.b16 %v929, %v928
      %v970 = vpack.c.b16 %v931, %v930
      %v971 = vpack.c.b16 %v933, %v932
      %v972 = vpack.c.b16 %v935, %v934
      %v973 = vpack.c.b16 %v937, %v936
      %v974 = vpack.c.b16 %v939, %v938
      %v975 = vpack.c.b16 %v941, %v940
      %v976 = vpack.c.b16 %v943, %v942
      %v977 = vpack.c.b16 %v945, %v944
      %vm1010 = vcmask 1043456
      %vm1011 = vcmask 392196
      %vm1012 = vmor %vm1011, %vm1010
      %1013 = vst.msk [vmem:[%s177] sm:$0xff] %vm1012, %v946
      %1014 = vst.msk [vmem:[%s177 + $0x8] sm:$0xff] %vm1012, %v947
      %1015 = vst.msk [vmem:[%s177 + $0x10] sm:$0xff] %vm1012, %v948
      %1016 = vst.msk [vmem:[%s177 + $0x18] sm:$0xff] %vm1012, %v949
      %1017 = vst.msk [vmem:[%s177 + $0x20] sm:$0xff] %vm1012, %v950
      %1018 = vst.msk [vmem:[%s177 + $0x28] sm:$0xff] %vm1012, %v951
      %1019 = vst.msk [vmem:[%s177 + $0x30] sm:$0xff] %vm1012, %v952
      %1020 = vst.msk [vmem:[%s177 + $0x38] sm:$0xff] %vm1012, %v953
      %1021 = vst.msk [vmem:[%s177 + $0x40] sm:$0xff] %vm1012, %v954
      %1022 = vst.msk [vmem:[%s177 + $0x48] sm:$0xff] %vm1012, %v955
      %1023 = vst.msk [vmem:[%s177 + $0x50] sm:$0xff] %vm1012, %v956
      %1024 = vst.msk [vmem:[%s177 + $0x58] sm:$0xff] %vm1012, %v957
      %1025 = vst.msk [vmem:[%s177 + $0x60] sm:$0xff] %vm1012, %v958
      %1026 = vst.msk [vmem:[%s177 + $0x68] sm:$0xff] %vm1012, %v959
      %1027 = vst.msk [vmem:[%s177 + $0x70] sm:$0xff] %vm1012, %v960
      %1028 = vst.msk [vmem:[%s177 + $0x78] sm:$0xff] %vm1012, %v961
      %1029 = vst.msk [vmem:[%s177 + $0x80] sm:$0xff] %vm1012, %v962
      %1030 = vst.msk [vmem:[%s177 + $0x88] sm:$0xff] %vm1012, %v963
      %1031 = vst.msk [vmem:[%s177 + $0x90] sm:$0xff] %vm1012, %v964
      %1032 = vst.msk [vmem:[%s177 + $0x98] sm:$0xff] %vm1012, %v965
      %1033 = vst.msk [vmem:[%s177 + $0xa0] sm:$0xff] %vm1012, %v966
      %1034 = vst.msk [vmem:[%s177 + $0xa8] sm:$0xff] %vm1012, %v967
      %1035 = vst.msk [vmem:[%s177 + $0xb0] sm:$0xff] %vm1012, %v968
      %1036 = vst.msk [vmem:[%s177 + $0xb8] sm:$0xff] %vm1012, %v969
      %1037 = vst.msk [vmem:[%s177 + $0xc0] sm:$0xff] %vm1012, %v970
      %1038 = vst.msk [vmem:[%s177 + $0xc8] sm:$0xff] %vm1012, %v971
      %1039 = vst.msk [vmem:[%s177 + $0xd0] sm:$0xff] %vm1012, %v972
      %1040 = vst.msk [vmem:[%s177 + $0xd8] sm:$0xff] %vm1012, %v973
      %1041 = vst.msk [vmem:[%s177 + $0xe0] sm:$0xff] %vm1012, %v974
      %1042 = vst.msk [vmem:[%s177 + $0xe8] sm:$0xff] %vm1012, %v975
      %1043 = vst.msk [vmem:[%s177 + $0xf0] sm:$0xff] %vm1012, %v976
      %1044 = vst.msk [vmem:[%s177 + $0xf8] sm:$0xff] %vm1012, %v977
      %s1045 = smul.u32 32, %s14
      %p1046 = scmp.lt.s32.totalorder %s1045, 63
      %s1047 = scalar_select %p1046, %s1045, 63
      %s1048 = smul.addr %s1047, 2
      %s1049 = smul.addr %s1048, 4
      %s1050 = scalar_lea.vmem %s3, %s1049
      // Predicated region
      $region33: #{mixed_3b_forward.4} parent=31 // pred_check
        %p1051 = pneg %p100
      $region34: #{mixed_3b_forward.4} parent=31 // pred_check_branch
        %1053 = sbr.rel (%p1051) target = $region36
      $region35: #{mixed_3b_forward.4} parent=31 // pred_region
        %s1054 = smul.u32 32, %s14
      $region36: #{mixed_3b_forward.4} parent=31 // pred_fallthru
        _
    $region32: #{mixed_3b_forward.4} parent=5 // pred_fallthru
      _
    %p1055 = scmp.le.s32.totalorder 2, %s9
    // Predicated region
    $region37: #{mixed_3b_forward.4} parent=5 // pred_check
      %p1056 = pneg %p1055
    $region38: #{mixed_3b_forward.4} parent=5 // pred_check_branch
      %1058 = sbr.rel (%p1056) target = $region40
    $region39: #{mixed_3b_forward.4} parent=5 // pred_region
      %s1059 = ssub.s32 %s9, 2
      // Predicated region
      $region41: #{mixed_3b_forward.4} parent=39 // pred_check
        %p1060 = pneg %p106
      $region42: #{mixed_3b_forward.4} parent=39 // pred_check_branch
        %1062 = sbr.rel (%p1060) target = $region44
      $region43: #{mixed_3b_forward.4} parent=39 // pred_region
        %s1063 = smul.u32 32, %s15
        %p1064 = scmp.lt.s32.totalorder %s1063, 63
        %s1065 = scalar_select %p1064, %s1063, 63
        %s1066 = smul.addr %s1065, 2
        %s1067 = smul.addr %s1066, 4
        %s1068 = scalar_lea.vmem %s3, %s1067
      $region44: #{mixed_3b_forward.4} parent=39 // pred_fallthru
        _
    $region40: #{mixed_3b_forward.4} parent=5 // pred_fallthru
      _
  $region6: #{mixed_3b_forward.4} parent=0 // loop_footer
    %s13 = sadd.s32 1, %s9
  $region7: #{mixed_3b_forward.4} parent=0 // loop_footer_branch
    %8 = sbr.rel target = $region3
  $region8: #{mixed_3b_forward.4} parent=0 // loop_exit
    _

// kernel: mixed_3b_forward.7
$region0: #{mixed_3b_forward.7}
  #allocation0 [shape = 'u32[]', space=smem, size = 0x4, offset = 0x4, fixed_abs, tag = 'smem constant byte address 0x4 - core index']
  #allocation1 [shape = 'u32[144,128]{1,0:T(1,128)}', space=vmem, size = 0x12000, scoped, tag = 'internal scratch']
  %s0 = inlined_call_operand.vmem [shape: bf16[2,6,10,10,192], index: 0, kind: input, shape index: {}]
  %s1 = inlined_call_operand.vmem [shape: bf16[192,32], index: 1, kind: input, shape index: {}]
  %s2 = inlined_call_operand.vmem [shape: f32[1,32], index: 2, kind: input, shape index: {}]
  %s3 = inlined_call_operand.vmem [shape: f32[2,4,8,8,32], index: 3, kind: output, shape index: {}]
  %s4 = sld [smem:[#allocation0]]
  $region45: #{mixed_3b_forward.7} parent=0
    _
  %s6 = ssub.s32 1, %s4
  %s7 = scalar_select 0, %s6, %s4
  loop: start=0, step=1, limit=4
  $region2: #{mixed_3b_forward.7} parent=0 // loop_pre_header
    _
  $region3: #{mixed_3b_forward.7} parent=0 // loop_header
    %s9 = sphi 0, %s13
    %p10 = scmp.ge.s32.totalorder %s9, 4
    %s19 = sphi 0, %s21
    %s22 = sphi 0, %s19
    %s23 = sphi 0, %s22
    %s39 = sphi 0, %s23
    %s43 = sphi 0, %s43
    %s45 = sphi 0, %s43
    %s46 = sphi 0, %s45
    %s60 = sphi 0, %s46
    %s64 = sphi 0, %s64
    %s66 = sphi 0, %s64
    %s67 = sphi 0, %s66
    %s81 = sphi 0, %s67
    %s87 = sphi 0, %s89
    %s90 = sphi 0, %s87
    %s91 = sphi 0, %s90
    %s107 = sphi 0, %s91
  $region4: #{mixed_3b_forward.7} parent=0 // loop_header_branch
    %12 = sbr.rel (%p10) target = $region8
  $region5: #{mixed_3b_forward.7} parent=0 // loop_body
    %s14 = ssub.s32 %s9, 1
    %s15 = ssub.s32 %s9, 2
    %s16 = sadd.s32 %s9, 1
    %s17 = ssub.s32 %s9, %s16
    %p18 = scmp.eq.s32.totalorder %s17, 0
    %s20 = sadd.s32 %s19, 1
    %s21 = scalar_select %p18, %s19, %s20
    %p24 = pneg %p18
    %p25 = scmp.eq.s32.totalorder %s9, 1
    %p26 = por %p24, %p25
    %p27 = scmp.ne.s32.totalorder %s19, %s22
    %p28 = scmp.eq.s32.totalorder %s9, 0
    %p29 = por %p27, %p28
    %p30 = scmp.ne.s32.totalorder %s19, %s22
    %p31 = scmp.eq.s32.totalorder %s14, 1
    %p32 = por %p30, %p31
    %p33 = scmp.ne.s32.totalorder %s22, %s23
    %p34 = scmp.eq.s32.totalorder %s14, 0
    %p35 = por %p33, %p34
    %p36 = scmp.ne.s32.totalorder %s22, %s23
    %p37 = scmp.eq.s32.totalorder %s15, 1
    %p38 = por %p36, %p37
    %p40 = scmp.ne.s32.totalorder %s23, %s39
    %p41 = scmp.eq.s32.totalorder %s15, 0
    %p42 = por %p40, %p41
    %s44 = sadd.s32 %s43, 1
    %p47 = scmp.eq.s32.totalorder %s9, 1
    %p48 = scmp.ne.s32.totalorder %s43, %s45
    %p49 = scmp.eq.s32.totalorder %s9, 0
    %p50 = por %p48, %p49
    %p51 = scmp.ne.s32.totalorder %s43, %s45
    %p52 = scmp.eq.s32.totalorder %s14, 1
    %p53 = por %p51, %p52
    %p54 = scmp.ne.s32.totalorder %s45, %s46
    %p55 = scmp.eq.s32.totalorder %s14, 0
    %p56 = por %p54, %p55
    %p57 = scmp.ne.s32.totalorder %s45, %s46
    %p58 = scmp.eq.s32.totalorder %s15, 1
    %p59 = por %p57, %p58
    %p61 = scmp.ne.s32.totalorder %s46, %s60
    %p62 = scmp.eq.s32.totalorder %s15, 0
    %p63 = por %p61, %p62
    %s65 = sadd.s32 %s64, 1
    %p68 = scmp.eq.s32.totalorder %s9, 1
    %p69 = scmp.ne.s32.totalorder %s64, %s66
    %p70 = scmp.eq.s32.totalorder %s9, 0
    %p71 = por %p69, %p70
    %p72 = scmp.ne.s32.totalorder %s64, %s66
    %p73 = scmp.eq.s32.totalorder %s14, 1
    %p74 = por %p72, %p73
    %p75 = scmp.ne.s32.totalorder %s66, %s67
    %p76 = scmp.eq.s32.totalorder %s14, 0
    %p77 = por %p75, %p76
    %p78 = scmp.ne.s32.totalorder %s66, %s67
    %p79 = scmp.eq.s32.totalorder %s15, 1
    %p80 = por %p78, %p79
    %p82 = scmp.ne.s32.totalorder %s67, %s81
    %p83 = scmp.eq.s32.totalorder %s15, 0
    %p84 = por %p82, %p83
    %s85 = ssub.s32 %s9, %s16
    %p86 = scmp.eq.s32.totalorder %s85, 0
    %s88 = sadd.s32 %s87, 1
    %s89 = scalar_select %p86, %s87, %s88
    %p92 = pneg %p86
    %p93 = scmp.eq.s32.totalorder %s9, 1
    %p94 = por %p92, %p93
    %p95 = scmp.ne.s32.totalorder %s87, %s90
    %p96 = scmp.eq.s32.totalorder %s9, 0
    %p97 = por %p95, %p96
    %p98 = scmp.ne.s32.totalorder %s87, %s90
    %p99 = scmp.eq.s32.totalorder %s14, 1
    %p100 = por %p98, %p99
    %p101 = scmp.ne.s32.totalorder %s90, %s91
    %p102 = scmp.eq.s32.totalorder %s14, 0
    %p103 = por %p101, %p102
    %p104 = scmp.ne.s32.totalorder %s90, %s91
    %p105 = scmp.eq.s32.totalorder %s15, 1
    %p106 = por %p104, %p105
    %p108 = scmp.ne.s32.totalorder %s91, %s107
    %p109 = scmp.eq.s32.totalorder %s15, 0
    %p110 = por %p108, %p109
    %p111 = scmp.le.s32.totalorder 1, %s9
    %p112 = scmp.lt.s32.totalorder %s9, 3
    %p113 = pnand %p111, %p112
    %p114 = pneg %p113
    // Predicated region
    $region9: #{mixed_3b_forward.7} parent=5 // pred_check
      _
    $region10: #{mixed_3b_forward.7} parent=5 // pred_check_branch
      %116 = sbr.rel (%p113) target = $region12
    $region11: #{mixed_3b_forward.7} parent=5 // pred_region
      %s117 = ssub.s32 %s9, 1
      // Predicated region
      $region13: #{mixed_3b_forward.7} parent=11 // pred_check
        %p118 = pneg %p56
      $region14: #{mixed_3b_forward.7} parent=11 // pred_check_branch
        %120 = sbr.rel (%p118) target = $region16
      $region15: #{mixed_3b_forward.7} parent=11 // pred_region
        _
      $region16: #{mixed_3b_forward.7} parent=11 // pred_fallthru
        _
      // Predicated region
      $region17: #{mixed_3b_forward.7} parent=11 // pred_check
        %p121 = pneg %p77
      $region18: #{mixed_3b_forward.7} parent=11 // pred_check_branch
        %123 = sbr.rel (%p121) target = $region20
      $region19: #{mixed_3b_forward.7} parent=11 // pred_region
        _
      $region20: #{mixed_3b_forward.7} parent=11 // pred_fallthru
        _
    $region12: #{mixed_3b_forward.7} parent=5 // pred_fallthru
      _
    %p124 = scmp.lt.s32.totalorder %s9, 2
    // Predicated region
    $region21: #{mixed_3b_forward.7} parent=5 // pred_check
      %p125 = pneg %p124
    $region22: #{mixed_3b_forward.7} parent=5 // pred_check_branch
      %127 = sbr.rel (%p125) target = $region24
    $region23: #{mixed_3b_forward.7} parent=5 // pred_region
      // Predicated region
      $region25: #{mixed_3b_forward.7} parent=23 // pred_check
        %p128 = pneg %p29
      $region26: #{mixed_3b_forward.7} parent=23 // pred_check_branch
        %130 = sbr.rel (%p128) target = $region28
      $region27: #{mixed_3b_forward.7} parent=23 // pred_region
        %p131 = scmp.lt.s32.totalorder %s9, 1
        %s132 = scalar_select %p131, %s9, 1
        %s133 = smul.addr %s132, 240
        %s134 = smul.addr %s133, 4
        %s135 = scalar_lea.vmem %s0, %s134
      $region28: #{mixed_3b_forward.7} parent=23 // pred_fallthru
        _
    $region24: #{mixed_3b_forward.7} parent=5 // pred_fallthru
      _
    %p136 = scmp.le.s32.totalorder 1, %s9
    %p137 = scmp.lt.s32.totalorder %s9, 3
    %p138 = pnand %p136, %p137
    %p139 = pneg %p138
    // Predicated region
    $region29: #{mixed_3b_forward.7} parent=5 // pred_check
      _
    $region30: #{mixed_3b_forward.7} parent=5 // pred_check_branch
      %141 = sbr.rel (%p138) target = $region32
    $region31: #{mixed_3b_forward.7} parent=5 // pred_region
      %s142 = ssub.s32 %s9, 1
      %p143 = scmp.lt.s32.totalorder %s14, 1
      %s144 = scalar_select %p143, %s14, 1
      %s145 = smul.addr %s144, 240
      %s146 = smul.addr %s145, 4
      %s147 = scalar_lea.vmem %s0, %s146
      %p148 = pneg %p35
      %p149 = pneg %p32
      %p150 = pneg %p56
      %p151 = pneg %p53
      %p152 = pneg %p77
      %p153 = pneg %p74
      %p154 = pneg %p103
      %p155 = pneg %p100
      %p156 = scmp.lt.s32.totalorder %s14, 1
      %s157 = scalar_select %p156, %s14, 1
      %s158 = smul.addr %s157, 32
      %s159 = smul.addr %s158, 8
      %s160 = scalar_lea.vmem %s3, %s159
      %p161 = scmp.lt.s32.totalorder %s14, 1
      %s162 = scalar_select %p161, %s14, 1
      %s163 = smul.addr %s162, 240
      %s164 = smul.addr %s163, 4
      %s165 = scalar_lea.vmem %s0, %s164
      %p166 = scmp.lt.s32.totalorder %s14, 1
      %s167 = scalar_select %p166, %s14, 1
      %s168 = smul.addr %s167, 32
      %s169 = smul.addr %s168, 8
      %s170 = scalar_lea.vmem %s3, %s169
      %v172 = vld [vmem:[%s165] sm:$0xff]
      %v173 = vld [vmem:[%s165 + $0x8] sm:$0x11]
      %v174 = vld [vmem:[%s165 + $0x10] sm:$0xff]
      %v175 = vld [vmem:[%s165 + $0x18] sm:$0x11]
      %v176 = vld [vmem:[%s165 + $0x20] sm:$0xff]
      %v177 = vld [vmem:[%s165 + $0x28] sm:$0x11]
      %v178 = vld [vmem:[%s165 + $0x30] sm:$0xff]
      %v179 = vld [vmem:[%s165 + $0x38] sm:$0x11]
      %v180 = vld [vmem:[%s165 + $0x40] sm:$0xff]
      %v181 = vld [vmem:[%s165 + $0x48] sm:$0x11]
      %v182 = vld [vmem:[%s165 + $0x50] sm:$0xff]
      %v183 = vld [vmem:[%s165 + $0x58] sm:$0x11]
      %v184 = vld [vmem:[%s165 + $0x60] sm:$0xff]
      %v185 = vld [vmem:[%s165 + $0x68] sm:$0x11]
      %v186 = vld [vmem:[%s165 + $0x70] sm:$0xff]
      %v187 = vld [vmem:[%s165 + $0x78] sm:$0x11]
      %v188 = vld [vmem:[%s165 + $0x80] sm:$0xff]
      %v189 = vld [vmem:[%s165 + $0x88] sm:$0x11]
      %v190 = vld [vmem:[%s165 + $0x90] sm:$0xff]
      %v191 = vld [vmem:[%s165 + $0x98] sm:$0x11]
      %v192 = vld [vmem:[%s165 + $0xa0] sm:$0xff]
      %v193 = vld [vmem:[%s165 + $0xa8] sm:$0x11]
      %v194 = vld [vmem:[%s165 + $0xb0] sm:$0xff]
      %v195 = vld [vmem:[%s165 + $0xb8] sm:$0x11]
      %v196 = vld [vmem:[%s165 + $0xc0] sm:$0xff]
      %v197 = vld [vmem:[%s165 + $0xc8] sm:$0x11]
      %v198 = vld [vmem:[%s165 + $0xd0] sm:$0xff]
      %v199 = vld [vmem:[%s165 + $0xd8] sm:$0x11]
      %v200 = vld [vmem:[%s165 + $0xe0] sm:$0xff]
      %v201 = vld [vmem:[%s165 + $0xe8] sm:$0x11]
      %v202 = vld [vmem:[%s165 + $0xf0] sm:$0xff]
      %v203 = vld [vmem:[%s165 + $0xf8] sm:$0x11]
      %v204 = vld [vmem:[%s165 + $0x100] sm:$0xff]
      %v205 = vld [vmem:[%s165 + $0x108] sm:$0x11]
      %v206 = vld [vmem:[%s165 + $0x110] sm:$0xff]
      %v207 = vld [vmem:[%s165 + $0x118] sm:$0x11]
      %v208 = vld [vmem:[%s165 + $0x120] sm:$0xff]
      %v209 = vld [vmem:[%s165 + $0x128] sm:$0x11]
      %v210 = vld [vmem:[%s165 + $0x130] sm:$0xff]
      %v211 = vld [vmem:[%s165 + $0x138] sm:$0x11]
      %v212 = vld [vmem:[%s165 + $0x140] sm:$0xff]
      %v213 = vld [vmem:[%s165 + $0x148] sm:$0x11]
      %v214 = vld [vmem:[%s165 + $0x150] sm:$0xff]
      %v215 = vld [vmem:[%s165 + $0x158] sm:$0x11]
      %v216 = vld [vmem:[%s165 + $0x160] sm:$0xff]
      %v217 = vld [vmem:[%s165 + $0x168] sm:$0x11]
      %v218 = vld [vmem:[%s165 + $0x170] sm:$0xff]
      %v219 = vld [vmem:[%s165 + $0x178] sm:$0x11]
      %v220 = vld [vmem:[%s165 + $0x180] sm:$0xff]
      %v221 = vld [vmem:[%s165 + $0x188] sm:$0x11]
      %v222 = vld [vmem:[%s165 + $0x190] sm:$0xff]
      %v223 = vld [vmem:[%s165 + $0x198] sm:$0x11]
      %v224 = vld [vmem:[%s165 + $0x1a0] sm:$0xff]
      %v225 = vld [vmem:[%s165 + $0x1a8] sm:$0x11]
      %v226 = vld [vmem:[%s165 + $0x1b0] sm:$0xff]
      %v227 = vld [vmem:[%s165 + $0x1b8] sm:$0x11]
      %v228 = vld [vmem:[%s165 + $0x1c0] sm:$0xff]
      %v229 = vld [vmem:[%s165 + $0x1c8] sm:$0x11]
      %v230 = vld [vmem:[%s165 + $0x1d0] sm:$0xff]
      %v231 = vld [vmem:[%s165 + $0x1d8] sm:$0x11]
      %v232 = vld [vmem:[%s165 + $0x1e0] sm:$0xff]
      %v233 = vld [vmem:[%s165 + $0x1e8] sm:$0x11]
      %v234 = vld [vmem:[%s165 + $0x1f0] sm:$0xff]
      %v235 = vld [vmem:[%s165 + $0x1f8] sm:$0x11]
      %v236 = vld [vmem:[%s165 + $0x200] sm:$0xff]
      %v237 = vld [vmem:[%s165 + $0x208] sm:$0x11]
      %v238 = vld [vmem:[%s165 + $0x210] sm:$0xff]
      %v239 = vld [vmem:[%s165 + $0x218] sm:$0x11]
      %v240 = vld [vmem:[%s165 + $0x220] sm:$0xff]
      %v241 = vld [vmem:[%s165 + $0x228] sm:$0x11]
      %v242 = vld [vmem:[%s165 + $0x230] sm:$0xff]
      %v243 = vld [vmem:[%s165 + $0x238] sm:$0x11]
      %v244 = vld [vmem:[%s165 + $0x240] sm:$0xff]
      %v245 = vld [vmem:[%s165 + $0x248] sm:$0x11]
      %v246 = vld [vmem:[%s165 + $0x250] sm:$0xff]
      %v247 = vld [vmem:[%s165 + $0x258] sm:$0x11]
      %v248 = vld [vmem:[%s165 + $0x260] sm:$0xff]
      %v249 = vld [vmem:[%s165 + $0x268] sm:$0x11]
      %v250 = vld [vmem:[%s165 + $0x270] sm:$0xff]
      %v251 = vld [vmem:[%s165 + $0x278] sm:$0x11]
      %v252 = vld [vmem:[%s165 + $0x280] sm:$0xff]
      %v253 = vld [vmem:[%s165 + $0x288] sm:$0x11]
      %v254 = vld [vmem:[%s165 + $0x290] sm:$0xff]
      %v255 = vld [vmem:[%s165 + $0x298] sm:$0x11]
      %v256 = vld [vmem:[%s165 + $0x2a0] sm:$0xff]
      %v257 = vld [vmem:[%s165 + $0x2a8] sm:$0x11]
      %v258 = vld [vmem:[%s165 + $0x2b0] sm:$0xff]
      %v259 = vld [vmem:[%s165 + $0x2b8] sm:$0x11]
      %v260 = vld [vmem:[%s165 + $0x2c0] sm:$0xff]
      %v261 = vld [vmem:[%s165 + $0x2c8] sm:$0x11]
      %v262 = vld [vmem:[%s165 + $0x2d0] sm:$0xff]
      %v263 = vld [vmem:[%s165 + $0x2d8] sm:$0x11]
      %v264 = vld [vmem:[%s165 + $0x2e0] sm:$0xff]
      %v265 = vld [vmem:[%s165 + $0x2e8] sm:$0x11]
      %v266 = vld [vmem:[%s165 + $0x2f0] sm:$0xff]
      %v267 = vld [vmem:[%s165 + $0x2f8] sm:$0x11]
      %v268 = vld [vmem:[%s165 + $0x300] sm:$0xff]
      %v269 = vld [vmem:[%s165 + $0x308] sm:$0x11]
      %v270 = vld [vmem:[%s165 + $0x310] sm:$0xff]
      %v271 = vld [vmem:[%s165 + $0x318] sm:$0x11]
      %v272 = vld [vmem:[%s165 + $0x320] sm:$0xff]
      %v273 = vld [vmem:[%s165 + $0x328] sm:$0x11]
      %v274 = vld [vmem:[%s165 + $0x330] sm:$0xff]
      %v275 = vld [vmem:[%s165 + $0x338] sm:$0x11]
      %v276 = vld [vmem:[%s165 + $0x340] sm:$0xff]
      %v277 = vld [vmem:[%s165 + $0x348] sm:$0x11]
      %v278 = vld [vmem:[%s165 + $0x350] sm:$0xff]
      %v279 = vld [vmem:[%s165 + $0x358] sm:$0x11]
      %v280 = vld [vmem:[%s165 + $0x360] sm:$0xff]
      %v281 = vld [vmem:[%s165 + $0x368] sm:$0x11]
      %v282 = vld [vmem:[%s165 + $0x370] sm:$0xff]
      %v283 = vld [vmem:[%s165 + $0x378] sm:$0x11]
      %v284 = vld [vmem:[%s165 + $0x380] sm:$0xff]
      %v285 = vld [vmem:[%s165 + $0x388] sm:$0x11]
      %v286 = vld [vmem:[%s165 + $0x390] sm:$0xff]
      %v287 = vld [vmem:[%s165 + $0x398] sm:$0x11]
      %v288 = vld [vmem:[%s165 + $0x3a0] sm:$0xff]
      %v289 = vld [vmem:[%s165 + $0x3a8] sm:$0x11]
      %v290 = vld [vmem:[%s165 + $0x3b0] sm:$0xff]
      %v291 = vld [vmem:[%s165 + $0x3b8] sm:$0x11]
      %vm292 = vsmask.f32 3328
      %vm293 = vsmask.f32 7440
      %vm294 = vmor %vm292, %vm293
      %v296 = vshrl.u32 %v172, 16
      %v298 = vrot.slane %v296, 4
      %v299 = vshll.u32 %v172, 16
      %v301 = vrot.slane %v299, 5
      %v302 = vor.u32 %v298, %v301
      %v303 = vrot.slane %v302, 4
      %v305 = vshll.u32 %v173, 16
      %v307 = vrot.slane %v305, 5
      %v308 = vsel %vm294, %v303, %v307
      %v310 = vshrl.u32 %v174, 16
      %v312 = vrot.slane %v310, 4
      %v313 = vshll.u32 %v174, 16
      %v315 = vrot.slane %v313, 5
      %v316 = vor.u32 %v312, %v315
      %v317 = vrot.slane %v316, 4
      %v319 = vshll.u32 %v175, 16
      %v321 = vrot.slane %v319, 5
      %v322 = vsel %vm294, %v317, %v321
      %v324 = vshrl.u32 %v176, 16
      %v326 = vrot.slane %v324, 4
      %v327 = vshll.u32 %v176, 16
      %v329 = vrot.slane %v327, 5
      %v330 = vor.u32 %v326, %v329
      %v331 = vrot.slane %v330, 4
      %v333 = vshll.u32 %v177, 16
      %v335 = vrot.slane %v333, 5
      %v336 = vsel %vm294, %v331, %v335
      %v338 = vshrl.u32 %v178, 16
      %v340 = vrot.slane %v338, 4
      %v341 = vshll.u32 %v178, 16
      %v343 = vrot.slane %v341, 5
      %v344 = vor.u32 %v340, %v343
      %v345 = vrot.slane %v344, 4
      %v347 = vshll.u32 %v179, 16
      %v349 = vrot.slane %v347, 5
      %v350 = vsel %vm294, %v345, %v349
      %v352 = vshrl.u32 %v180, 16
      %v354 = vrot.slane %v352, 4
      %v355 = vshll.u32 %v180, 16
      %v357 = vrot.slane %v355, 5
      %v358 = vor.u32 %v354, %v357
      %v359 = vrot.slane %v358, 4
      %v361 = vshll.u32 %v181, 16
      %v363 = vrot.slane %v361, 5
      %v364 = vsel %vm294, %v359, %v363
      %v366 = vshrl.u32 %v182, 16
      %v368 = vrot.slane %v366, 4
      %v369 = vshll.u32 %v182, 16
      %v371 = vrot.slane %v369, 5
      %v372 = vor.u32 %v368, %v371
      %v373 = vrot.slane %v372, 4
      %v375 = vshll.u32 %v183, 16
      %v377 = vrot.slane %v375, 5
      %v378 = vsel %vm294, %v373, %v377
      %v380 = vshrl.u32 %v184, 16
      %v382 = vrot.slane %v380, 4
      %v383 = vshll.u32 %v184, 16
      %v385 = vrot.slane %v383, 5
      %v386 = vor.u32 %v382, %v385
      %v387 = vrot.slane %v386, 4
      %v389 = vshll.u32 %v185, 16
      %v391 = vrot.slane %v389, 5
      %v392 = vsel %vm294, %v387, %v391
      %v394 = vshrl.u32 %v186, 16
      %v396 = vrot.slane %v394, 4
      %v397 = vshll.u32 %v186, 16
      %v399 = vrot.slane %v397, 5
      %v400 = vor.u32 %v396, %v399
      %v401 = vrot.slane %v400, 4
      %v403 = vshll.u32 %v187, 16
      %v405 = vrot.slane %v403, 5
      %v406 = vsel %vm294, %v401, %v405
      %v408 = vshrl.u32 %v188, 16
      %v410 = vrot.slane %v408, 4
      %v411 = vshll.u32 %v188, 16
      %v413 = vrot.slane %v411, 5
      %v414 = vor.u32 %v410, %v413
      %v415 = vrot.slane %v414, 4
      %v417 = vshll.u32 %v189, 16
      %v419 = vrot.slane %v417, 5
      %v420 = vsel %vm294, %v415, %v419
      %v422 = vshrl.u32 %v190, 16
      %v424 = vrot.slane %v422, 4
      %v425 = vshll.u32 %v190, 16
      %v427 = vrot.slane %v425, 5
      %v428 = vor.u32 %v424, %v427
      %v429 = vrot.slane %v428, 4
      %v431 = vshll.u32 %v191, 16
      %v433 = vrot.slane %v431, 5
      %v434 = vsel %vm294, %v429, %v433
      %v436 = vshrl.u32 %v192, 16
      %v438 = vrot.slane %v436, 4
      %v439 = vshll.u32 %v192, 16
      %v441 = vrot.slane %v439, 5
      %v442 = vor.u32 %v438, %v441
      %v443 = vrot.slane %v442, 4
      %v445 = vshll.u32 %v193, 16
      %v447 = vrot.slane %v445, 5
      %v448 = vsel %vm294, %v443, %v447
      %v450 = vshrl.u32 %v194, 16
      %v452 = vrot.slane %v450, 4
      %v453 = vshll.u32 %v194, 16
      %v455 = vrot.slane %v453, 5
      %v456 = vor.u32 %v452, %v455
      %v457 = vrot.slane %v456, 4
      %v459 = vshll.u32 %v195, 16
      %v461 = vrot.slane %v459, 5
      %v462 = vsel %vm294, %v457, %v461
      %v464 = vshrl.u32 %v196, 16
      %v466 = vrot.slane %v464, 4
      %v467 = vshll.u32 %v196, 16
      %v469 = vrot.slane %v467, 5
      %v470 = vor.u32 %v466, %v469
      %v471 = vrot.slane %v470, 4
      %v473 = vshll.u32 %v197, 16
      %v475 = vrot.slane %v473, 5
      %v476 = vsel %vm294, %v471, %v475
      %v478 = vshrl.u32 %v198, 16
      %v480 = vrot.slane %v478, 4
      %v481 = vshll.u32 %v198, 16
      %v483 = vrot.slane %v481, 5
      %v484 = vor.u32 %v480, %v483
      %v485 = vrot.slane %v484, 4
      %v487 = vshll.u32 %v199, 16
      %v489 = vrot.slane %v487, 5
      %v490 = vsel %vm294, %v485, %v489
      %v492 = vshrl.u32 %v200, 16
      %v494 = vrot.slane %v492, 4
      %v495 = vshll.u32 %v200, 16
      %v497 = vrot.slane %v495, 5
      %v498 = vor.u32 %v494, %v497
      %v499 = vrot.slane %v498, 4
      %v501 = vshll.u32 %v201, 16
      %v503 = vrot.slane %v501, 5
      %v504 = vsel %vm294, %v499, %v503
      %v506 = vshrl.u32 %v202, 16
      %v508 = vrot.slane %v506, 4
      %v509 = vshll.u32 %v202, 16
      %v511 = vrot.slane %v509, 5
      %v512 = vor.u32 %v508, %v511
      %v513 = vrot.slane %v512, 4
      %v515 = vshll.u32 %v203, 16
      %v517 = vrot.slane %v515, 5
      %v518 = vsel %vm294, %v513, %v517
      %v520 = vshrl.u32 %v204, 16
      %v522 = vrot.slane %v520, 4
      %v523 = vshll.u32 %v204, 16
      %v525 = vrot.slane %v523, 5
      %v526 = vor.u32 %v522, %v525
      %v527 = vrot.slane %v526, 4
      %v529 = vshll.u32 %v205, 16
      %v531 = vrot.slane %v529, 5
      %v532 = vsel %vm294, %v527, %v531
      %v534 = vshrl.u32 %v206, 16
      %v536 = vrot.slane %v534, 4
      %v537 = vshll.u32 %v206, 16
      %v539 = vrot.slane %v537, 5
      %v540 = vor.u32 %v536, %v539
      %v541 = vrot.slane %v540, 4
      %v543 = vshll.u32 %v207, 16
      %v545 = vrot.slane %v543, 5
      %v546 = vsel %vm294, %v541, %v545
      %v548 = vshrl.u32 %v208, 16
      %v550 = vrot.slane %v548, 4
      %v551 = vshll.u32 %v208, 16
      %v553 = vrot.slane %v551, 5
      %v554 = vor.u32 %v550, %v553
      %v555 = vrot.slane %v554, 4
      %v557 = vshll.u32 %v209, 16
      %v559 = vrot.slane %v557, 5
      %v560 = vsel %vm294, %v555, %v559
      %v562 = vshrl.u32 %v210, 16
      %v564 = vrot.slane %v562, 4
      %v565 = vshll.u32 %v210, 16
      %v567 = vrot.slane %v565, 5
      %v568 = vor.u32 %v564, %v567
      %v569 = vrot.slane %v568, 4
      %v571 = vshll.u32 %v211, 16
      %v573 = vrot.slane %v571, 5
      %v574 = vsel %vm294, %v569, %v573
      %v576 = vshrl.u32 %v212, 16
      %v578 = vrot.slane %v576, 4
      %v579 = vshll.u32 %v212, 16
      %v581 = vrot.slane %v579, 5
      %v582 = vor.u32 %v578, %v581
      %v583 = vrot.slane %v582, 4
      %v585 = vshll.u32 %v213, 16
      %v587 = vrot.slane %v585, 5
      %v588 = vsel %vm294, %v583, %v587
      %v590 = vshrl.u32 %v214, 16
      %v592 = vrot.slane %v590, 4
      %v593 = vshll.u32 %v214, 16
      %v595 = vrot.slane %v593, 5
      %v596 = vor.u32 %v592, %v595
      %v597 = vrot.slane %v596, 4
      %v599 = vshll.u32 %v215, 16
      %v601 = vrot.slane %v599, 5
      %v602 = vsel %vm294, %v597, %v601
      %v604 = vshrl.u32 %v216, 16
      %v606 = vrot.slane %v604, 4
      %v607 = vshll.u32 %v216, 16
      %v609 = vrot.slane %v607, 5
      %v610 = vor.u32 %v606, %v609
      %v611 = vrot.slane %v610, 4
      %v613 = vshll.u32 %v217, 16
      %v615 = vrot.slane %v613, 5
      %v616 = vsel %vm294, %v611, %v615
      %v618 = vshrl.u32 %v218, 16
      %v620 = vrot.slane %v618, 4
      %v621 = vshll.u32 %v218, 16
      %v623 = vrot.slane %v621, 5
      %v624 = vor.u32 %v620, %v623
      %v625 = vrot.slane %v624, 4
      %v627 = vshll.u32 %v219, 16
      %v629 = vrot.slane %v627, 5
      %v630 = vsel %vm294, %v625, %v629
      %v632 = vshrl.u32 %v220, 16
      %v634 = vrot.slane %v632, 4
      %v635 = vshll.u32 %v220, 16
      %v637 = vrot.slane %v635, 5
      %v638 = vor.u32 %v634, %v637
      %v639 = vrot.slane %v638, 4
      %v641 = vshll.u32 %v221, 16
      %v643 = vrot.slane %v641, 5
      %v644 = vsel %vm294, %v639, %v643
      %v646 = vshrl.u32 %v222, 16
      %v648 = vrot.slane %v646, 4
      %v649 = vshll.u32 %v222, 16
      %v651 = vrot.slane %v649, 5
      %v652 = vor.u32 %v648, %v651
      %v653 = vrot.slane %v652, 4
      %v655 = vshll.u32 %v223, 16
      %v657 = vrot.slane %v655, 5
      %v658 = vsel %vm294, %v653, %v657
      %v660 = vshrl.u32 %v224, 16
      %v662 = vrot.slane %v660, 4
      %v663 = vshll.u32 %v224, 16
      %v665 = vrot.slane %v663, 5
      %v666 = vor.u32 %v662, %v665
      %v667 = vrot.slane %v666, 4
      %v669 = vshll.u32 %v225, 16
      %v671 = vrot.slane %v669, 5
      %v672 = vsel %vm294, %v667, %v671
      %v674 = vshrl.u32 %v226, 16
      %v676 = vrot.slane %v674, 4
      %v677 = vshll.u32 %v226, 16
      %v679 = vrot.slane %v677, 5
      %v680 = vor.u32 %v676, %v679
      %v681 = vrot.slane %v680, 4
      %v683 = vshll.u32 %v227, 16
      %v685 = vrot.slane %v683, 5
      %v686 = vsel %vm294, %v681, %v685
      %v688 = vshrl.u32 %v228, 16
      %v690 = vrot.slane %v688, 4
      %v691 = vshll.u32 %v228, 16
      %v693 = vrot.slane %v691, 5
      %v694 = vor.u32 %v690, %v693
      %v695 = vrot.slane %v694, 4
      %v697 = vshll.u32 %v229, 16
      %v699 = vrot.slane %v697, 5
      %v700 = vsel %vm294, %v695, %v699
      %v702 = vshrl.u32 %v230, 16
      %v704 = vrot.slane %v702, 4
      %v705 = vshll.u32 %v230, 16
      %v707 = vrot.slane %v705, 5
      %v708 = vor.u32 %v704, %v707
      %v709 = vrot.slane %v708, 4
      %v711 = vshll.u32 %v231, 16
      %v713 = vrot.slane %v711, 5
      %v714 = vsel %vm294, %v709, %v713
      %v716 = vshrl.u32 %v232, 16
      %v718 = vrot.slane %v716, 4
      %v719 = vshll.u32 %v232, 16
      %v721 = vrot.slane %v719, 5
      %v722 = vor.u32 %v718, %v721
      %v723 = vrot.slane %v722, 4
      %v725 = vshll.u32 %v233, 16
      %v727 = vrot.slane %v725, 5
      %v728 = vsel %vm294, %v723, %v727
      %v730 = vshrl.u32 %v234, 16
      %v732 = vrot.slane %v730, 4
      %v733 = vshll.u32 %v234, 16
      %v735 = vrot.slane %v733, 5
      %v736 = vor.u32 %v732, %v735
      %v737 = vrot.slane %v736, 4
      %v739 = vshll.u32 %v235, 16
      %v741 = vrot.slane %v739, 5
      %v742 = vsel %vm294, %v737, %v741
      %v744 = vshrl.u32 %v236, 16
      %v746 = vrot.slane %v744, 4
      %v747 = vshll.u32 %v236, 16
      %v749 = vrot.slane %v747, 5
      %v750 = vor.u32 %v746, %v749
      %v751 = vrot.slane %v750, 4
      %v753 = vshll.u32 %v237, 16
      %v755 = vrot.slane %v753, 5
      %v756 = vsel %vm294, %v751, %v755
      %v758 = vshrl.u32 %v238, 16
      %v760 = vrot.slane %v758, 4
      %v761 = vshll.u32 %v238, 16
      %v763 = vrot.slane %v761, 5
      %v764 = vor.u32 %v760, %v763
      %v765 = vrot.slane %v764, 4
      %v767 = vshll.u32 %v239, 16
      %v769 = vrot.slane %v767, 5
      %v770 = vsel %vm294, %v765, %v769
      %v772 = vshrl.u32 %v240, 16
      %v774 = vrot.slane %v772, 4
      %v775 = vshll.u32 %v240, 16
      %v777 = vrot.slane %v775, 5
      %v778 = vor.u32 %v774, %v777
      %v779 = vrot.slane %v778, 4
      %v781 = vshll.u32 %v241, 16
      %v783 = vrot.slane %v781, 5
      %v784 = vsel %vm294, %v779, %v783
      %v786 = vshrl.u32 %v242, 16
      %v788 = vrot.slane %v786, 4
      %v789 = vshll.u32 %v242, 16
      %v791 = vrot.slane %v789, 5
      %v792 = vor.u32 %v788, %v791
      %v793 = vrot.slane %v792, 4
      %v795 = vshll.u32 %v243, 16
      %v797 = vrot.slane %v795, 5
      %v798 = vsel %vm294, %v793, %v797
      %v800 = vshrl.u32 %v244, 16
      %v802 = vrot.slane %v800, 4
      %v803 = vshll.u32 %v244, 16
      %v805 = vrot.slane %v803, 5
      %v806 = vor.u32 %v802, %v805
      %v807 = vrot.slane %v806, 4
      %v809 = vshll.u32 %v245, 16
      %v811 = vrot.slane %v809, 5
      %v812 = vsel %vm294, %v807, %v811
      %v814 = vshrl.u32 %v246, 16
      %v816 = vrot.slane %v814, 4
      %v817 = vshll.u32 %v246, 16
      %v819 = vrot.slane %v817, 5
      %v820 = vor.u32 %v816, %v819
      %v821 = vrot.slane %v820, 4
      %v823 = vshll.u32 %v247, 16
      %v825 = vrot.slane %v823, 5
      %v826 = vsel %vm294, %v821, %v825
      %v828 = vshrl.u32 %v248, 16
      %v830 = vrot.slane %v828, 4
      %v831 = vshll.u32 %v248, 16
      %v833 = vrot.slane %v831, 5
      %v834 = vor.u32 %v830, %v833
      %v835 = vrot.slane %v834, 4
      %v837 = vshll.u32 %v249, 16
      %v839 = vrot.slane %v837, 5
      %v840 = vsel %vm294, %v835, %v839
      %v842 = vshrl.u32 %v250, 16
      %v844 = vrot.slane %v842, 4
      %v845 = vshll.u32 %v250, 16
      %v847 = vrot.slane %v845, 5
      %v848 = vor.u32 %v844, %v847
      %v849 = vrot.slane %v848, 4
      %v851 = vshll.u32 %v251, 16
      %v853 = vrot.slane %v851, 5
      %v854 = vsel %vm294, %v849, %v853
      %v856 = vshrl.u32 %v252, 16
      %v858 = vrot.slane %v856, 4
      %v859 = vshll.u32 %v252, 16
      %v861 = vrot.slane %v859, 5
      %v862 = vor.u32 %v858, %v861
      %v863 = vrot.slane %v862, 4
      %v865 = vshll.u32 %v253, 16
      %v867 = vrot.slane %v865, 5
      %v868 = vsel %vm294, %v863, %v867
      %v870 = vshrl.u32 %v254, 16
      %v872 = vrot.slane %v870, 4
      %v873 = vshll.u32 %v254, 16
      %v875 = vrot.slane %v873, 5
      %v876 = vor.u32 %v872, %v875
      %v877 = vrot.slane %v876, 4
      %v879 = vshll.u32 %v255, 16
      %v881 = vrot.slane %v879, 5
      %v882 = vsel %vm294, %v877, %v881
      %v884 = vshrl.u32 %v256, 16
      %v886 = vrot.slane %v884, 4
      %v887 = vshll.u32 %v256, 16
      %v889 = vrot.slane %v887, 5
      %v890 = vor.u32 %v886, %v889
      %v891 = vrot.slane %v890, 4
      %v893 = vshll.u32 %v257, 16
      %v895 = vrot.slane %v893, 5
      %v896 = vsel %vm294, %v891, %v895
      %v898 = vshrl.u32 %v258, 16
      %v900 = vrot.slane %v898, 4
      %v901 = vshll.u32 %v258, 16
      %v903 = vrot.slane %v901, 5
      %v904 = vor.u32 %v900, %v903
      %v905 = vrot.slane %v904, 4
      %v907 = vshll.u32 %v259, 16
      %v909 = vrot.slane %v907, 5
      %v910 = vsel %vm294, %v905, %v909
      %v912 = vshrl.u32 %v260, 16
      %v914 = vrot.slane %v912, 4
      %v915 = vshll.u32 %v260, 16
      %v917 = vrot.slane %v915, 5
      %v918 = vor.u32 %v914, %v917
      %v919 = vrot.slane %v918, 4
      %v921 = vshll.u32 %v261, 16
      %v923 = vrot.slane %v921, 5
      %v924 = vsel %vm294, %v919, %v923
      %v926 = vshrl.u32 %v262, 16
      %v928 = vrot.slane %v926, 4
      %v929 = vshll.u32 %v262, 16
      %v931 = vrot.slane %v929, 5
      %v932 = vor.u32 %v928, %v931
      %v933 = vrot.slane %v932, 4
      %v935 = vshll.u32 %v263, 16
      %v937 = vrot.slane %v935, 5
      %v938 = vsel %vm294, %v933, %v937
      %v940 = vshrl.u32 %v264, 16
      %v942 = vrot.slane %v940, 4
      %v943 = vshll.u32 %v264, 16
      %v945 = vrot.slane %v943, 5
      %v946 = vor.u32 %v942, %v945
      %v947 = vrot.slane %v946, 4
      %v949 = vshll.u32 %v265, 16
      %v951 = vrot.slane %v949, 5
      %v952 = vsel %vm294, %v947, %v951
      %v954 = vshrl.u32 %v266, 16
      %v956 = vrot.slane %v954, 4
      %v957 = vshll.u32 %v266, 16
      %v959 = vrot.slane %v957, 5
      %v960 = vor.u32 %v956, %v959
      %v961 = vrot.slane %v960, 4
      %v963 = vshll.u32 %v267, 16
      %v965 = vrot.slane %v963, 5
      %v966 = vsel %vm294, %v961, %v965
      %v968 = vshrl.u32 %v268, 16
      %v970 = vrot.slane %v968, 4
      %v971 = vshll.u32 %v268, 16
      %v973 = vrot.slane %v971, 5
      %v974 = vor.u32 %v970, %v973
      %v975 = vrot.slane %v974, 4
      %v977 = vshll.u32 %v269, 16
      %v979 = vrot.slane %v977, 5
      %v980 = vsel %vm294, %v975, %v979
      %v982 = vshrl.u32 %v270, 16
      %v984 = vrot.slane %v982, 4
      %v985 = vshll.u32 %v270, 16
      %v987 = vrot.slane %v985, 5
      %v988 = vor.u32 %v984, %v987
      %v989 = vrot.slane %v988, 4
      %v991 = vshll.u32 %v271, 16
      %v993 = vrot.slane %v991, 5
      %v994 = vsel %vm294, %v989, %v993
      %v996 = vshrl.u32 %v272, 16
      %v998 = vrot.slane %v996, 4
      %v999 = vshll.u32 %v272, 16
      %v1001 = vrot.slane %v999, 5
      %v1002 = vor.u32 %v998, %v1001
      %v1003 = vrot.slane %v1002, 4
      %v1005 = vshll.u32 %v273, 16
      %v1007 = vrot.slane %v1005, 5
      %v1008 = vsel %vm294, %v1003, %v1007
      %v1010 = vshrl.u32 %v274, 16
      %v1012 = vrot.slane %v1010, 4
      %v1013 = vshll.u32 %v274, 16
      %v1015 = vrot.slane %v1013, 5
      %v1016 = vor.u32 %v1012, %v1015
      %v1017 = vrot.slane %v1016, 4
      %v1019 = vshll.u32 %v275, 16
      %v1021 = vrot.slane %v1019, 5
      %v1022 = vsel %vm294, %v1017, %v1021
      %v1024 = vshrl.u32 %v276, 16
      %v1026 = vrot.slane %v1024, 4
      %v1027 = vshll.u32 %v276, 16
      %v1029 = vrot.slane %v1027, 5
      %v1030 = vor.u32 %v1026, %v1029
      %v1031 = vrot.slane %v1030, 4
      %v1033 = vshll.u32 %v277, 16
      %v1035 = vrot.slane %v1033, 5
      %v1036 = vsel %vm294, %v1031, %v1035
      %v1038 = vshrl.u32 %v278, 16
      %v1040 = vrot.slane %v1038, 4
      %v1041 = vshll.u32 %v278, 16
      %v1043 = vrot.slane %v1041, 5
      %v1044 = vor.u32 %v1040, %v1043
      %v1045 = vrot.slane %v1044, 4
      %v1047 = vshll.u32 %v279, 16
      %v1049 = vrot.slane %v1047, 5
      %v1050 = vsel %vm294, %v1045, %v1049
      %v1052 = vshrl.u32 %v280, 16
      %v1054 = vrot.slane %v1052, 4
      %v1055 = vshll.u32 %v280, 16
      %v1057 = vrot.slane %v1055, 5
      %v1058 = vor.u32 %v1054, %v1057
      %v1059 = vrot.slane %v1058, 4
      %v1061 = vshll.u32 %v281, 16
      %v1063 = vrot.slane %v1061, 5
      %v1064 = vsel %vm294, %v1059, %v1063
      %v1066 = vshrl.u32 %v282, 16
      %v1068 = vrot.slane %v1066, 4
      %v1069 = vshll.u32 %v282, 16
      %v1071 = vrot.slane %v1069, 5
      %v1072 = vor.u32 %v1068, %v1071
      %v1073 = vrot.slane %v1072, 4
      %v1075 = vshll.u32 %v283, 16
      %v1077 = vrot.slane %v1075, 5
      %v1078 = vsel %vm294, %v1073, %v1077
      %v1080 = vshrl.u32 %v284, 16
      %v1082 = vrot.slane %v1080, 4
      %v1083 = vshll.u32 %v284, 16
      %v1085 = vrot.slane %v1083, 5
      %v1086 = vor.u32 %v1082, %v1085
      %v1087 = vrot.slane %v1086, 4
      %v1089 = vshll.u32 %v285, 16
      %v1091 = vrot.slane %v1089, 5
      %v1092 = vsel %vm294, %v1087, %v1091
      %v1094 = vshrl.u32 %v286, 16
      %v1096 = vrot.slane %v1094, 4
      %v1097 = vshll.u32 %v286, 16
      %v1099 = vrot.slane %v1097, 5
      %v1100 = vor.u32 %v1096, %v1099
      %v1101 = vrot.slane %v1100, 4
      %v1103 = vshll.u32 %v287, 16
      %v1105 = vrot.slane %v1103, 5
      %v1106 = vsel %vm294, %v1101, %v1105
      %v1108 = vshrl.u32 %v288, 16
      %v1110 = vrot.slane %v1108, 4
      %v1111 = vshll.u32 %v288, 16
      %v1113 = vrot.slane %v1111, 5
      %v1114 = vor.u32 %v1110, %v1113
      %v1115 = vrot.slane %v1114, 4
      %v1117 = vshll.u32 %v289, 16
      %v1119 = vrot.slane %v1117, 5
      %v1120 = vsel %vm294, %v1115, %v1119
      %v1122 = vshrl.u32 %v290, 16
      %v1124 = vrot.slane %v1122, 4
      %v1125 = vshll.u32 %v290, 16
      %v1127 = vrot.slane %v1125, 5
      %v1128 = vor.u32 %v1124, %v1127
      %v1129 = vrot.slane %v1128, 4
      %v1131 = vshll.u32 %v291, 16
      %v1133 = vrot.slane %v1131, 5
      %v1134 = vsel %vm294, %v1129, %v1133
      %v1195 = vmax.bf16 %v172, %v308
      %v1196 = vmax.bf16 %v174, %v322
      %v1197 = vmax.bf16 %v176, %v336
      %v1198 = vmax.bf16 %v178, %v350
      %v1199 = vmax.bf16 %v180, %v364
      %v1200 = vmax.bf16 %v182, %v378
      %v1201 = vmax.bf16 %v184, %v392
      %v1202 = vmax.bf16 %v186, %v406
      %v1203 = vmax.bf16 %v188, %v420
      %v1204 = vmax.bf16 %v190, %v434
      %v1205 = vmax.bf16 %v192, %v448
      %v1206 = vmax.bf16 %v194, %v462
      %v1207 = vmax.bf16 %v196, %v476
      %v1208 = vmax.bf16 %v198, %v490
      %v1209 = vmax.bf16 %v200, %v504
      %v1210 = vmax.bf16 %v202, %v518
      %v1211 = vmax.bf16 %v204, %v532
      %v1212 = vmax.bf16 %v206, %v546
      %v1213 = vmax.bf16 %v208, %v560
      %v1214 = vmax.bf16 %v210, %v574
      %v1215 = vmax.bf16 %v212, %v588
      %v1216 = vmax.bf16 %v214, %v602
      %v1217 = vmax.bf16 %v216, %v616
      %v1218 = vmax.bf16 %v218, %v630
      %v1219 = vmax.bf16 %v220, %v644
      %v1220 = vmax.bf16 %v222, %v658
      %v1221 = vmax.bf16 %v224, %v672
      %v1222 = vmax.bf16 %v226, %v686
      %v1223 = vmax.bf16 %v228, %v700
      %v1224 = vmax.bf16 %v230, %v714
      %v1225 = vmax.bf16 %v232, %v728
      %v1226 = vmax.bf16 %v234, %v742
      %v1227 = vmax.bf16 %v236, %v756
      %v1228 = vmax.bf16 %v238, %v770
      %v1229 = vmax.bf16 %v240, %v784
      %v1230 = vmax.bf16 %v242, %v798
      %v1231 = vmax.bf16 %v244, %v812
      %v1232 = vmax.bf16 %v246, %v826
      %v1233 = vmax.bf16 %v248, %v840
      %v1234 = vmax.bf16 %v250, %v854
      %v1235 = vmax.bf16 %v252, %v868
      %v1236 = vmax.bf16 %v254, %v882
      %v1237 = vmax.bf16 %v256, %v896
      %v1238 = vmax.bf16 %v258, %v910
      %v1239 = vmax.bf16 %v260, %v924
      %v1240 = vmax.bf16 %v262, %v938
      %v1241 = vmax.bf16 %v264, %v952
      %v1242 = vmax.bf16 %v266, %v966
      %v1243 = vmax.bf16 %v268, %v980
      %v1244 = vmax.bf16 %v270, %v994
      %v1245 = vmax.bf16 %v272, %v1008
      %v1246 = vmax.bf16 %v274, %v1022
      %v1247 = vmax.bf16 %v276, %v1036
      %v1248 = vmax.bf16 %v278, %v1050
      %v1249 = vmax.bf16 %v280, %v1064
      %v1250 = vmax.bf16 %v282, %v1078
      %v1251 = vmax.bf16 %v284, %v1092
      %v1252 = vmax.bf16 %v286, %v1106
      %v1253 = vmax.bf16 %v288, %v1120
      %v1254 = vmax.bf16 %v290, %v1134
      %vm1375 = vcmask 1042432
      %vm1376 = vcmask 1046532
      %vm1377 = vmor %vm1375, %vm1376
      %v1378 = vrot.slane %v172, 5
      %v1379 = vrot.slane %v1378, 4
      %v1380 = vrot.slane %v173, 5
      %v1381 = vsel %vm1377, %v1379, %v1380
      %v1382 = vrot.slane %v174, 5
      %v1383 = vrot.slane %v1382, 4
      %v1384 = vrot.slane %v175, 5
      %v1385 = vsel %vm1377, %v1383, %v1384
      %v1386 = vrot.slane %v176, 5
      %v1387 = vrot.slane %v1386, 4
      %v1388 = vrot.slane %v177, 5
      %v1389 = vsel %vm1377, %v1387, %v1388
      %v1390 = vrot.slane %v178, 5
      %v1391 = vrot.slane %v1390, 4
      %v1392 = vrot.slane %v179, 5
      %v1393 = vsel %vm1377, %v1391, %v1392
      %v1394 = vrot.slane %v180, 5
      %v1395 = vrot.slane %v1394, 4
      %v1396 = vrot.slane %v181, 5
      %v1397 = vsel %vm1377, %v1395, %v1396
      %v1398 = vrot.slane %v182, 5
      %v1399 = vrot.slane %v1398, 4
      %v1400 = vrot.slane %v183, 5
      %v1401 = vsel %vm1377, %v1399, %v1400
      %v1402 = vrot.slane %v184, 5
      %v1403 = vrot.slane %v1402, 4
      %v1404 = vrot.slane %v185, 5
      %v1405 = vsel %vm1377, %v1403, %v1404
      %v1406 = vrot.slane %v186, 5
      %v1407 = vrot.slane %v1406, 4
      %v1408 = vrot.slane %v187, 5
      %v1409 = vsel %vm1377, %v1407, %v1408
      %v1410 = vrot.slane %v188, 5
      %v1411 = vrot.slane %v1410, 4
      %v1412 = vrot.slane %v189, 5
      %v1413 = vsel %vm1377, %v1411, %v1412
      %v1414 = vrot.slane %v190, 5
      %v1415 = vrot.slane %v1414, 4
      %v1416 = vrot.slane %v191, 5
      %v1417 = vsel %vm1377, %v1415, %v1416
      %v1418 = vrot.slane %v192, 5
      %v1419 = vrot.slane %v1418, 4
      %v1420 = vrot.slane %v193, 5
      %v1421 = vsel %vm1377, %v1419, %v1420
      %v1422 = vrot.slane %v194, 5
      %v1423 = vrot.slane %v1422, 4
      %v1424 = vrot.slane %v195, 5
      %v1425 = vsel %vm1377, %v1423, %v1424
      %v1426 = vrot.slane %v196, 5
      %v1427 = vrot.slane %v1426, 4
      %v1428 = vrot.slane %v197, 5
      %v1429 = vsel %vm1377, %v1427, %v1428
      %v1430 = vrot.slane %v198, 5
      %v1431 = vrot.slane %v1430, 4
      %v1432 = vrot.slane %v199, 5
      %v1433 = vsel %vm1377, %v1431, %v1432
      %v1434 = vrot.slane %v200, 5
      %v1435 = vrot.slane %v1434, 4
      %v1436 = vrot.slane %v201, 5
      %v1437 = vsel %vm1377, %v1435, %v1436
      %v1438 = vrot.slane %v202, 5
      %v1439 = vrot.slane %v1438, 4
      %v1440 = vrot.slane %v203, 5
      %v1441 = vsel %vm1377, %v1439, %v1440
      %v1442 = vrot.slane %v204, 5
      %v1443 = vrot.slane %v1442, 4
      %v1444 = vrot.slane %v205, 5
      %v1445 = vsel %vm1377, %v1443, %v1444
      %v1446 = vrot.slane %v206, 5
      %v1447 = vrot.slane %v1446, 4
      %v1448 = vrot.slane %v207, 5
      %v1449 = vsel %vm1377, %v1447, %v1448
      %v1450 = vrot.slane %v208, 5
      %v1451 = vrot.slane %v1450, 4
      %v1452 = vrot.slane %v209, 5
      %v1453 = vsel %vm1377, %v1451, %v1452
      %v1454 = vrot.slane %v210, 5
      %v1455 = vrot.slane %v1454, 4
      %v1456 = vrot.slane %v211, 5
      %v1457 = vsel %vm1377, %v1455, %v1456
      %v1458 = vrot.slane %v212, 5
      %v1459 = vrot.slane %v1458, 4
      %v1460 = vrot.slane %v213, 5
      %v1461 = vsel %vm1377, %v1459, %v1460
      %v1462 = vrot.slane %v214, 5
      %v1463 = vrot.slane %v1462, 4
      %v1464 = vrot.slane %v215, 5
      %v1465 = vsel %vm1377, %v1463, %v1464
      %v1466 = vrot.slane %v216, 5
      %v1467 = vrot.slane %v1466, 4
      %v1468 = vrot.slane %v217, 5
      %v1469 = vsel %vm1377, %v1467, %v1468
      %v1470 = vrot.slane %v218, 5
      %v1471 = vrot.slane %v1470, 4
      %v1472 = vrot.slane %v219, 5
      %v1473 = vsel %vm1377, %v1471, %v1472
      %v1474 = vrot.slane %v220, 5
      %v1475 = vrot.slane %v1474, 4
      %v1476 = vrot.slane %v221, 5
      %v1477 = vsel %vm1377, %v1475, %v1476
      %v1478 = vrot.slane %v222, 5
      %v1479 = vrot.slane %v1478, 4
      %v1480 = vrot.slane %v223, 5
      %v1481 = vsel %vm1377, %v1479, %v1480
      %v1482 = vrot.slane %v224, 5
      %v1483 = vrot.slane %v1482, 4
      %v1484 = vrot.slane %v225, 5
      %v1485 = vsel %vm1377, %v1483, %v1484
      %v1486 = vrot.slane %v226, 5
      %v1487 = vrot.slane %v1486, 4
      %v1488 = vrot.slane %v227, 5
      %v1489 = vsel %vm1377, %v1487, %v1488
      %v1490 = vrot.slane %v228, 5
      %v1491 = vrot.slane %v1490, 4
      %v1492 = vrot.slane %v229, 5
      %v1493 = vsel %vm1377, %v1491, %v1492
      %v1494 = vrot.slane %v230, 5
      %v1495 = vrot.slane %v1494, 4
      %v1496 = vrot.slane %v231, 5
      %v1497 = vsel %vm1377, %v1495, %v1496
      %v1498 = vrot.slane %v232, 5
      %v1499 = vrot.slane %v1498, 4
      %v1500 = vrot.slane %v233, 5
      %v1501 = vsel %vm1377, %v1499, %v1500
      %v1502 = vrot.slane %v234, 5
      %v1503 = vrot.slane %v1502, 4
      %v1504 = vrot.slane %v235, 5
      %v1505 = vsel %vm1377, %v1503, %v1504
      %v1506 = vrot.slane %v236, 5
      %v1507 = vrot.slane %v1506, 4
      %v1508 = vrot.slane %v237, 5
      %v1509 = vsel %vm1377, %v1507, %v1508
      %v1510 = vrot.slane %v238, 5
      %v1511 = vrot.slane %v1510, 4
      %v1512 = vrot.slane %v239, 5
      %v1513 = vsel %vm1377, %v1511, %v1512
      %v1514 = vrot.slane %v240, 5
      %v1515 = vrot.slane %v1514, 4
      %v1516 = vrot.slane %v241, 5
      %v1517 = vsel %vm1377, %v1515, %v1516
      %v1518 = vrot.slane %v242, 5
      %v1519 = vrot.slane %v1518, 4
      %v1520 = vrot.slane %v243, 5
      %v1521 = vsel %vm1377, %v1519, %v1520
      %v1522 = vrot.slane %v244, 5
      %v1523 = vrot.slane %v1522, 4
      %v1524 = vrot.slane %v245, 5
      %v1525 = vsel %vm1377, %v1523, %v1524
      %v1526 = vrot.slane %v246, 5
      %v1527 = vrot.slane %v1526, 4
      %v1528 = vrot.slane %v247, 5
      %v1529 = vsel %vm1377, %v1527, %v1528
      %v1530 = vrot.slane %v248, 5
      %v1531 = vrot.slane %v1530, 4
      %v1532 = vrot.slane %v249, 5
      %v1533 = vsel %vm1377, %v1531, %v1532
      %v1534 = vrot.slane %v250, 5
      %v1535 = vrot.slane %v1534, 4
      %v1536 = vrot.slane %v251, 5
      %v1537 = vsel %vm1377, %v1535, %v1536
      %v1538 = vrot.slane %v252, 5
      %v1539 = vrot.slane %v1538, 4
      %v1540 = vrot.slane %v253, 5
      %v1541 = vsel %vm1377, %v1539, %v1540
      %v1542 = vrot.slane %v254, 5
      %v1543 = vrot.slane %v1542, 4
      %v1544 = vrot.slane %v255, 5
      %v1545 = vsel %vm1377, %v1543, %v1544
      %v1546 = vrot.slane %v256, 5
      %v1547 = vrot.slane %v1546, 4
      %v1548 = vrot.slane %v257, 5
      %v1549 = vsel %vm1377, %v1547, %v1548
      %v1550 = vrot.slane %v258, 5
      %v1551 = vrot.slane %v1550, 4
      %v1552 = vrot.slane %v259, 5
      %v1553 = vsel %vm1377, %v1551, %v1552
      %v1554 = vrot.slane %v260, 5
      %v1555 = vrot.slane %v1554, 4
      %v1556 = vrot.slane %v261, 5
      %v1557 = vsel %vm1377, %v1555, %v1556
      %v1558 = vrot.slane %v262, 5
      %v1559 = vrot.slane %v1558, 4
      %v1560 = vrot.slane %v263, 5
      %v1561 = vsel %vm1377, %v1559, %v1560
      %v1562 = vrot.slane %v264, 5
      %v1563 = vrot.slane %v1562, 4
      %v1564 = vrot.slane %v265, 5
      %v1565 = vsel %vm1377, %v1563, %v1564
      %v1566 = vrot.slane %v266, 5
      %v1567 = vrot.slane %v1566, 4
      %v1568 = vrot.slane %v267, 5
      %v1569 = vsel %vm1377, %v1567, %v1568
      %v1570 = vrot.slane %v268, 5
      %v1571 = vrot.slane %v1570, 4
      %v1572 = vrot.slane %v269, 5
      %v1573 = vsel %vm1377, %v1571, %v1572
      %v1574 = vrot.slane %v270, 5
      %v1575 = vrot.slane %v1574, 4
      %v1576 = vrot.slane %v271, 5
      %v1577 = vsel %vm1377, %v1575, %v1576
      %v1578 = vrot.slane %v272, 5
      %v1579 = vrot.slane %v1578, 4
      %v1580 = vrot.slane %v273, 5
      %v1581 = vsel %vm1377, %v1579, %v1580
      %v1582 = vrot.slane %v274, 5
      %v1583 = vrot.slane %v1582, 4
      %v1584 = vrot.slane %v275, 5
      %v1585 = vsel %vm1377, %v1583, %v1584
      %v1586 = vrot.slane %v276, 5
      %v1587 = vrot.slane %v1586, 4
      %v1588 = vrot.slane %v277, 5
      %v1589 = vsel %vm1377, %v1587, %v1588
      %v1590 = vrot.slane %v278, 5
      %v1591 = vrot.slane %v1590, 4
      %v1592 = vrot.slane %v279, 5
      %v1593 = vsel %vm1377, %v1591, %v1592
      %v1594 = vrot.slane %v280, 5
      %v1595 = vrot.slane %v1594, 4
      %v1596 = vrot.slane %v281, 5
      %v1597 = vsel %vm1377, %v1595, %v1596
      %v1598 = vrot.slane %v282, 5
      %v1599 = vrot.slane %v1598, 4
      %v1600 = vrot.slane %v283, 5
      %v1601 = vsel %vm1377, %v1599, %v1600
      %v1602 = vrot.slane %v284, 5
      %v1603 = vrot.slane %v1602, 4
      %v1604 = vrot.slane %v285, 5
      %v1605 = vsel %vm1377, %v1603, %v1604
      %v1606 = vrot.slane %v286, 5
      %v1607 = vrot.slane %v1606, 4
      %v1608 = vrot.slane %v287, 5
      %v1609 = vsel %vm1377, %v1607, %v1608
      %v1610 = vrot.slane %v288, 5
      %v1611 = vrot.slane %v1610, 4
      %v1612 = vrot.slane %v289, 5
      %v1613 = vsel %vm1377, %v1611, %v1612
      %v1614 = vrot.slane %v290, 5
      %v1615 = vrot.slane %v1614, 4
      %v1616 = vrot.slane %v291, 5
      %v1617 = vsel %vm1377, %v1615, %v1616
      %v1678 = vmax.bf16 %v1195, %v1381
      %v1679 = vmax.bf16 %v1196, %v1385
      %v1680 = vmax.bf16 %v1197, %v1389
      %v1681 = vmax.bf16 %v1198, %v1393
      %v1682 = vmax.bf16 %v1199, %v1397
      %v1683 = vmax.bf16 %v1200, %v1401
      %v1684 = vmax.bf16 %v1201, %v1405
      %v1685 = vmax.bf16 %v1202, %v1409
      %v1686 = vmax.bf16 %v1203, %v1413
      %v1687 = vmax.bf16 %v1204, %v1417
      %v1688 = vmax.bf16 %v1205, %v1421
      %v1689 = vmax.bf16 %v1206, %v1425
      %v1690 = vmax.bf16 %v1207, %v1429
      %v1691 = vmax.bf16 %v1208, %v1433
      %v1692 = vmax.bf16 %v1209, %v1437
      %v1693 = vmax.bf16 %v1210, %v1441
      %v1694 = vmax.bf16 %v1211, %v1445
      %v1695 = vmax.bf16 %v1212, %v1449
      %v1696 = vmax.bf16 %v1213, %v1453
      %v1697 = vmax.bf16 %v1214, %v1457
      %v1698 = vmax.bf16 %v1215, %v1461
      %v1699 = vmax.bf16 %v1216, %v1465
      %v1700 = vmax.bf16 %v1217, %v1469
      %v1701 = vmax.bf16 %v1218, %v1473
      %v1702 = vmax.bf16 %v1219, %v1477
      %v1703 = vmax.bf16 %v1220, %v1481
      %v1704 = vmax.bf16 %v1221, %v1485
      %v1705 = vmax.bf16 %v1222, %v1489
      %v1706 = vmax.bf16 %v1223, %v1493
      %v1707 = vmax.bf16 %v1224, %v1497
      %v1708 = vmax.bf16 %v1225, %v1501
      %v1709 = vmax.bf16 %v1226, %v1505
      %v1710 = vmax.bf16 %v1227, %v1509
      %v1711 = vmax.bf16 %v1228, %v1513
      %v1712 = vmax.bf16 %v1229, %v1517
      %v1713 = vmax.bf16 %v1230, %v1521
      %v1714 = vmax.bf16 %v1231, %v1525
      %v1715 = vmax.bf16 %v1232, %v1529
      %v1716 = vmax.bf16 %v1233, %v1533
      %v1717 = vmax.bf16 %v1234, %v1537
      %v1718 = vmax.bf16 %v1235, %v1541
      %v1719 = vmax.bf16 %v1236, %v1545
      %v1720 = vmax.bf16 %v1237, %v1549
      %v1721 = vmax.bf16 %v1238, %v1553
      %v1722 = vmax.bf16 %v1239, %v1557
      %v1723 = vmax.bf16 %v1240, %v1561
      %v1724 = vmax.bf16 %v1241, %v1565
      %v1725 = vmax.bf16 %v1242, %v1569
      %v1726 = vmax.bf16 %v1243, %v1573
      %v1727 = vmax.bf16 %v1244, %v1577
      %v1728 = vmax.bf16 %v1245, %v1581
      %v1729 = vmax.bf16 %v1246, %v1585
      %v1730 = vmax.bf16 %v1247, %v1589
      %v1731 = vmax.bf16 %v1248, %v1593
      %v1732 = vmax.bf16 %v1249, %v1597
      %v1733 = vmax.bf16 %v1250, %v1601
      %v1734 = vmax.bf16 %v1251, %v1605
      %v1735 = vmax.bf16 %v1252, %v1609
      %v1736 = vmax.bf16 %v1253, %v1613
      %v1737 = vmax.bf16 %v1254, %v1617
      %v1738 = vmax.bf16 %v1678, %v1679
      %v1739 = vmax.bf16 %v1679, %v1680
      %v1740 = vmax.bf16 %v1680, %v1681
      %v1741 = vmax.bf16 %v1681, %v1682
      %v1742 = vmax.bf16 %v1682, %v1683
      %v1743 = vmax.bf16 %v1683, %v1684
      %v1744 = vmax.bf16 %v1684, %v1685
      %v1745 = vmax.bf16 %v1685, %v1686
      %v1746 = vmax.bf16 %v1688, %v1689
      %v1747 = vmax.bf16 %v1689, %v1690
      %v1748 = vmax.bf16 %v1690, %v1691
      %v1749 = vmax.bf16 %v1691, %v1692
      %v1750 = vmax.bf16 %v1692, %v1693
      %v1751 = vmax.bf16 %v1693, %v1694
      %v1752 = vmax.bf16 %v1694, %v1695
      %v1753 = vmax.bf16 %v1695, %v1696
      %v1754 = vmax.bf16 %v1698, %v1699
      %v1755 = vmax.bf16 %v1699, %v1700
      %v1756 = vmax.bf16 %v1700, %v1701
      %v1757 = vmax.bf16 %v1701, %v1702
      %v1758 = vmax.bf16 %v1702, %v1703
      %v1759 = vmax.bf16 %v1703, %v1704
      %v1760 = vmax.bf16 %v1704, %v1705
      %v1761 = vmax.bf16 %v1705, %v1706
      %v1762 = vmax.bf16 %v1708, %v1709
      %v1763 = vmax.bf16 %v1709, %v1710
      %v1764 = vmax.bf16 %v1710, %v1711
      %v1765 = vmax.bf16 %v1711, %v1712
      %v1766 = vmax.bf16 %v1712, %v1713
      %v1767 = vmax.bf16 %v1713, %v1714
      %v1768 = vmax.bf16 %v1714, %v1715
      %v1769 = vmax.bf16 %v1715, %v1716
      %v1770 = vmax.bf16 %v1718, %v1719
      %v1771 = vmax.bf16 %v1719, %v1720
      %v1772 = vmax.bf16 %v1720, %v1721
      %v1773 = vmax.bf16 %v1721, %v1722
      %v1774 = vmax.bf16 %v1722, %v1723
      %v1775 = vmax.bf16 %v1723, %v1724
      %v1776 = vmax.bf16 %v1724, %v1725
      %v1777 = vmax.bf16 %v1725, %v1726
      %v1778 = vmax.bf16 %v1728, %v1729
      %v1779 = vmax.bf16 %v1729, %v1730
      %v1780 = vmax.bf16 %v1730, %v1731
      %v1781 = vmax.bf16 %v1731, %v1732
      %v1782 = vmax.bf16 %v1732, %v1733
      %v1783 = vmax.bf16 %v1733, %v1734
      %v1784 = vmax.bf16 %v1734, %v1735
      %v1785 = vmax.bf16 %v1735, %v1736
      %v1786 = vmax.bf16 %v1738, %v1680
      %v1787 = vmax.bf16 %v1739, %v1681
      %v1788 = vmax.bf16 %v1740, %v1682
      %v1789 = vmax.bf16 %v1741, %v1683
      %v1790 = vmax.bf16 %v1742, %v1684
      %v1791 = vmax.bf16 %v1743, %v1685
      %v1792 = vmax.bf16 %v1744, %v1686
      %v1793 = vmax.bf16 %v1745, %v1687
      %v1794 = vmax.bf16 %v1746, %v1690
      %v1795 = vmax.bf16 %v1747, %v1691
      %v1796 = vmax.bf16 %v1748, %v1692
      %v1797 = vmax.bf16 %v1749, %v1693
      %v1798 = vmax.bf16 %v1750, %v1694
      %v1799 = vmax.bf16 %v1751, %v1695
      %v1800 = vmax.bf16 %v1752, %v1696
      %v1801 = vmax.bf16 %v1753, %v1697
      %v1802 = vmax.bf16 %v1754, %v1700
      %v1803 = vmax.bf16 %v1755, %v1701
      %v1804 = vmax.bf16 %v1756, %v1702
      %v1805 = vmax.bf16 %v1757, %v1703
      %v1806 = vmax.bf16 %v1758, %v1704
      %v1807 = vmax.bf16 %v1759, %v1705
      %v1808 = vmax.bf16 %v1760, %v1706
      %v1809 = vmax.bf16 %v1761, %v1707
      %v1810 = vmax.bf16 %v1762, %v1710
      %v1811 = vmax.bf16 %v1763, %v1711
      %v1812 = vmax.bf16 %v1764, %v1712
      %v1813 = vmax.bf16 %v1765, %v1713
      %v1814 = vmax.bf16 %v1766, %v1714
      %v1815 = vmax.bf16 %v1767, %v1715
      %v1816 = vmax.bf16 %v1768, %v1716
      %v1817 = vmax.bf16 %v1769, %v1717
      %v1818 = vmax.bf16 %v1770, %v1720
      %v1819 = vmax.bf16 %v1771, %v1721
      %v1820 = vmax.bf16 %v1772, %v1722
      %v1821 = vmax.bf16 %v1773, %v1723
      %v1822 = vmax.bf16 %v1774, %v1724
      %v1823 = vmax.bf16 %v1775, %v1725
      %v1824 = vmax.bf16 %v1776, %v1726
      %v1825 = vmax.bf16 %v1777, %v1727
      %v1826 = vmax.bf16 %v1778, %v1730
      %v1827 = vmax.bf16 %v1779, %v1731
      %v1828 = vmax.bf16 %v1780, %v1732
      %v1829 = vmax.bf16 %v1781, %v1733
      %v1830 = vmax.bf16 %v1782, %v1734
      %v1831 = vmax.bf16 %v1783, %v1735
      %v1832 = vmax.bf16 %v1784, %v1736
      %v1833 = vmax.bf16 %v1785, %v1737
      %v1834 = vmax.bf16 %v1786, %v1794
      %v1835 = vmax.bf16 %v1787, %v1795
      %v1836 = vmax.bf16 %v1788, %v1796
      %v1837 = vmax.bf16 %v1789, %v1797
      %v1838 = vmax.bf16 %v1790, %v1798
      %v1839 = vmax.bf16 %v1791, %v1799
      %v1840 = vmax.bf16 %v1792, %v1800
      %v1841 = vmax.bf16 %v1793, %v1801
      %v1842 = vmax.bf16 %v1794, %v1802
      %v1843 = vmax.bf16 %v1795, %v1803
      %v1844 = vmax.bf16 %v1796, %v1804
      %v1845 = vmax.bf16 %v1797, %v1805
      %v1846 = vmax.bf16 %v1798, %v1806
      %v1847 = vmax.bf16 %v1799, %v1807
      %v1848 = vmax.bf16 %v1800, %v1808
      %v1849 = vmax.bf16 %v1801, %v1809
      %v1850 = vmax.bf16 %v1802, %v1810
      %v1851 = vmax.bf16 %v1803, %v1811
      %v1852 = vmax.bf16 %v1804, %v1812
      %v1853 = vmax.bf16 %v1805, %v1813
      %v1854 = vmax.bf16 %v1806, %v1814
      %v1855 = vmax.bf16 %v1807, %v1815
      %v1856 = vmax.bf16 %v1808, %v1816
      %v1857 = vmax.bf16 %v1809, %v1817
      %v1858 = vmax.bf16 %v1810, %v1818
      %v1859 = vmax.bf16 %v1811, %v1819
      %v1860 = vmax.bf16 %v1812, %v1820
      %v1861 = vmax.bf16 %v1813, %v1821
      %v1862 = vmax.bf16 %v1814, %v1822
      %v1863 = vmax.bf16 %v1815, %v1823
      %v1864 = vmax.bf16 %v1816, %v1824
      %v1865 = vmax.bf16 %v1817, %v1825
      %v1866 = vmax.bf16 %v1834, %v1802
      %v1867 = vmax.bf16 %v1835, %v1803
      %v1868 = vmax.bf16 %v1836, %v1804
      %v1869 = vmax.bf16 %v1837, %v1805
      %v1870 = vmax.bf16 %v1838, %v1806
      %v1871 = vmax.bf16 %v1839, %v1807
      %v1872 = vmax.bf16 %v1840, %v1808
      %v1873 = vmax.bf16 %v1841, %v1809
      %v1874 = vmax.bf16 %v1842, %v1810
      %v1875 = vmax.bf16 %v1843, %v1811
      %v1876 = vmax.bf16 %v1844, %v1812
      %v1877 = vmax.bf16 %v1845, %v1813
      %v1878 = vmax.bf16 %v1846, %v1814
      %v1879 = vmax.bf16 %v1847, %v1815
      %v1880 = vmax.bf16 %v1848, %v1816
      %v1881 = vmax.bf16 %v1849, %v1817
      %v1882 = vmax.bf16 %v1850, %v1818
      %v1883 = vmax.bf16 %v1851, %v1819
      %v1884 = vmax.bf16 %v1852, %v1820
      %v1885 = vmax.bf16 %v1853, %v1821
      %v1886 = vmax.bf16 %v1854, %v1822
      %v1887 = vmax.bf16 %v1855, %v1823
      %v1888 = vmax.bf16 %v1856, %v1824
      %v1889 = vmax.bf16 %v1857, %v1825
      %v1890 = vmax.bf16 %v1858, %v1826
      %v1891 = vmax.bf16 %v1859, %v1827
      %v1892 = vmax.bf16 %v1860, %v1828
      %v1893 = vmax.bf16 %v1861, %v1829
      %v1894 = vmax.bf16 %v1862, %v1830
      %v1895 = vmax.bf16 %v1863, %v1831
      %v1896 = vmax.bf16 %v1864, %v1832
      %v1897 = vmax.bf16 %v1865, %v1833
      %v1898 = vld [vmem:[%s1] sm:$0xf]
      %v1899 = vld [vmem:[%s1 + $0x4] sm:$0xf]
      %v1900 = vld [vmem:[%s1 + $0x8] sm:$0xf]
      %v1901 = vld [vmem:[%s1 + $0xc] sm:$0xf]
      %v1902 = vld [vmem:[%s1 + $0x10] sm:$0xf]
      %v1903 = vld [vmem:[%s1 + $0x14] sm:$0xf]
      %v1904 = vld [vmem:[%s1 + $0x18] sm:$0xf]
      %v1905 = vld [vmem:[%s1 + $0x1c] sm:$0xf]
      %v1906 = vld [vmem:[%s1 + $0x20] sm:$0xf]
      %v1907 = vld [vmem:[%s1 + $0x24] sm:$0xf]
      %v1908 = vld [vmem:[%s1 + $0x28] sm:$0xf]
      %v1909 = vld [vmem:[%s1 + $0x2c] sm:$0xf]
      %v1910 = vld [vmem:[%s1 + $0x30] sm:$0xf]
      %v1911 = vld [vmem:[%s1 + $0x34] sm:$0xf]
      %v1912 = vld [vmem:[%s1 + $0x38] sm:$0xf]
      %v1913 = vld [vmem:[%s1 + $0x3c] sm:$0xf]
      %v1914 = vld [vmem:[%s1 + $0x40] sm:$0xf]
      %v1915 = vld [vmem:[%s1 + $0x44] sm:$0xf]
      %v1916 = vld [vmem:[%s1 + $0x48] sm:$0xf]
      %v1917 = vld [vmem:[%s1 + $0x4c] sm:$0xf]
      %v1918 = vld [vmem:[%s1 + $0x50] sm:$0xf]
      %v1919 = vld [vmem:[%s1 + $0x54] sm:$0xf]
      %v1920 = vld [vmem:[%s1 + $0x58] sm:$0xf]
      %v1921 = vld [vmem:[%s1 + $0x5c] sm:$0xf]
      %v1922 = vld [vmem:[%s2] sm:$0x1]
      %v1924 = vlaneseq
      %v1925 = vshrl.u32 %v1924, 7
      %v1926 = vsub.s32 0, %v1925
      %v1927 = vrot.slane %v1922, %v1926
      %v1961 = vunpack.c.l.b16 %v1866
      %v1962 = vunpack.c.h.b16 %v1866
      %v1963 = vunpack.c.l.b16 %v1867
      %v1964 = vunpack.c.h.b16 %v1867
      %v1965 = vunpack.c.l.b16 %v1868
      %v1966 = vunpack.c.h.b16 %v1868
      %v1967 = vunpack.c.l.b16 %v1869
      %v1968 = vunpack.c.h.b16 %v1869
      %v1969 = vunpack.c.l.b16 %v1870
      %v1970 = vunpack.c.h.b16 %v1870
      %v1971 = vunpack.c.l.b16 %v1871
      %v1972 = vunpack.c.h.b16 %v1871
      %v1973 = vunpack.c.l.b16 %v1872
      %v1974 = vunpack.c.h.b16 %v1872
      %v1975 = vunpack.c.l.b16 %v1873
      %v1976 = vunpack.c.h.b16 %v1873
      %v1977 = vunpack.c.l.b16 %v1874
      %v1978 = vunpack.c.h.b16 %v1874
      %v1979 = vunpack.c.l.b16 %v1875
      %v1980 = vunpack.c.h.b16 %v1875
      %v1981 = vunpack.c.l.b16 %v1876
      %v1982 = vunpack.c.h.b16 %v1876
      %v1983 = vunpack.c.l.b16 %v1877
      %v1984 = vunpack.c.h.b16 %v1877
      %v1985 = vunpack.c.l.b16 %v1878
      %v1986 = vunpack.c.h.b16 %v1878
      %v1987 = vunpack.c.l.b16 %v1879
      %v1988 = vunpack.c.h.b16 %v1879
      %v1989 = vunpack.c.l.b16 %v1880
      %v1990 = vunpack.c.h.b16 %v1880
      %v1991 = vunpack.c.l.b16 %v1881
      %v1992 = vunpack.c.h.b16 %v1881
      %v1993 = vunpack.c.l.b16 %v1882
      %v1994 = vunpack.c.h.b16 %v1882
      %v1995 = vunpack.c.l.b16 %v1883
      %v1996 = vunpack.c.h.b16 %v1883
      %v1997 = vunpack.c.l.b16 %v1884
      %v1998 = vunpack.c.h.b16 %v1884
      %v1999 = vunpack.c.l.b16 %v1885
      %v2000 = vunpack.c.h.b16 %v1885
      %v2001 = vunpack.c.l.b16 %v1886
      %v2002 = vunpack.c.h.b16 %v1886
      %v2003 = vunpack.c.l.b16 %v1887
      %v2004 = vunpack.c.h.b16 %v1887
      %v2005 = vunpack.c.l.b16 %v1888
      %v2006 = vunpack.c.h.b16 %v1888
      %v2007 = vunpack.c.l.b16 %v1889
      %v2008 = vunpack.c.h.b16 %v1889
      %v2009 = vunpack.c.l.b16 %v1890
      %v2010 = vunpack.c.h.b16 %v1890
      %v2011 = vunpack.c.l.b16 %v1891
      %v2012 = vunpack.c.h.b16 %v1891
      %v2013 = vunpack.c.l.b16 %v1892
      %v2014 = vunpack.c.h.b16 %v1892
      %v2015 = vunpack.c.l.b16 %v1893
      %v2016 = vunpack.c.h.b16 %v1893
      %v2017 = vunpack.c.l.b16 %v1894
      %v2018 = vunpack.c.h.b16 %v1894
      %v2019 = vunpack.c.l.b16 %v1895
      %v2020 = vunpack.c.h.b16 %v1895
      %v2021 = vunpack.c.l.b16 %v1896
      %v2022 = vunpack.c.h.b16 %v1896
      %v2023 = vunpack.c.l.b16 %v1897
      %v2024 = vunpack.c.h.b16 %v1897
      %v2025 = vpack.c.b16 %v1963, %v1961
      %v2026 = vpack.c.b16 %v1964, %v1962
      %v2027 = vpack.c.b16 %v1967, %v1965
      %v2028 = vpack.c.b16 %v1968, %v1966
      %v2029 = vpack.c.b16 %v1971, %v1969
      %v2030 = vpack.c.b16 %v1972, %v1970
      %v2031 = vpack.c.b16 %v1975, %v1973
      %v2032 = vpack.c.b16 %v1976, %v1974
      %v2033 = vpack.c.b16 %v1979, %v1977
      %v2034 = vpack.c.b16 %v1980, %v1978
      %v2035 = vpack.c.b16 %v1983, %v1981
      %v2036 = vpack.c.b16 %v1984, %v1982
      %v2037 = vpack.c.b16 %v1987, %v1985
      %v2038 = vpack.c.b16 %v1988, %v1986
      %v2039 = vpack.c.b16 %v1991, %v1989
      %v2040 = vpack.c.b16 %v1992, %v1990
      %v2041 = vpack.c.b16 %v1995, %v1993
      %v2042 = vpack.c.b16 %v1996, %v1994
      %v2043 = vpack.c.b16 %v1999, %v1997
      %v2044 = vpack.c.b16 %v2000, %v1998
      %v2045 = vpack.c.b16 %v2003, %v2001
      %v2046 = vpack.c.b16 %v2004, %v2002
      %v2047 = vpack.c.b16 %v2007, %v2005
      %v2048 = vpack.c.b16 %v2008, %v2006
      %v2049 = vpack.c.b16 %v2011, %v2009
      %v2050 = vpack.c.b16 %v2012, %v2010
      %v2051 = vpack.c.b16 %v2015, %v2013
      %v2052 = vpack.c.b16 %v2016, %v2014
      %v2053 = vpack.c.b16 %v2019, %v2017
      %v2054 = vpack.c.b16 %v2020, %v2018
      %v2055 = vpack.c.b16 %v2023, %v2021
      %v2056 = vpack.c.b16 %v2024, %v2022
      %v2097 = vunpack.c.l.b16 %v1898
      %v2098 = vunpack.c.l.b16 %v1899
      %v2099 = vunpack.c.l.b16 %v1900
      %v2100 = vunpack.c.l.b16 %v1901
      %v2101 = vunpack.c.l.b16 %v1902
      %v2102 = vunpack.c.l.b16 %v1903
      %v2103 = vunpack.c.l.b16 %v1904
      %v2104 = vunpack.c.l.b16 %v1905
      %v2105 = vunpack.c.l.b16 %v1906
      %v2106 = vunpack.c.l.b16 %v1907
      %v2107 = vunpack.c.l.b16 %v1908
      %v2108 = vunpack.c.l.b16 %v1909
      %v2109 = vunpack.c.l.b16 %v1910
      %v2110 = vunpack.c.l.b16 %v1911
      %v2111 = vunpack.c.l.b16 %v1912
      %v2112 = vunpack.c.l.b16 %v1913
      %v2113 = vunpack.c.l.b16 %v1914
      %v2114 = vunpack.c.l.b16 %v1915
      %v2115 = vunpack.c.l.b16 %v1916
      %v2116 = vunpack.c.l.b16 %v1917
      %v2117 = vunpack.c.l.b16 %v1918
      %v2118 = vunpack.c.l.b16 %v1919
      %v2119 = vunpack.c.l.b16 %v1920
      %v2120 = vunpack.c.l.b16 %v1921
      %v2121 = vpack.c.b16 %v2098, %v2097
      %v2122 = vpack.c.b16 %v2100, %v2099
      %v2123 = vpack.c.b16 %v2102, %v2101
      %v2124 = vpack.c.b16 %v2104, %v2103
      %v2125 = vpack.c.b16 %v2106, %v2105
      %v2126 = vpack.c.b16 %v2108, %v2107
      %v2127 = vpack.c.b16 %v2110, %v2109
      %v2128 = vpack.c.b16 %v2112, %v2111
      %v2129 = vpack.c.b16 %v2114, %v2113
      %v2130 = vpack.c.b16 %v2116, %v2115
      %v2131 = vpack.c.b16 %v2118, %v2117
      %v2132 = vpack.c.b16 %v2120, %v2119
      %vm2145 = vcmask 523264
      %v2147 = vsel %vm2145, %v2026, 0
      %v2150 = vsel %vm2145, %v2028, 0
      %v2153 = vsel %vm2145, %v2030, 0
      %v2156 = vsel %vm2145, %v2032, 0
      %v2159 = vsel %vm2145, %v2034, 0
      %v2162 = vsel %vm2145, %v2036, 0
      %v2165 = vsel %vm2145, %v2038, 0
      %v2168 = vsel %vm2145, %v2040, 0
      %v2171 = vsel %vm2145, %v2042, 0
      %v2174 = vsel %vm2145, %v2044, 0
      %v2177 = vsel %vm2145, %v2046, 0
      %v2180 = vsel %vm2145, %v2048, 0
      %v2183 = vsel %vm2145, %v2050, 0
      %v2186 = vsel %vm2145, %v2052, 0
      %v2189 = vsel %vm2145, %v2054, 0
      %v2192 = vsel %vm2145, %v2056, 0
      %2194 = vmatprep.subr.bf16.mxu0 0
      %2195 = vmatpush1.bf16.msra.mxu0 %v2121
      %2196 = vmatprep.subr.bf16.mxu0 0
      %2197 = vmatpush1.bf16.msra.mxu0 %v2122
      %2198 = vmatprep.subr.bf16.mxu0 0
      %2199 = vmatpush1.bf16.msra.mxu0 %v2123
      %2200 = vmatprep.subr.bf16.mxu0 0
      %2201 = vmatpush1.bf16.msra.mxu0 %v2124
      %2202 = vmatprep.subr.bf16.mxu0 0
      %2203 = vmatpush1.bf16.msra.mxu0 %v2125
      %2204 = vmatprep.subr.bf16.mxu0 0
      %2205 = vmatpush1.bf16.msra.mxu0 %v2126
      %2206 = vmatprep.subr.bf16.mxu0 0
      %2207 = vmatpush1.bf16.msra.mxu0 %v2127
      %2208 = vmatprep.subr.bf16.mxu0 0
      %2209 = vmatpush1.bf16.msra.mxu0 %v2128
      %2210 = vmatprep.subr.bf16.mxu0 0
      %2211 = vmatpush1.bf16.msra.mxu0 %v2129
      %2212 = vmatprep.subr.bf16.mxu0 0
      %2213 = vmatpush1.bf16.msra.mxu0 %v2130
      %2214 = vmatprep.subr.bf16.mxu0 0
      %2215 = vmatpush1.bf16.msra.mxu0 %v2131
      %2216 = vmatprep.subr.bf16.mxu0 0
      %2217 = vmatpush1.bf16.msra.mxu0 %v2132
      %2218 = vmatprep.subr.bf16.mxu0 0
      %2219 = vmatpush1.bf16.msra.mxu0 0
      %2220 = vmatprep.subr.bf16.mxu0 0
      %2221 = vmatpush1.bf16.msra.mxu0 0
      %2222 = vmatprep.subr.bf16.mxu0 0
      %2223 = vmatpush1.bf16.msra.mxu0 0
      %2224 = vmatprep.subr.bf16.mxu0 0
      %2225 = vmatpush1.bf16.msra.mxu0 0
      %2226 = vmatprep.mubr.bf16.mxu0 %v2147
      %2227 = vmatmul.mubr.bf16.gmra.mrb[0].mxu0 %v2025
      %v2228 = vpop.f32.mrb[0].mxu0
      %v2229 = vadd.f32 %v1927, %v2228
      %v2230 = vpop.f32.mrb[0].mxu0
      %v2231 = vpop.f32.mrb[0].mxu0
      %v2232 = vadd.f32 %v1927, %v2231
      %v2233 = vpop.f32.mrb[0].mxu0
      %2234 = vmatprep.mubr.bf16.mxu0 %v2150
      %2235 = vmatmul.mubr.bf16.gmra.mrb[0].mxu0 %v2027
      %v2236 = vpop.f32.mrb[0].mxu0
      %v2237 = vadd.f32 %v1927, %v2236
      %v2238 = vpop.f32.mrb[0].mxu0
      %v2239 = vpop.f32.mrb[0].mxu0
      %v2240 = vadd.f32 %v1927, %v2239
      %v2241 = vpop.f32.mrb[0].mxu0
      %2242 = vmatprep.mubr.bf16.mxu0 %v2153
      %2243 = vmatmul.mubr.bf16.gmra.mrb[0].mxu0 %v2029
      %v2244 = vpop.f32.mrb[0].mxu0
      %v2245 = vadd.f32 %v1927, %v2244
      %v2246 = vpop.f32.mrb[0].mxu0
      %v2247 = vpop.f32.mrb[0].mxu0
      %v2248 = vadd.f32 %v1927, %v2247
      %v2249 = vpop.f32.mrb[0].mxu0
      %2250 = vmatprep.mubr.bf16.mxu0 %v2156
      %2251 = vmatmul.mubr.bf16.gmra.mrb[0].mxu0 %v2031
      %v2252 = vpop.f32.mrb[0].mxu0
      %v2253 = vadd.f32 %v1927, %v2252
      %v2254 = vpop.f32.mrb[0].mxu0
      %v2255 = vpop.f32.mrb[0].mxu0
      %v2256 = vadd.f32 %v1927, %v2255
      %v2257 = vpop.f32.mrb[0].mxu0
      %2258 = vmatprep.mubr.bf16.mxu0 %v2159
      %2259 = vmatmul.mubr.bf16.gmra.mrb[0].mxu0 %v2033
      %v2260 = vpop.f32.mrb[0].mxu0
      %v2261 = vadd.f32 %v1927, %v2260
      %v2262 = vpop.f32.mrb[0].mxu0
      %v2263 = vpop.f32.mrb[0].mxu0
      %v2264 = vadd.f32 %v1927, %v2263
      %v2265 = vpop.f32.mrb[0].mxu0
      %2266 = vmatprep.mubr.bf16.mxu0 %v2162
      %2267 = vmatmul.mubr.bf16.gmra.mrb[0].mxu0 %v2035
      %v2268 = vpop.f32.mrb[0].mxu0
      %v2269 = vadd.f32 %v1927, %v2268
      %v2270 = vpop.f32.mrb[0].mxu0
      %v2271 = vpop.f32.mrb[0].mxu0
      %v2272 = vadd.f32 %v1927, %v2271
      %v2273 = vpop.f32.mrb[0].mxu0
      %2274 = vmatprep.mubr.bf16.mxu0 %v2165
      %2275 = vmatmul.mubr.bf16.gmra.mrb[0].mxu0 %v2037
      %v2276 = vpop.f32.mrb[0].mxu0
      %v2277 = vadd.f32 %v1927, %v2276
      %v2278 = vpop.f32.mrb[0].mxu0
      %v2279 = vpop.f32.mrb[0].mxu0
      %v2280 = vadd.f32 %v1927, %v2279
      %v2281 = vpop.f32.mrb[0].mxu0
      %2282 = vmatprep.mubr.bf16.mxu0 %v2168
      %2283 = vmatmul.mubr.bf16.gmra.mrb[0].mxu0 %v2039
      %v2284 = vpop.f32.mrb[0].mxu0
      %v2285 = vadd.f32 %v1927, %v2284
      %v2286 = vpop.f32.mrb[0].mxu0
      %v2287 = vpop.f32.mrb[0].mxu0
      %v2288 = vadd.f32 %v1927, %v2287
      %v2289 = vpop.f32.mrb[0].mxu0
      %2290 = vmatprep.mubr.bf16.mxu0 %v2171
      %2291 = vmatmul.mubr.bf16.gmra.mrb[0].mxu0 %v2041
      %v2292 = vpop.f32.mrb[0].mxu0
      %v2293 = vadd.f32 %v1927, %v2292
      %v2294 = vpop.f32.mrb[0].mxu0
      %v2295 = vpop.f32.mrb[0].mxu0
      %v2296 = vadd.f32 %v1927, %v2295
      %v2297 = vpop.f32.mrb[0].mxu0
      %2298 = vmatprep.mubr.bf16.mxu0 %v2174
      %2299 = vmatmul.mubr.bf16.gmra.mrb[0].mxu0 %v2043
      %v2300 = vpop.f32.mrb[0].mxu0
      %v2301 = vadd.f32 %v1927, %v2300
      %v2302 = vpop.f32.mrb[0].mxu0
      %v2303 = vpop.f32.mrb[0].mxu0
      %v2304 = vadd.f32 %v1927, %v2303
      %v2305 = vpop.f32.mrb[0].mxu0
      %2306 = vmatprep.mubr.bf16.mxu0 %v2177
      %2307 = vmatmul.mubr.bf16.gmra.mrb[0].mxu0 %v2045
      %v2308 = vpop.f32.mrb[0].mxu0
      %v2309 = vadd.f32 %v1927, %v2308
      %v2310 = vpop.f32.mrb[0].mxu0
      %v2311 = vpop.f32.mrb[0].mxu0
      %v2312 = vadd.f32 %v1927, %v2311
      %v2313 = vpop.f32.mrb[0].mxu0
      %2314 = vmatprep.mubr.bf16.mxu0 %v2180
      %2315 = vmatmul.mubr.bf16.gmra.mrb[0].mxu0 %v2047
      %v2316 = vpop.f32.mrb[0].mxu0
      %v2317 = vadd.f32 %v1927, %v2316
      %v2318 = vpop.f32.mrb[0].mxu0
      %v2319 = vpop.f32.mrb[0].mxu0
      %v2320 = vadd.f32 %v1927, %v2319
      %v2321 = vpop.f32.mrb[0].mxu0
      %2322 = vmatprep.mubr.bf16.mxu0 %v2183
      %2323 = vmatmul.mubr.bf16.gmra.mrb[0].mxu0 %v2049
      %v2324 = vpop.f32.mrb[0].mxu0
      %v2325 = vadd.f32 %v1927, %v2324
      %v2326 = vpop.f32.mrb[0].mxu0
      %v2327 = vpop.f32.mrb[0].mxu0
      %v2328 = vadd.f32 %v1927, %v2327
      %v2329 = vpop.f32.mrb[0].mxu0
      %2330 = vmatprep.mubr.bf16.mxu0 %v2186
      %2331 = vmatmul.mubr.bf16.gmra.mrb[0].mxu0 %v2051
      %v2332 = vpop.f32.mrb[0].mxu0
      %v2333 = vadd.f32 %v1927, %v2332
      %v2334 = vpop.f32.mrb[0].mxu0
      %v2335 = vpop.f32.mrb[0].mxu0
      %v2336 = vadd.f32 %v1927, %v2335
      %v2337 = vpop.f32.mrb[0].mxu0
      %2338 = vmatprep.mubr.bf16.mxu0 %v2189
      %2339 = vmatmul.mubr.bf16.gmra.mrb[0].mxu0 %v2053
      %v2340 = vpop.f32.mrb[0].mxu0
      %v2341 = vadd.f32 %v1927, %v2340
      %v2342 = vpop.f32.mrb[0].mxu0
      %v2343 = vpop.f32.mrb[0].mxu0
      %v2344 = vadd.f32 %v1927, %v2343
      %v2345 = vpop.f32.mrb[0].mxu0
      %2346 = vmatprep.mubr.bf16.mxu0 %v2192
      %2347 = vmatmul.mubr.bf16.gmra.mrb[0].mxu0 %v2055
      %v2348 = vpop.f32.mrb[0].mxu0
      %v2349 = vadd.f32 %v1927, %v2348
      %v2350 = vpop.f32.mrb[0].mxu0
      %v2351 = vpop.f32.mrb[0].mxu0
      %v2352 = vadd.f32 %v1927, %v2351
      %v2353 = vpop.f32.mrb[0].mxu0
      %2354 = vdwg.mxu0
      %v2355 = vmax.f32 %v2229, 0.0
      %v2356 = vmax.f32 %v2232, 0.0
      %v2357 = vmax.f32 %v2237, 0.0
      %v2358 = vmax.f32 %v2240, 0.0
      %v2359 = vmax.f32 %v2245, 0.0
      %v2360 = vmax.f32 %v2248, 0.0
      %v2361 = vmax.f32 %v2253, 0.0
      %v2362 = vmax.f32 %v2256, 0.0
      %v2363 = vmax.f32 %v2261, 0.0
      %v2364 = vmax.f32 %v2264, 0.0
      %v2365 = vmax.f32 %v2269, 0.0
      %v2366 = vmax.f32 %v2272, 0.0
      %v2367 = vmax.f32 %v2277, 0.0
      %v2368 = vmax.f32 %v2280, 0.0
      %v2369 = vmax.f32 %v2285, 0.0
      %v2370 = vmax.f32 %v2288, 0.0
      %v2371 = vmax.f32 %v2293, 0.0
      %v2372 = vmax.f32 %v2296, 0.0
      %v2373 = vmax.f32 %v2301, 0.0
      %v2374 = vmax.f32 %v2304, 0.0
      %v2375 = vmax.f32 %v2309, 0.0
      %v2376 = vmax.f32 %v2312, 0.0
      %v2377 = vmax.f32 %v2317, 0.0
      %v2378 = vmax.f32 %v2320, 0.0
      %v2379 = vmax.f32 %v2325, 0.0
      %v2380 = vmax.f32 %v2328, 0.0
      %v2381 = vmax.f32 %v2333, 0.0
      %v2382 = vmax.f32 %v2336, 0.0
      %v2383 = vmax.f32 %v2341, 0.0
      %v2384 = vmax.f32 %v2344, 0.0
      %v2385 = vmax.f32 %v2349, 0.0
      %v2386 = vmax.f32 %v2352, 0.0
      %vm2387 = vcmask 261120
      %2388 = vst.msk [vmem:[%s170] sm:$0xff] %vm2387, %v2355
      %2389 = vst.msk [vmem:[%s170 + $0x8] sm:$0xff] %vm2387, %v2356
      %2390 = vst.msk [vmem:[%s170 + $0x10] sm:$0xff] %vm2387, %v2357
      %2391 = vst.msk [vmem:[%s170 + $0x18] sm:$0xff] %vm2387, %v2358
      %2392 = vst.msk [vmem:[%s170 + $0x20] sm:$0xff] %vm2387, %v2359
      %2393 = vst.msk [vmem:[%s170 + $0x28] sm:$0xff] %vm2387, %v2360
      %2394 = vst.msk [vmem:[%s170 + $0x30] sm:$0xff] %vm2387, %v2361
      %2395 = vst.msk [vmem:[%s170 + $0x38] sm:$0xff] %vm2387, %v2362
      %2396 = vst.msk [vmem:[%s170 + $0x40] sm:$0xff] %vm2387, %v2363
      %2397 = vst.msk [vmem:[%s170 + $0x48] sm:$0xff] %vm2387, %v2364
      %2398 = vst.msk [vmem:[%s170 + $0x50] sm:$0xff] %vm2387, %v2365
      %2399 = vst.msk [vmem:[%s170 + $0x58] sm:$0xff] %vm2387, %v2366
      %2400 = vst.msk [vmem:[%s170 + $0x60] sm:$0xff] %vm2387, %v2367
      %2401 = vst.msk [vmem:[%s170 + $0x68] sm:$0xff] %vm2387, %v2368
      %2402 = vst.msk [vmem:[%s170 + $0x70] sm:$0xff] %vm2387, %v2369
      %2403 = vst.msk [vmem:[%s170 + $0x78] sm:$0xff] %vm2387, %v2370
      %2404 = vst.msk [vmem:[%s170 + $0x80] sm:$0xff] %vm2387, %v2371
      %2405 = vst.msk [vmem:[%s170 + $0x88] sm:$0xff] %vm2387, %v2372
      %2406 = vst.msk [vmem:[%s170 + $0x90] sm:$0xff] %vm2387, %v2373
      %2407 = vst.msk [vmem:[%s170 + $0x98] sm:$0xff] %vm2387, %v2374
      %2408 = vst.msk [vmem:[%s170 + $0xa0] sm:$0xff] %vm2387, %v2375
      %2409 = vst.msk [vmem:[%s170 + $0xa8] sm:$0xff] %vm2387, %v2376
      %2410 = vst.msk [vmem:[%s170 + $0xb0] sm:$0xff] %vm2387, %v2377
      %2411 = vst.msk [vmem:[%s170 + $0xb8] sm:$0xff] %vm2387, %v2378
      %2412 = vst.msk [vmem:[%s170 + $0xc0] sm:$0xff] %vm2387, %v2379
      %2413 = vst.msk [vmem:[%s170 + $0xc8] sm:$0xff] %vm2387, %v2380
      %2414 = vst.msk [vmem:[%s170 + $0xd0] sm:$0xff] %vm2387, %v2381
      %2415 = vst.msk [vmem:[%s170 + $0xd8] sm:$0xff] %vm2387, %v2382
      %2416 = vst.msk [vmem:[%s170 + $0xe0] sm:$0xff] %vm2387, %v2383
      %2417 = vst.msk [vmem:[%s170 + $0xe8] sm:$0xff] %vm2387, %v2384
      %2418 = vst.msk [vmem:[%s170 + $0xf0] sm:$0xff] %vm2387, %v2385
      %2419 = vst.msk [vmem:[%s170 + $0xf8] sm:$0xff] %vm2387, %v2386
      %p2420 = scmp.lt.s32.totalorder %s14, 1
      %s2421 = scalar_select %p2420, %s14, 1
      %s2422 = smul.addr %s2421, 32
      %s2423 = smul.addr %s2422, 8
      %s2424 = scalar_lea.vmem %s3, %s2423
      // Predicated region
      $region33: #{mixed_3b_forward.7} parent=31 // pred_check
        %p2425 = pneg %p100
      $region34: #{mixed_3b_forward.7} parent=31 // pred_check_branch
        %2427 = sbr.rel (%p2425) target = $region36
      $region35: #{mixed_3b_forward.7} parent=31 // pred_region
        _
      $region36: #{mixed_3b_forward.7} parent=31 // pred_fallthru
        _
    $region32: #{mixed_3b_forward.7} parent=5 // pred_fallthru
      _
    %p2428 = scmp.le.s32.totalorder 2, %s9
    // Predicated region
    $region37: #{mixed_3b_forward.7} parent=5 // pred_check
      %p2429 = pneg %p2428
    $region38: #{mixed_3b_forward.7} parent=5 // pred_check_branch
      %2431 = sbr.rel (%p2429) target = $region40
    $region39: #{mixed_3b_forward.7} parent=5 // pred_region
      %s2432 = ssub.s32 %s9, 2
      // Predicated region
      $region41: #{mixed_3b_forward.7} parent=39 // pred_check
        %p2433 = pneg %p106
      $region42: #{mixed_3b_forward.7} parent=39 // pred_check_branch
        %2435 = sbr.rel (%p2433) target = $region44
      $region43: #{mixed_3b_forward.7} parent=39 // pred_region
        %p2436 = scmp.lt.s32.totalorder %s15, 1
        %s2437 = scalar_select %p2436, %s15, 1
        %s2438 = smul.addr %s2437, 32
        %s2439 = smul.addr %s2438, 8
        %s2440 = scalar_lea.vmem %s3, %s2439
      $region44: #{mixed_3b_forward.7} parent=39 // pred_fallthru
        _
    $region40: #{mixed_3b_forward.7} parent=5 // pred_fallthru
      _
  $region6: #{mixed_3b_forward.7} parent=0 // loop_footer
    %s13 = sadd.s32 1, %s9
  $region7: #{mixed_3b_forward.7} parent=0 // loop_footer_branch
    %8 = sbr.rel target = $region3
  $region8: #{mixed_3b_forward.7} parent=0 // loop_exit
    _

// kernel: mixed_3b_forward.6
$region0: #{mixed_3b_forward.6}
  #allocation0 [shape = 'u32[]', space=smem, size = 0x4, offset = 0x4, fixed_abs, tag = 'smem constant byte address 0x4 - core index']
  #allocation1 [shape = 'u32[144,128]{1,0:T(1,128)}', space=vmem, size = 0x12000, scoped, tag = 'internal scratch']
  %s0 = inlined_call_operand.vmem [shape: bf16[2,4,10,10,16], index: 0, kind: input, shape index: {}]
  %s1 = inlined_call_operand.vmem [shape: bf16[3,3,16,32], index: 1, kind: input, shape index: {}]
  %s2 = inlined_call_operand.vmem [shape: f32[1,32], index: 2, kind: input, shape index: {}]
  %s3 = inlined_call_operand.vmem [shape: bf16[3,32,32], index: 3, kind: input, shape index: {}]
  %s4 = inlined_call_operand.vmem [shape: f32[1,32], index: 4, kind: input, shape index: {}]
  %s5 = inlined_call_operand.vmem [shape: f32[2,4,8,8,32], index: 5, kind: output, shape index: {}]
  %s6 = sld [smem:[#allocation0]]
  $region53: #{mixed_3b_forward.6} parent=0
    _
  %s8 = ssub.s32 1, %s6
  %s9 = scalar_select 0, %s8, %s6
  loop: start=0, step=1, limit=4
  $region2: #{mixed_3b_forward.6} parent=0 // loop_pre_header
    _
  $region3: #{mixed_3b_forward.6} parent=0 // loop_header
    %s11 = sphi 0, %s15
    %p12 = scmp.ge.s32.totalorder %s11, 4
    %s21 = sphi 0, %s23
    %s24 = sphi 0, %s21
    %s25 = sphi 0, %s24
    %s41 = sphi 0, %s25
    %s45 = sphi 0, %s45
    %s47 = sphi 0, %s45
    %s48 = sphi 0, %s47
    %s62 = sphi 0, %s48
    %s66 = sphi 0, %s66
    %s68 = sphi 0, %s66
    %s69 = sphi 0, %s68
    %s83 = sphi 0, %s69
    %s87 = sphi 0, %s87
    %s89 = sphi 0, %s87
    %s90 = sphi 0, %s89
    %s104 = sphi 0, %s90
    %s108 = sphi 0, %s108
    %s110 = sphi 0, %s108
    %s111 = sphi 0, %s110
    %s125 = sphi 0, %s111
    %s131 = sphi 0, %s133
    %s134 = sphi 0, %s131
    %s135 = sphi 0, %s134
    %s151 = sphi 0, %s135
  $region4: #{mixed_3b_forward.6} parent=0 // loop_header_branch
    %14 = sbr.rel (%p12) target = $region8
  $region5: #{mixed_3b_forward.6} parent=0 // loop_body
    %s16 = ssub.s32 %s11, 1
    %s17 = ssub.s32 %s11, 2
    %s18 = sadd.s32 %s11, 1
    %s19 = ssub.s32 %s11, %s18
    %p20 = scmp.eq.s32.totalorder %s19, 0
    %s22 = sadd.s32 %s21, 1
    %s23 = scalar_select %p20, %s21, %s22
    %p26 = pneg %p20
    %p27 = scmp.eq.s32.totalorder %s11, 1
    %p28 = por %p26, %p27
    %p29 = scmp.ne.s32.totalorder %s21, %s24
    %p30 = scmp.eq.s32.totalorder %s11, 0
    %p31 = por %p29, %p30
    %p32 = scmp.ne.s32.totalorder %s21, %s24
    %p33 = scmp.eq.s32.totalorder %s16, 1
    %p34 = por %p32, %p33
    %p35 = scmp.ne.s32.totalorder %s24, %s25
    %p36 = scmp.eq.s32.totalorder %s16, 0
    %p37 = por %p35, %p36
    %p38 = scmp.ne.s32.totalorder %s24, %s25
    %p39 = scmp.eq.s32.totalorder %s17, 1
    %p40 = por %p38, %p39
    %p42 = scmp.ne.s32.totalorder %s25, %s41
    %p43 = scmp.eq.s32.totalorder %s17, 0
    %p44 = por %p42, %p43
    %s46 = sadd.s32 %s45, 1
    %p49 = scmp.eq.s32.totalorder %s11, 1
    %p50 = scmp.ne.s32.totalorder %s45, %s47
    %p51 = scmp.eq.s32.totalorder %s11, 0
    %p52 = por %p50, %p51
    %p53 = scmp.ne.s32.totalorder %s45, %s47
    %p54 = scmp.eq.s32.totalorder %s16, 1
    %p55 = por %p53, %p54
    %p56 = scmp.ne.s32.totalorder %s47, %s48
    %p57 = scmp.eq.s32.totalorder %s16, 0
    %p58 = por %p56, %p57
    %p59 = scmp.ne.s32.totalorder %s47, %s48
    %p60 = scmp.eq.s32.totalorder %s17, 1
    %p61 = por %p59, %p60
    %p63 = scmp.ne.s32.totalorder %s48, %s62
    %p64 = scmp.eq.s32.totalorder %s17, 0
    %p65 = por %p63, %p64
    %s67 = sadd.s32 %s66, 1
    %p70 = scmp.eq.s32.totalorder %s11, 1
    %p71 = scmp.ne.s32.totalorder %s66, %s68
    %p72 = scmp.eq.s32.totalorder %s11, 0
    %p73 = por %p71, %p72
    %p74 = scmp.ne.s32.totalorder %s66, %s68
    %p75 = scmp.eq.s32.totalorder %s16, 1
    %p76 = por %p74, %p75
    %p77 = scmp.ne.s32.totalorder %s68, %s69
    %p78 = scmp.eq.s32.totalorder %s16, 0
    %p79 = por %p77, %p78
    %p80 = scmp.ne.s32.totalorder %s68, %s69
    %p81 = scmp.eq.s32.totalorder %s17, 1
    %p82 = por %p80, %p81
    %p84 = scmp.ne.s32.totalorder %s69, %s83
    %p85 = scmp.eq.s32.totalorder %s17, 0
    %p86 = por %p84, %p85
    %s88 = sadd.s32 %s87, 1
    %p91 = scmp.eq.s32.totalorder %s11, 1
    %p92 = scmp.ne.s32.totalorder %s87, %s89
    %p93 = scmp.eq.s32.totalorder %s11, 0
    %p94 = por %p92, %p93
    %p95 = scmp.ne.s32.totalorder %s87, %s89
    %p96 = scmp.eq.s32.totalorder %s16, 1
    %p97 = por %p95, %p96
    %p98 = scmp.ne.s32.totalorder %s89, %s90
    %p99 = scmp.eq.s32.totalorder %s16, 0
    %p100 = por %p98, %p99
    %p101 = scmp.ne.s32.totalorder %s89, %s90
    %p102 = scmp.eq.s32.totalorder %s17, 1
    %p103 = por %p101, %p102
    %p105 = scmp.ne.s32.totalorder %s90, %s104
    %p106 = scmp.eq.s32.totalorder %s17, 0
    %p107 = por %p105, %p106
    %s109 = sadd.s32 %s108, 1
    %p112 = scmp.eq.s32.totalorder %s11, 1
    %p113 = scmp.ne.s32.totalorder %s108, %s110
    %p114 = scmp.eq.s32.totalorder %s11, 0
    %p115 = por %p113, %p114
    %p116 = scmp.ne.s32.totalorder %s108, %s110
    %p117 = scmp.eq.s32.totalorder %s16, 1
    %p118 = por %p116, %p117
    %p119 = scmp.ne.s32.totalorder %s110, %s111
    %p120 = scmp.eq.s32.totalorder %s16, 0
    %p121 = por %p119, %p120
    %p122 = scmp.ne.s32.totalorder %s110, %s111
    %p123 = scmp.eq.s32.totalorder %s17, 1
    %p124 = por %p122, %p123
    %p126 = scmp.ne.s32.totalorder %s111, %s125
    %p127 = scmp.eq.s32.totalorder %s17, 0
    %p128 = por %p126, %p127
    %s129 = ssub.s32 %s11, %s18
    %p130 = scmp.eq.s32.totalorder %s129, 0
    %s132 = sadd.s32 %s131, 1
    %s133 = scalar_select %p130, %s131, %s132
    %p136 = pneg %p130
    %p137 = scmp.eq.s32.totalorder %s11, 1
    %p138 = por %p136, %p137
    %p139 = scmp.ne.s32.totalorder %s131, %s134
    %p140 = scmp.eq.s32.totalorder %s11, 0
    %p141 = por %p139, %p140
    %p142 = scmp.ne.s32.totalorder %s131, %s134
    %p143 = scmp.eq.s32.totalorder %s16, 1
    %p144 = por %p142, %p143
    %p145 = scmp.ne.s32.totalorder %s134, %s135
    %p146 = scmp.eq.s32.totalorder %s16, 0
    %p147 = por %p145, %p146
    %p148 = scmp.ne.s32.totalorder %s134, %s135
    %p149 = scmp.eq.s32.totalorder %s17, 1
    %p150 = por %p148, %p149
    %p152 = scmp.ne.s32.totalorder %s135, %s151
    %p153 = scmp.eq.s32.totalorder %s17, 0
    %p154 = por %p152, %p153
    %p155 = scmp.le.s32.totalorder 1, %s11
    %p156 = scmp.lt.s32.totalorder %s11, 3
    %p157 = pnand %p155, %p156
    %p158 = pneg %p157
    // Predicated region
    $region9: #{mixed_3b_forward.6} parent=5 // pred_check
      _
    $region10: #{mixed_3b_forward.6} parent=5 // pred_check_branch
      %160 = sbr.rel (%p157) target = $region12
    $region11: #{mixed_3b_forward.6} parent=5 // pred_region
      %s161 = ssub.s32 %s11, 1
      // Predicated region
      $region13: #{mixed_3b_forward.6} parent=11 // pred_check
        %p162 = pneg %p58
      $region14: #{mixed_3b_forward.6} parent=11 // pred_check_branch
        %164 = sbr.rel (%p162) target = $region16
      $region15: #{mixed_3b_forward.6} parent=11 // pred_region
        _
      $region16: #{mixed_3b_forward.6} parent=11 // pred_fallthru
        _
      // Predicated region
      $region17: #{mixed_3b_forward.6} parent=11 // pred_check
        %p165 = pneg %p79
      $region18: #{mixed_3b_forward.6} parent=11 // pred_check_branch
        %167 = sbr.rel (%p165) target = $region20
      $region19: #{mixed_3b_forward.6} parent=11 // pred_region
        _
      $region20: #{mixed_3b_forward.6} parent=11 // pred_fallthru
        _
      // Predicated region
      $region21: #{mixed_3b_forward.6} parent=11 // pred_check
        %p168 = pneg %p100
      $region22: #{mixed_3b_forward.6} parent=11 // pred_check_branch
        %170 = sbr.rel (%p168) target = $region24
      $region23: #{mixed_3b_forward.6} parent=11 // pred_region
        _
      $region24: #{mixed_3b_forward.6} parent=11 // pred_fallthru
        _
      // Predicated region
      $region25: #{mixed_3b_forward.6} parent=11 // pred_check
        %p171 = pneg %p121
      $region26: #{mixed_3b_forward.6} parent=11 // pred_check_branch
        %173 = sbr.rel (%p171) target = $region28
      $region27: #{mixed_3b_forward.6} parent=11 // pred_region
        _
      $region28: #{mixed_3b_forward.6} parent=11 // pred_fallthru
        _
    $region12: #{mixed_3b_forward.6} parent=5 // pred_fallthru
      _
    %p174 = scmp.lt.s32.totalorder %s11, 2
    // Predicated region
    $region29: #{mixed_3b_forward.6} parent=5 // pred_check
      %p175 = pneg %p174
    $region30: #{mixed_3b_forward.6} parent=5 // pred_check_branch
      %177 = sbr.rel (%p175) target = $region32
    $region31: #{mixed_3b_forward.6} parent=5 // pred_region
      // Predicated region
      $region33: #{mixed_3b_forward.6} parent=31 // pred_check
        %p178 = pneg %p31
      $region34: #{mixed_3b_forward.6} parent=31 // pred_check_branch
        %180 = sbr.rel (%p178) target = $region36
      $region35: #{mixed_3b_forward.6} parent=31 // pred_region
        %p181 = scmp.lt.s32.totalorder %s11, 1
        %s182 = scalar_select %p181, %s11, 1
        %s183 = smul.addr %s182, 80
        %s184 = smul.addr %s183, 4
        %s185 = scalar_lea.vmem %s0, %s184
      $region36: #{mixed_3b_forward.6} parent=31 // pred_fallthru
        _
    $region32: #{mixed_3b_forward.6} parent=5 // pred_fallthru
      _
    %p186 = scmp.le.s32.totalorder 1, %s11
    %p187 = scmp.lt.s32.totalorder %s11, 3
    %p188 = pnand %p186, %p187
    %p189 = pneg %p188
    // Predicated region
    $region37: #{mixed_3b_forward.6} parent=5 // pred_check
      _
    $region38: #{mixed_3b_forward.6} parent=5 // pred_check_branch
      %191 = sbr.rel (%p188) target = $region40
    $region39: #{mixed_3b_forward.6} parent=5 // pred_region
      %s192 = ssub.s32 %s11, 1
      %p193 = scmp.lt.s32.totalorder %s16, 1
      %s194 = scalar_select %p193, %s16, 1
      %s195 = smul.addr %s194, 80
      %s196 = smul.addr %s195, 4
      %s197 = scalar_lea.vmem %s0, %s196
      %p198 = pneg %p37
      %p199 = pneg %p34
      %p200 = pneg %p58
      %p201 = pneg %p55
      %p202 = pneg %p79
      %p203 = pneg %p76
      %p204 = pneg %p100
      %p205 = pneg %p97
      %p206 = pneg %p121
      %p207 = pneg %p118
      %p208 = pneg %p147
      %p209 = pneg %p144
      %p210 = scmp.lt.s32.totalorder %s16, 1
      %s211 = scalar_select %p210, %s16, 1
      %s212 = smul.addr %s211, 32
      %s213 = smul.addr %s212, 8
      %s214 = scalar_lea.vmem %s5, %s213
      %p215 = scmp.lt.s32.totalorder %s16, 1
      %s216 = scalar_select %p215, %s16, 1
      %s217 = smul.addr %s216, 80
      %s218 = smul.addr %s217, 4
      %s219 = scalar_lea.vmem %s0, %s218
      %p220 = scmp.lt.s32.totalorder %s16, 1
      %s221 = scalar_select %p220, %s16, 1
      %s222 = smul.addr %s221, 32
      %s223 = smul.addr %s222, 8
      %s224 = scalar_lea.vmem %s5, %s223
      %v226 = vld [vmem:[%s219] sm:$0xf]
      %v227 = vld [vmem:[%s219 + $0x4] sm:$0x1]
      %v228 = vld [vmem:[%s219 + $0x8] sm:$0xf]
      %v229 = vld [vmem:[%s219 + $0xc] sm:$0x1]
      %v230 = vld [vmem:[%s219 + $0x10] sm:$0xf]
      %v231 = vld [vmem:[%s219 + $0x14] sm:$0x1]
      %v232 = vld [vmem:[%s219 + $0x18] sm:$0xf]
      %v233 = vld [vmem:[%s219 + $0x1c] sm:$0x1]
      %v234 = vld [vmem:[%s219 + $0x20] sm:$0xf]
      %v235 = vld [vmem:[%s219 + $0x24] sm:$0x1]
      %v236 = vld [vmem:[%s219 + $0x28] sm:$0xf]
      %v237 = vld [vmem:[%s219 + $0x2c] sm:$0x1]
      %v238 = vld [vmem:[%s219 + $0x30] sm:$0xf]
      %v239 = vld [vmem:[%s219 + $0x34] sm:$0x1]
      %v240 = vld [vmem:[%s219 + $0x38] sm:$0xf]
      %v241 = vld [vmem:[%s219 + $0x3c] sm:$0x1]
      %v242 = vld [vmem:[%s219 + $0x40] sm:$0xf]
      %v243 = vld [vmem:[%s219 + $0x44] sm:$0x1]
      %v244 = vld [vmem:[%s219 + $0x48] sm:$0xf]
      %v245 = vld [vmem:[%s219 + $0x4c] sm:$0x1]
      %v246 = vld [vmem:[%s219 + $0x50] sm:$0xf]
      %v247 = vld [vmem:[%s219 + $0x54] sm:$0x1]
      %v248 = vld [vmem:[%s219 + $0x58] sm:$0xf]
      %v249 = vld [vmem:[%s219 + $0x5c] sm:$0x1]
      %v250 = vld [vmem:[%s219 + $0x60] sm:$0xf]
      %v251 = vld [vmem:[%s219 + $0x64] sm:$0x1]
      %v252 = vld [vmem:[%s219 + $0x68] sm:$0xf]
      %v253 = vld [vmem:[%s219 + $0x6c] sm:$0x1]
      %v254 = vld [vmem:[%s219 + $0x70] sm:$0xf]
      %v255 = vld [vmem:[%s219 + $0x74] sm:$0x1]
      %v256 = vld [vmem:[%s219 + $0x78] sm:$0xf]
      %v257 = vld [vmem:[%s219 + $0x7c] sm:$0x1]
      %v258 = vld [vmem:[%s219 + $0x80] sm:$0xf]
      %v259 = vld [vmem:[%s219 + $0x84] sm:$0x1]
      %v260 = vld [vmem:[%s219 + $0x88] sm:$0xf]
      %v261 = vld [vmem:[%s219 + $0x8c] sm:$0x1]
      %v262 = vld [vmem:[%s219 + $0x90] sm:$0xf]
      %v263 = vld [vmem:[%s219 + $0x94] sm:$0x1]
      %v264 = vld [vmem:[%s219 + $0x98] sm:$0xf]
      %v265 = vld [vmem:[%s219 + $0x9c] sm:$0x1]
      %v266 = vld [vmem:[%s219 + $0xa0] sm:$0xf]
      %v267 = vld [vmem:[%s219 + $0xa4] sm:$0x1]
      %v268 = vld [vmem:[%s219 + $0xa8] sm:$0xf]
      %v269 = vld [vmem:[%s219 + $0xac] sm:$0x1]
      %v270 = vld [vmem:[%s219 + $0xb0] sm:$0xf]
      %v271 = vld [vmem:[%s219 + $0xb4] sm:$0x1]
      %v272 = vld [vmem:[%s219 + $0xb8] sm:$0xf]
      %v273 = vld [vmem:[%s219 + $0xbc] sm:$0x1]
      %v274 = vld [vmem:[%s219 + $0xc0] sm:$0xf]
      %v275 = vld [vmem:[%s219 + $0xc4] sm:$0x1]
      %v276 = vld [vmem:[%s219 + $0xc8] sm:$0xf]
      %v277 = vld [vmem:[%s219 + $0xcc] sm:$0x1]
      %v278 = vld [vmem:[%s219 + $0xd0] sm:$0xf]
      %v279 = vld [vmem:[%s219 + $0xd4] sm:$0x1]
      %v280 = vld [vmem:[%s219 + $0xd8] sm:$0xf]
      %v281 = vld [vmem:[%s219 + $0xdc] sm:$0x1]
      %v282 = vld [vmem:[%s219 + $0xe0] sm:$0xf]
      %v283 = vld [vmem:[%s219 + $0xe4] sm:$0x1]
      %v284 = vld [vmem:[%s219 + $0xe8] sm:$0xf]
      %v285 = vld [vmem:[%s219 + $0xec] sm:$0x1]
      %v286 = vld [vmem:[%s219 + $0xf0] sm:$0xf]
      %v287 = vld [vmem:[%s219 + $0xf4] sm:$0x1]
      %v288 = vld [vmem:[%s219 + $0xf8] sm:$0xf]
      %v289 = vld [vmem:[%s219 + $0xfc] sm:$0x1]
      %v290 = vld [vmem:[%s219 + $0x100] sm:$0xf]
      %v291 = vld [vmem:[%s219 + $0x104] sm:$0x1]
      %v292 = vld [vmem:[%s219 + $0x108] sm:$0xf]
      %v293 = vld [vmem:[%s219 + $0x10c] sm:$0x1]
      %v294 = vld [vmem:[%s219 + $0x110] sm:$0xf]
      %v295 = vld [vmem:[%s219 + $0x114] sm:$0x1]
      %v296 = vld [vmem:[%s219 + $0x118] sm:$0xf]
      %v297 = vld [vmem:[%s219 + $0x11c] sm:$0x1]
      %v298 = vld [vmem:[%s219 + $0x120] sm:$0xf]
      %v299 = vld [vmem:[%s219 + $0x124] sm:$0x1]
      %v300 = vld [vmem:[%s219 + $0x128] sm:$0xf]
      %v301 = vld [vmem:[%s219 + $0x12c] sm:$0x1]
      %v302 = vld [vmem:[%s219 + $0x130] sm:$0xf]
      %v303 = vld [vmem:[%s219 + $0x134] sm:$0x1]
      %v304 = vld [vmem:[%s219 + $0x138] sm:$0xf]
      %v305 = vld [vmem:[%s219 + $0x13c] sm:$0x1]
      %v306 = vld [vmem:[%s1] sm:$0xf]
      %v307 = vld [vmem:[%s1 + $0x4] sm:$0xf]
      %vm308 = vsmask.f32 3328
      %vm309 = vsmask.f32 7440
      %vm310 = vmor %vm308, %vm309
      %v312 = vshrl.u32 %v226, 16
      %v314 = vrot.slane %v312, 4
      %v315 = vshll.u32 %v226, 16
      %v317 = vrot.slane %v315, 5
      %v318 = vor.u32 %v314, %v317
      %v319 = vrot.slane %v318, 4
      %v321 = vshll.u32 %v227, 16
      %v323 = vrot.slane %v321, 5
      %v324 = vsel %vm310, %v319, %v323
      %v326 = vshrl.u32 %v228, 16
      %v328 = vrot.slane %v326, 4
      %v329 = vshll.u32 %v228, 16
      %v331 = vrot.slane %v329, 5
      %v332 = vor.u32 %v328, %v331
      %v333 = vrot.slane %v332, 4
      %v335 = vshll.u32 %v229, 16
      %v337 = vrot.slane %v335, 5
      %v338 = vsel %vm310, %v333, %v337
      %v340 = vshrl.u32 %v230, 16
      %v342 = vrot.slane %v340, 4
      %v343 = vshll.u32 %v230, 16
      %v345 = vrot.slane %v343, 5
      %v346 = vor.u32 %v342, %v345
      %v347 = vrot.slane %v346, 4
      %v349 = vshll.u32 %v231, 16
      %v351 = vrot.slane %v349, 5
      %v352 = vsel %vm310, %v347, %v351
      %v354 = vshrl.u32 %v232, 16
      %v356 = vrot.slane %v354, 4
      %v357 = vshll.u32 %v232, 16
      %v359 = vrot.slane %v357, 5
      %v360 = vor.u32 %v356, %v359
      %v361 = vrot.slane %v360, 4
      %v363 = vshll.u32 %v233, 16
      %v365 = vrot.slane %v363, 5
      %v366 = vsel %vm310, %v361, %v365
      %v368 = vshrl.u32 %v234, 16
      %v370 = vrot.slane %v368, 4
      %v371 = vshll.u32 %v234, 16
      %v373 = vrot.slane %v371, 5
      %v374 = vor.u32 %v370, %v373
      %v375 = vrot.slane %v374, 4
      %v377 = vshll.u32 %v235, 16
      %v379 = vrot.slane %v377, 5
      %v380 = vsel %vm310, %v375, %v379
      %v382 = vshrl.u32 %v236, 16
      %v384 = vrot.slane %v382, 4
      %v385 = vshll.u32 %v236, 16
      %v387 = vrot.slane %v385, 5
      %v388 = vor.u32 %v384, %v387
      %v389 = vrot.slane %v388, 4
      %v391 = vshll.u32 %v237, 16
      %v393 = vrot.slane %v391, 5
      %v394 = vsel %vm310, %v389, %v393
      %v396 = vshrl.u32 %v238, 16
      %v398 = vrot.slane %v396, 4
      %v399 = vshll.u32 %v238, 16
      %v401 = vrot.slane %v399, 5
      %v402 = vor.u32 %v398, %v401
      %v403 = vrot.slane %v402, 4
      %v405 = vshll.u32 %v239, 16
      %v407 = vrot.slane %v405, 5
      %v408 = vsel %vm310, %v403, %v407
      %v410 = vshrl.u32 %v240, 16
      %v412 = vrot.slane %v410, 4
      %v413 = vshll.u32 %v240, 16
      %v415 = vrot.slane %v413, 5
      %v416 = vor.u32 %v412, %v415
      %v417 = vrot.slane %v416, 4
      %v419 = vshll.u32 %v241, 16
      %v421 = vrot.slane %v419, 5
      %v422 = vsel %vm310, %v417, %v421
      %v424 = vshrl.u32 %v246, 16
      %v426 = vrot.slane %v424, 4
      %v427 = vshll.u32 %v246, 16
      %v429 = vrot.slane %v427, 5
      %v430 = vor.u32 %v426, %v429
      %v431 = vrot.slane %v430, 4
      %v433 = vshll.u32 %v247, 16
      %v435 = vrot.slane %v433, 5
      %v436 = vsel %vm310, %v431, %v435
      %v438 = vshrl.u32 %v248, 16
      %v440 = vrot.slane %v438, 4
      %v441 = vshll.u32 %v248, 16
      %v443 = vrot.slane %v441, 5
      %v444 = vor.u32 %v440, %v443
      %v445 = vrot.slane %v444, 4
      %v447 = vshll.u32 %v249, 16
      %v449 = vrot.slane %v447, 5
      %v450 = vsel %vm310, %v445, %v449
      %v452 = vshrl.u32 %v250, 16
      %v454 = vrot.slane %v452, 4
      %v455 = vshll.u32 %v250, 16
      %v457 = vrot.slane %v455, 5
      %v458 = vor.u32 %v454, %v457
      %v459 = vrot.slane %v458, 4
      %v461 = vshll.u32 %v251, 16
      %v463 = vrot.slane %v461, 5
      %v464 = vsel %vm310, %v459, %v463
      %v466 = vshrl.u32 %v252, 16
      %v468 = vrot.slane %v466, 4
      %v469 = vshll.u32 %v252, 16
      %v471 = vrot.slane %v469, 5
      %v472 = vor.u32 %v468, %v471
      %v473 = vrot.slane %v472, 4
      %v475 = vshll.u32 %v253, 16
      %v477 = vrot.slane %v475, 5
      %v478 = vsel %vm310, %v473, %v477
      %v480 = vshrl.u32 %v254, 16
      %v482 = vrot.slane %v480, 4
      %v483 = vshll.u32 %v254, 16
      %v485 = vrot.slane %v483, 5
      %v486 = vor.u32 %v482, %v485
      %v487 = vrot.slane %v486, 4
      %v489 = vshll.u32 %v255, 16
      %v491 = vrot.slane %v489, 5
      %v492 = vsel %vm310, %v487, %v491
      %v494 = vshrl.u32 %v256, 16
      %v496 = vrot.slane %v494, 4
      %v497 = vshll.u32 %v256, 16
      %v499 = vrot.slane %v497, 5
      %v500 = vor.u32 %v496, %v499
      %v501 = vrot.slane %v500, 4
      %v503 = vshll.u32 %v257, 16
      %v505 = vrot.slane %v503, 5
      %v506 = vsel %vm310, %v501, %v505
      %v508 = vshrl.u32 %v258, 16
      %v510 = vrot.slane %v508, 4
      %v511 = vshll.u32 %v258, 16
      %v513 = vrot.slane %v511, 5
      %v514 = vor.u32 %v510, %v513
      %v515 = vrot.slane %v514, 4
      %v517 = vshll.u32 %v259, 16
      %v519 = vrot.slane %v517, 5
      %v520 = vsel %vm310, %v515, %v519
      %v522 = vshrl.u32 %v260, 16
      %v524 = vrot.slane %v522, 4
      %v525 = vshll.u32 %v260, 16
      %v527 = vrot.slane %v525, 5
      %v528 = vor.u32 %v524, %v527
      %v529 = vrot.slane %v528, 4
      %v531 = vshll.u32 %v261, 16
      %v533 = vrot.slane %v531, 5
      %v534 = vsel %vm310, %v529, %v533
      %v536 = vshrl.u32 %v266, 16
      %v538 = vrot.slane %v536, 4
      %v539 = vshll.u32 %v266, 16
      %v541 = vrot.slane %v539, 5
      %v542 = vor.u32 %v538, %v541
      %v543 = vrot.slane %v542, 4
      %v545 = vshll.u32 %v267, 16
      %v547 = vrot.slane %v545, 5
      %v548 = vsel %vm310, %v543, %v547
      %v550 = vshrl.u32 %v268, 16
      %v552 = vrot.slane %v550, 4
      %v553 = vshll.u32 %v268, 16
      %v555 = vrot.slane %v553, 5
      %v556 = vor.u32 %v552, %v555
      %v557 = vrot.slane %v556, 4
      %v559 = vshll.u32 %v269, 16
      %v561 = vrot.slane %v559, 5
      %v562 = vsel %vm310, %v557, %v561
      %v564 = vshrl.u32 %v270, 16
      %v566 = vrot.slane %v564, 4
      %v567 = vshll.u32 %v270, 16
      %v569 = vrot.slane %v567, 5
      %v570 = vor.u32 %v566, %v569
      %v571 = vrot.slane %v570, 4
      %v573 = vshll.u32 %v271, 16
      %v575 = vrot.slane %v573, 5
      %v576 = vsel %vm310, %v571, %v575
      %v578 = vshrl.u32 %v272, 16
      %v580 = vrot.slane %v578, 4
      %v581 = vshll.u32 %v272, 16
      %v583 = vrot.slane %v581, 5
      %v584 = vor.u32 %v580, %v583
      %v585 = vrot.slane %v584, 4
      %v587 = vshll.u32 %v273, 16
      %v589 = vrot.slane %v587, 5
      %v590 = vsel %vm310, %v585, %v589
      %v592 = vshrl.u32 %v274, 16
      %v594 = vrot.slane %v592, 4
      %v595 = vshll.u32 %v274, 16
      %v597 = vrot.slane %v595, 5
      %v598 = vor.u32 %v594, %v597
      %v599 = vrot.slane %v598, 4
      %v601 = vshll.u32 %v275, 16
      %v603 = vrot.slane %v601, 5
      %v604 = vsel %vm310, %v599, %v603
      %v606 = vshrl.u32 %v276, 16
      %v608 = vrot.slane %v606, 4
      %v609 = vshll.u32 %v276, 16
      %v611 = vrot.slane %v609, 5
      %v612 = vor.u32 %v608, %v611
      %v613 = vrot.slane %v612, 4
      %v615 = vshll.u32 %v277, 16
      %v617 = vrot.slane %v615, 5
      %v618 = vsel %vm310, %v613, %v617
      %v620 = vshrl.u32 %v278, 16
      %v622 = vrot.slane %v620, 4
      %v623 = vshll.u32 %v278, 16
      %v625 = vrot.slane %v623, 5
      %v626 = vor.u32 %v622, %v625
      %v627 = vrot.slane %v626, 4
      %v629 = vshll.u32 %v279, 16
      %v631 = vrot.slane %v629, 5
      %v632 = vsel %vm310, %v627, %v631
      %v634 = vshrl.u32 %v280, 16
      %v636 = vrot.slane %v634, 4
      %v637 = vshll.u32 %v280, 16
      %v639 = vrot.slane %v637, 5
      %v640 = vor.u32 %v636, %v639
      %v641 = vrot.slane %v640, 4
      %v643 = vshll.u32 %v281, 16
      %v645 = vrot.slane %v643, 5
      %v646 = vsel %vm310, %v641, %v645
      %v648 = vshrl.u32 %v286, 16
      %v650 = vrot.slane %v648, 4
      %v651 = vshll.u32 %v286, 16
      %v653 = vrot.slane %v651, 5
      %v654 = vor.u32 %v650, %v653
      %v655 = vrot.slane %v654, 4
      %v657 = vshll.u32 %v287, 16
      %v659 = vrot.slane %v657, 5
      %v660 = vsel %vm310, %v655, %v659
      %v662 = vshrl.u32 %v288, 16
      %v664 = vrot.slane %v662, 4
      %v665 = vshll.u32 %v288, 16
      %v667 = vrot.slane %v665, 5
      %v668 = vor.u32 %v664, %v667
      %v669 = vrot.slane %v668, 4
      %v671 = vshll.u32 %v289, 16
      %v673 = vrot.slane %v671, 5
      %v674 = vsel %vm310, %v669, %v673
      %v676 = vshrl.u32 %v290, 16
      %v678 = vrot.slane %v676, 4
      %v679 = vshll.u32 %v290, 16
      %v681 = vrot.slane %v679, 5
      %v682 = vor.u32 %v678, %v681
      %v683 = vrot.slane %v682, 4
      %v685 = vshll.u32 %v291, 16
      %v687 = vrot.slane %v685, 5
      %v688 = vsel %vm310, %v683, %v687
      %v690 = vshrl.u32 %v292, 16
      %v692 = vrot.slane %v690, 4
      %v693 = vshll.u32 %v292, 16
      %v695 = vrot.slane %v693, 5
      %v696 = vor.u32 %v692, %v695
      %v697 = vrot.slane %v696, 4
      %v699 = vshll.u32 %v293, 16
      %v701 = vrot.slane %v699, 5
      %v702 = vsel %vm310, %v697, %v701
      %v704 = vshrl.u32 %v294, 16
      %v706 = vrot.slane %v704, 4
      %v707 = vshll.u32 %v294, 16
      %v709 = vrot.slane %v707, 5
      %v710 = vor.u32 %v706, %v709
      %v711 = vrot.slane %v710, 4
      %v713 = vshll.u32 %v295, 16
      %v715 = vrot.slane %v713, 5
      %v716 = vsel %vm310, %v711, %v715
      %v718 = vshrl.u32 %v296, 16
      %v720 = vrot.slane %v718, 4
      %v721 = vshll.u32 %v296, 16
      %v723 = vrot.slane %v721, 5
      %v724 = vor.u32 %v720, %v723
      %v725 = vrot.slane %v724, 4
      %v727 = vshll.u32 %v297, 16
      %v729 = vrot.slane %v727, 5
      %v730 = vsel %vm310, %v725, %v729
      %v732 = vshrl.u32 %v298, 16
      %v734 = vrot.slane %v732, 4
      %v735 = vshll.u32 %v298, 16
      %v737 = vrot.slane %v735, 5
      %v738 = vor.u32 %v734, %v737
      %v739 = vrot.slane %v738, 4
      %v741 = vshll.u32 %v299, 16
      %v743 = vrot.slane %v741, 5
      %v744 = vsel %vm310, %v739, %v743
      %v746 = vshrl.u32 %v300, 16
      %v748 = vrot.slane %v746, 4
      %v749 = vshll.u32 %v300, 16
      %v751 = vrot.slane %v749, 5
      %v752 = vor.u32 %v748, %v751
      %v753 = vrot.slane %v752, 4
      %v755 = vshll.u32 %v301, 16
      %v757 = vrot.slane %v755, 5
      %v758 = vsel %vm310, %v753, %v757
      %s759 = scalar_lea.vmem %s1, 8
      %v760 = vld [vmem:[%s759] sm:$0xf]
      %v761 = vld [vmem:[%s759 + $0x4] sm:$0xf]
      %v762 = vunpack.c.l.b16 %v324
      %v763 = vunpack.c.l.b16 %v338
      %v764 = vunpack.c.l.b16 %v352
      %v765 = vunpack.c.l.b16 %v366
      %v766 = vunpack.c.l.b16 %v380
      %v767 = vunpack.c.l.b16 %v394
      %v768 = vunpack.c.l.b16 %v408
      %v769 = vunpack.c.l.b16 %v422
      %v770 = vunpack.c.l.b16 %v436
      %v771 = vunpack.c.l.b16 %v450
      %v772 = vunpack.c.l.b16 %v464
      %v773 = vunpack.c.l.b16 %v478
      %v774 = vunpack.c.l.b16 %v492
      %v775 = vunpack.c.l.b16 %v506
      %v776 = vunpack.c.l.b16 %v520
      %v777 = vunpack.c.l.b16 %v534
      %v778 = vunpack.c.l.b16 %v548
      %v779 = vunpack.c.l.b16 %v562
      %v780 = vunpack.c.l.b16 %v576
      %v781 = vunpack.c.l.b16 %v590
      %v782 = vunpack.c.l.b16 %v604
      %v783 = vunpack.c.l.b16 %v618
      %v784 = vunpack.c.l.b16 %v632
      %v785 = vunpack.c.l.b16 %v646
      %v786 = vunpack.c.l.b16 %v660
      %v787 = vunpack.c.l.b16 %v674
      %v788 = vunpack.c.l.b16 %v688
      %v789 = vunpack.c.l.b16 %v702
      %v790 = vunpack.c.l.b16 %v716
      %v791 = vunpack.c.l.b16 %v730
      %v792 = vunpack.c.l.b16 %v744
      %v793 = vunpack.c.l.b16 %v758
      %v794 = vpack.c.b16 %v763, %v762
      %v795 = vpack.c.b16 %v765, %v764
      %v796 = vpack.c.b16 %v767, %v766
      %v797 = vpack.c.b16 %v769, %v768
      %v798 = vpack.c.b16 %v771, %v770
      %v799 = vpack.c.b16 %v773, %v772
      %v800 = vpack.c.b16 %v775, %v774
      %v801 = vpack.c.b16 %v777, %v776
      %v802 = vpack.c.b16 %v779, %v778
      %v803 = vpack.c.b16 %v781, %v780
      %v804 = vpack.c.b16 %v783, %v782
      %v805 = vpack.c.b16 %v785, %v784
      %v806 = vpack.c.b16 %v787, %v786
      %v807 = vpack.c.b16 %v789, %v788
      %v808 = vpack.c.b16 %v791, %v790
      %v809 = vpack.c.b16 %v793, %v792
      %v812 = vunpack.c.l.b16 %v760
      %v813 = vunpack.c.l.b16 %v761
      %v814 = vpack.c.b16 %v813, %v812
      %vm816 = vcmask 130048
      %v818 = vsel %vm816, %v794, 0
      %v821 = vsel %vm816, %v795, 0
      %v824 = vsel %vm816, %v796, 0
      %v827 = vsel %vm816, %v797, 0
      %v830 = vsel %vm816, %v798, 0
      %v833 = vsel %vm816, %v799, 0
      %v836 = vsel %vm816, %v800, 0
      %v839 = vsel %vm816, %v801, 0
      %v842 = vsel %vm816, %v802, 0
      %v845 = vsel %vm816, %v803, 0
      %v848 = vsel %vm816, %v804, 0
      %v851 = vsel %vm816, %v805, 0
      %v854 = vsel %vm816, %v806, 0
      %v857 = vsel %vm816, %v807, 0
      %v860 = vsel %vm816, %v808, 0
      %v863 = vsel %vm816, %v809, 0
      %865 = vmatprep.subr.bf16.mxu0 0
      %866 = vmatpush1.bf16.msra.mxu0 %v814
      %867 = vmatprep.subr.bf16.mxu0 0
      %868 = vmatpush1.bf16.msra.mxu0 0
      %869 = vmatprep.subr.bf16.mxu0 0
      %870 = vmatpush1.bf16.msra.mxu0 0
      %871 = vmatprep.subr.bf16.mxu0 0
      %872 = vmatpush1.bf16.msra.mxu0 0
      %873 = vmatprep.subr.bf16.mxu0 0
      %874 = vmatpush1.bf16.msra.mxu0 0
      %875 = vmatprep.subr.bf16.mxu0 0
      %876 = vmatpush1.bf16.msra.mxu0 0
      %877 = vmatprep.subr.bf16.mxu0 0
      %878 = vmatpush1.bf16.msra.mxu0 0
      %879 = vmatprep.subr.bf16.mxu0 0
      %880 = vmatpush1.bf16.msra.mxu0 0
      %881 = vmatprep.subr.bf16.mxu0 0
      %882 = vmatpush1.bf16.msra.mxu0 0
      %883 = vmatprep.subr.bf16.mxu0 0
      %884 = vmatpush1.bf16.msra.mxu0 0
      %885 = vmatprep.subr.bf16.mxu0 0
      %886 = vmatpush1.bf16.msra.mxu0 0
      %887 = vmatprep.subr.bf16.mxu0 0
      %888 = vmatpush1.bf16.msra.mxu0 0
      %889 = vmatprep.subr.bf16.mxu0 0
      %890 = vmatpush1.bf16.msra.mxu0 0
      %891 = vmatprep.subr.bf16.mxu0 0
      %892 = vmatpush1.bf16.msra.mxu0 0
      %893 = vmatprep.subr.bf16.mxu0 0
      %894 = vmatpush1.bf16.msra.mxu0 0
      %895 = vmatprep.subr.bf16.mxu0 0
      %896 = vmatpush1.bf16.msra.mxu0 0
      %897 = vmatprep.mubr.bf16.mxu0 0
      %898 = vmatmul.mubr.bf16.gmra.mrb[0].mxu0 %v818
      %v899 = vpop.f32.mrb[0].mxu0
      %v900 = vadd.f32 0.0, %v899
      %v901 = vpop.f32.mrb[0].mxu0
      %v902 = vpop.f32.mrb[0].mxu0
      %v903 = vadd.f32 0.0, %v902
      %v904 = vpop.f32.mrb[0].mxu0
      %905 = vmatprep.mubr.bf16.mxu0 0
      %906 = vmatmul.mubr.bf16.gmra.mrb[0].mxu0 %v821
      %v907 = vpop.f32.mrb[0].mxu0
      %v908 = vadd.f32 0.0, %v907
      %v909 = vpop.f32.mrb[0].mxu0
      %v910 = vpop.f32.mrb[0].mxu0
      %v911 = vadd.f32 0.0, %v910
      %v912 = vpop.f32.mrb[0].mxu0
      %913 = vmatprep.mubr.bf16.mxu0 0
      %914 = vmatmul.mubr.bf16.gmra.mrb[0].mxu0 %v824
      %v915 = vpop.f32.mrb[0].mxu0
      %v916 = vadd.f32 0.0, %v915
      %v917 = vpop.f32.mrb[0].mxu0
      %v918 = vpop.f32.mrb[0].mxu0
      %v919 = vadd.f32 0.0, %v918
      %v920 = vpop.f32.mrb[0].mxu0
      %921 = vmatprep.mubr.bf16.mxu0 0
      %922 = vmatmul.mubr.bf16.gmra.mrb[0].mxu0 %v827
      %v923 = vpop.f32.mrb[0].mxu0
      %v924 = vadd.f32 0.0, %v923
      %v925 = vpop.f32.mrb[0].mxu0
      %v926 = vpop.f32.mrb[0].mxu0
      %v927 = vadd.f32 0.0, %v926
      %v928 = vpop.f32.mrb[0].mxu0
      %929 = vmatprep.mubr.bf16.mxu0 0
      %930 = vmatmul.mubr.bf16.gmra.mrb[0].mxu0 %v830
      %v931 = vpop.f32.mrb[0].mxu0
      %v932 = vadd.f32 0.0, %v931
      %v933 = vpop.f32.mrb[0].mxu0
      %v934 = vpop.f32.mrb[0].mxu0
      %v935 = vadd.f32 0.0, %v934
      %v936 = vpop.f32.mrb[0].mxu0
      %937 = vmatprep.mubr.bf16.mxu0 0
      %938 = vmatmul.mubr.bf16.gmra.mrb[0].mxu0 %v833
      %v939 = vpop.f32.mrb[0].mxu0
      %v940 = vadd.f32 0.0, %v939
      %v941 = vpop.f32.mrb[0].mxu0
      %v942 = vpop.f32.mrb[0].mxu0
      %v943 = vadd.f32 0.0, %v942
      %v944 = vpop.f32.mrb[0].mxu0
      %945 = vmatprep.mubr.bf16.mxu0 0
      %946 = vmatmul.mubr.bf16.gmra.mrb[0].mxu0 %v836
      %v947 = vpop.f32.mrb[0].mxu0
      %v948 = vadd.f32 0.0, %v947
      %v949 = vpop.f32.mrb[0].mxu0
      %v950 = vpop.f32.mrb[0].mxu0
      %v951 = vadd.f32 0.0, %v950
      %v952 = vpop.f32.mrb[0].mxu0
      %953 = vmatprep.mubr.bf16.mxu0 0
      %954 = vmatmul.mubr.bf16.gmra.mrb[0].mxu0 %v839
      %v955 = vpop.f32.mrb[0].mxu0
      %v956 = vadd.f32 0.0, %v955
      %v957 = vpop.f32.mrb[0].mxu0
      %v958 = vpop.f32.mrb[0].mxu0
      %v959 = vadd.f32 0.0, %v958
      %v960 = vpop.f32.mrb[0].mxu0
      %961 = vmatprep.mubr.bf16.mxu0 0
      %962 = vmatmul.mubr.bf16.gmra.mrb[0].mxu0 %v842
      %v963 = vpop.f32.mrb[0].mxu0
      %v964 = vadd.f32 0.0, %v963
      %v965 = vpop.f32.mrb[0].mxu0
      %v966 = vpop.f32.mrb[0].mxu0
      %v967 = vadd.f32 0.0, %v966
      %v968 = vpop.f32.mrb[0].mxu0
      %969 = vmatprep.mubr.bf16.mxu0 0
      %970 = vmatmul.mubr.bf16.gmra.mrb[0].mxu0 %v845
      %v971 = vpop.f32.mrb[0].mxu0
      %v972 = vadd.f32 0.0, %v971
      %v973 = vpop.f32.mrb[0].mxu0
      %v974 = vpop.f32.mrb[0].mxu0
      %v975 = vadd.f32 0.0, %v974
      %v976 = vpop.f32.mrb[0].mxu0
      %977 = vmatprep.mubr.bf16.mxu0 0
      %978 = vmatmul.mubr.bf16.gmra.mrb[0].mxu0 %v848
      %v979 = vpop.f32.mrb[0].mxu0
      %v980 = vadd.f32 0.0, %v979
      %v981 = vpop.f32.mrb[0].mxu0
      %v982 = vpop.f32.mrb[0].mxu0
      %v983 = vadd.f32 0.0, %v982
      %v984 = vpop.f32.mrb[0].mxu0
      %985 = vmatprep.mubr.bf16.mxu0 0
      %986 = vmatmul.mubr.bf16.gmra.mrb[0].mxu0 %v851
      %v987 = vpop.f32.mrb[0].mxu0
      %v988 = vadd.f32 0.0, %v987
      %v989 = vpop.f32.mrb[0].mxu0
      %v990 = vpop.f32.mrb[0].mxu0
      %v991 = vadd.f32 0.0, %v990
      %v992 = vpop.f32.mrb[0].mxu0
      %993 = vmatprep.mubr.bf16.mxu0 0
      %994 = vmatmul.mubr.bf16.gmra.mrb[0].mxu0 %v854
      %v995 = vpop.f32.mrb[0].mxu0
      %v996 = vadd.f32 0.0, %v995
      %v997 = vpop.f32.mrb[0].mxu0
      %v998 = vpop.f32.mrb[0].mxu0
      %v999 = vadd.f32 0.0, %v998
      %v1000 = vpop.f32.mrb[0].mxu0
      %1001 = vmatprep.mubr.bf16.mxu0 0
      %1002 = vmatmul.mubr.bf16.gmra.mrb[0].mxu0 %v857
      %v1003 = vpop.f32.mrb[0].mxu0
      %v1004 = vadd.f32 0.0, %v1003
      %v1005 = vpop.f32.mrb[0].mxu0
      %v1006 = vpop.f32.mrb[0].mxu0
      %v1007 = vadd.f32 0.0, %v1006
      %v1008 = vpop.f32.mrb[0].mxu0
      %1009 = vmatprep.mubr.bf16.mxu0 0
      %1010 = vmatmul.mubr.bf16.gmra.mrb[0].mxu0 %v860
      %v1011 = vpop.f32.mrb[0].mxu0
      %v1012 = vadd.f32 0.0, %v1011
      %v1013 = vpop.f32.mrb[0].mxu0
      %v1014 = vpop.f32.mrb[0].mxu0
      %v1015 = vadd.f32 0.0, %v1014
      %v1016 = vpop.f32.mrb[0].mxu0
      %1017 = vmatprep.mubr.bf16.mxu0 0
      %1018 = vmatmul.mubr.bf16.gmra.mrb[0].mxu0 %v863
      %v1019 = vpop.f32.mrb[0].mxu0
      %v1020 = vadd.f32 0.0, %v1019
      %v1021 = vpop.f32.mrb[0].mxu0
      %v1022 = vpop.f32.mrb[0].mxu0
      %v1023 = vadd.f32 0.0, %v1022
      %v1024 = vpop.f32.mrb[0].mxu0
      %1025 = vdwg.mxu0
      %v1058 = vunpack.c.l.b16 %v226
      %v1059 = vunpack.c.l.b16 %v228
      %v1060 = vunpack.c.l.b16 %v230
      %v1061 = vunpack.c.l.b16 %v232
      %v1062 = vunpack.c.l.b16 %v234
      %v1063 = vunpack.c.l.b16 %v236
      %v1064 = vunpack.c.l.b16 %v238
      %v1065 = vunpack.c.l.b16 %v240
      %v1066 = vunpack.c.l.b16 %v246
      %v1067 = vunpack.c.l.b16 %v248
      %v1068 = vunpack.c.l.b16 %v250
      %v1069 = vunpack.c.l.b16 %v252
      %v1070 = vunpack.c.l.b16 %v254
      %v1071 = vunpack.c.l.b16 %v256
      %v1072 = vunpack.c.l.b16 %v258
      %v1073 = vunpack.c.l.b16 %v260
      %v1074 = vunpack.c.l.b16 %v266
      %v1075 = vunpack.c.l.b16 %v268
      %v1076 = vunpack.c.l.b16 %v270
      %v1077 = vunpack.c.l.b16 %v272
      %v1078 = vunpack.c.l.b16 %v274
      %v1079 = vunpack.c.l.b16 %v276
      %v1080 = vunpack.c.l.b16 %v278
      %v1081 = vunpack.c.l.b16 %v280
      %v1082 = vunpack.c.l.b16 %v286
      %v1083 = vunpack.c.l.b16 %v288
      %v1084 = vunpack.c.l.b16 %v290
      %v1085 = vunpack.c.l.b16 %v292
      %v1086 = vunpack.c.l.b16 %v294
      %v1087 = vunpack.c.l.b16 %v296
      %v1088 = vunpack.c.l.b16 %v298
      %v1089 = vunpack.c.l.b16 %v300
      %v1090 = vpack.c.b16 %v1059, %v1058
      %v1091 = vpack.c.b16 %v1061, %v1060
      %v1092 = vpack.c.b16 %v1063, %v1062
      %v1093 = vpack.c.b16 %v1065, %v1064
      %v1094 = vpack.c.b16 %v1067, %v1066
      %v1095 = vpack.c.b16 %v1069, %v1068
      %v1096 = vpack.c.b16 %v1071, %v1070
      %v1097 = vpack.c.b16 %v1073, %v1072
      %v1098 = vpack.c.b16 %v1075, %v1074
      %v1099 = vpack.c.b16 %v1077, %v1076
      %v1100 = vpack.c.b16 %v1079, %v1078
      %v1101 = vpack.c.b16 %v1081, %v1080
      %v1102 = vpack.c.b16 %v1083, %v1082
      %v1103 = vpack.c.b16 %v1085, %v1084
      %v1104 = vpack.c.b16 %v1087, %v1086
      %v1105 = vpack.c.b16 %v1089, %v1088
      %v1108 = vunpack.c.l.b16 %v306
      %v1109 = vunpack.c.l.b16 %v307
      %v1110 = vpack.c.b16 %v1109, %v1108
      %v1113 = vsel %vm816, %v1090, 0
      %v1116 = vsel %vm816, %v1091, 0
      %v1119 = vsel %vm816, %v1092, 0
      %v1122 = vsel %vm816, %v1093, 0
      %v1125 = vsel %vm816, %v1094, 0
      %v1128 = vsel %vm816, %v1095, 0
      %v1131 = vsel %vm816, %v1096, 0
      %v1134 = vsel %vm816, %v1097, 0
      %v1137 = vsel %vm816, %v1098, 0
      %v1140 = vsel %vm816, %v1099, 0
      %v1143 = vsel %vm816, %v1100, 0
      %v1146 = vsel %vm816, %v1101, 0
      %v1149 = vsel %vm816, %v1102, 0
      %v1152 = vsel %vm816, %v1103, 0
      %v1155 = vsel %vm816, %v1104, 0
      %v1158 = vsel %vm816, %v1105, 0
      %1160 = vmatprep.subr.bf16.mxu0 0
      %1161 = vmatpush1.bf16.msra.mxu0 %v1110
      %1162 = vmatprep.subr.bf16.mxu0 0
      %1163 = vmatpush1.bf16.msra.mxu0 0
      %1164 = vmatprep.subr.bf16.mxu0 0
      %1165 = vmatpush1.bf16.msra.mxu0 0
      %1166 = vmatprep.subr.bf16.mxu0 0
      %1167 = vmatpush1.bf16.msra.mxu0 0
      %1168 = vmatprep.subr.bf16.mxu0 0
      %1169 = vmatpush1.bf16.msra.mxu0 0
      %1170 = vmatprep.subr.bf16.mxu0 0
      %1171 = vmatpush1.bf16.msra.mxu0 0
      %1172 = vmatprep.subr.bf16.mxu0 0
      %1173 = vmatpush1.bf16.msra.mxu0 0
      %1174 = vmatprep.subr.bf16.mxu0 0
      %1175 = vmatpush1.bf16.msra.mxu0 0
      %1176 = vmatprep.subr.bf16.mxu0 0
      %1177 = vmatpush1.bf16.msra.mxu0 0
      %1178 = vmatprep.subr.bf16.mxu0 0
      %1179 = vmatpush1.bf16.msra.mxu0 0
      %1180 = vmatprep.subr.bf16.mxu0 0
      %1181 = vmatpush1.bf16.msra.mxu0 0
      %1182 = vmatprep.subr.bf16.mxu0 0
      %1183 = vmatpush1.bf16.msra.mxu0 0
      %1184 = vmatprep.subr.bf16.mxu0 0
      %1185 = vmatpush1.bf16.msra.mxu0 0
      %1186 = vmatprep.subr.bf16.mxu0 0
      %1187 = vmatpush1.bf16.msra.mxu0 0
      %1188 = vmatprep.subr.bf16.mxu0 0
      %1189 = vmatpush1.bf16.msra.mxu0 0
      %1190 = vmatprep.subr.bf16.mxu0 0
      %1191 = vmatpush1.bf16.msra.mxu0 0
      %1192 = vmatprep.mubr.bf16.mxu0 0
      %1193 = vmatmul.mubr.bf16.gmra.mrb[0].mxu0 %v1113
      %v1194 = vpop.f32.mrb[0].mxu0
      %v1195 = vadd.f32 %v900, %v1194
      %v1196 = vpop.f32.mrb[0].mxu0
      %v1197 = vpop.f32.mrb[0].mxu0
      %v1198 = vadd.f32 %v903, %v1197
      %v1199 = vpop.f32.mrb[0].mxu0
      %1200 = vmatprep.mubr.bf16.mxu0 0
      %1201 = vmatmul.mubr.bf16.gmra.mrb[0].mxu0 %v1116
      %v1202 = vpop.f32.mrb[0].mxu0
      %v1203 = vadd.f32 %v908, %v1202
      %v1204 = vpop.f32.mrb[0].mxu0
      %v1205 = vpop.f32.mrb[0].mxu0
      %v1206 = vadd.f32 %v911, %v1205
      %v1207 = vpop.f32.mrb[0].mxu0
      %1208 = vmatprep.mubr.bf16.mxu0 0
      %1209 = vmatmul.mubr.bf16.gmra.mrb[0].mxu0 %v1119
      %v1210 = vpop.f32.mrb[0].mxu0
      %v1211 = vadd.f32 %v916, %v1210
      %v1212 = vpop.f32.mrb[0].mxu0
      %v1213 = vpop.f32.mrb[0].mxu0
      %v1214 = vadd.f32 %v919, %v1213
      %v1215 = vpop.f32.mrb[0].mxu0
      %1216 = vmatprep.mubr.bf16.mxu0 0
      %1217 = vmatmul.mubr.bf16.gmra.mrb[0].mxu0 %v1122
      %v1218 = vpop.f32.mrb[0].mxu0
      %v1219 = vadd.f32 %v924, %v1218
      %v1220 = vpop.f32.mrb[0].mxu0
      %v1221 = vpop.f32.mrb[0].mxu0
      %v1222 = vadd.f32 %v927, %v1221
      %v1223 = vpop.f32.mrb[0].mxu0
      %1224 = vmatprep.mubr.bf16.mxu0 0
      %1225 = vmatmul.mubr.bf16.gmra.mrb[0].mxu0 %v1125
      %v1226 = vpop.f32.mrb[0].mxu0
      %v1227 = vadd.f32 %v932, %v1226
      %v1228 = vpop.f32.mrb[0].mxu0
      %v1229 = vpop.f32.mrb[0].mxu0
      %v1230 = vadd.f32 %v935, %v1229
      %v1231 = vpop.f32.mrb[0].mxu0
      %1232 = vmatprep.mubr.bf16.mxu0 0
      %1233 = vmatmul.mubr.bf16.gmra.mrb[0].mxu0 %v1128
      %v1234 = vpop.f32.mrb[0].mxu0
      %v1235 = vadd.f32 %v940, %v1234
      %v1236 = vpop.f32.mrb[0].mxu0
      %v1237 = vpop.f32.mrb[0].mxu0
      %v1238 = vadd.f32 %v943, %v1237
      %v1239 = vpop.f32.mrb[0].mxu0
      %1240 = vmatprep.mubr.bf16.mxu0 0
      %1241 = vmatmul.mubr.bf16.gmra.mrb[0].mxu0 %v1131
      %v1242 = vpop.f32.mrb[0].mxu0
      %v1243 = vadd.f32 %v948, %v1242
      %v1244 = vpop.f32.mrb[0].mxu0
      %v1245 = vpop.f32.mrb[0].mxu0
      %v1246 = vadd.f32 %v951, %v1245
      %v1247 = vpop.f32.mrb[0].mxu0
      %1248 = vmatprep.mubr.bf16.mxu0 0
      %1249 = vmatmul.mubr.bf16.gmra.mrb[0].mxu0 %v1134
      %v1250 = vpop.f32.mrb[0].mxu0
      %v1251 = vadd.f32 %v956, %v1250
      %v1252 = vpop.f32.mrb[0].mxu0
      %v1253 = vpop.f32.mrb[0].mxu0
      %v1254 = vadd.f32 %v959, %v1253
      %v1255 = vpop.f32.mrb[0].mxu0
      %1256 = vmatprep.mubr.bf16.mxu0 0
      %1257 = vmatmul.mubr.bf16.gmra.mrb[0].mxu0 %v1137
      %v1258 = vpop.f32.mrb[0].mxu0
      %v1259 = vadd.f32 %v964, %v1258
      %v1260 = vpop.f32.mrb[0].mxu0
      %v1261 = vpop.f32.mrb[0].mxu0
      %v1262 = vadd.f32 %v967, %v1261
      %v1263 = vpop.f32.mrb[0].mxu0
      %1264 = vmatprep.mubr.bf16.mxu0 0
      %1265 = vmatmul.mubr.bf16.gmra.mrb[0].mxu0 %v1140
      %v1266 = vpop.f32.mrb[0].mxu0
      %v1267 = vadd.f32 %v972, %v1266
      %v1268 = vpop.f32.mrb[0].mxu0
      %v1269 = vpop.f32.mrb[0].mxu0
      %v1270 = vadd.f32 %v975, %v1269
      %v1271 = vpop.f32.mrb[0].mxu0
      %1272 = vmatprep.mubr.bf16.mxu0 0
      %1273 = vmatmul.mubr.bf16.gmra.mrb[0].mxu0 %v1143
      %v1274 = vpop.f32.mrb[0].mxu0
      %v1275 = vadd.f32 %v980, %v1274
      %v1276 = vpop.f32.mrb[0].mxu0
      %v1277 = vpop.f32.mrb[0].mxu0
      %v1278 = vadd.f32 %v983, %v1277
      %v1279 = vpop.f32.mrb[0].mxu0
      %1280 = vmatprep.mubr.bf16.mxu0 0
      %1281 = vmatmul.mubr.bf16.gmra.mrb[0].mxu0 %v1146
      %v1282 = vpop.f32.mrb[0].mxu0
      %v1283 = vadd.f32 %v988, %v1282
      %v1284 = vpop.f32.mrb[0].mxu0
      %v1285 = vpop.f32.mrb[0].mxu0
      %v1286 = vadd.f32 %v991, %v1285
      %v1287 = vpop.f32.mrb[0].mxu0
      %1288 = vmatprep.mubr.bf16.mxu0 0
      %1289 = vmatmul.mubr.bf16.gmra.mrb[0].mxu0 %v1149
      %v1290 = vpop.f32.mrb[0].mxu0
      %v1291 = vadd.f32 %v996, %v1290
      %v1292 = vpop.f32.mrb[0].mxu0
      %v1293 = vpop.f32.mrb[0].mxu0
      %v1294 = vadd.f32 %v999, %v1293
      %v1295 = vpop.f32.mrb[0].mxu0
      %1296 = vmatprep.mubr.bf16.mxu0 0
      %1297 = vmatmul.mubr.bf16.gmra.mrb[0].mxu0 %v1152
      %v1298 = vpop.f32.mrb[0].mxu0
      %v1299 = vadd.f32 %v1004, %v1298
      %v1300 = vpop.f32.mrb[0].mxu0
      %v1301 = vpop.f32.mrb[0].mxu0
      %v1302 = vadd.f32 %v1007, %v1301
      %v1303 = vpop.f32.mrb[0].mxu0
      %1304 = vmatprep.mubr.bf16.mxu0 0
      %1305 = vmatmul.mubr.bf16.gmra.mrb[0].mxu0 %v1155
      %v1306 = vpop.f32.mrb[0].mxu0
      %v1307 = vadd.f32 %v1012, %v1306
      %v1308 = vpop.f32.mrb[0].mxu0
      %v1309 = vpop.f32.mrb[0].mxu0
      %v1310 = vadd.f32 %v1015, %v1309
      %v1311 = vpop.f32.mrb[0].mxu0
      %1312 = vmatprep.mubr.bf16.mxu0 0
      %1313 = vmatmul.mubr.bf16.gmra.mrb[0].mxu0 %v1158
      %v1314 = vpop.f32.mrb[0].mxu0
      %v1315 = vadd.f32 %v1020, %v1314
      %v1316 = vpop.f32.mrb[0].mxu0
      %v1317 = vpop.f32.mrb[0].mxu0
      %v1318 = vadd.f32 %v1023, %v1317
      %v1319 = vpop.f32.mrb[0].mxu0
      %1320 = vdwg.mxu0
      %vm1353 = vcmask 1042432
      %vm1354 = vcmask 1046532
      %vm1355 = vmor %vm1353, %vm1354
      %v1356 = vrot.slane %v226, 5
      %v1357 = vrot.slane %v1356, 4
      %v1358 = vrot.slane %v227, 5
      %v1359 = vsel %vm1355, %v1357, %v1358
      %v1360 = vrot.slane %v228, 5
      %v1361 = vrot.slane %v1360, 4
      %v1362 = vrot.slane %v229, 5
      %v1363 = vsel %vm1355, %v1361, %v1362
      %v1364 = vrot.slane %v230, 5
      %v1365 = vrot.slane %v1364, 4
      %v1366 = vrot.slane %v231, 5
      %v1367 = vsel %vm1355, %v1365, %v1366
      %v1368 = vrot.slane %v232, 5
      %v1369 = vrot.slane %v1368, 4
      %v1370 = vrot.slane %v233, 5
      %v1371 = vsel %vm1355, %v1369, %v1370
      %v1372 = vrot.slane %v234, 5
      %v1373 = vrot.slane %v1372, 4
      %v1374 = vrot.slane %v235, 5
      %v1375 = vsel %vm1355, %v1373, %v1374
      %v1376 = vrot.slane %v236, 5
      %v1377 = vrot.slane %v1376, 4
      %v1378 = vrot.slane %v237, 5
      %v1379 = vsel %vm1355, %v1377, %v1378
      %v1380 = vrot.slane %v238, 5
      %v1381 = vrot.slane %v1380, 4
      %v1382 = vrot.slane %v239, 5
      %v1383 = vsel %vm1355, %v1381, %v1382
      %v1384 = vrot.slane %v240, 5
      %v1385 = vrot.slane %v1384, 4
      %v1386 = vrot.slane %v241, 5
      %v1387 = vsel %vm1355, %v1385, %v1386
      %v1388 = vrot.slane %v246, 5
      %v1389 = vrot.slane %v1388, 4
      %v1390 = vrot.slane %v247, 5
      %v1391 = vsel %vm1355, %v1389, %v1390
      %v1392 = vrot.slane %v248, 5
      %v1393 = vrot.slane %v1392, 4
      %v1394 = vrot.slane %v249, 5
      %v1395 = vsel %vm1355, %v1393, %v1394
      %v1396 = vrot.slane %v250, 5
      %v1397 = vrot.slane %v1396, 4
      %v1398 = vrot.slane %v251, 5
      %v1399 = vsel %vm1355, %v1397, %v1398
      %v1400 = vrot.slane %v252, 5
      %v1401 = vrot.slane %v1400, 4
      %v1402 = vrot.slane %v253, 5
      %v1403 = vsel %vm1355, %v1401, %v1402
      %v1404 = vrot.slane %v254, 5
      %v1405 = vrot.slane %v1404, 4
      %v1406 = vrot.slane %v255, 5
      %v1407 = vsel %vm1355, %v1405, %v1406
      %v1408 = vrot.slane %v256, 5
      %v1409 = vrot.slane %v1408, 4
      %v1410 = vrot.slane %v257, 5
      %v1411 = vsel %vm1355, %v1409, %v1410
      %v1412 = vrot.slane %v258, 5
      %v1413 = vrot.slane %v1412, 4
      %v1414 = vrot.slane %v259, 5
      %v1415 = vsel %vm1355, %v1413, %v1414
      %v1416 = vrot.slane %v260, 5
      %v1417 = vrot.slane %v1416, 4
      %v1418 = vrot.slane %v261, 5
      %v1419 = vsel %vm1355, %v1417, %v1418
      %v1420 = vrot.slane %v266, 5
      %v1421 = vrot.slane %v1420, 4
      %v1422 = vrot.slane %v267, 5
      %v1423 = vsel %vm1355, %v1421, %v1422
      %v1424 = vrot.slane %v268, 5
      %v1425 = vrot.slane %v1424, 4
      %v1426 = vrot.slane %v269, 5
      %v1427 = vsel %vm1355, %v1425, %v1426
      %v1428 = vrot.slane %v270, 5
      %v1429 = vrot.slane %v1428, 4
      %v1430 = vrot.slane %v271, 5
      %v1431 = vsel %vm1355, %v1429, %v1430
      %v1432 = vrot.slane %v272, 5
      %v1433 = vrot.slane %v1432, 4
      %v1434 = vrot.slane %v273, 5
      %v1435 = vsel %vm1355, %v1433, %v1434
      %v1436 = vrot.slane %v274, 5
      %v1437 = vrot.slane %v1436, 4
      %v1438 = vrot.slane %v275, 5
      %v1439 = vsel %vm1355, %v1437, %v1438
      %v1440 = vrot.slane %v276, 5
      %v1441 = vrot.slane %v1440, 4
      %v1442 = vrot.slane %v277, 5
      %v1443 = vsel %vm1355, %v1441, %v1442
      %v1444 = vrot.slane %v278, 5
      %v1445 = vrot.slane %v1444, 4
      %v1446 = vrot.slane %v279, 5
      %v1447 = vsel %vm1355, %v1445, %v1446
      %v1448 = vrot.slane %v280, 5
      %v1449 = vrot.slane %v1448, 4
      %v1450 = vrot.slane %v281, 5
      %v1451 = vsel %vm1355, %v1449, %v1450
      %v1452 = vrot.slane %v286, 5
      %v1453 = vrot.slane %v1452, 4
      %v1454 = vrot.slane %v287, 5
      %v1455 = vsel %vm1355, %v1453, %v1454
      %v1456 = vrot.slane %v288, 5
      %v1457 = vrot.slane %v1456, 4
      %v1458 = vrot.slane %v289, 5
      %v1459 = vsel %vm1355, %v1457, %v1458
      %v1460 = vrot.slane %v290, 5
      %v1461 = vrot.slane %v1460, 4
      %v1462 = vrot.slane %v291, 5
      %v1463 = vsel %vm1355, %v1461, %v1462
      %v1464 = vrot.slane %v292, 5
      %v1465 = vrot.slane %v1464, 4
      %v1466 = vrot.slane %v293, 5
      %v1467 = vsel %vm1355, %v1465, %v1466
      %v1468 = vrot.slane %v294, 5
      %v1469 = vrot.slane %v1468, 4
      %v1470 = vrot.slane %v295, 5
      %v1471 = vsel %vm1355, %v1469, %v1470
      %v1472 = vrot.slane %v296, 5
      %v1473 = vrot.slane %v1472, 4
      %v1474 = vrot.slane %v297, 5
      %v1475 = vsel %vm1355, %v1473, %v1474
      %v1476 = vrot.slane %v298, 5
      %v1477 = vrot.slane %v1476, 4
      %v1478 = vrot.slane %v299, 5
      %v1479 = vsel %vm1355, %v1477, %v1478
      %v1480 = vrot.slane %v300, 5
      %v1481 = vrot.slane %v1480, 4
      %v1482 = vrot.slane %v301, 5
      %v1483 = vsel %vm1355, %v1481, %v1482
      %s1484 = scalar_lea.vmem %s1, 16
      %v1485 = vld [vmem:[%s1484] sm:$0xf]
      %v1486 = vld [vmem:[%s1484 + $0x4] sm:$0xf]
      %v1487 = vunpack.c.l.b16 %v1359
      %v1488 = vunpack.c.l.b16 %v1363
      %v1489 = vunpack.c.l.b16 %v1367
      %v1490 = vunpack.c.l.b16 %v1371
      %v1491 = vunpack.c.l.b16 %v1375
      %v1492 = vunpack.c.l.b16 %v1379
      %v1493 = vunpack.c.l.b16 %v1383
      %v1494 = vunpack.c.l.b16 %v1387
      %v1495 = vunpack.c.l.b16 %v1391
      %v1496 = vunpack.c.l.b16 %v1395
      %v1497 = vunpack.c.l.b16 %v1399
      %v1498 = vunpack.c.l.b16 %v1403
      %v1499 = vunpack.c.l.b16 %v1407
      %v1500 = vunpack.c.l.b16 %v1411
      %v1501 = vunpack.c.l.b16 %v1415
      %v1502 = vunpack.c.l.b16 %v1419
      %v1503 = vunpack.c.l.b16 %v1423
      %v1504 = vunpack.c.l.b16 %v1427
      %v1505 = vunpack.c.l.b16 %v1431
      %v1506 = vunpack.c.l.b16 %v1435
      %v1507 = vunpack.c.l.b16 %v1439
      %v1508 = vunpack.c.l.b16 %v1443
      %v1509 = vunpack.c.l.b16 %v1447
      %v1510 = vunpack.c.l.b16 %v1451
      %v1511 = vunpack.c.l.b16 %v1455
      %v1512 = vunpack.c.l.b16 %v1459
      %v1513 = vunpack.c.l.b16 %v1463
      %v1514 = vunpack.c.l.b16 %v1467
      %v1515 = vunpack.c.l.b16 %v1471
      %v1516 = vunpack.c.l.b16 %v1475
      %v1517 = vunpack.c.l.b16 %v1479
      %v1518 = vunpack.c.l.b16 %v1483
      %v1519 = vpack.c.b16 %v1488, %v1487
      %v1520 = vpack.c.b16 %v1490, %v1489
      %v1521 = vpack.c.b16 %v1492, %v1491
      %v1522 = vpack.c.b16 %v1494, %v1493
      %v1523 = vpack.c.b16 %v1496, %v1495
      %v1524 = vpack.c.b16 %v1498, %v1497
      %v1525 = vpack.c.b16 %v1500, %v1499
      %v1526 = vpack.c.b16 %v1502, %v1501
      %v1527 = vpack.c.b16 %v1504, %v1503
      %v1528 = vpack.c.b16 %v1506, %v1505
      %v1529 = vpack.c.b16 %v1508, %v1507
      %v1530 = vpack.c.b16 %v1510, %v1509
      %v1531 = vpack.c.b16 %v1512, %v1511
      %v1532 = vpack.c.b16 %v1514, %v1513
      %v1533 = vpack.c.b16 %v1516, %v1515
      %v1534 = vpack.c.b16 %v1518, %v1517
      %v1537 = vunpack.c.l.b16 %v1485
      %v1538 = vunpack.c.l.b16 %v1486
      %v1539 = vpack.c.b16 %v1538, %v1537
      %v1542 = vsel %vm816, %v1519, 0
      %v1545 = vsel %vm816, %v1520, 0
      %v1548 = vsel %vm816, %v1521, 0
      %v1551 = vsel %vm816, %v1522, 0
      %v1554 = vsel %vm816, %v1523, 0
      %v1557 = vsel %vm816, %v1524, 0
      %v1560 = vsel %vm816, %v1525, 0
      %v1563 = vsel %vm816, %v1526, 0
      %v1566 = vsel %vm816, %v1527, 0
      %v1569 = vsel %vm816, %v1528, 0
      %v1572 = vsel %vm816, %v1529, 0
      %v1575 = vsel %vm816, %v1530, 0
      %v1578 = vsel %vm816, %v1531, 0
      %v1581 = vsel %vm816, %v1532, 0
      %v1584 = vsel %vm816, %v1533, 0
      %v1587 = vsel %vm816, %v1534, 0
      %1589 = vmatprep.subr.bf16.mxu0 0
      %1590 = vmatpush1.bf16.msra.mxu0 %v1539
      %1591 = vmatprep.subr.bf16.mxu0 0
      %1592 = vmatpush1.bf16.msra.mxu0 0
      %1593 = vmatprep.subr.bf16.mxu0 0
      %1594 = vmatpush1.bf16.msra.mxu0 0
      %1595 = vmatprep.subr.bf16.mxu0 0
      %1596 = vmatpush1.bf16.msra.mxu0 0
      %1597 = vmatprep.subr.bf16.mxu0 0
      %1598 = vmatpush1.bf16.msra.mxu0 0
      %1599 = vmatprep.subr.bf16.mxu0 0
      %1600 = vmatpush1.bf16.msra.mxu0 0
      %1601 = vmatprep.subr.bf16.mxu0 0
      %1602 = vmatpush1.bf16.msra.mxu0 0
      %1603 = vmatprep.subr.bf16.mxu0 0
      %1604 = vmatpush1.bf16.msra.mxu0 0
      %1605 = vmatprep.subr.bf16.mxu0 0
      %1606 = vmatpush1.bf16.msra.mxu0 0
      %1607 = vmatprep.subr.bf16.mxu0 0
      %1608 = vmatpush1.bf16.msra.mxu0 0
      %1609 = vmatprep.subr.bf16.mxu0 0
      %1610 = vmatpush1.bf16.msra.mxu0 0
      %1611 = vmatprep.subr.bf16.mxu0 0
      %1612 = vmatpush1.bf16.msra.mxu0 0
      %1613 = vmatprep.subr.bf16.mxu0 0
      %1614 = vmatpush1.bf16.msra.mxu0 0
      %1615 = vmatprep.subr.bf16.mxu0 0
      %1616 = vmatpush1.bf16.msra.mxu0 0
      %1617 = vmatprep.subr.bf16.mxu0 0
      %1618 = vmatpush1.bf16.msra.mxu0 0
      %1619 = vmatprep.subr.bf16.mxu0 0
      %1620 = vmatpush1.bf16.msra.mxu0 0
      %1621 = vmatprep.mubr.bf16.mxu0 0
      %1622 = vmatmul.mubr.bf16.gmra.mrb[0].mxu0 %v1542
      %v1623 = vpop.f32.mrb[0].mxu0
      %v1624 = vadd.f32 0.0, %v1623
      %v1625 = vpop.f32.mrb[0].mxu0
      %v1626 = vpop.f32.mrb[0].mxu0
      %v1627 = vadd.f32 0.0, %v1626
      %v1628 = vpop.f32.mrb[0].mxu0
      %1629 = vmatprep.mubr.bf16.mxu0 0
      %1630 = vmatmul.mubr.bf16.gmra.mrb[0].mxu0 %v1545
      %v1631 = vpop.f32.mrb[0].mxu0
      %v1632 = vadd.f32 0.0, %v1631
      %v1633 = vpop.f32.mrb[0].mxu0
      %v1634 = vpop.f32.mrb[0].mxu0
      %v1635 = vadd.f32 0.0, %v1634
      %v1636 = vpop.f32.mrb[0].mxu0
      %1637 = vmatprep.mubr.bf16.mxu0 0
      %1638 = vmatmul.mubr.bf16.gmra.mrb[0].mxu0 %v1548
      %v1639 = vpop.f32.mrb[0].mxu0
      %v1640 = vadd.f32 0.0, %v1639
      %v1641 = vpop.f32.mrb[0].mxu0
      %v1642 = vpop.f32.mrb[0].mxu0
      %v1643 = vadd.f32 0.0, %v1642
      %v1644 = vpop.f32.mrb[0].mxu0
      %1645 = vmatprep.mubr.bf16.mxu0 0
      %1646 = vmatmul.mubr.bf16.gmra.mrb[0].mxu0 %v1551
      %v1647 = vpop.f32.mrb[0].mxu0
      %v1648 = vadd.f32 0.0, %v1647
      %v1649 = vpop.f32.mrb[0].mxu0
      %v1650 = vpop.f32.mrb[0].mxu0
      %v1651 = vadd.f32 0.0, %v1650
      %v1652 = vpop.f32.mrb[0].mxu0
      %1653 = vmatprep.mubr.bf16.mxu0 0
      %1654 = vmatmul.mubr.bf16.gmra.mrb[0].mxu0 %v1554
      %v1655 = vpop.f32.mrb[0].mxu0
      %v1656 = vadd.f32 0.0, %v1655
      %v1657 = vpop.f32.mrb[0].mxu0
      %v1658 = vpop.f32.mrb[0].mxu0
      %v1659 = vadd.f32 0.0, %v1658
      %v1660 = vpop.f32.mrb[0].mxu0
      %1661 = vmatprep.mubr.bf16.mxu0 0
      %1662 = vmatmul.mubr.bf16.gmra.mrb[0].mxu0 %v1557
      %v1663 = vpop.f32.mrb[0].mxu0
      %v1664 = vadd.f32 0.0, %v1663
      %v1665 = vpop.f32.mrb[0].mxu0
      %v1666 = vpop.f32.mrb[0].mxu0
      %v1667 = vadd.f32 0.0, %v1666
      %v1668 = vpop.f32.mrb[0].mxu0
      %1669 = vmatprep.mubr.bf16.mxu0 0
      %1670 = vmatmul.mubr.bf16.gmra.mrb[0].mxu0 %v1560
      %v1671 = vpop.f32.mrb[0].mxu0
      %v1672 = vadd.f32 0.0, %v1671
      %v1673 = vpop.f32.mrb[0].mxu0
      %v1674 = vpop.f32.mrb[0].mxu0
      %v1675 = vadd.f32 0.0, %v1674
      %v1676 = vpop.f32.mrb[0].mxu0
      %1677 = vmatprep.mubr.bf16.mxu0 0
      %1678 = vmatmul.mubr.bf16.gmra.mrb[0].mxu0 %v1563
      %v1679 = vpop.f32.mrb[0].mxu0
      %v1680 = vadd.f32 0.0, %v1679
      %v1681 = vpop.f32.mrb[0].mxu0
      %v1682 = vpop.f32.mrb[0].mxu0
      %v1683 = vadd.f32 0.0, %v1682
      %v1684 = vpop.f32.mrb[0].mxu0
      %1685 = vmatprep.mubr.bf16.mxu0 0
      %1686 = vmatmul.mubr.bf16.gmra.mrb[0].mxu0 %v1566
      %v1687 = vpop.f32.mrb[0].mxu0
      %v1688 = vadd.f32 0.0, %v1687
      %v1689 = vpop.f32.mrb[0].mxu0
      %v1690 = vpop.f32.mrb[0].mxu0
      %v1691 = vadd.f32 0.0, %v1690
      %v1692 = vpop.f32.mrb[0].mxu0
      %1693 = vmatprep.mubr.bf16.mxu0 0
      %1694 = vmatmul.mubr.bf16.gmra.mrb[0].mxu0 %v1569
      %v1695 = vpop.f32.mrb[0].mxu0
      %v1696 = vadd.f32 0.0, %v1695
      %v1697 = vpop.f32.mrb[0].mxu0
      %v1698 = vpop.f32.mrb[0].mxu0
      %v1699 = vadd.f32 0.0, %v1698
      %v1700 = vpop.f32.mrb[0].mxu0
      %1701 = vmatprep.mubr.bf16.mxu0 0
      %1702 = vmatmul.mubr.bf16.gmra.mrb[0].mxu0 %v1572
      %v1703 = vpop.f32.mrb[0].mxu0
      %v1704 = vadd.f32 0.0, %v1703
      %v1705 = vpop.f32.mrb[0].mxu0
      %v1706 = vpop.f32.mrb[0].mxu0
      %v1707 = vadd.f32 0.0, %v1706
      %v1708 = vpop.f32.mrb[0].mxu0
      %1709 = vmatprep.mubr.bf16.mxu0 0
      %1710 = vmatmul.mubr.bf16.gmra.mrb[0].mxu0 %v1575
      %v1711 = vpop.f32.mrb[0].mxu0
      %v1712 = vadd.f32 0.0, %v1711
      %v1713 = vpop.f32.mrb[0].mxu0
      %v1714 = vpop.f32.mrb[0].mxu0
      %v1715 = vadd.f32 0.0, %v1714
      %v1716 = vpop.f32.mrb[0].mxu0
      %1717 = vmatprep.mubr.bf16.mxu0 0
      %1718 = vmatmul.mubr.bf16.gmra.mrb[0].mxu0 %v1578
      %v1719 = vpop.f32.mrb[0].mxu0
      %v1720 = vadd.f32 0.0, %v1719
      %v1721 = vpop.f32.mrb[0].mxu0
      %v1722 = vpop.f32.mrb[0].mxu0
      %v1723 = vadd.f32 0.0, %v1722
      %v1724 = vpop.f32.mrb[0].mxu0
      %1725 = vmatprep.mubr.bf16.mxu0 0
      %1726 = vmatmul.mubr.bf16.gmra.mrb[0].mxu0 %v1581
      %v1727 = vpop.f32.mrb[0].mxu0
      %v1728 = vadd.f32 0.0, %v1727
      %v1729 = vpop.f32.mrb[0].mxu0
      %v1730 = vpop.f32.mrb[0].mxu0
      %v1731 = vadd.f32 0.0, %v1730
      %v1732 = vpop.f32.mrb[0].mxu0
      %1733 = vmatprep.mubr.bf16.mxu0 0
      %1734 = vmatmul.mubr.bf16.gmra.mrb[0].mxu0 %v1584
      %v1735 = vpop.f32.mrb[0].mxu0
      %v1736 = vadd.f32 0.0, %v1735
      %v1737 = vpop.f32.mrb[0].mxu0
      %v1738 = vpop.f32.mrb[0].mxu0
      %v1739 = vadd.f32 0.0, %v1738
      %v1740 = vpop.f32.mrb[0].mxu0
      %1741 = vmatprep.mubr.bf16.mxu0 0
      %1742 = vmatmul.mubr.bf16.gmra.mrb[0].mxu0 %v1587
      %v1743 = vpop.f32.mrb[0].mxu0
      %v1744 = vadd.f32 0.0, %v1743
      %v1745 = vpop.f32.mrb[0].mxu0
      %v1746 = vpop.f32.mrb[0].mxu0
      %v1747 = vadd.f32 0.0, %v1746
      %v1748 = vpop.f32.mrb[0].mxu0
      %1749 = vdwg.mxu0
      %v1750 = vadd.f32 %v1195, %v1624
      %v1751 = vadd.f32 %v1198, %v1627
      %v1752 = vadd.f32 %v1203, %v1632
      %v1753 = vadd.f32 %v1206, %v1635
      %v1754 = vadd.f32 %v1211, %v1640
      %v1755 = vadd.f32 %v1214, %v1643
      %v1756 = vadd.f32 %v1219, %v1648
      %v1757 = vadd.f32 %v1222, %v1651
      %v1758 = vadd.f32 %v1227, %v1656
      %v1759 = vadd.f32 %v1230, %v1659
      %v1760 = vadd.f32 %v1235, %v1664
      %v1761 = vadd.f32 %v1238, %v1667
      %v1762 = vadd.f32 %v1243, %v1672
      %v1763 = vadd.f32 %v1246, %v1675
      %v1764 = vadd.f32 %v1251, %v1680
      %v1765 = vadd.f32 %v1254, %v1683
      %v1766 = vadd.f32 %v1259, %v1688
      %v1767 = vadd.f32 %v1262, %v1691
      %v1768 = vadd.f32 %v1267, %v1696
      %v1769 = vadd.f32 %v1270, %v1699
      %v1770 = vadd.f32 %v1275, %v1704
      %v1771 = vadd.f32 %v1278, %v1707
      %v1772 = vadd.f32 %v1283, %v1712
      %v1773 = vadd.f32 %v1286, %v1715
      %v1774 = vadd.f32 %v1291, %v1720
      %v1775 = vadd.f32 %v1294, %v1723
      %v1776 = vadd.f32 %v1299, %v1728
      %v1777 = vadd.f32 %v1302, %v1731
      %v1778 = vadd.f32 %v1307, %v1736
      %v1779 = vadd.f32 %v1310, %v1739
      %v1780 = vadd.f32 %v1315, %v1744
      %v1781 = vadd.f32 %v1318, %v1747
      %s1782 = scalar_lea.vmem %s1, 24
      %v1783 = vld [vmem:[%s1782] sm:$0xf]
      %v1784 = vld [vmem:[%s1782 + $0x4] sm:$0xf]
      %v1789 = vunpack.c.l.b16 %v242
      %v1790 = vunpack.c.l.b16 %v262
      %v1791 = vunpack.c.l.b16 %v282
      %v1792 = vunpack.c.l.b16 %v302
      %v1793 = vpack.c.b16 %v1060, %v1059
      %v1794 = vpack.c.b16 %v1062, %v1061
      %v1795 = vpack.c.b16 %v1064, %v1063
      %v1796 = vpack.c.b16 %v1789, %v1065
      %v1797 = vpack.c.b16 %v1068, %v1067
      %v1798 = vpack.c.b16 %v1070, %v1069
      %v1799 = vpack.c.b16 %v1072, %v1071
      %v1800 = vpack.c.b16 %v1790, %v1073
      %v1801 = vpack.c.b16 %v1076, %v1075
      %v1802 = vpack.c.b16 %v1078, %v1077
      %v1803 = vpack.c.b16 %v1080, %v1079
      %v1804 = vpack.c.b16 %v1791, %v1081
      %v1805 = vpack.c.b16 %v1084, %v1083
      %v1806 = vpack.c.b16 %v1086, %v1085
      %v1807 = vpack.c.b16 %v1088, %v1087
      %v1808 = vpack.c.b16 %v1792, %v1089
      %v1811 = vunpack.c.l.b16 %v1783
      %v1812 = vunpack.c.l.b16 %v1784
      %v1813 = vpack.c.b16 %v1812, %v1811
      %v1816 = vsel %vm816, %v1793, 0
      %v1819 = vsel %vm816, %v1794, 0
      %v1822 = vsel %vm816, %v1795, 0
      %v1825 = vsel %vm816, %v1796, 0
      %v1828 = vsel %vm816, %v1797, 0
      %v1831 = vsel %vm816, %v1798, 0
      %v1834 = vsel %vm816, %v1799, 0
      %v1837 = vsel %vm816, %v1800, 0
      %v1840 = vsel %vm816, %v1801, 0
      %v1843 = vsel %vm816, %v1802, 0
      %v1846 = vsel %vm816, %v1803, 0
      %v1849 = vsel %vm816, %v1804, 0
      %v1852 = vsel %vm816, %v1805, 0
      %v1855 = vsel %vm816, %v1806, 0
      %v1858 = vsel %vm816, %v1807, 0
      %v1861 = vsel %vm816, %v1808, 0
      %1863 = vmatprep.subr.bf16.mxu0 0
      %1864 = vmatpush1.bf16.msra.mxu0 %v1813
      %1865 = vmatprep.subr.bf16.mxu0 0
      %1866 = vmatpush1.bf16.msra.mxu0 0
      %1867 = vmatprep.subr.bf16.mxu0 0
      %1868 = vmatpush1.bf16.msra.mxu0 0
      %1869 = vmatprep.subr.bf16.mxu0 0
      %1870 = vmatpush1.bf16.msra.mxu0 0
      %1871 = vmatprep.subr.bf16.mxu0 0
      %1872 = vmatpush1.bf16.msra.mxu0 0
      %1873 = vmatprep.subr.bf16.mxu0 0
      %1874 = vmatpush1.bf16.msra.mxu0 0
      %1875 = vmatprep.subr.bf16.mxu0 0
      %1876 = vmatpush1.bf16.msra.mxu0 0
      %1877 = vmatprep.subr.bf16.mxu0 0
      %1878 = vmatpush1.bf16.msra.mxu0 0
      %1879 = vmatprep.subr.bf16.mxu0 0
      %1880 = vmatpush1.bf16.msra.mxu0 0
      %1881 = vmatprep.subr.bf16.mxu0 0
      %1882 = vmatpush1.bf16.msra.mxu0 0
      %1883 = vmatprep.subr.bf16.mxu0 0
      %1884 = vmatpush1.bf16.msra.mxu0 0
      %1885 = vmatprep.subr.bf16.mxu0 0
      %1886 = vmatpush1.bf16.msra.mxu0 0
      %1887 = vmatprep.subr.bf16.mxu0 0
      %1888 = vmatpush1.bf16.msra.mxu0 0
      %1889 = vmatprep.subr.bf16.mxu0 0
      %1890 = vmatpush1.bf16.msra.mxu0 0
      %1891 = vmatprep.subr.bf16.mxu0 0
      %1892 = vmatpush1.bf16.msra.mxu0 0
      %1893 = vmatprep.subr.bf16.mxu0 0
      %1894 = vmatpush1.bf16.msra.mxu0 0
      %1895 = vmatprep.mubr.bf16.mxu0 0
      %1896 = vmatmul.mubr.bf16.gmra.mrb[0].mxu0 %v1816
      %v1897 = vpop.f32.mrb[0].mxu0
      %v1898 = vadd.f32 0.0, %v1897
      %v1899 = vpop.f32.mrb[0].mxu0
      %v1900 = vpop.f32.mrb[0].mxu0
      %v1901 = vadd.f32 0.0, %v1900
      %v1902 = vpop.f32.mrb[0].mxu0
      %1903 = vmatprep.mubr.bf16.mxu0 0
      %1904 = vmatmul.mubr.bf16.gmra.mrb[0].mxu0 %v1819
      %v1905 = vpop.f32.mrb[0].mxu0
      %v1906 = vadd.f32 0.0, %v1905
      %v1907 = vpop.f32.mrb[0].mxu0
      %v1908 = vpop.f32.mrb[0].mxu0
      %v1909 = vadd.f32 0.0, %v1908
      %v1910 = vpop.f32.mrb[0].mxu0
      %1911 = vmatprep.mubr.bf16.mxu0 0
      %1912 = vmatmul.mubr.bf16.gmra.mrb[0].mxu0 %v1822
      %v1913 = vpop.f32.mrb[0].mxu0
      %v1914 = vadd.f32 0.0, %v1913
      %v1915 = vpop.f32.mrb[0].mxu0
      %v1916 = vpop.f32.mrb[0].mxu0
      %v1917 = vadd.f32 0.0, %v1916
      %v1918 = vpop.f32.mrb[0].mxu0
      %1919 = vmatprep.mubr.bf16.mxu0 0
      %1920 = vmatmul.mubr.bf16.gmra.mrb[0].mxu0 %v1825
      %v1921 = vpop.f32.mrb[0].mxu0
      %v1922 = vadd.f32 0.0, %v1921
      %v1923 = vpop.f32.mrb[0].mxu0
      %v1924 = vpop.f32.mrb[0].mxu0
      %v1925 = vadd.f32 0.0, %v1924
      %v1926 = vpop.f32.mrb[0].mxu0
      %1927 = vmatprep.mubr.bf16.mxu0 0
      %1928 = vmatmul.mubr.bf16.gmra.mrb[0].mxu0 %v1828
      %v1929 = vpop.f32.mrb[0].mxu0
      %v1930 = vadd.f32 0.0, %v1929
      %v1931 = vpop.f32.mrb[0].mxu0
      %v1932 = vpop.f32.mrb[0].mxu0
      %v1933 = vadd.f32 0.0, %v1932
      %v1934 = vpop.f32.mrb[0].mxu0
      %1935 = vmatprep.mubr.bf16.mxu0 0
      %1936 = vmatmul.mubr.bf16.gmra.mrb[0].mxu0 %v1831
      %v1937 = vpop.f32.mrb[0].mxu0
      %v1938 = vadd.f32 0.0, %v1937
      %v1939 = vpop.f32.mrb[0].mxu0
      %v1940 = vpop.f32.mrb[0].mxu0
      %v1941 = vadd.f32 0.0, %v1940
      %v1942 = vpop.f32.mrb[0].mxu0
      %1943 = vmatprep.mubr.bf16.mxu0 0
      %1944 = vmatmul.mubr.bf16.gmra.mrb[0].mxu0 %v1834
      %v1945 = vpop.f32.mrb[0].mxu0
      %v1946 = vadd.f32 0.0, %v1945
      %v1947 = vpop.f32.mrb[0].mxu0
      %v1948 = vpop.f32.mrb[0].mxu0
      %v1949 = vadd.f32 0.0, %v1948
      %v1950 = vpop.f32.mrb[0].mxu0
      %1951 = vmatprep.mubr.bf16.mxu0 0
      %1952 = vmatmul.mubr.bf16.gmra.mrb[0].mxu0 %v1837
      %v1953 = vpop.f32.mrb[0].mxu0
      %v1954 = vadd.f32 0.0, %v1953
      %v1955 = vpop.f32.mrb[0].mxu0
      %v1956 = vpop.f32.mrb[0].mxu0
      %v1957 = vadd.f32 0.0, %v1956
      %v1958 = vpop.f32.mrb[0].mxu0
      %1959 = vmatprep.mubr.bf16.mxu0 0
      %1960 = vmatmul.mubr.bf16.gmra.mrb[0].mxu0 %v1840
      %v1961 = vpop.f32.mrb[0].mxu0
      %v1962 = vadd.f32 0.0, %v1961
      %v1963 = vpop.f32.mrb[0].mxu0
      %v1964 = vpop.f32.mrb[0].mxu0
      %v1965 = vadd.f32 0.0, %v1964
      %v1966 = vpop.f32.mrb[0].mxu0
      %1967 = vmatprep.mubr.bf16.mxu0 0
      %1968 = vmatmul.mubr.bf16.gmra.mrb[0].mxu0 %v1843
      %v1969 = vpop.f32.mrb[0].mxu0
      %v1970 = vadd.f32 0.0, %v1969
      %v1971 = vpop.f32.mrb[0].mxu0
      %v1972 = vpop.f32.mrb[0].mxu0
      %v1973 = vadd.f32 0.0, %v1972
      %v1974 = vpop.f32.mrb[0].mxu0
      %1975 = vmatprep.mubr.bf16.mxu0 0
      %1976 = vmatmul.mubr.bf16.gmra.mrb[0].mxu0 %v1846
      %v1977 = vpop.f32.mrb[0].mxu0
      %v1978 = vadd.f32 0.0, %v1977
      %v1979 = vpop.f32.mrb[0].mxu0
      %v1980 = vpop.f32.mrb[0].mxu0
      %v1981 = vadd.f32 0.0, %v1980
      %v1982 = vpop.f32.mrb[0].mxu0
      %1983 = vmatprep.mubr.bf16.mxu0 0
      %1984 = vmatmul.mubr.bf16.gmra.mrb[0].mxu0 %v1849
      %v1985 = vpop.f32.mrb[0].mxu0
      %v1986 = vadd.f32 0.0, %v1985
      %v1987 = vpop.f32.mrb[0].mxu0
      %v1988 = vpop.f32.mrb[0].mxu0
      %v1989 = vadd.f32 0.0, %v1988
      %v1990 = vpop.f32.mrb[0].mxu0
      %1991 = vmatprep.mubr.bf16.mxu0 0
      %1992 = vmatmul.mubr.bf16.gmra.mrb[0].mxu0 %v1852
      %v1993 = vpop.f32.mrb[0].mxu0
      %v1994 = vadd.f32 0.0, %v1993
      %v1995 = vpop.f32.mrb[0].mxu0
      %v1996 = vpop.f32.mrb[0].mxu0
      %v1997 = vadd.f32 0.0, %v1996
      %v1998 = vpop.f32.mrb[0].mxu0
      %1999 = vmatprep.mubr.bf16.mxu0 0
      %2000 = vmatmul.mubr.bf16.gmra.mrb[0].mxu0 %v1855
      %v2001 = vpop.f32.mrb[0].mxu0
      %v2002 = vadd.f32 0.0, %v2001
      %v2003 = vpop.f32.mrb[0].mxu0
      %v2004 = vpop.f32.mrb[0].mxu0
      %v2005 = vadd.f32 0.0, %v2004
      %v2006 = vpop.f32.mrb[0].mxu0
      %2007 = vmatprep.mubr.bf16.mxu0 0
      %2008 = vmatmul.mubr.bf16.gmra.mrb[0].mxu0 %v1858
      %v2009 = vpop.f32.mrb[0].mxu0
      %v2010 = vadd.f32 0.0, %v2009
      %v2011 = vpop.f32.mrb[0].mxu0
      %v2012 = vpop.f32.mrb[0].mxu0
      %v2013 = vadd.f32 0.0, %v2012
      %v2014 = vpop.f32.mrb[0].mxu0
      %2015 = vmatprep.mubr.bf16.mxu0 0
      %2016 = vmatmul.mubr.bf16.gmra.mrb[0].mxu0 %v1861
      %v2017 = vpop.f32.mrb[0].mxu0
      %v2018 = vadd.f32 0.0, %v2017
      %v2019 = vpop.f32.mrb[0].mxu0
      %v2020 = vpop.f32.mrb[0].mxu0
      %v2021 = vadd.f32 0.0, %v2020
      %v2022 = vpop.f32.mrb[0].mxu0
      %2023 = vdwg.mxu0
      %v2024 = vadd.f32 %v1750, %v1898
      %v2025 = vadd.f32 %v1751, %v1901
      %v2026 = vadd.f32 %v1752, %v1906
      %v2027 = vadd.f32 %v1753, %v1909
      %v2028 = vadd.f32 %v1754, %v1914
      %v2029 = vadd.f32 %v1755, %v1917
      %v2030 = vadd.f32 %v1756, %v1922
      %v2031 = vadd.f32 %v1757, %v1925
      %v2032 = vadd.f32 %v1758, %v1930
      %v2033 = vadd.f32 %v1759, %v1933
      %v2034 = vadd.f32 %v1760, %v1938
      %v2035 = vadd.f32 %v1761, %v1941
      %v2036 = vadd.f32 %v1762, %v1946
      %v2037 = vadd.f32 %v1763, %v1949
      %v2038 = vadd.f32 %v1764, %v1954
      %v2039 = vadd.f32 %v1765, %v1957
      %v2040 = vadd.f32 %v1766, %v1962
      %v2041 = vadd.f32 %v1767, %v1965
      %v2042 = vadd.f32 %v1768, %v1970
      %v2043 = vadd.f32 %v1769, %v1973
      %v2044 = vadd.f32 %v1770, %v1978
      %v2045 = vadd.f32 %v1771, %v1981
      %v2046 = vadd.f32 %v1772, %v1986
      %v2047 = vadd.f32 %v1773, %v1989
      %v2048 = vadd.f32 %v1774, %v1994
      %v2049 = vadd.f32 %v1775, %v1997
      %v2050 = vadd.f32 %v1776, %v2002
      %v2051 = vadd.f32 %v1777, %v2005
      %v2052 = vadd.f32 %v1778, %v2010
      %v2053 = vadd.f32 %v1779, %v2013
      %v2054 = vadd.f32 %v1780, %v2018
      %v2055 = vadd.f32 %v1781, %v2021
      %v2057 = vshrl.u32 %v242, 16
      %v2059 = vrot.slane %v2057, 4
      %v2060 = vshll.u32 %v242, 16
      %v2062 = vrot.slane %v2060, 5
      %v2063 = vor.u32 %v2059, %v2062
      %v2064 = vrot.slane %v2063, 4
      %v2066 = vshll.u32 %v243, 16
      %v2068 = vrot.slane %v2066, 5
      %v2069 = vsel %vm310, %v2064, %v2068
      %v2071 = vshrl.u32 %v262, 16
      %v2073 = vrot.slane %v2071, 4
      %v2074 = vshll.u32 %v262, 16
      %v2076 = vrot.slane %v2074, 5
      %v2077 = vor.u32 %v2073, %v2076
      %v2078 = vrot.slane %v2077, 4
      %v2080 = vshll.u32 %v263, 16
      %v2082 = vrot.slane %v2080, 5
      %v2083 = vsel %vm310, %v2078, %v2082
      %v2085 = vshrl.u32 %v282, 16
      %v2087 = vrot.slane %v2085, 4
      %v2088 = vshll.u32 %v282, 16
      %v2090 = vrot.slane %v2088, 5
      %v2091 = vor.u32 %v2087, %v2090
      %v2092 = vrot.slane %v2091, 4
      %v2094 = vshll.u32 %v283, 16
      %v2096 = vrot.slane %v2094, 5
      %v2097 = vsel %vm310, %v2092, %v2096
      %v2099 = vshrl.u32 %v302, 16
      %v2101 = vrot.slane %v2099, 4
      %v2102 = vshll.u32 %v302, 16
      %v2104 = vrot.slane %v2102, 5
      %v2105 = vor.u32 %v2101, %v2104
      %v2106 = vrot.slane %v2105, 4
      %v2108 = vshll.u32 %v303, 16
      %v2110 = vrot.slane %v2108, 5
      %v2111 = vsel %vm310, %v2106, %v2110
      %s2112 = scalar_lea.vmem %s1, 32
      %v2113 = vld [vmem:[%s2112] sm:$0xf]
      %v2114 = vld [vmem:[%s2112 + $0x4] sm:$0xf]
      %v2115 = vunpack.c.l.b16 %v2069
      %v2116 = vunpack.c.l.b16 %v2083
      %v2117 = vunpack.c.l.b16 %v2097
      %v2118 = vunpack.c.l.b16 %v2111
      %v2119 = vpack.c.b16 %v764, %v763
      %v2120 = vpack.c.b16 %v766, %v765
      %v2121 = vpack.c.b16 %v768, %v767
      %v2122 = vpack.c.b16 %v2115, %v769
      %v2123 = vpack.c.b16 %v772, %v771
      %v2124 = vpack.c.b16 %v774, %v773
      %v2125 = vpack.c.b16 %v776, %v775
      %v2126 = vpack.c.b16 %v2116, %v777
      %v2127 = vpack.c.b16 %v780, %v779
      %v2128 = vpack.c.b16 %v782, %v781
      %v2129 = vpack.c.b16 %v784, %v783
      %v2130 = vpack.c.b16 %v2117, %v785
      %v2131 = vpack.c.b16 %v788, %v787
      %v2132 = vpack.c.b16 %v790, %v789
      %v2133 = vpack.c.b16 %v792, %v791
      %v2134 = vpack.c.b16 %v2118, %v793
      %v2137 = vunpack.c.l.b16 %v2113
      %v2138 = vunpack.c.l.b16 %v2114
      %v2139 = vpack.c.b16 %v2138, %v2137
      %v2142 = vsel %vm816, %v2119, 0
      %v2145 = vsel %vm816, %v2120, 0
      %v2148 = vsel %vm816, %v2121, 0
      %v2151 = vsel %vm816, %v2122, 0
      %v2154 = vsel %vm816, %v2123, 0
      %v2157 = vsel %vm816, %v2124, 0
      %v2160 = vsel %vm816, %v2125, 0
      %v2163 = vsel %vm816, %v2126, 0
      %v2166 = vsel %vm816, %v2127, 0
      %v2169 = vsel %vm816, %v2128, 0
      %v2172 = vsel %vm816, %v2129, 0
      %v2175 = vsel %vm816, %v2130, 0
      %v2178 = vsel %vm816, %v2131, 0
      %v2181 = vsel %vm816, %v2132, 0
      %v2184 = vsel %vm816, %v2133, 0
      %v2187 = vsel %vm816, %v2134, 0
      %2189 = vmatprep.subr.bf16.mxu0 0
      %2190 = vmatpush1.bf16.msra.mxu0 %v2139
      %2191 = vmatprep.subr.bf16.mxu0 0
      %2192 = vmatpush1.bf16.msra.mxu0 0
      %2193 = vmatprep.subr.bf16.mxu0 0
      %2194 = vmatpush1.bf16.msra.mxu0 0
      %2195 = vmatprep.subr.bf16.mxu0 0
      %2196 = vmatpush1.bf16.msra.mxu0 0
      %2197 = vmatprep.subr.bf16.mxu0 0
      %2198 = vmatpush1.bf16.msra.mxu0 0
      %2199 = vmatprep.subr.bf16.mxu0 0
      %2200 = vmatpush1.bf16.msra.mxu0 0
      %2201 = vmatprep.subr.bf16.mxu0 0
      %2202 = vmatpush1.bf16.msra.mxu0 0
      %2203 = vmatprep.subr.bf16.mxu0 0
      %2204 = vmatpush1.bf16.msra.mxu0 0
      %2205 = vmatprep.subr.bf16.mxu0 0
      %2206 = vmatpush1.bf16.msra.mxu0 0
      %2207 = vmatprep.subr.bf16.mxu0 0
      %2208 = vmatpush1.bf16.msra.mxu0 0
      %2209 = vmatprep.subr.bf16.mxu0 0
      %2210 = vmatpush1.bf16.msra.mxu0 0
      %2211 = vmatprep.subr.bf16.mxu0 0
      %2212 = vmatpush1.bf16.msra.mxu0 0
      %2213 = vmatprep.subr.bf16.mxu0 0
      %2214 = vmatpush1.bf16.msra.mxu0 0
      %2215 = vmatprep.subr.bf16.mxu0 0
      %2216 = vmatpush1.bf16.msra.mxu0 0
      %2217 = vmatprep.subr.bf16.mxu0 0
      %2218 = vmatpush1.bf16.msra.mxu0 0
      %2219 = vmatprep.subr.bf16.mxu0 0
      %2220 = vmatpush1.bf16.msra.mxu0 0
      %2221 = vmatprep.mubr.bf16.mxu0 0
      %2222 = vmatmul.mubr.bf16.gmra.mrb[0].mxu0 %v2142
      %v2223 = vpop.f32.mrb[0].mxu0
      %v2224 = vadd.f32 0.0, %v2223
      %v2225 = vpop.f32.mrb[0].mxu0
      %v2226 = vpop.f32.mrb[0].mxu0
      %v2227 = vadd.f32 0.0, %v2226
      %v2228 = vpop.f32.mrb[0].mxu0
      %2229 = vmatprep.mubr.bf16.mxu0 0
      %2230 = vmatmul.mubr.bf16.gmra.mrb[0].mxu0 %v2145
      %v2231 = vpop.f32.mrb[0].mxu0
      %v2232 = vadd.f32 0.0, %v2231
      %v2233 = vpop.f32.mrb[0].mxu0
      %v2234 = vpop.f32.mrb[0].mxu0
      %v2235 = vadd.f32 0.0, %v2234
      %v2236 = vpop.f32.mrb[0].mxu0
      %2237 = vmatprep.mubr.bf16.mxu0 0
      %2238 = vmatmul.mubr.bf16.gmra.mrb[0].mxu0 %v2148
      %v2239 = vpop.f32.mrb[0].mxu0
      %v2240 = vadd.f32 0.0, %v2239
      %v2241 = vpop.f32.mrb[0].mxu0
      %v2242 = vpop.f32.mrb[0].mxu0
      %v2243 = vadd.f32 0.0, %v2242
      %v2244 = vpop.f32.mrb[0].mxu0
      %2245 = vmatprep.mubr.bf16.mxu0 0
      %2246 = vmatmul.mubr.bf16.gmra.mrb[0].mxu0 %v2151
      %v2247 = vpop.f32.mrb[0].mxu0
      %v2248 = vadd.f32 0.0, %v2247
      %v2249 = vpop.f32.mrb[0].mxu0
      %v2250 = vpop.f32.mrb[0].mxu0
      %v2251 = vadd.f32 0.0, %v2250
      %v2252 = vpop.f32.mrb[0].mxu0
      %2253 = vmatprep.mubr.bf16.mxu0 0
      %2254 = vmatmul.mubr.bf16.gmra.mrb[0].mxu0 %v2154
      %v2255 = vpop.f32.mrb[0].mxu0
      %v2256 = vadd.f32 0.0, %v2255
      %v2257 = vpop.f32.mrb[0].mxu0
      %v2258 = vpop.f32.mrb[0].mxu0
      %v2259 = vadd.f32 0.0, %v2258
      %v2260 = vpop.f32.mrb[0].mxu0
      %2261 = vmatprep.mubr.bf16.mxu0 0
      %2262 = vmatmul.mubr.bf16.gmra.mrb[0].mxu0 %v2157
      %v2263 = vpop.f32.mrb[0].mxu0
      %v2264 = vadd.f32 0.0, %v2263
      %v2265 = vpop.f32.mrb[0].mxu0
      %v2266 = vpop.f32.mrb[0].mxu0
      %v2267 = vadd.f32 0.0, %v2266
      %v2268 = vpop.f32.mrb[0].mxu0
      %2269 = vmatprep.mubr.bf16.mxu0 0
      %2270 = vmatmul.mubr.bf16.gmra.mrb[0].mxu0 %v2160
      %v2271 = vpop.f32.mrb[0].mxu0
      %v2272 = vadd.f32 0.0, %v2271
      %v2273 = vpop.f32.mrb[0].mxu0
      %v2274 = vpop.f32.mrb[0].mxu0
      %v2275 = vadd.f32 0.0, %v2274
      %v2276 = vpop.f32.mrb[0].mxu0
      %2277 = vmatprep.mubr.bf16.mxu0 0
      %2278 = vmatmul.mubr.bf16.gmra.mrb[0].mxu0 %v2163
      %v2279 = vpop.f32.mrb[0].mxu0
      %v2280 = vadd.f32 0.0, %v2279
      %v2281 = vpop.f32.mrb[0].mxu0
      %v2282 = vpop.f32.mrb[0].mxu0
      %v2283 = vadd.f32 0.0, %v2282
      %v2284 = vpop.f32.mrb[0].mxu0
      %2285 = vmatprep.mubr.bf16.mxu0 0
      %2286 = vmatmul.mubr.bf16.gmra.mrb[0].mxu0 %v2166
      %v2287 = vpop.f32.mrb[0].mxu0
      %v2288 = vadd.f32 0.0, %v2287
      %v2289 = vpop.f32.mrb[0].mxu0
      %v2290 = vpop.f32.mrb[0].mxu0
      %v2291 = vadd.f32 0.0, %v2290
      %v2292 = vpop.f32.mrb[0].mxu0
      %2293 = vmatprep.mubr.bf16.mxu0 0
      %2294 = vmatmul.mubr.bf16.gmra.mrb[0].mxu0 %v2169
      %v2295 = vpop.f32.mrb[0].mxu0
      %v2296 = vadd.f32 0.0, %v2295
      %v2297 = vpop.f32.mrb[0].mxu0
      %v2298 = vpop.f32.mrb[0].mxu0
      %v2299 = vadd.f32 0.0, %v2298
      %v2300 = vpop.f32.mrb[0].mxu0
      %2301 = vmatprep.mubr.bf16.mxu0 0
      %2302 = vmatmul.mubr.bf16.gmra.mrb[0].mxu0 %v2172
      %v2303 = vpop.f32.mrb[0].mxu0
      %v2304 = vadd.f32 0.0, %v2303
      %v2305 = vpop.f32.mrb[0].mxu0
      %v2306 = vpop.f32.mrb[0].mxu0
      %v2307 = vadd.f32 0.0, %v2306
      %v2308 = vpop.f32.mrb[0].mxu0
      %2309 = vmatprep.mubr.bf16.mxu0 0
      %2310 = vmatmul.mubr.bf16.gmra.mrb[0].mxu0 %v2175
      %v2311 = vpop.f32.mrb[0].mxu0
      %v2312 = vadd.f32 0.0, %v2311
      %v2313 = vpop.f32.mrb[0].mxu0
      %v2314 = vpop.f32.mrb[0].mxu0
      %v2315 = vadd.f32 0.0, %v2314
      %v2316 = vpop.f32.mrb[0].mxu0
      %2317 = vmatprep.mubr.bf16.mxu0 0
      %2318 = vmatmul.mubr.bf16.gmra.mrb[0].mxu0 %v2178
      %v2319 = vpop.f32.mrb[0].mxu0
      %v2320 = vadd.f32 0.0, %v2319
      %v2321 = vpop.f32.mrb[0].mxu0
      %v2322 = vpop.f32.mrb[0].mxu0
      %v2323 = vadd.f32 0.0, %v2322
      %v2324 = vpop.f32.mrb[0].mxu0
      %2325 = vmatprep.mubr.bf16.mxu0 0
      %2326 = vmatmul.mubr.bf16.gmra.mrb[0].mxu0 %v2181
      %v2327 = vpop.f32.mrb[0].mxu0
      %v2328 = vadd.f32 0.0, %v2327
      %v2329 = vpop.f32.mrb[0].mxu0
      %v2330 = vpop.f32.mrb[0].mxu0
      %v2331 = vadd.f32 0.0, %v2330
      %v2332 = vpop.f32.mrb[0].mxu0
      %2333 = vmatprep.mubr.bf16.mxu0 0
      %2334 = vmatmul.mubr.bf16.gmra.mrb[0].mxu0 %v2184
      %v2335 = vpop.f32.mrb[0].mxu0
      %v2336 = vadd.f32 0.0, %v2335
      %v2337 = vpop.f32.mrb[0].mxu0
      %v2338 = vpop.f32.mrb[0].mxu0
      %v2339 = vadd.f32 0.0, %v2338
      %v2340 = vpop.f32.mrb[0].mxu0
      %2341 = vmatprep.mubr.bf16.mxu0 0
      %2342 = vmatmul.mubr.bf16.gmra.mrb[0].mxu0 %v2187
      %v2343 = vpop.f32.mrb[0].mxu0
      %v2344 = vadd.f32 0.0, %v2343
      %v2345 = vpop.f32.mrb[0].mxu0
      %v2346 = vpop.f32.mrb[0].mxu0
      %v2347 = vadd.f32 0.0, %v2346
      %v2348 = vpop.f32.mrb[0].mxu0
      %2349 = vdwg.mxu0
      %v2350 = vadd.f32 %v2024, %v2224
      %v2351 = vadd.f32 %v2025, %v2227
      %v2352 = vadd.f32 %v2026, %v2232
      %v2353 = vadd.f32 %v2027, %v2235
      %v2354 = vadd.f32 %v2028, %v2240
      %v2355 = vadd.f32 %v2029, %v2243
      %v2356 = vadd.f32 %v2030, %v2248
      %v2357 = vadd.f32 %v2031, %v2251
      %v2358 = vadd.f32 %v2032, %v2256
      %v2359 = vadd.f32 %v2033, %v2259
      %v2360 = vadd.f32 %v2034, %v2264
      %v2361 = vadd.f32 %v2035, %v2267
      %v2362 = vadd.f32 %v2036, %v2272
      %v2363 = vadd.f32 %v2037, %v2275
      %v2364 = vadd.f32 %v2038, %v2280
      %v2365 = vadd.f32 %v2039, %v2283
      %v2366 = vadd.f32 %v2040, %v2288
      %v2367 = vadd.f32 %v2041, %v2291
      %v2368 = vadd.f32 %v2042, %v2296
      %v2369 = vadd.f32 %v2043, %v2299
      %v2370 = vadd.f32 %v2044, %v2304
      %v2371 = vadd.f32 %v2045, %v2307
      %v2372 = vadd.f32 %v2046, %v2312
      %v2373 = vadd.f32 %v2047, %v2315
      %v2374 = vadd.f32 %v2048, %v2320
      %v2375 = vadd.f32 %v2049, %v2323
      %v2376 = vadd.f32 %v2050, %v2328
      %v2377 = vadd.f32 %v2051, %v2331
      %v2378 = vadd.f32 %v2052, %v2336
      %v2379 = vadd.f32 %v2053, %v2339
      %v2380 = vadd.f32 %v2054, %v2344
      %v2381 = vadd.f32 %v2055, %v2347
      %v2386 = vrot.slane %v242, 5
      %v2387 = vrot.slane %v2386, 4
      %v2388 = vrot.slane %v243, 5
      %v2389 = vsel %vm1355, %v2387, %v2388
      %v2390 = vrot.slane %v262, 5
      %v2391 = vrot.slane %v2390, 4
      %v2392 = vrot.slane %v263, 5
      %v2393 = vsel %vm1355, %v2391, %v2392
      %v2394 = vrot.slane %v282, 5
      %v2395 = vrot.slane %v2394, 4
      %v2396 = vrot.slane %v283, 5
      %v2397 = vsel %vm1355, %v2395, %v2396
      %v2398 = vrot.slane %v302, 5
      %v2399 = vrot.slane %v2398, 4
      %v2400 = vrot.slane %v303, 5
      %v2401 = vsel %vm1355, %v2399, %v2400
      %s2402 = scalar_lea.vmem %s1, 40
      %v2403 = vld [vmem:[%s2402] sm:$0xf]
      %v2404 = vld [vmem:[%s2402 + $0x4] sm:$0xf]
      %v2405 = vunpack.c.l.b16 %v2389
      %v2406 = vunpack.c.l.b16 %v2393
      %v2407 = vunpack.c.l.b16 %v2397
      %v2408 = vunpack.c.l.b16 %v2401
      %v2409 = vpack.c.b16 %v1489, %v1488
      %v2410 = vpack.c.b16 %v1491, %v1490
      %v2411 = vpack.c.b16 %v1493, %v1492
      %v2412 = vpack.c.b16 %v2405, %v1494
      %v2413 = vpack.c.b16 %v1497, %v1496
      %v2414 = vpack.c.b16 %v1499, %v1498
      %v2415 = vpack.c.b16 %v1501, %v1500
      %v2416 = vpack.c.b16 %v2406, %v1502
      %v2417 = vpack.c.b16 %v1505, %v1504
      %v2418 = vpack.c.b16 %v1507, %v1506
      %v2419 = vpack.c.b16 %v1509, %v1508
      %v2420 = vpack.c.b16 %v2407, %v1510
      %v2421 = vpack.c.b16 %v1513, %v1512
      %v2422 = vpack.c.b16 %v1515, %v1514
      %v2423 = vpack.c.b16 %v1517, %v1516
      %v2424 = vpack.c.b16 %v2408, %v1518
      %v2427 = vunpack.c.l.b16 %v2403
      %v2428 = vunpack.c.l.b16 %v2404
      %v2429 = vpack.c.b16 %v2428, %v2427
      %v2432 = vsel %vm816, %v2409, 0
      %v2435 = vsel %vm816, %v2410, 0
      %v2438 = vsel %vm816, %v2411, 0
      %v2441 = vsel %vm816, %v2412, 0
      %v2444 = vsel %vm816, %v2413, 0
      %v2447 = vsel %vm816, %v2414, 0
      %v2450 = vsel %vm816, %v2415, 0
      %v2453 = vsel %vm816, %v2416, 0
      %v2456 = vsel %vm816, %v2417, 0
      %v2459 = vsel %vm816, %v2418, 0
      %v2462 = vsel %vm816, %v2419, 0
      %v2465 = vsel %vm816, %v2420, 0
      %v2468 = vsel %vm816, %v2421, 0
      %v2471 = vsel %vm816, %v2422, 0
      %v2474 = vsel %vm816, %v2423, 0
      %v2477 = vsel %vm816, %v2424, 0
      %2479 = vmatprep.subr.bf16.mxu0 0
      %2480 = vmatpush1.bf16.msra.mxu0 %v2429
      %2481 = vmatprep.subr.bf16.mxu0 0
      %2482 = vmatpush1.bf16.msra.mxu0 0
      %2483 = vmatprep.subr.bf16.mxu0 0
      %2484 = vmatpush1.bf16.msra.mxu0 0
      %2485 = vmatprep.subr.bf16.mxu0 0
      %2486 = vmatpush1.bf16.msra.mxu0 0
      %2487 = vmatprep.subr.bf16.mxu0 0
      %2488 = vmatpush1.bf16.msra.mxu0 0
      %2489 = vmatprep.subr.bf16.mxu0 0
      %2490 = vmatpush1.bf16.msra.mxu0 0
      %2491 = vmatprep.subr.bf16.mxu0 0
      %2492 = vmatpush1.bf16.msra.mxu0 0
      %2493 = vmatprep.subr.bf16.mxu0 0
      %2494 = vmatpush1.bf16.msra.mxu0 0
      %2495 = vmatprep.subr.bf16.mxu0 0
      %2496 = vmatpush1.bf16.msra.mxu0 0
      %2497 = vmatprep.subr.bf16.mxu0 0
      %2498 = vmatpush1.bf16.msra.mxu0 0
      %2499 = vmatprep.subr.bf16.mxu0 0
      %2500 = vmatpush1.bf16.msra.mxu0 0
      %2501 = vmatprep.subr.bf16.mxu0 0
      %2502 = vmatpush1.bf16.msra.mxu0 0
      %2503 = vmatprep.subr.bf16.mxu0 0
      %2504 = vmatpush1.bf16.msra.mxu0 0
      %2505 = vmatprep.subr.bf16.mxu0 0
      %2506 = vmatpush1.bf16.msra.mxu0 0
      %2507 = vmatprep.subr.bf16.mxu0 0
      %2508 = vmatpush1.bf16.msra.mxu0 0
      %2509 = vmatprep.subr.bf16.mxu0 0
      %2510 = vmatpush1.bf16.msra.mxu0 0
      %2511 = vmatprep.mubr.bf16.mxu0 0
      %2512 = vmatmul.mubr.bf16.gmra.mrb[0].mxu0 %v2432
      %v2513 = vpop.f32.mrb[0].mxu0
      %v2514 = vadd.f32 0.0, %v2513
      %v2515 = vpop.f32.mrb[0].mxu0
      %v2516 = vpop.f32.mrb[0].mxu0
      %v2517 = vadd.f32 0.0, %v2516
      %v2518 = vpop.f32.mrb[0].mxu0
      %2519 = vmatprep.mubr.bf16.mxu0 0
      %2520 = vmatmul.mubr.bf16.gmra.mrb[0].mxu0 %v2435
      %v2521 = vpop.f32.mrb[0].mxu0
      %v2522 = vadd.f32 0.0, %v2521
      %v2523 = vpop.f32.mrb[0].mxu0
      %v2524 = vpop.f32.mrb[0].mxu0
      %v2525 = vadd.f32 0.0, %v2524
      %v2526 = vpop.f32.mrb[0].mxu0
      %2527 = vmatprep.mubr.bf16.mxu0 0
      %2528 = vmatmul.mubr.bf16.gmra.mrb[0].mxu0 %v2438
      %v2529 = vpop.f32.mrb[0].mxu0
      %v2530 = vadd.f32 0.0, %v2529
      %v2531 = vpop.f32.mrb[0].mxu0
      %v2532 = vpop.f32.mrb[0].mxu0
      %v2533 = vadd.f32 0.0, %v2532
      %v2534 = vpop.f32.mrb[0].mxu0
      %2535 = vmatprep.mubr.bf16.mxu0 0
      %2536 = vmatmul.mubr.bf16.gmra.mrb[0].mxu0 %v2441
      %v2537 = vpop.f32.mrb[0].mxu0
      %v2538 = vadd.f32 0.0, %v2537
      %v2539 = vpop.f32.mrb[0].mxu0
      %v2540 = vpop.f32.mrb[0].mxu0
      %v2541 = vadd.f32 0.0, %v2540
      %v2542 = vpop.f32.mrb[0].mxu0
      %2543 = vmatprep.mubr.bf16.mxu0 0
      %2544 = vmatmul.mubr.bf16.gmra.mrb[0].mxu0 %v2444
      %v2545 = vpop.f32.mrb[0].mxu0
      %v2546 = vadd.f32 0.0, %v2545
      %v2547 = vpop.f32.mrb[0].mxu0
      %v2548 = vpop.f32.mrb[0].mxu0
      %v2549 = vadd.f32 0.0, %v2548
      %v2550 = vpop.f32.mrb[0].mxu0
      %2551 = vmatprep.mubr.bf16.mxu0 0
      %2552 = vmatmul.mubr.bf16.gmra.mrb[0].mxu0 %v2447
      %v2553 = vpop.f32.mrb[0].mxu0
      %v2554 = vadd.f32 0.0, %v2553
      %v2555 = vpop.f32.mrb[0].mxu0
      %v2556 = vpop.f32.mrb[0].mxu0
      %v2557 = vadd.f32 0.0, %v2556
      %v2558 = vpop.f32.mrb[0].mxu0
      %2559 = vmatprep.mubr.bf16.mxu0 0
      %2560 = vmatmul.mubr.bf16.gmra.mrb[0].mxu0 %v2450
      %v2561 = vpop.f32.mrb[0].mxu0
      %v2562 = vadd.f32 0.0, %v2561
      %v2563 = vpop.f32.mrb[0].mxu0
      %v2564 = vpop.f32.mrb[0].mxu0
      %v2565 = vadd.f32 0.0, %v2564
      %v2566 = vpop.f32.mrb[0].mxu0
      %2567 = vmatprep.mubr.bf16.mxu0 0
      %2568 = vmatmul.mubr.bf16.gmra.mrb[0].mxu0 %v2453
      %v2569 = vpop.f32.mrb[0].mxu0
      %v2570 = vadd.f32 0.0, %v2569
      %v2571 = vpop.f32.mrb[0].mxu0
      %v2572 = vpop.f32.mrb[0].mxu0
      %v2573 = vadd.f32 0.0, %v2572
      %v2574 = vpop.f32.mrb[0].mxu0
      %2575 = vmatprep.mubr.bf16.mxu0 0
      %2576 = vmatmul.mubr.bf16.gmra.mrb[0].mxu0 %v2456
      %v2577 = vpop.f32.mrb[0].mxu0
      %v2578 = vadd.f32 0.0, %v2577
      %v2579 = vpop.f32.mrb[0].mxu0
      %v2580 = vpop.f32.mrb[0].mxu0
      %v2581 = vadd.f32 0.0, %v2580
      %v2582 = vpop.f32.mrb[0].mxu0
      %2583 = vmatprep.mubr.bf16.mxu0 0
      %2584 = vmatmul.mubr.bf16.gmra.mrb[0].mxu0 %v2459
      %v2585 = vpop.f32.mrb[0].mxu0
      %v2586 = vadd.f32 0.0, %v2585
      %v2587 = vpop.f32.mrb[0].mxu0
      %v2588 = vpop.f32.mrb[0].mxu0
      %v2589 = vadd.f32 0.0, %v2588
      %v2590 = vpop.f32.mrb[0].mxu0
      %2591 = vmatprep.mubr.bf16.mxu0 0
      %2592 = vmatmul.mubr.bf16.gmra.mrb[0].mxu0 %v2462
      %v2593 = vpop.f32.mrb[0].mxu0
      %v2594 = vadd.f32 0.0, %v2593
      %v2595 = vpop.f32.mrb[0].mxu0
      %v2596 = vpop.f32.mrb[0].mxu0
      %v2597 = vadd.f32 0.0, %v2596
      %v2598 = vpop.f32.mrb[0].mxu0
      %2599 = vmatprep.mubr.bf16.mxu0 0
      %2600 = vmatmul.mubr.bf16.gmra.mrb[0].mxu0 %v2465
      %v2601 = vpop.f32.mrb[0].mxu0
      %v2602 = vadd.f32 0.0, %v2601
      %v2603 = vpop.f32.mrb[0].mxu0
      %v2604 = vpop.f32.mrb[0].mxu0
      %v2605 = vadd.f32 0.0, %v2604
      %v2606 = vpop.f32.mrb[0].mxu0
      %2607 = vmatprep.mubr.bf16.mxu0 0
      %2608 = vmatmul.mubr.bf16.gmra.mrb[0].mxu0 %v2468
      %v2609 = vpop.f32.mrb[0].mxu0
      %v2610 = vadd.f32 0.0, %v2609
      %v2611 = vpop.f32.mrb[0].mxu0
      %v2612 = vpop.f32.mrb[0].mxu0
      %v2613 = vadd.f32 0.0, %v2612
      %v2614 = vpop.f32.mrb[0].mxu0
      %2615 = vmatprep.mubr.bf16.mxu0 0
      %2616 = vmatmul.mubr.bf16.gmra.mrb[0].mxu0 %v2471
      %v2617 = vpop.f32.mrb[0].mxu0
      %v2618 = vadd.f32 0.0, %v2617
      %v2619 = vpop.f32.mrb[0].mxu0
      %v2620 = vpop.f32.mrb[0].mxu0
      %v2621 = vadd.f32 0.0, %v2620
      %v2622 = vpop.f32.mrb[0].mxu0
      %2623 = vmatprep.mubr.bf16.mxu0 0
      %2624 = vmatmul.mubr.bf16.gmra.mrb[0].mxu0 %v2474
      %v2625 = vpop.f32.mrb[0].mxu0
      %v2626 = vadd.f32 0.0, %v2625
      %v2627 = vpop.f32.mrb[0].mxu0
      %v2628 = vpop.f32.mrb[0].mxu0
      %v2629 = vadd.f32 0.0, %v2628
      %v2630 = vpop.f32.mrb[0].mxu0
      %2631 = vmatprep.mubr.bf16.mxu0 0
      %2632 = vmatmul.mubr.bf16.gmra.mrb[0].mxu0 %v2477
      %v2633 = vpop.f32.mrb[0].mxu0
      %v2634 = vadd.f32 0.0, %v2633
      %v2635 = vpop.f32.mrb[0].mxu0
      %v2636 = vpop.f32.mrb[0].mxu0
      %v2637 = vadd.f32 0.0, %v2636
      %v2638 = vpop.f32.mrb[0].mxu0
      %2639 = vdwg.mxu0
      %v2640 = vadd.f32 %v2350, %v2514
      %v2641 = vadd.f32 %v2351, %v2517
      %v2642 = vadd.f32 %v2352, %v2522
      %v2643 = vadd.f32 %v2353, %v2525
      %v2644 = vadd.f32 %v2354, %v2530
      %v2645 = vadd.f32 %v2355, %v2533
      %v2646 = vadd.f32 %v2356, %v2538
      %v2647 = vadd.f32 %v2357, %v2541
      %v2648 = vadd.f32 %v2358, %v2546
      %v2649 = vadd.f32 %v2359, %v2549
      %v2650 = vadd.f32 %v2360, %v2554
      %v2651 = vadd.f32 %v2361, %v2557
      %v2652 = vadd.f32 %v2362, %v2562
      %v2653 = vadd.f32 %v2363, %v2565
      %v2654 = vadd.f32 %v2364, %v2570
      %v2655 = vadd.f32 %v2365, %v2573
      %v2656 = vadd.f32 %v2366, %v2578
      %v2657 = vadd.f32 %v2367, %v2581
      %v2658 = vadd.f32 %v2368, %v2586
      %v2659 = vadd.f32 %v2369, %v2589
      %v2660 = vadd.f32 %v2370, %v2594
      %v2661 = vadd.f32 %v2371, %v2597
      %v2662 = vadd.f32 %v2372, %v2602
      %v2663 = vadd.f32 %v2373, %v2605
      %v2664 = vadd.f32 %v2374, %v2610
      %v2665 = vadd.f32 %v2375, %v2613
      %v2666 = vadd.f32 %v2376, %v2618
      %v2667 = vadd.f32 %v2377, %v2621
      %v2668 = vadd.f32 %v2378, %v2626
      %v2669 = vadd.f32 %v2379, %v2629
      %v2670 = vadd.f32 %v2380, %v2634
      %v2671 = vadd.f32 %v2381, %v2637
      %s2672 = scalar_lea.vmem %s1, 48
      %v2673 = vld [vmem:[%s2672] sm:$0xf]
      %v2674 = vld [vmem:[%s2672 + $0x4] sm:$0xf]
      %v2679 = vunpack.c.l.b16 %v244
      %v2680 = vunpack.c.l.b16 %v264
      %v2681 = vunpack.c.l.b16 %v284
      %v2682 = vunpack.c.l.b16 %v304
      %v2683 = vpack.c.b16 %v2679, %v1789
      %v2684 = vpack.c.b16 %v2680, %v1790
      %v2685 = vpack.c.b16 %v2681, %v1791
      %v2686 = vpack.c.b16 %v2682, %v1792
      %v2689 = vunpack.c.l.b16 %v2673
      %v2690 = vunpack.c.l.b16 %v2674
      %v2691 = vpack.c.b16 %v2690, %v2689
      %v2694 = vsel %vm816, %v2683, 0
      %v2697 = vsel %vm816, %v2684, 0
      %v2700 = vsel %vm816, %v2685, 0
      %v2703 = vsel %vm816, %v2686, 0
      %2705 = vmatprep.subr.bf16.mxu0 0
      %2706 = vmatpush1.bf16.msra.mxu0 %v2691
      %2707 = vmatprep.subr.bf16.mxu0 0
      %2708 = vmatpush1.bf16.msra.mxu0 0
      %2709 = vmatprep.subr.bf16.mxu0 0
      %2710 = vmatpush1.bf16.msra.mxu0 0
      %2711 = vmatprep.subr.bf16.mxu0 0
      %2712 = vmatpush1.bf16.msra.mxu0 0
      %2713 = vmatprep.subr.bf16.mxu0 0
      %2714 = vmatpush1.bf16.msra.mxu0 0
      %2715 = vmatprep.subr.bf16.mxu0 0
      %2716 = vmatpush1.bf16.msra.mxu0 0
      %2717 = vmatprep.subr.bf16.mxu0 0
      %2718 = vmatpush1.bf16.msra.mxu0 0
      %2719 = vmatprep.subr.bf16.mxu0 0
      %2720 = vmatpush1.bf16.msra.mxu0 0
      %2721 = vmatprep.subr.bf16.mxu0 0
      %2722 = vmatpush1.bf16.msra.mxu0 0
      %2723 = vmatprep.subr.bf16.mxu0 0
      %2724 = vmatpush1.bf16.msra.mxu0 0
      %2725 = vmatprep.subr.bf16.mxu0 0
      %2726 = vmatpush1.bf16.msra.mxu0 0
      %2727 = vmatprep.subr.bf16.mxu0 0
      %2728 = vmatpush1.bf16.msra.mxu0 0
      %2729 = vmatprep.subr.bf16.mxu0 0
      %2730 = vmatpush1.bf16.msra.mxu0 0
      %2731 = vmatprep.subr.bf16.mxu0 0
      %2732 = vmatpush1.bf16.msra.mxu0 0
      %2733 = vmatprep.subr.bf16.mxu0 0
      %2734 = vmatpush1.bf16.msra.mxu0 0
      %2735 = vmatprep.subr.bf16.mxu0 0
      %2736 = vmatpush1.bf16.msra.mxu0 0
      %2737 = vmatprep.mubr.bf16.mxu0 0
      %2738 = vmatmul.mubr.bf16.gmra.mrb[0].mxu0 %v1116
      %v2739 = vpop.f32.mrb[0].mxu0
      %v2740 = vadd.f32 0.0, %v2739
      %v2741 = vpop.f32.mrb[0].mxu0
      %v2742 = vpop.f32.mrb[0].mxu0
      %v2743 = vadd.f32 0.0, %v2742
      %v2744 = vpop.f32.mrb[0].mxu0
      %2745 = vmatprep.mubr.bf16.mxu0 0
      %2746 = vmatmul.mubr.bf16.gmra.mrb[0].mxu0 %v1119
      %v2747 = vpop.f32.mrb[0].mxu0
      %v2748 = vadd.f32 0.0, %v2747
      %v2749 = vpop.f32.mrb[0].mxu0
      %v2750 = vpop.f32.mrb[0].mxu0
      %v2751 = vadd.f32 0.0, %v2750
      %v2752 = vpop.f32.mrb[0].mxu0
      %2753 = vmatprep.mubr.bf16.mxu0 0
      %2754 = vmatmul.mubr.bf16.gmra.mrb[0].mxu0 %v1122
      %v2755 = vpop.f32.mrb[0].mxu0
      %v2756 = vadd.f32 0.0, %v2755
      %v2757 = vpop.f32.mrb[0].mxu0
      %v2758 = vpop.f32.mrb[0].mxu0
      %v2759 = vadd.f32 0.0, %v2758
      %v2760 = vpop.f32.mrb[0].mxu0
      %2761 = vmatprep.mubr.bf16.mxu0 0
      %2762 = vmatmul.mubr.bf16.gmra.mrb[0].mxu0 %v2694
      %v2763 = vpop.f32.mrb[0].mxu0
      %v2764 = vadd.f32 0.0, %v2763
      %v2765 = vpop.f32.mrb[0].mxu0
      %v2766 = vpop.f32.mrb[0].mxu0
      %v2767 = vadd.f32 0.0, %v2766
      %v2768 = vpop.f32.mrb[0].mxu0
      %2769 = vmatprep.mubr.bf16.mxu0 0
      %2770 = vmatmul.mubr.bf16.gmra.mrb[0].mxu0 %v1128
      %v2771 = vpop.f32.mrb[0].mxu0
      %v2772 = vadd.f32 0.0, %v2771
      %v2773 = vpop.f32.mrb[0].mxu0
      %v2774 = vpop.f32.mrb[0].mxu0
      %v2775 = vadd.f32 0.0, %v2774
      %v2776 = vpop.f32.mrb[0].mxu0
      %2777 = vmatprep.mubr.bf16.mxu0 0
      %2778 = vmatmul.mubr.bf16.gmra.mrb[0].mxu0 %v1131
      %v2779 = vpop.f32.mrb[0].mxu0
      %v2780 = vadd.f32 0.0, %v2779
      %v2781 = vpop.f32.mrb[0].mxu0
      %v2782 = vpop.f32.mrb[0].mxu0
      %v2783 = vadd.f32 0.0, %v2782
      %v2784 = vpop.f32.mrb[0].mxu0
      %2785 = vmatprep.mubr.bf16.mxu0 0
      %2786 = vmatmul.mubr.bf16.gmra.mrb[0].mxu0 %v1134
      %v2787 = vpop.f32.mrb[0].mxu0
      %v2788 = vadd.f32 0.0, %v2787
      %v2789 = vpop.f32.mrb[0].mxu0
      %v2790 = vpop.f32.mrb[0].mxu0
      %v2791 = vadd.f32 0.0, %v2790
      %v2792 = vpop.f32.mrb[0].mxu0
      %2793 = vmatprep.mubr.bf16.mxu0 0
      %2794 = vmatmul.mubr.bf16.gmra.mrb[0].mxu0 %v2697
      %v2795 = vpop.f32.mrb[0].mxu0
      %v2796 = vadd.f32 0.0, %v2795
      %v2797 = vpop.f32.mrb[0].mxu0
      %v2798 = vpop.f32.mrb[0].mxu0
      %v2799 = vadd.f32 0.0, %v2798
      %v2800 = vpop.f32.mrb[0].mxu0
      %2801 = vmatprep.mubr.bf16.mxu0 0
      %2802 = vmatmul.mubr.bf16.gmra.mrb[0].mxu0 %v1140
      %v2803 = vpop.f32.mrb[0].mxu0
      %v2804 = vadd.f32 0.0, %v2803
      %v2805 = vpop.f32.mrb[0].mxu0
      %v2806 = vpop.f32.mrb[0].mxu0
      %v2807 = vadd.f32 0.0, %v2806
      %v2808 = vpop.f32.mrb[0].mxu0
      %2809 = vmatprep.mubr.bf16.mxu0 0
      %2810 = vmatmul.mubr.bf16.gmra.mrb[0].mxu0 %v1143
      %v2811 = vpop.f32.mrb[0].mxu0
      %v2812 = vadd.f32 0.0, %v2811
      %v2813 = vpop.f32.mrb[0].mxu0
      %v2814 = vpop.f32.mrb[0].mxu0
      %v2815 = vadd.f32 0.0, %v2814
      %v2816 = vpop.f32.mrb[0].mxu0
      %2817 = vmatprep.mubr.bf16.mxu0 0
      %2818 = vmatmul.mubr.bf16.gmra.mrb[0].mxu0 %v1146
      %v2819 = vpop.f32.mrb[0].mxu0
      %v2820 = vadd.f32 0.0, %v2819
      %v2821 = vpop.f32.mrb[0].mxu0
      %v2822 = vpop.f32.mrb[0].mxu0
      %v2823 = vadd.f32 0.0, %v2822
      %v2824 = vpop.f32.mrb[0].mxu0
      %2825 = vmatprep.mubr.bf16.mxu0 0
      %2826 = vmatmul.mubr.bf16.gmra.mrb[0].mxu0 %v2700
      %v2827 = vpop.f32.mrb[0].mxu0
      %v2828 = vadd.f32 0.0, %v2827
      %v2829 = vpop.f32.mrb[0].mxu0
      %v2830 = vpop.f32.mrb[0].mxu0
      %v2831 = vadd.f32 0.0, %v2830
      %v2832 = vpop.f32.mrb[0].mxu0
      %2833 = vmatprep.mubr.bf16.mxu0 0
      %2834 = vmatmul.mubr.bf16.gmra.mrb[0].mxu0 %v1152
      %v2835 = vpop.f32.mrb[0].mxu0
      %v2836 = vadd.f32 0.0, %v2835
      %v2837 = vpop.f32.mrb[0].mxu0
      %v2838 = vpop.f32.mrb[0].mxu0
      %v2839 = vadd.f32 0.0, %v2838
      %v2840 = vpop.f32.mrb[0].mxu0
      %2841 = vmatprep.mubr.bf16.mxu0 0
      %2842 = vmatmul.mubr.bf16.gmra.mrb[0].mxu0 %v1155
      %v2843 = vpop.f32.mrb[0].mxu0
      %v2844 = vadd.f32 0.0, %v2843
      %v2845 = vpop.f32.mrb[0].mxu0
      %v2846 = vpop.f32.mrb[0].mxu0
      %v2847 = vadd.f32 0.0, %v2846
      %v2848 = vpop.f32.mrb[0].mxu0
      %2849 = vmatprep.mubr.bf16.mxu0 0
      %2850 = vmatmul.mubr.bf16.gmra.mrb[0].mxu0 %v1158
      %v2851 = vpop.f32.mrb[0].mxu0
      %v2852 = vadd.f32 0.0, %v2851
      %v2853 = vpop.f32.mrb[0].mxu0
      %v2854 = vpop.f32.mrb[0].mxu0
      %v2855 = vadd.f32 0.0, %v2854
      %v2856 = vpop.f32.mrb[0].mxu0
      %2857 = vmatprep.mubr.bf16.mxu0 0
      %2858 = vmatmul.mubr.bf16.gmra.mrb[0].mxu0 %v2703
      %v2859 = vpop.f32.mrb[0].mxu0
      %v2860 = vadd.f32 0.0, %v2859
      %v2861 = vpop.f32.mrb[0].mxu0
      %v2862 = vpop.f32.mrb[0].mxu0
      %v2863 = vadd.f32 0.0, %v2862
      %v2864 = vpop.f32.mrb[0].mxu0
      %2865 = vdwg.mxu0
      %v2866 = vadd.f32 %v2640, %v2740
      %v2867 = vadd.f32 %v2641, %v2743
      %v2868 = vadd.f32 %v2642, %v2748
      %v2869 = vadd.f32 %v2643, %v2751
      %v2870 = vadd.f32 %v2644, %v2756
      %v2871 = vadd.f32 %v2645, %v2759
      %v2872 = vadd.f32 %v2646, %v2764
      %v2873 = vadd.f32 %v2647, %v2767
      %v2874 = vadd.f32 %v2648, %v2772
      %v2875 = vadd.f32 %v2649, %v2775
      %v2876 = vadd.f32 %v2650, %v2780
      %v2877 = vadd.f32 %v2651, %v2783
      %v2878 = vadd.f32 %v2652, %v2788
      %v2879 = vadd.f32 %v2653, %v2791
      %v2880 = vadd.f32 %v2654, %v2796
      %v2881 = vadd.f32 %v2655, %v2799
      %v2882 = vadd.f32 %v2656, %v2804
      %v2883 = vadd.f32 %v2657, %v2807
      %v2884 = vadd.f32 %v2658, %v2812
      %v2885 = vadd.f32 %v2659, %v2815
      %v2886 = vadd.f32 %v2660, %v2820
      %v2887 = vadd.f32 %v2661, %v2823
      %v2888 = vadd.f32 %v2662, %v2828
      %v2889 = vadd.f32 %v2663, %v2831
      %v2890 = vadd.f32 %v2664, %v2836
      %v2891 = vadd.f32 %v2665, %v2839
      %v2892 = vadd.f32 %v2666, %v2844
      %v2893 = vadd.f32 %v2667, %v2847
      %v2894 = vadd.f32 %v2668, %v2852
      %v2895 = vadd.f32 %v2669, %v2855
      %v2896 = vadd.f32 %v2670, %v2860
      %v2897 = vadd.f32 %v2671, %v2863
      %v2899 = vshrl.u32 %v244, 16
      %v2901 = vrot.slane %v2899, 4
      %v2902 = vshll.u32 %v244, 16
      %v2904 = vrot.slane %v2902, 5
      %v2905 = vor.u32 %v2901, %v2904
      %v2906 = vrot.slane %v2905, 4
      %v2908 = vshll.u32 %v245, 16
      %v2910 = vrot.slane %v2908, 5
      %v2911 = vsel %vm310, %v2906, %v2910
      %v2913 = vshrl.u32 %v264, 16
      %v2915 = vrot.slane %v2913, 4
      %v2916 = vshll.u32 %v264, 16
      %v2918 = vrot.slane %v2916, 5
      %v2919 = vor.u32 %v2915, %v2918
      %v2920 = vrot.slane %v2919, 4
      %v2922 = vshll.u32 %v265, 16
      %v2924 = vrot.slane %v2922, 5
      %v2925 = vsel %vm310, %v2920, %v2924
      %v2927 = vshrl.u32 %v284, 16
      %v2929 = vrot.slane %v2927, 4
      %v2930 = vshll.u32 %v284, 16
      %v2932 = vrot.slane %v2930, 5
      %v2933 = vor.u32 %v2929, %v2932
      %v2934 = vrot.slane %v2933, 4
      %v2936 = vshll.u32 %v285, 16
      %v2938 = vrot.slane %v2936, 5
      %v2939 = vsel %vm310, %v2934, %v2938
      %v2941 = vshrl.u32 %v304, 16
      %v2943 = vrot.slane %v2941, 4
      %v2944 = vshll.u32 %v304, 16
      %v2946 = vrot.slane %v2944, 5
      %v2947 = vor.u32 %v2943, %v2946
      %v2948 = vrot.slane %v2947, 4
      %v2950 = vshll.u32 %v305, 16
      %v2952 = vrot.slane %v2950, 5
      %v2953 = vsel %vm310, %v2948, %v2952
      %s2954 = scalar_lea.vmem %s1, 56
      %v2955 = vld [vmem:[%s2954] sm:$0xf]
      %v2956 = vld [vmem:[%s2954 + $0x4] sm:$0xf]
      %v2957 = vunpack.c.l.b16 %v2911
      %v2958 = vunpack.c.l.b16 %v2925
      %v2959 = vunpack.c.l.b16 %v2939
      %v2960 = vunpack.c.l.b16 %v2953
      %v2961 = vpack.c.b16 %v2957, %v2115
      %v2962 = vpack.c.b16 %v2958, %v2116
      %v2963 = vpack.c.b16 %v2959, %v2117
      %v2964 = vpack.c.b16 %v2960, %v2118
      %v2967 = vunpack.c.l.b16 %v2955
      %v2968 = vunpack.c.l.b16 %v2956
      %v2969 = vpack.c.b16 %v2968, %v2967
      %v2972 = vsel %vm816, %v2961, 0
      %v2975 = vsel %vm816, %v2962, 0
      %v2978 = vsel %vm816, %v2963, 0
      %v2981 = vsel %vm816, %v2964, 0
      %2983 = vmatprep.subr.bf16.mxu0 0
      %2984 = vmatpush1.bf16.msra.mxu0 %v2969
      %2985 = vmatprep.subr.bf16.mxu0 0
      %2986 = vmatpush1.bf16.msra.mxu0 0
      %2987 = vmatprep.subr.bf16.mxu0 0
      %2988 = vmatpush1.bf16.msra.mxu0 0
      %2989 = vmatprep.subr.bf16.mxu0 0
      %2990 = vmatpush1.bf16.msra.mxu0 0
      %2991 = vmatprep.subr.bf16.mxu0 0
      %2992 = vmatpush1.bf16.msra.mxu0 0
      %2993 = vmatprep.subr.bf16.mxu0 0
      %2994 = vmatpush1.bf16.msra.mxu0 0
      %2995 = vmatprep.subr.bf16.mxu0 0
      %2996 = vmatpush1.bf16.msra.mxu0 0
      %2997 = vmatprep.subr.bf16.mxu0 0
      %2998 = vmatpush1.bf16.msra.mxu0 0
      %2999 = vmatprep.subr.bf16.mxu0 0
      %3000 = vmatpush1.bf16.msra.mxu0 0
      %3001 = vmatprep.subr.bf16.mxu0 0
      %3002 = vmatpush1.bf16.msra.mxu0 0
      %3003 = vmatprep.subr.bf16.mxu0 0
      %3004 = vmatpush1.bf16.msra.mxu0 0
      %3005 = vmatprep.subr.bf16.mxu0 0
      %3006 = vmatpush1.bf16.msra.mxu0 0
      %3007 = vmatprep.subr.bf16.mxu0 0
      %3008 = vmatpush1.bf16.msra.mxu0 0
      %3009 = vmatprep.subr.bf16.mxu0 0
      %3010 = vmatpush1.bf16.msra.mxu0 0
      %3011 = vmatprep.subr.bf16.mxu0 0
      %3012 = vmatpush1.bf16.msra.mxu0 0
      %3013 = vmatprep.subr.bf16.mxu0 0
      %3014 = vmatpush1.bf16.msra.mxu0 0
      %3015 = vmatprep.mubr.bf16.mxu0 0
      %3016 = vmatmul.mubr.bf16.gmra.mrb[0].mxu0 %v821
      %v3017 = vpop.f32.mrb[0].mxu0
      %v3018 = vadd.f32 0.0, %v3017
      %v3019 = vpop.f32.mrb[0].mxu0
      %v3020 = vpop.f32.mrb[0].mxu0
      %v3021 = vadd.f32 0.0, %v3020
      %v3022 = vpop.f32.mrb[0].mxu0
      %3023 = vmatprep.mubr.bf16.mxu0 0
      %3024 = vmatmul.mubr.bf16.gmra.mrb[0].mxu0 %v824
      %v3025 = vpop.f32.mrb[0].mxu0
      %v3026 = vadd.f32 0.0, %v3025
      %v3027 = vpop.f32.mrb[0].mxu0
      %v3028 = vpop.f32.mrb[0].mxu0
      %v3029 = vadd.f32 0.0, %v3028
      %v3030 = vpop.f32.mrb[0].mxu0
      %3031 = vmatprep.mubr.bf16.mxu0 0
      %3032 = vmatmul.mubr.bf16.gmra.mrb[0].mxu0 %v827
      %v3033 = vpop.f32.mrb[0].mxu0
      %v3034 = vadd.f32 0.0, %v3033
      %v3035 = vpop.f32.mrb[0].mxu0
      %v3036 = vpop.f32.mrb[0].mxu0
      %v3037 = vadd.f32 0.0, %v3036
      %v3038 = vpop.f32.mrb[0].mxu0
      %3039 = vmatprep.mubr.bf16.mxu0 0
      %3040 = vmatmul.mubr.bf16.gmra.mrb[0].mxu0 %v2972
      %v3041 = vpop.f32.mrb[0].mxu0
      %v3042 = vadd.f32 0.0, %v3041
      %v3043 = vpop.f32.mrb[0].mxu0
      %v3044 = vpop.f32.mrb[0].mxu0
      %v3045 = vadd.f32 0.0, %v3044
      %v3046 = vpop.f32.mrb[0].mxu0
      %3047 = vmatprep.mubr.bf16.mxu0 0
      %3048 = vmatmul.mubr.bf16.gmra.mrb[0].mxu0 %v833
      %v3049 = vpop.f32.mrb[0].mxu0
      %v3050 = vadd.f32 0.0, %v3049
      %v3051 = vpop.f32.mrb[0].mxu0
      %v3052 = vpop.f32.mrb[0].mxu0
      %v3053 = vadd.f32 0.0, %v3052
      %v3054 = vpop.f32.mrb[0].mxu0
      %3055 = vmatprep.mubr.bf16.mxu0 0
      %3056 = vmatmul.mubr.bf16.gmra.mrb[0].mxu0 %v836
      %v3057 = vpop.f32.mrb[0].mxu0
      %v3058 = vadd.f32 0.0, %v3057
      %v3059 = vpop.f32.mrb[0].mxu0
      %v3060 = vpop.f32.mrb[0].mxu0
      %v3061 = vadd.f32 0.0, %v3060
      %v3062 = vpop.f32.mrb[0].mxu0
      %3063 = vmatprep.mubr.bf16.mxu0 0
      %3064 = vmatmul.mubr.bf16.gmra.mrb[0].mxu0 %v839
      %v3065 = vpop.f32.mrb[0].mxu0
      %v3066 = vadd.f32 0.0, %v3065
      %v3067 = vpop.f32.mrb[0].mxu0
      %v3068 = vpop.f32.mrb[0].mxu0
      %v3069 = vadd.f32 0.0, %v3068
      %v3070 = vpop.f32.mrb[0].mxu0
      %3071 = vmatprep.mubr.bf16.mxu0 0
      %3072 = vmatmul.mubr.bf16.gmra.mrb[0].mxu0 %v2975
      %v3073 = vpop.f32.mrb[0].mxu0
      %v3074 = vadd.f32 0.0, %v3073
      %v3075 = vpop.f32.mrb[0].mxu0
      %v3076 = vpop.f32.mrb[0].mxu0
      %v3077 = vadd.f32 0.0, %v3076
      %v3078 = vpop.f32.mrb[0].mxu0
      %3079 = vmatprep.mubr.bf16.mxu0 0
      %3080 = vmatmul.mubr.bf16.gmra.mrb[0].mxu0 %v845
      %v3081 = vpop.f32.mrb[0].mxu0
      %v3082 = vadd.f32 0.0, %v3081
      %v3083 = vpop.f32.mrb[0].mxu0
      %v3084 = vpop.f32.mrb[0].mxu0
      %v3085 = vadd.f32 0.0, %v3084
      %v3086 = vpop.f32.mrb[0].mxu0
      %3087 = vmatprep.mubr.bf16.mxu0 0
      %3088 = vmatmul.mubr.bf16.gmra.mrb[0].mxu0 %v848
      %v3089 = vpop.f32.mrb[0].mxu0
      %v3090 = vadd.f32 0.0, %v3089
      %v3091 = vpop.f32.mrb[0].mxu0
      %v3092 = vpop.f32.mrb[0].mxu0
      %v3093 = vadd.f32 0.0, %v3092
      %v3094 = vpop.f32.mrb[0].mxu0
      %3095 = vmatprep.mubr.bf16.mxu0 0
      %3096 = vmatmul.mubr.bf16.gmra.mrb[0].mxu0 %v851
      %v3097 = vpop.f32.mrb[0].mxu0
      %v3098 = vadd.f32 0.0, %v3097
      %v3099 = vpop.f32.mrb[0].mxu0
      %v3100 = vpop.f32.mrb[0].mxu0
      %v3101 = vadd.f32 0.0, %v3100
      %v3102 = vpop.f32.mrb[0].mxu0
      %3103 = vmatprep.mubr.bf16.mxu0 0
      %3104 = vmatmul.mubr.bf16.gmra.mrb[0].mxu0 %v2978
      %v3105 = vpop.f32.mrb[0].mxu0
      %v3106 = vadd.f32 0.0, %v3105
      %v3107 = vpop.f32.mrb[0].mxu0
      %v3108 = vpop.f32.mrb[0].mxu0
      %v3109 = vadd.f32 0.0, %v3108
      %v3110 = vpop.f32.mrb[0].mxu0
      %3111 = vmatprep.mubr.bf16.mxu0 0
      %3112 = vmatmul.mubr.bf16.gmra.mrb[0].mxu0 %v857
      %v3113 = vpop.f32.mrb[0].mxu0
      %v3114 = vadd.f32 0.0, %v3113
      %v3115 = vpop.f32.mrb[0].mxu0
      %v3116 = vpop.f32.mrb[0].mxu0
      %v3117 = vadd.f32 0.0, %v3116
      %v3118 = vpop.f32.mrb[0].mxu0
      %3119 = vmatprep.mubr.bf16.mxu0 0
      %3120 = vmatmul.mubr.bf16.gmra.mrb[0].mxu0 %v860
      %v3121 = vpop.f32.mrb[0].mxu0
      %v3122 = vadd.f32 0.0, %v3121
      %v3123 = vpop.f32.mrb[0].mxu0
      %v3124 = vpop.f32.mrb[0].mxu0
      %v3125 = vadd.f32 0.0, %v3124
      %v3126 = vpop.f32.mrb[0].mxu0
      %3127 = vmatprep.mubr.bf16.mxu0 0
      %3128 = vmatmul.mubr.bf16.gmra.mrb[0].mxu0 %v863
      %v3129 = vpop.f32.mrb[0].mxu0
      %v3130 = vadd.f32 0.0, %v3129
      %v3131 = vpop.f32.mrb[0].mxu0
      %v3132 = vpop.f32.mrb[0].mxu0
      %v3133 = vadd.f32 0.0, %v3132
      %v3134 = vpop.f32.mrb[0].mxu0
      %3135 = vmatprep.mubr.bf16.mxu0 0
      %3136 = vmatmul.mubr.bf16.gmra.mrb[0].mxu0 %v2981
      %v3137 = vpop.f32.mrb[0].mxu0
      %v3138 = vadd.f32 0.0, %v3137
      %v3139 = vpop.f32.mrb[0].mxu0
      %v3140 = vpop.f32.mrb[0].mxu0
      %v3141 = vadd.f32 0.0, %v3140
      %v3142 = vpop.f32.mrb[0].mxu0
      %3143 = vdwg.mxu0
      %v3144 = vadd.f32 %v2866, %v3018
      %v3145 = vadd.f32 %v2867, %v3021
      %v3146 = vadd.f32 %v2868, %v3026
      %v3147 = vadd.f32 %v2869, %v3029
      %v3148 = vadd.f32 %v2870, %v3034
      %v3149 = vadd.f32 %v2871, %v3037
      %v3150 = vadd.f32 %v2872, %v3042
      %v3151 = vadd.f32 %v2873, %v3045
      %v3152 = vadd.f32 %v2874, %v3050
      %v3153 = vadd.f32 %v2875, %v3053
      %v3154 = vadd.f32 %v2876, %v3058
      %v3155 = vadd.f32 %v2877, %v3061
      %v3156 = vadd.f32 %v2878, %v3066
      %v3157 = vadd.f32 %v2879, %v3069
      %v3158 = vadd.f32 %v2880, %v3074
      %v3159 = vadd.f32 %v2881, %v3077
      %v3160 = vadd.f32 %v2882, %v3082
      %v3161 = vadd.f32 %v2883, %v3085
      %v3162 = vadd.f32 %v2884, %v3090
      %v3163 = vadd.f32 %v2885, %v3093
      %v3164 = vadd.f32 %v2886, %v3098
      %v3165 = vadd.f32 %v2887, %v3101
      %v3166 = vadd.f32 %v2888, %v3106
      %v3167 = vadd.f32 %v2889, %v3109
      %v3168 = vadd.f32 %v2890, %v3114
      %v3169 = vadd.f32 %v2891, %v3117
      %v3170 = vadd.f32 %v2892, %v3122
      %v3171 = vadd.f32 %v2893, %v3125
      %v3172 = vadd.f32 %v2894, %v3130
      %v3173 = vadd.f32 %v2895, %v3133
      %v3174 = vadd.f32 %v2896, %v3138
      %v3175 = vadd.f32 %v2897, %v3141
      %v3180 = vrot.slane %v244, 5
      %v3181 = vrot.slane %v3180, 4
      %v3182 = vrot.slane %v245, 5
      %v3183 = vsel %vm1355, %v3181, %v3182
      %v3184 = vrot.slane %v264, 5
      %v3185 = vrot.slane %v3184, 4
      %v3186 = vrot.slane %v265, 5
      %v3187 = vsel %vm1355, %v3185, %v3186
      %v3188 = vrot.slane %v284, 5
      %v3189 = vrot.slane %v3188, 4
      %v3190 = vrot.slane %v285, 5
      %v3191 = vsel %vm1355, %v3189, %v3190
      %v3192 = vrot.slane %v304, 5
      %v3193 = vrot.slane %v3192, 4
      %v3194 = vrot.slane %v305, 5
      %v3195 = vsel %vm1355, %v3193, %v3194
      %s3196 = scalar_lea.vmem %s1, 64
      %v3197 = vld [vmem:[%s3196] sm:$0xf]
      %v3198 = vld [vmem:[%s3196 + $0x4] sm:$0xf]
      %v3199 = vunpack.c.l.b16 %v3183
      %v3200 = vunpack.c.l.b16 %v3187
      %v3201 = vunpack.c.l.b16 %v3191
      %v3202 = vunpack.c.l.b16 %v3195
      %v3203 = vpack.c.b16 %v3199, %v2405
      %v3204 = vpack.c.b16 %v3200, %v2406
      %v3205 = vpack.c.b16 %v3201, %v2407
      %v3206 = vpack.c.b16 %v3202, %v2408
      %v3209 = vunpack.c.l.b16 %v3197
      %v3210 = vunpack.c.l.b16 %v3198
      %v3211 = vpack.c.b16 %v3210, %v3209
      %v3214 = vsel %vm816, %v3203, 0
      %v3217 = vsel %vm816, %v3204, 0
      %v3220 = vsel %vm816, %v3205, 0
      %v3223 = vsel %vm816, %v3206, 0
      %3225 = vmatprep.subr.bf16.mxu0 0
      %3226 = vmatpush1.bf16.msra.mxu0 %v3211
      %3227 = vmatprep.subr.bf16.mxu0 0
      %3228 = vmatpush1.bf16.msra.mxu0 0
      %3229 = vmatprep.subr.bf16.mxu0 0
      %3230 = vmatpush1.bf16.msra.mxu0 0
      %3231 = vmatprep.subr.bf16.mxu0 0
      %3232 = vmatpush1.bf16.msra.mxu0 0
      %3233 = vmatprep.subr.bf16.mxu0 0
      %3234 = vmatpush1.bf16.msra.mxu0 0
      %3235 = vmatprep.subr.bf16.mxu0 0
      %3236 = vmatpush1.bf16.msra.mxu0 0
      %3237 = vmatprep.subr.bf16.mxu0 0
      %3238 = vmatpush1.bf16.msra.mxu0 0
      %3239 = vmatprep.subr.bf16.mxu0 0
      %3240 = vmatpush1.bf16.msra.mxu0 0
      %3241 = vmatprep.subr.bf16.mxu0 0
      %3242 = vmatpush1.bf16.msra.mxu0 0
      %3243 = vmatprep.subr.bf16.mxu0 0
      %3244 = vmatpush1.bf16.msra.mxu0 0
      %3245 = vmatprep.subr.bf16.mxu0 0
      %3246 = vmatpush1.bf16.msra.mxu0 0
      %3247 = vmatprep.subr.bf16.mxu0 0
      %3248 = vmatpush1.bf16.msra.mxu0 0
      %3249 = vmatprep.subr.bf16.mxu0 0
      %3250 = vmatpush1.bf16.msra.mxu0 0
      %3251 = vmatprep.subr.bf16.mxu0 0
      %3252 = vmatpush1.bf16.msra.mxu0 0
      %3253 = vmatprep.subr.bf16.mxu0 0
      %3254 = vmatpush1.bf16.msra.mxu0 0
      %3255 = vmatprep.subr.bf16.mxu0 0
      %3256 = vmatpush1.bf16.msra.mxu0 0
      %3257 = vmatprep.mubr.bf16.mxu0 0
      %3258 = vmatmul.mubr.bf16.gmra.mrb[0].mxu0 %v1545
      %v3259 = vpop.f32.mrb[0].mxu0
      %v3260 = vadd.f32 0.0, %v3259
      %v3261 = vpop.f32.mrb[0].mxu0
      %v3262 = vpop.f32.mrb[0].mxu0
      %v3263 = vadd.f32 0.0, %v3262
      %v3264 = vpop.f32.mrb[0].mxu0
      %3265 = vmatprep.mubr.bf16.mxu0 0
      %3266 = vmatmul.mubr.bf16.gmra.mrb[0].mxu0 %v1548
      %v3267 = vpop.f32.mrb[0].mxu0
      %v3268 = vadd.f32 0.0, %v3267
      %v3269 = vpop.f32.mrb[0].mxu0
      %v3270 = vpop.f32.mrb[0].mxu0
      %v3271 = vadd.f32 0.0, %v3270
      %v3272 = vpop.f32.mrb[0].mxu0
      %3273 = vmatprep.mubr.bf16.mxu0 0
      %3274 = vmatmul.mubr.bf16.gmra.mrb[0].mxu0 %v1551
      %v3275 = vpop.f32.mrb[0].mxu0
      %v3276 = vadd.f32 0.0, %v3275
      %v3277 = vpop.f32.mrb[0].mxu0
      %v3278 = vpop.f32.mrb[0].mxu0
      %v3279 = vadd.f32 0.0, %v3278
      %v3280 = vpop.f32.mrb[0].mxu0
      %3281 = vmatprep.mubr.bf16.mxu0 0
      %3282 = vmatmul.mubr.bf16.gmra.mrb[0].mxu0 %v3214
      %v3283 = vpop.f32.mrb[0].mxu0
      %v3284 = vadd.f32 0.0, %v3283
      %v3285 = vpop.f32.mrb[0].mxu0
      %v3286 = vpop.f32.mrb[0].mxu0
      %v3287 = vadd.f32 0.0, %v3286
      %v3288 = vpop.f32.mrb[0].mxu0
      %3289 = vmatprep.mubr.bf16.mxu0 0
      %3290 = vmatmul.mubr.bf16.gmra.mrb[0].mxu0 %v1557
      %v3291 = vpop.f32.mrb[0].mxu0
      %v3292 = vadd.f32 0.0, %v3291
      %v3293 = vpop.f32.mrb[0].mxu0
      %v3294 = vpop.f32.mrb[0].mxu0
      %v3295 = vadd.f32 0.0, %v3294
      %v3296 = vpop.f32.mrb[0].mxu0
      %3297 = vmatprep.mubr.bf16.mxu0 0
      %3298 = vmatmul.mubr.bf16.gmra.mrb[0].mxu0 %v1560
      %v3299 = vpop.f32.mrb[0].mxu0
      %v3300 = vadd.f32 0.0, %v3299
      %v3301 = vpop.f32.mrb[0].mxu0
      %v3302 = vpop.f32.mrb[0].mxu0
      %v3303 = vadd.f32 0.0, %v3302
      %v3304 = vpop.f32.mrb[0].mxu0
      %3305 = vmatprep.mubr.bf16.mxu0 0
      %3306 = vmatmul.mubr.bf16.gmra.mrb[0].mxu0 %v1563
      %v3307 = vpop.f32.mrb[0].mxu0
      %v3308 = vadd.f32 0.0, %v3307
      %v3309 = vpop.f32.mrb[0].mxu0
      %v3310 = vpop.f32.mrb[0].mxu0
      %v3311 = vadd.f32 0.0, %v3310
      %v3312 = vpop.f32.mrb[0].mxu0
      %3313 = vmatprep.mubr.bf16.mxu0 0
      %3314 = vmatmul.mubr.bf16.gmra.mrb[0].mxu0 %v3217
      %v3315 = vpop.f32.mrb[0].mxu0
      %v3316 = vadd.f32 0.0, %v3315
      %v3317 = vpop.f32.mrb[0].mxu0
      %v3318 = vpop.f32.mrb[0].mxu0
      %v3319 = vadd.f32 0.0, %v3318
      %v3320 = vpop.f32.mrb[0].mxu0
      %3321 = vmatprep.mubr.bf16.mxu0 0
      %3322 = vmatmul.mubr.bf16.gmra.mrb[0].mxu0 %v1569
      %v3323 = vpop.f32.mrb[0].mxu0
      %v3324 = vadd.f32 0.0, %v3323
      %v3325 = vpop.f32.mrb[0].mxu0
      %v3326 = vpop.f32.mrb[0].mxu0
      %v3327 = vadd.f32 0.0, %v3326
      %v3328 = vpop.f32.mrb[0].mxu0
      %3329 = vmatprep.mubr.bf16.mxu0 0
      %3330 = vmatmul.mubr.bf16.gmra.mrb[0].mxu0 %v1572
      %v3331 = vpop.f32.mrb[0].mxu0
      %v3332 = vadd.f32 0.0, %v3331
      %v3333 = vpop.f32.mrb[0].mxu0
      %v3334 = vpop.f32.mrb[0].mxu0
      %v3335 = vadd.f32 0.0, %v3334
      %v3336 = vpop.f32.mrb[0].mxu0
      %3337 = vmatprep.mubr.bf16.mxu0 0
      %3338 = vmatmul.mubr.bf16.gmra.mrb[0].mxu0 %v1575
      %v3339 = vpop.f32.mrb[0].mxu0
      %v3340 = vadd.f32 0.0, %v3339
      %v3341 = vpop.f32.mrb[0].mxu0
      %v3342 = vpop.f32.mrb[0].mxu0
      %v3343 = vadd.f32 0.0, %v3342
      %v3344 = vpop.f32.mrb[0].mxu0
      %3345 = vmatprep.mubr.bf16.mxu0 0
      %3346 = vmatmul.mubr.bf16.gmra.mrb[0].mxu0 %v3220
      %v3347 = vpop.f32.mrb[0].mxu0
      %v3348 = vadd.f32 0.0, %v3347
      %v3349 = vpop.f32.mrb[0].mxu0
      %v3350 = vpop.f32.mrb[0].mxu0
      %v3351 = vadd.f32 0.0, %v3350
      %v3352 = vpop.f32.mrb[0].mxu0
      %3353 = vmatprep.mubr.bf16.mxu0 0
      %3354 = vmatmul.mubr.bf16.gmra.mrb[0].mxu0 %v1581
      %v3355 = vpop.f32.mrb[0].mxu0
      %v3356 = vadd.f32 0.0, %v3355
      %v3357 = vpop.f32.mrb[0].mxu0
      %v3358 = vpop.f32.mrb[0].mxu0
      %v3359 = vadd.f32 0.0, %v3358
      %v3360 = vpop.f32.mrb[0].mxu0
      %3361 = vmatprep.mubr.bf16.mxu0 0
      %3362 = vmatmul.mubr.bf16.gmra.mrb[0].mxu0 %v1584
      %v3363 = vpop.f32.mrb[0].mxu0
      %v3364 = vadd.f32 0.0, %v3363
      %v3365 = vpop.f32.mrb[0].mxu0
      %v3366 = vpop.f32.mrb[0].mxu0
      %v3367 = vadd.f32 0.0, %v3366
      %v3368 = vpop.f32.mrb[0].mxu0
      %3369 = vmatprep.mubr.bf16.mxu0 0
      %3370 = vmatmul.mubr.bf16.gmra.mrb[0].mxu0 %v1587
      %v3371 = vpop.f32.mrb[0].mxu0
      %v3372 = vadd.f32 0.0, %v3371
      %v3373 = vpop.f32.mrb[0].mxu0
      %v3374 = vpop.f32.mrb[0].mxu0
      %v3375 = vadd.f32 0.0, %v3374
      %v3376 = vpop.f32.mrb[0].mxu0
      %3377 = vmatprep.mubr.bf16.mxu0 0
      %3378 = vmatmul.mubr.bf16.gmra.mrb[0].mxu0 %v3223
      %v3379 = vpop.f32.mrb[0].mxu0
      %v3380 = vadd.f32 0.0, %v3379
      %v3381 = vpop.f32.mrb[0].mxu0
      %v3382 = vpop.f32.mrb[0].mxu0
      %v3383 = vadd.f32 0.0, %v3382
      %v3384 = vpop.f32.mrb[0].mxu0
      %3385 = vdwg.mxu0
      %v3386 = vadd.f32 %v3144, %v3260
      %v3387 = vadd.f32 %v3145, %v3263
      %v3388 = vadd.f32 %v3146, %v3268
      %v3389 = vadd.f32 %v3147, %v3271
      %v3390 = vadd.f32 %v3148, %v3276
      %v3391 = vadd.f32 %v3149, %v3279
      %v3392 = vadd.f32 %v3150, %v3284
      %v3393 = vadd.f32 %v3151, %v3287
      %v3394 = vadd.f32 %v3152, %v3292
      %v3395 = vadd.f32 %v3153, %v3295
      %v3396 = vadd.f32 %v3154, %v3300
      %v3397 = vadd.f32 %v3155, %v3303
      %v3398 = vadd.f32 %v3156, %v3308
      %v3399 = vadd.f32 %v3157, %v3311
      %v3400 = vadd.f32 %v3158, %v3316
      %v3401 = vadd.f32 %v3159, %v3319
      %v3402 = vadd.f32 %v3160, %v3324
      %v3403 = vadd.f32 %v3161, %v3327
      %v3404 = vadd.f32 %v3162, %v3332
      %v3405 = vadd.f32 %v3163, %v3335
      %v3406 = vadd.f32 %v3164, %v3340
      %v3407 = vadd.f32 %v3165, %v3343
      %v3408 = vadd.f32 %v3166, %v3348
      %v3409 = vadd.f32 %v3167, %v3351
      %v3410 = vadd.f32 %v3168, %v3356
      %v3411 = vadd.f32 %v3169, %v3359
      %v3412 = vadd.f32 %v3170, %v3364
      %v3413 = vadd.f32 %v3171, %v3367
      %v3414 = vadd.f32 %v3172, %v3372
      %v3415 = vadd.f32 %v3173, %v3375
      %v3416 = vadd.f32 %v3174, %v3380
      %v3417 = vadd.f32 %v3175, %v3383
      %v3418 = vld [vmem:[%s2] sm:$0x1]
      %v3420 = vlaneseq
      %v3421 = vshrl.u32 %v3420, 7
      %v3422 = vsub.s32 0, %v3421
      %v3423 = vrot.slane %v3418, %v3422
      %v3425 = vadd.f32 %v3386, %v3423
      %v3426 = vadd.f32 %v3387, %v3423
      %v3427 = vadd.f32 %v3388, %v3423
      %v3428 = vadd.f32 %v3389, %v3423
      %v3429 = vadd.f32 %v3390, %v3423
      %v3430 = vadd.f32 %v3391, %v3423
      %v3431 = vadd.f32 %v3392, %v3423
      %v3432 = vadd.f32 %v3393, %v3423
      %v3433 = vadd.f32 %v3394, %v3423
      %v3434 = vadd.f32 %v3395, %v3423
      %v3435 = vadd.f32 %v3396, %v3423
      %v3436 = vadd.f32 %v3397, %v3423
      %v3437 = vadd.f32 %v3398, %v3423
      %v3438 = vadd.f32 %v3399, %v3423
      %v3439 = vadd.f32 %v3400, %v3423
      %v3440 = vadd.f32 %v3401, %v3423
      %v3441 = vadd.f32 %v3402, %v3423
      %v3442 = vadd.f32 %v3403, %v3423
      %v3443 = vadd.f32 %v3404, %v3423
      %v3444 = vadd.f32 %v3405, %v3423
      %v3445 = vadd.f32 %v3406, %v3423
      %v3446 = vadd.f32 %v3407, %v3423
      %v3447 = vadd.f32 %v3408, %v3423
      %v3448 = vadd.f32 %v3409, %v3423
      %v3449 = vadd.f32 %v3410, %v3423
      %v3450 = vadd.f32 %v3411, %v3423
      %v3451 = vadd.f32 %v3412, %v3423
      %v3452 = vadd.f32 %v3413, %v3423
      %v3453 = vadd.f32 %v3414, %v3423
      %v3454 = vadd.f32 %v3415, %v3423
      %v3455 = vadd.f32 %v3416, %v3423
      %v3456 = vadd.f32 %v3417, %v3423
      %v3457 = vmax.f32 %v3425, 0.0
      %v3458 = vmax.f32 %v3426, 0.0
      %v3459 = vmax.f32 %v3427, 0.0
      %v3460 = vmax.f32 %v3428, 0.0
      %v3461 = vmax.f32 %v3429, 0.0
      %v3462 = vmax.f32 %v3430, 0.0
      %v3463 = vmax.f32 %v3431, 0.0
      %v3464 = vmax.f32 %v3432, 0.0
      %v3465 = vmax.f32 %v3433, 0.0
      %v3466 = vmax.f32 %v3434, 0.0
      %v3467 = vmax.f32 %v3435, 0.0
      %v3468 = vmax.f32 %v3436, 0.0
      %v3469 = vmax.f32 %v3437, 0.0
      %v3470 = vmax.f32 %v3438, 0.0
      %v3471 = vmax.f32 %v3439, 0.0
      %v3472 = vmax.f32 %v3440, 0.0
      %v3473 = vmax.f32 %v3441, 0.0
      %v3474 = vmax.f32 %v3442, 0.0
      %v3475 = vmax.f32 %v3443, 0.0
      %v3476 = vmax.f32 %v3444, 0.0
      %v3477 = vmax.f32 %v3445, 0.0
      %v3478 = vmax.f32 %v3446, 0.0
      %v3479 = vmax.f32 %v3447, 0.0
      %v3480 = vmax.f32 %v3448, 0.0
      %v3481 = vmax.f32 %v3449, 0.0
      %v3482 = vmax.f32 %v3450, 0.0
      %v3483 = vmax.f32 %v3451, 0.0
      %v3484 = vmax.f32 %v3452, 0.0
      %v3485 = vmax.f32 %v3453, 0.0
      %v3486 = vmax.f32 %v3454, 0.0
      %v3487 = vmax.f32 %v3455, 0.0
      %v3488 = vmax.f32 %v3456, 0.0
      %v3489 = vpack.c.bf16 %v3458, %v3457
      %v3490 = vpack.c.bf16 %v3460, %v3459
      %v3491 = vpack.c.bf16 %v3462, %v3461
      %v3492 = vpack.c.bf16 %v3464, %v3463
      %v3493 = vpack.c.bf16 %v3466, %v3465
      %v3494 = vpack.c.bf16 %v3468, %v3467
      %v3495 = vpack.c.bf16 %v3470, %v3469
      %v3496 = vpack.c.bf16 %v3472, %v3471
      %v3497 = vpack.c.bf16 %v3474, %v3473
      %v3498 = vpack.c.bf16 %v3476, %v3475
      %v3499 = vpack.c.bf16 %v3478, %v3477
      %v3500 = vpack.c.bf16 %v3480, %v3479
      %v3501 = vpack.c.bf16 %v3482, %v3481
      %v3502 = vpack.c.bf16 %v3484, %v3483
      %v3503 = vpack.c.bf16 %v3486, %v3485
      %v3504 = vpack.c.bf16 %v3488, %v3487
      %v3505 = vld [vmem:[%s3] sm:$0xf]
      %v3506 = vld [vmem:[%s3 + $0x4] sm:$0xf]
      %v3507 = vld [vmem:[%s3 + $0x8] sm:$0xf]
      %v3508 = vld [vmem:[%s3 + $0xc] sm:$0xf]
      %s3509 = scalar_lea.vmem %s3, 16
      %v3510 = vld [vmem:[%s3509] sm:$0xf]
      %v3511 = vld [vmem:[%s3509 + $0x4] sm:$0xf]
      %v3512 = vld [vmem:[%s3509 + $0x8] sm:$0xf]
      %v3513 = vld [vmem:[%s3509 + $0xc] sm:$0xf]
      %v3518 = vunpack.c.l.b16 %v3510
      %v3519 = vunpack.c.l.b16 %v3511
      %v3520 = vunpack.c.l.b16 %v3512
      %v3521 = vunpack.c.l.b16 %v3513
      %v3522 = vpack.c.b16 %v3519, %v3518
      %v3523 = vpack.c.b16 %v3521, %v3520
      %vm3526 = vcmask 261120
      %v3528 = vsel %vm3526, %v3489, 0
      %v3531 = vsel %vm3526, %v3490, 0
      %v3534 = vsel %vm3526, %v3491, 0
      %v3537 = vsel %vm3526, %v3492, 0
      %v3540 = vsel %vm3526, %v3493, 0
      %v3543 = vsel %vm3526, %v3494, 0
      %v3546 = vsel %vm3526, %v3495, 0
      %v3549 = vsel %vm3526, %v3496, 0
      %v3552 = vsel %vm3526, %v3497, 0
      %v3555 = vsel %vm3526, %v3498, 0
      %v3558 = vsel %vm3526, %v3499, 0
      %v3561 = vsel %vm3526, %v3500, 0
      %v3564 = vsel %vm3526, %v3501, 0
      %v3567 = vsel %vm3526, %v3502, 0
      %v3570 = vsel %vm3526, %v3503, 0
      %v3573 = vsel %vm3526, %v3504, 0
      %3575 = vmatprep.subr.bf16.mxu0 0
      %3576 = vmatpush1.bf16.msra.mxu0 %v3522
      %3577 = vmatprep.subr.bf16.mxu0 0
      %3578 = vmatpush1.bf16.msra.mxu0 %v3523
      %3579 = vmatprep.subr.bf16.mxu0 0
      %3580 = vmatpush1.bf16.msra.mxu0 0
      %3581 = vmatprep.subr.bf16.mxu0 0
      %3582 = vmatpush1.bf16.msra.mxu0 0
      %3583 = vmatprep.subr.bf16.mxu0 0
      %3584 = vmatpush1.bf16.msra.mxu0 0
      %3585 = vmatprep.subr.bf16.mxu0 0
      %3586 = vmatpush1.bf16.msra.mxu0 0
      %3587 = vmatprep.subr.bf16.mxu0 0
      %3588 = vmatpush1.bf16.msra.mxu0 0
      %3589 = vmatprep.subr.bf16.mxu0 0
      %3590 = vmatpush1.bf16.msra.mxu0 0
      %3591 = vmatprep.subr.bf16.mxu0 0
      %3592 = vmatpush1.bf16.msra.mxu0 0
      %3593 = vmatprep.subr.bf16.mxu0 0
      %3594 = vmatpush1.bf16.msra.mxu0 0
      %3595 = vmatprep.subr.bf16.mxu0 0
      %3596 = vmatpush1.bf16.msra.mxu0 0
      %3597 = vmatprep.subr.bf16.mxu0 0
      %3598 = vmatpush1.bf16.msra.mxu0 0
      %3599 = vmatprep.subr.bf16.mxu0 0
      %3600 = vmatpush1.bf16.msra.mxu0 0
      %3601 = vmatprep.subr.bf16.mxu0 0
      %3602 = vmatpush1.bf16.msra.mxu0 0
      %3603 = vmatprep.subr.bf16.mxu0 0
      %3604 = vmatpush1.bf16.msra.mxu0 0
      %3605 = vmatprep.subr.bf16.mxu0 0
      %3606 = vmatpush1.bf16.msra.mxu0 0
      %3607 = vmatprep.mubr.bf16.mxu0 0
      %3608 = vmatmul.mubr.bf16.gmra.mrb[0].mxu0 %v3528
      %v3609 = vpop.f32.mrb[0].mxu0
      %v3610 = vadd.f32 0.0, %v3609
      %v3611 = vpop.f32.mrb[0].mxu0
      %v3612 = vpop.f32.mrb[0].mxu0
      %v3613 = vadd.f32 0.0, %v3612
      %v3614 = vpop.f32.mrb[0].mxu0
      %3615 = vmatprep.mubr.bf16.mxu0 0
      %3616 = vmatmul.mubr.bf16.gmra.mrb[0].mxu0 %v3531
      %v3617 = vpop.f32.mrb[0].mxu0
      %v3618 = vadd.f32 0.0, %v3617
      %v3619 = vpop.f32.mrb[0].mxu0
      %v3620 = vpop.f32.mrb[0].mxu0
      %v3621 = vadd.f32 0.0, %v3620
      %v3622 = vpop.f32.mrb[0].mxu0
      %3623 = vmatprep.mubr.bf16.mxu0 0
      %3624 = vmatmul.mubr.bf16.gmra.mrb[0].mxu0 %v3534
      %v3625 = vpop.f32.mrb[0].mxu0
      %v3626 = vadd.f32 0.0, %v3625
      %v3627 = vpop.f32.mrb[0].mxu0
      %v3628 = vpop.f32.mrb[0].mxu0
      %v3629 = vadd.f32 0.0, %v3628
      %v3630 = vpop.f32.mrb[0].mxu0
      %3631 = vmatprep.mubr.bf16.mxu0 0
      %3632 = vmatmul.mubr.bf16.gmra.mrb[0].mxu0 %v3537
      %v3633 = vpop.f32.mrb[0].mxu0
      %v3634 = vadd.f32 0.0, %v3633
      %v3635 = vpop.f32.mrb[0].mxu0
      %v3636 = vpop.f32.mrb[0].mxu0
      %v3637 = vadd.f32 0.0, %v3636
      %v3638 = vpop.f32.mrb[0].mxu0
      %3639 = vmatprep.mubr.bf16.mxu0 0
      %3640 = vmatmul.mubr.bf16.gmra.mrb[0].mxu0 %v3540
      %v3641 = vpop.f32.mrb[0].mxu0
      %v3642 = vadd.f32 0.0, %v3641
      %v3643 = vpop.f32.mrb[0].mxu0
      %v3644 = vpop.f32.mrb[0].mxu0
      %v3645 = vadd.f32 0.0, %v3644
      %v3646 = vpop.f32.mrb[0].mxu0
      %3647 = vmatprep.mubr.bf16.mxu0 0
      %3648 = vmatmul.mubr.bf16.gmra.mrb[0].mxu0 %v3543
      %v3649 = vpop.f32.mrb[0].mxu0
      %v3650 = vadd.f32 0.0, %v3649
      %v3651 = vpop.f32.mrb[0].mxu0
      %v3652 = vpop.f32.mrb[0].mxu0
      %v3653 = vadd.f32 0.0, %v3652
      %v3654 = vpop.f32.mrb[0].mxu0
      %3655 = vmatprep.mubr.bf16.mxu0 0
      %3656 = vmatmul.mubr.bf16.gmra.mrb[0].mxu0 %v3546
      %v3657 = vpop.f32.mrb[0].mxu0
      %v3658 = vadd.f32 0.0, %v3657
      %v3659 = vpop.f32.mrb[0].mxu0
      %v3660 = vpop.f32.mrb[0].mxu0
      %v3661 = vadd.f32 0.0, %v3660
      %v3662 = vpop.f32.mrb[0].mxu0
      %3663 = vmatprep.mubr.bf16.mxu0 0
      %3664 = vmatmul.mubr.bf16.gmra.mrb[0].mxu0 %v3549
      %v3665 = vpop.f32.mrb[0].mxu0
      %v3666 = vadd.f32 0.0, %v3665
      %v3667 = vpop.f32.mrb[0].mxu0
      %v3668 = vpop.f32.mrb[0].mxu0
      %v3669 = vadd.f32 0.0, %v3668
      %v3670 = vpop.f32.mrb[0].mxu0
      %3671 = vmatprep.mubr.bf16.mxu0 0
      %3672 = vmatmul.mubr.bf16.gmra.mrb[0].mxu0 %v3552
      %v3673 = vpop.f32.mrb[0].mxu0
      %v3674 = vadd.f32 0.0, %v3673
      %v3675 = vpop.f32.mrb[0].mxu0
      %v3676 = vpop.f32.mrb[0].mxu0
      %v3677 = vadd.f32 0.0, %v3676
      %v3678 = vpop.f32.mrb[0].mxu0
      %3679 = vmatprep.mubr.bf16.mxu0 0
      %3680 = vmatmul.mubr.bf16.gmra.mrb[0].mxu0 %v3555
      %v3681 = vpop.f32.mrb[0].mxu0
      %v3682 = vadd.f32 0.0, %v3681
      %v3683 = vpop.f32.mrb[0].mxu0
      %v3684 = vpop.f32.mrb[0].mxu0
      %v3685 = vadd.f32 0.0, %v3684
      %v3686 = vpop.f32.mrb[0].mxu0
      %3687 = vmatprep.mubr.bf16.mxu0 0
      %3688 = vmatmul.mubr.bf16.gmra.mrb[0].mxu0 %v3558
      %v3689 = vpop.f32.mrb[0].mxu0
      %v3690 = vadd.f32 0.0, %v3689
      %v3691 = vpop.f32.mrb[0].mxu0
      %v3692 = vpop.f32.mrb[0].mxu0
      %v3693 = vadd.f32 0.0, %v3692
      %v3694 = vpop.f32.mrb[0].mxu0
      %3695 = vmatprep.mubr.bf16.mxu0 0
      %3696 = vmatmul.mubr.bf16.gmra.mrb[0].mxu0 %v3561
      %v3697 = vpop.f32.mrb[0].mxu0
      %v3698 = vadd.f32 0.0, %v3697
      %v3699 = vpop.f32.mrb[0].mxu0
      %v3700 = vpop.f32.mrb[0].mxu0
      %v3701 = vadd.f32 0.0, %v3700
      %v3702 = vpop.f32.mrb[0].mxu0
      %3703 = vmatprep.mubr.bf16.mxu0 0
      %3704 = vmatmul.mubr.bf16.gmra.mrb[0].mxu0 %v3564
      %v3705 = vpop.f32.mrb[0].mxu0
      %v3706 = vadd.f32 0.0, %v3705
      %v3707 = vpop.f32.mrb[0].mxu0
      %v3708 = vpop.f32.mrb[0].mxu0
      %v3709 = vadd.f32 0.0, %v3708
      %v3710 = vpop.f32.mrb[0].mxu0
      %3711 = vmatprep.mubr.bf16.mxu0 0
      %3712 = vmatmul.mubr.bf16.gmra.mrb[0].mxu0 %v3567
      %v3713 = vpop.f32.mrb[0].mxu0
      %v3714 = vadd.f32 0.0, %v3713
      %v3715 = vpop.f32.mrb[0].mxu0
      %v3716 = vpop.f32.mrb[0].mxu0
      %v3717 = vadd.f32 0.0, %v3716
      %v3718 = vpop.f32.mrb[0].mxu0
      %3719 = vmatprep.mubr.bf16.mxu0 0
      %3720 = vmatmul.mubr.bf16.gmra.mrb[0].mxu0 %v3570
      %v3721 = vpop.f32.mrb[0].mxu0
      %v3722 = vadd.f32 0.0, %v3721
      %v3723 = vpop.f32.mrb[0].mxu0
      %v3724 = vpop.f32.mrb[0].mxu0
      %v3725 = vadd.f32 0.0, %v3724
      %v3726 = vpop.f32.mrb[0].mxu0
      %3727 = vmatprep.mubr.bf16.mxu0 0
      %3728 = vmatmul.mubr.bf16.gmra.mrb[0].mxu0 %v3573
      %v3729 = vpop.f32.mrb[0].mxu0
      %v3730 = vadd.f32 0.0, %v3729
      %v3731 = vpop.f32.mrb[0].mxu0
      %v3732 = vpop.f32.mrb[0].mxu0
      %v3733 = vadd.f32 0.0, %v3732
      %v3734 = vpop.f32.mrb[0].mxu0
      %3735 = vdwg.mxu0
      %v3740 = vunpack.c.l.b16 %v3505
      %v3741 = vunpack.c.l.b16 %v3506
      %v3742 = vunpack.c.l.b16 %v3507
      %v3743 = vunpack.c.l.b16 %v3508
      %v3744 = vpack.c.b16 %v3741, %v3740
      %v3745 = vpack.c.b16 %v3743, %v3742
      %v3749 = vsel %vm3526, 0, 0
      %3751 = vmatprep.subr.bf16.mxu0 0
      %3752 = vmatpush1.bf16.msra.mxu0 %v3744
      %3753 = vmatprep.subr.bf16.mxu0 0
      %3754 = vmatpush1.bf16.msra.mxu0 %v3745
      %3755 = vmatprep.subr.bf16.mxu0 0
      %3756 = vmatpush1.bf16.msra.mxu0 0
      %3757 = vmatprep.subr.bf16.mxu0 0
      %3758 = vmatpush1.bf16.msra.mxu0 0
      %3759 = vmatprep.subr.bf16.mxu0 0
      %3760 = vmatpush1.bf16.msra.mxu0 0
      %3761 = vmatprep.subr.bf16.mxu0 0
      %3762 = vmatpush1.bf16.msra.mxu0 0
      %3763 = vmatprep.subr.bf16.mxu0 0
      %3764 = vmatpush1.bf16.msra.mxu0 0
      %3765 = vmatprep.subr.bf16.mxu0 0
      %3766 = vmatpush1.bf16.msra.mxu0 0
      %3767 = vmatprep.subr.bf16.mxu0 0
      %3768 = vmatpush1.bf16.msra.mxu0 0
      %3769 = vmatprep.subr.bf16.mxu0 0
      %3770 = vmatpush1.bf16.msra.mxu0 0
      %3771 = vmatprep.subr.bf16.mxu0 0
      %3772 = vmatpush1.bf16.msra.mxu0 0
      %3773 = vmatprep.subr.bf16.mxu0 0
      %3774 = vmatpush1.bf16.msra.mxu0 0
      %3775 = vmatprep.subr.bf16.mxu0 0
      %3776 = vmatpush1.bf16.msra.mxu0 0
      %3777 = vmatprep.subr.bf16.mxu0 0
      %3778 = vmatpush1.bf16.msra.mxu0 0
      %3779 = vmatprep.subr.bf16.mxu0 0
      %3780 = vmatpush1.bf16.msra.mxu0 0
      %3781 = vmatprep.subr.bf16.mxu0 0
      %3782 = vmatpush1.bf16.msra.mxu0 0
      %3783 = vmatprep.mubr.bf16.mxu0 0
      %3784 = vmatmul.mubr.bf16.gmra.mrb[0].mxu0 %v3749
      %v3785 = vpop.f32.mrb[0].mxu0
      %v3786 = vadd.f32 %v3610, %v3785
      %v3787 = vpop.f32.mrb[0].mxu0
      %v3788 = vpop.f32.mrb[0].mxu0
      %v3789 = vadd.f32 %v3613, %v3788
      %v3790 = vpop.f32.mrb[0].mxu0
      %3791 = vmatprep.mubr.bf16.mxu0 0
      %3792 = vmatmul.mubr.bf16.gmra.mrb[0].mxu0 %v3749
      %v3793 = vpop.f32.mrb[0].mxu0
      %v3794 = vadd.f32 %v3618, %v3793
      %v3795 = vpop.f32.mrb[0].mxu0
      %v3796 = vpop.f32.mrb[0].mxu0
      %v3797 = vadd.f32 %v3621, %v3796
      %v3798 = vpop.f32.mrb[0].mxu0
      %3799 = vmatprep.mubr.bf16.mxu0 0
      %3800 = vmatmul.mubr.bf16.gmra.mrb[0].mxu0 %v3749
      %v3801 = vpop.f32.mrb[0].mxu0
      %v3802 = vadd.f32 %v3626, %v3801
      %v3803 = vpop.f32.mrb[0].mxu0
      %v3804 = vpop.f32.mrb[0].mxu0
      %v3805 = vadd.f32 %v3629, %v3804
      %v3806 = vpop.f32.mrb[0].mxu0
      %3807 = vmatprep.mubr.bf16.mxu0 0
      %3808 = vmatmul.mubr.bf16.gmra.mrb[0].mxu0 %v3749
      %v3809 = vpop.f32.mrb[0].mxu0
      %v3810 = vadd.f32 %v3634, %v3809
      %v3811 = vpop.f32.mrb[0].mxu0
      %v3812 = vpop.f32.mrb[0].mxu0
      %v3813 = vadd.f32 %v3637, %v3812
      %v3814 = vpop.f32.mrb[0].mxu0
      %3815 = vmatprep.mubr.bf16.mxu0 0
      %3816 = vmatmul.mubr.bf16.gmra.mrb[0].mxu0 %v3528
      %v3817 = vpop.f32.mrb[0].mxu0
      %v3818 = vadd.f32 %v3642, %v3817
      %v3819 = vpop.f32.mrb[0].mxu0
      %v3820 = vpop.f32.mrb[0].mxu0
      %v3821 = vadd.f32 %v3645, %v3820
      %v3822 = vpop.f32.mrb[0].mxu0
      %3823 = vmatprep.mubr.bf16.mxu0 0
      %3824 = vmatmul.mubr.bf16.gmra.mrb[0].mxu0 %v3531
      %v3825 = vpop.f32.mrb[0].mxu0
      %v3826 = vadd.f32 %v3650, %v3825
      %v3827 = vpop.f32.mrb[0].mxu0
      %v3828 = vpop.f32.mrb[0].mxu0
      %v3829 = vadd.f32 %v3653, %v3828
      %v3830 = vpop.f32.mrb[0].mxu0
      %3831 = vmatprep.mubr.bf16.mxu0 0
      %3832 = vmatmul.mubr.bf16.gmra.mrb[0].mxu0 %v3534
      %v3833 = vpop.f32.mrb[0].mxu0
      %v3834 = vadd.f32 %v3658, %v3833
      %v3835 = vpop.f32.mrb[0].mxu0
      %v3836 = vpop.f32.mrb[0].mxu0
      %v3837 = vadd.f32 %v3661, %v3836
      %v3838 = vpop.f32.mrb[0].mxu0
      %3839 = vmatprep.mubr.bf16.mxu0 0
      %3840 = vmatmul.mubr.bf16.gmra.mrb[0].mxu0 %v3537
      %v3841 = vpop.f32.mrb[0].mxu0
      %v3842 = vadd.f32 %v3666, %v3841
      %v3843 = vpop.f32.mrb[0].mxu0
      %v3844 = vpop.f32.mrb[0].mxu0
      %v3845 = vadd.f32 %v3669, %v3844
      %v3846 = vpop.f32.mrb[0].mxu0
      %3847 = vmatprep.mubr.bf16.mxu0 0
      %3848 = vmatmul.mubr.bf16.gmra.mrb[0].mxu0 %v3540
      %v3849 = vpop.f32.mrb[0].mxu0
      %v3850 = vadd.f32 %v3674, %v3849
      %v3851 = vpop.f32.mrb[0].mxu0
      %v3852 = vpop.f32.mrb[0].mxu0
      %v3853 = vadd.f32 %v3677, %v3852
      %v3854 = vpop.f32.mrb[0].mxu0
      %3855 = vmatprep.mubr.bf16.mxu0 0
      %3856 = vmatmul.mubr.bf16.gmra.mrb[0].mxu0 %v3543
      %v3857 = vpop.f32.mrb[0].mxu0
      %v3858 = vadd.f32 %v3682, %v3857
      %v3859 = vpop.f32.mrb[0].mxu0
      %v3860 = vpop.f32.mrb[0].mxu0
      %v3861 = vadd.f32 %v3685, %v3860
      %v3862 = vpop.f32.mrb[0].mxu0
      %3863 = vmatprep.mubr.bf16.mxu0 0
      %3864 = vmatmul.mubr.bf16.gmra.mrb[0].mxu0 %v3546
      %v3865 = vpop.f32.mrb[0].mxu0
      %v3866 = vadd.f32 %v3690, %v3865
      %v3867 = vpop.f32.mrb[0].mxu0
      %v3868 = vpop.f32.mrb[0].mxu0
      %v3869 = vadd.f32 %v3693, %v3868
      %v3870 = vpop.f32.mrb[0].mxu0
      %3871 = vmatprep.mubr.bf16.mxu0 0
      %3872 = vmatmul.mubr.bf16.gmra.mrb[0].mxu0 %v3549
      %v3873 = vpop.f32.mrb[0].mxu0
      %v3874 = vadd.f32 %v3698, %v3873
      %v3875 = vpop.f32.mrb[0].mxu0
      %v3876 = vpop.f32.mrb[0].mxu0
      %v3877 = vadd.f32 %v3701, %v3876
      %v3878 = vpop.f32.mrb[0].mxu0
      %3879 = vmatprep.mubr.bf16.mxu0 0
      %3880 = vmatmul.mubr.bf16.gmra.mrb[0].mxu0 %v3552
      %v3881 = vpop.f32.mrb[0].mxu0
      %v3882 = vadd.f32 %v3706, %v3881
      %v3883 = vpop.f32.mrb[0].mxu0
      %v3884 = vpop.f32.mrb[0].mxu0
      %v3885 = vadd.f32 %v3709, %v3884
      %v3886 = vpop.f32.mrb[0].mxu0
      %3887 = vmatprep.mubr.bf16.mxu0 0
      %3888 = vmatmul.mubr.bf16.gmra.mrb[0].mxu0 %v3555
      %v3889 = vpop.f32.mrb[0].mxu0
      %v3890 = vadd.f32 %v3714, %v3889
      %v3891 = vpop.f32.mrb[0].mxu0
      %v3892 = vpop.f32.mrb[0].mxu0
      %v3893 = vadd.f32 %v3717, %v3892
      %v3894 = vpop.f32.mrb[0].mxu0
      %3895 = vmatprep.mubr.bf16.mxu0 0
      %3896 = vmatmul.mubr.bf16.gmra.mrb[0].mxu0 %v3558
      %v3897 = vpop.f32.mrb[0].mxu0
      %v3898 = vadd.f32 %v3722, %v3897
      %v3899 = vpop.f32.mrb[0].mxu0
      %v3900 = vpop.f32.mrb[0].mxu0
      %v3901 = vadd.f32 %v3725, %v3900
      %v3902 = vpop.f32.mrb[0].mxu0
      %3903 = vmatprep.mubr.bf16.mxu0 0
      %3904 = vmatmul.mubr.bf16.gmra.mrb[0].mxu0 %v3561
      %v3905 = vpop.f32.mrb[0].mxu0
      %v3906 = vadd.f32 %v3730, %v3905
      %v3907 = vpop.f32.mrb[0].mxu0
      %v3908 = vpop.f32.mrb[0].mxu0
      %v3909 = vadd.f32 %v3733, %v3908
      %v3910 = vpop.f32.mrb[0].mxu0
      %3911 = vdwg.mxu0
      %s3912 = scalar_lea.vmem %s3, 32
      %v3913 = vld [vmem:[%s3912] sm:$0xf]
      %v3914 = vld [vmem:[%s3912 + $0x4] sm:$0xf]
      %v3915 = vld [vmem:[%s3912 + $0x8] sm:$0xf]
      %v3916 = vld [vmem:[%s3912 + $0xc] sm:$0xf]
      %v3921 = vunpack.c.l.b16 %v3913
      %v3922 = vunpack.c.l.b16 %v3914
      %v3923 = vunpack.c.l.b16 %v3915
      %v3924 = vunpack.c.l.b16 %v3916
      %v3925 = vpack.c.b16 %v3922, %v3921
      %v3926 = vpack.c.b16 %v3924, %v3923
      %3929 = vmatprep.subr.bf16.mxu0 0
      %3930 = vmatpush1.bf16.msra.mxu0 %v3925
      %3931 = vmatprep.subr.bf16.mxu0 0
      %3932 = vmatpush1.bf16.msra.mxu0 %v3926
      %3933 = vmatprep.subr.bf16.mxu0 0
      %3934 = vmatpush1.bf16.msra.mxu0 0
      %3935 = vmatprep.subr.bf16.mxu0 0
      %3936 = vmatpush1.bf16.msra.mxu0 0
      %3937 = vmatprep.subr.bf16.mxu0 0
      %3938 = vmatpush1.bf16.msra.mxu0 0
      %3939 = vmatprep.subr.bf16.mxu0 0
      %3940 = vmatpush1.bf16.msra.mxu0 0
      %3941 = vmatprep.subr.bf16.mxu0 0
      %3942 = vmatpush1.bf16.msra.mxu0 0
      %3943 = vmatprep.subr.bf16.mxu0 0
      %3944 = vmatpush1.bf16.msra.mxu0 0
      %3945 = vmatprep.subr.bf16.mxu0 0
      %3946 = vmatpush1.bf16.msra.mxu0 0
      %3947 = vmatprep.subr.bf16.mxu0 0
      %3948 = vmatpush1.bf16.msra.mxu0 0
      %3949 = vmatprep.subr.bf16.mxu0 0
      %3950 = vmatpush1.bf16.msra.mxu0 0
      %3951 = vmatprep.subr.bf16.mxu0 0
      %3952 = vmatpush1.bf16.msra.mxu0 0
      %3953 = vmatprep.subr.bf16.mxu0 0
      %3954 = vmatpush1.bf16.msra.mxu0 0
      %3955 = vmatprep.subr.bf16.mxu0 0
      %3956 = vmatpush1.bf16.msra.mxu0 0
      %3957 = vmatprep.subr.bf16.mxu0 0
      %3958 = vmatpush1.bf16.msra.mxu0 0
      %3959 = vmatprep.subr.bf16.mxu0 0
      %3960 = vmatpush1.bf16.msra.mxu0 0
      %3961 = vmatprep.mubr.bf16.mxu0 0
      %3962 = vmatmul.mubr.bf16.gmra.mrb[0].mxu0 %v3540
      %v3963 = vpop.f32.mrb[0].mxu0
      %v3964 = vadd.f32 0.0, %v3963
      %v3965 = vpop.f32.mrb[0].mxu0
      %v3966 = vpop.f32.mrb[0].mxu0
      %v3967 = vadd.f32 0.0, %v3966
      %v3968 = vpop.f32.mrb[0].mxu0
      %3969 = vmatprep.mubr.bf16.mxu0 0
      %3970 = vmatmul.mubr.bf16.gmra.mrb[0].mxu0 %v3543
      %v3971 = vpop.f32.mrb[0].mxu0
      %v3972 = vadd.f32 0.0, %v3971
      %v3973 = vpop.f32.mrb[0].mxu0
      %v3974 = vpop.f32.mrb[0].mxu0
      %v3975 = vadd.f32 0.0, %v3974
      %v3976 = vpop.f32.mrb[0].mxu0
      %3977 = vmatprep.mubr.bf16.mxu0 0
      %3978 = vmatmul.mubr.bf16.gmra.mrb[0].mxu0 %v3546
      %v3979 = vpop.f32.mrb[0].mxu0
      %v3980 = vadd.f32 0.0, %v3979
      %v3981 = vpop.f32.mrb[0].mxu0
      %v3982 = vpop.f32.mrb[0].mxu0
      %v3983 = vadd.f32 0.0, %v3982
      %v3984 = vpop.f32.mrb[0].mxu0
      %3985 = vmatprep.mubr.bf16.mxu0 0
      %3986 = vmatmul.mubr.bf16.gmra.mrb[0].mxu0 %v3549
      %v3987 = vpop.f32.mrb[0].mxu0
      %v3988 = vadd.f32 0.0, %v3987
      %v3989 = vpop.f32.mrb[0].mxu0
      %v3990 = vpop.f32.mrb[0].mxu0
      %v3991 = vadd.f32 0.0, %v3990
      %v3992 = vpop.f32.mrb[0].mxu0
      %3993 = vmatprep.mubr.bf16.mxu0 0
      %3994 = vmatmul.mubr.bf16.gmra.mrb[0].mxu0 %v3552
      %v3995 = vpop.f32.mrb[0].mxu0
      %v3996 = vadd.f32 0.0, %v3995
      %v3997 = vpop.f32.mrb[0].mxu0
      %v3998 = vpop.f32.mrb[0].mxu0
      %v3999 = vadd.f32 0.0, %v3998
      %v4000 = vpop.f32.mrb[0].mxu0
      %4001 = vmatprep.mubr.bf16.mxu0 0
      %4002 = vmatmul.mubr.bf16.gmra.mrb[0].mxu0 %v3555
      %v4003 = vpop.f32.mrb[0].mxu0
      %v4004 = vadd.f32 0.0, %v4003
      %v4005 = vpop.f32.mrb[0].mxu0
      %v4006 = vpop.f32.mrb[0].mxu0
      %v4007 = vadd.f32 0.0, %v4006
      %v4008 = vpop.f32.mrb[0].mxu0
      %4009 = vmatprep.mubr.bf16.mxu0 0
      %4010 = vmatmul.mubr.bf16.gmra.mrb[0].mxu0 %v3558
      %v4011 = vpop.f32.mrb[0].mxu0
      %v4012 = vadd.f32 0.0, %v4011
      %v4013 = vpop.f32.mrb[0].mxu0
      %v4014 = vpop.f32.mrb[0].mxu0
      %v4015 = vadd.f32 0.0, %v4014
      %v4016 = vpop.f32.mrb[0].mxu0
      %4017 = vmatprep.mubr.bf16.mxu0 0
      %4018 = vmatmul.mubr.bf16.gmra.mrb[0].mxu0 %v3561
      %v4019 = vpop.f32.mrb[0].mxu0
      %v4020 = vadd.f32 0.0, %v4019
      %v4021 = vpop.f32.mrb[0].mxu0
      %v4022 = vpop.f32.mrb[0].mxu0
      %v4023 = vadd.f32 0.0, %v4022
      %v4024 = vpop.f32.mrb[0].mxu0
      %4025 = vmatprep.mubr.bf16.mxu0 0
      %4026 = vmatmul.mubr.bf16.gmra.mrb[0].mxu0 %v3564
      %v4027 = vpop.f32.mrb[0].mxu0
      %v4028 = vadd.f32 0.0, %v4027
      %v4029 = vpop.f32.mrb[0].mxu0
      %v4030 = vpop.f32.mrb[0].mxu0
      %v4031 = vadd.f32 0.0, %v4030
      %v4032 = vpop.f32.mrb[0].mxu0
      %4033 = vmatprep.mubr.bf16.mxu0 0
      %4034 = vmatmul.mubr.bf16.gmra.mrb[0].mxu0 %v3567
      %v4035 = vpop.f32.mrb[0].mxu0
      %v4036 = vadd.f32 0.0, %v4035
      %v4037 = vpop.f32.mrb[0].mxu0
      %v4038 = vpop.f32.mrb[0].mxu0
      %v4039 = vadd.f32 0.0, %v4038
      %v4040 = vpop.f32.mrb[0].mxu0
      %4041 = vmatprep.mubr.bf16.mxu0 0
      %4042 = vmatmul.mubr.bf16.gmra.mrb[0].mxu0 %v3570
      %v4043 = vpop.f32.mrb[0].mxu0
      %v4044 = vadd.f32 0.0, %v4043
      %v4045 = vpop.f32.mrb[0].mxu0
      %v4046 = vpop.f32.mrb[0].mxu0
      %v4047 = vadd.f32 0.0, %v4046
      %v4048 = vpop.f32.mrb[0].mxu0
      %4049 = vmatprep.mubr.bf16.mxu0 0
      %4050 = vmatmul.mubr.bf16.gmra.mrb[0].mxu0 %v3573
      %v4051 = vpop.f32.mrb[0].mxu0
      %v4052 = vadd.f32 0.0, %v4051
      %v4053 = vpop.f32.mrb[0].mxu0
      %v4054 = vpop.f32.mrb[0].mxu0
      %v4055 = vadd.f32 0.0, %v4054
      %v4056 = vpop.f32.mrb[0].mxu0
      %4057 = vmatprep.mubr.bf16.mxu0 0
      %4058 = vmatmul.mubr.bf16.gmra.mrb[0].mxu0 %v3749
      %v4059 = vpop.f32.mrb[0].mxu0
      %v4060 = vadd.f32 0.0, %v4059
      %v4061 = vpop.f32.mrb[0].mxu0
      %v4062 = vpop.f32.mrb[0].mxu0
      %v4063 = vadd.f32 0.0, %v4062
      %v4064 = vpop.f32.mrb[0].mxu0
      %4065 = vmatprep.mubr.bf16.mxu0 0
      %4066 = vmatmul.mubr.bf16.gmra.mrb[0].mxu0 %v3749
      %v4067 = vpop.f32.mrb[0].mxu0
      %v4068 = vadd.f32 0.0, %v4067
      %v4069 = vpop.f32.mrb[0].mxu0
      %v4070 = vpop.f32.mrb[0].mxu0
      %v4071 = vadd.f32 0.0, %v4070
      %v4072 = vpop.f32.mrb[0].mxu0
      %4073 = vmatprep.mubr.bf16.mxu0 0
      %4074 = vmatmul.mubr.bf16.gmra.mrb[0].mxu0 %v3749
      %v4075 = vpop.f32.mrb[0].mxu0
      %v4076 = vadd.f32 0.0, %v4075
      %v4077 = vpop.f32.mrb[0].mxu0
      %v4078 = vpop.f32.mrb[0].mxu0
      %v4079 = vadd.f32 0.0, %v4078
      %v4080 = vpop.f32.mrb[0].mxu0
      %4081 = vmatprep.mubr.bf16.mxu0 0
      %4082 = vmatmul.mubr.bf16.gmra.mrb[0].mxu0 %v3749
      %v4083 = vpop.f32.mrb[0].mxu0
      %v4084 = vadd.f32 0.0, %v4083
      %v4085 = vpop.f32.mrb[0].mxu0
      %v4086 = vpop.f32.mrb[0].mxu0
      %v4087 = vadd.f32 0.0, %v4086
      %v4088 = vpop.f32.mrb[0].mxu0
      %4089 = vdwg.mxu0
      %v4090 = vadd.f32 %v3786, %v3964
      %v4091 = vadd.f32 %v3789, %v3967
      %v4092 = vadd.f32 %v3794, %v3972
      %v4093 = vadd.f32 %v3797, %v3975
      %v4094 = vadd.f32 %v3802, %v3980
      %v4095 = vadd.f32 %v3805, %v3983
      %v4096 = vadd.f32 %v3810, %v3988
      %v4097 = vadd.f32 %v3813, %v3991
      %v4098 = vadd.f32 %v3818, %v3996
      %v4099 = vadd.f32 %v3821, %v3999
      %v4100 = vadd.f32 %v3826, %v4004
      %v4101 = vadd.f32 %v3829, %v4007
      %v4102 = vadd.f32 %v3834, %v4012
      %v4103 = vadd.f32 %v3837, %v4015
      %v4104 = vadd.f32 %v3842, %v4020
      %v4105 = vadd.f32 %v3845, %v4023
      %v4106 = vadd.f32 %v3850, %v4028
      %v4107 = vadd.f32 %v3853, %v4031
      %v4108 = vadd.f32 %v3858, %v4036
      %v4109 = vadd.f32 %v3861, %v4039
      %v4110 = vadd.f32 %v3866, %v4044
      %v4111 = vadd.f32 %v3869, %v4047
      %v4112 = vadd.f32 %v3874, %v4052
      %v4113 = vadd.f32 %v3877, %v4055
      %v4114 = vadd.f32 %v3882, %v4060
      %v4115 = vadd.f32 %v3885, %v4063
      %v4116 = vadd.f32 %v3890, %v4068
      %v4117 = vadd.f32 %v3893, %v4071
      %v4118 = vadd.f32 %v3898, %v4076
      %v4119 = vadd.f32 %v3901, %v4079
      %v4120 = vadd.f32 %v3906, %v4084
      %v4121 = vadd.f32 %v3909, %v4087
      %v4122 = vld [vmem:[%s4] sm:$0x1]
      %v4124 = vlaneseq
      %v4125 = vshrl.u32 %v4124, 7
      %v4126 = vsub.s32 0, %v4125
      %v4127 = vrot.slane %v4122, %v4126
      %v4129 = vadd.f32 %v4090, %v4127
      %v4130 = vadd.f32 %v4091, %v4127
      %v4131 = vadd.f32 %v4092, %v4127
      %v4132 = vadd.f32 %v4093, %v4127
      %v4133 = vadd.f32 %v4094, %v4127
      %v4134 = vadd.f32 %v4095, %v4127
      %v4135 = vadd.f32 %v4096, %v4127
      %v4136 = vadd.f32 %v4097, %v4127
      %v4137 = vadd.f32 %v4098, %v4127
      %v4138 = vadd.f32 %v4099, %v4127
      %v4139 = vadd.f32 %v4100, %v4127
      %v4140 = vadd.f32 %v4101, %v4127
      %v4141 = vadd.f32 %v4102, %v4127
      %v4142 = vadd.f32 %v4103, %v4127
      %v4143 = vadd.f32 %v4104, %v4127
      %v4144 = vadd.f32 %v4105, %v4127
      %v4145 = vadd.f32 %v4106, %v4127
      %v4146 = vadd.f32 %v4107, %v4127
      %v4147 = vadd.f32 %v4108, %v4127
      %v4148 = vadd.f32 %v4109, %v4127
      %v4149 = vadd.f32 %v4110, %v4127
      %v4150 = vadd.f32 %v4111, %v4127
      %v4151 = vadd.f32 %v4112, %v4127
      %v4152 = vadd.f32 %v4113, %v4127
      %v4153 = vadd.f32 %v4114, %v4127
      %v4154 = vadd.f32 %v4115, %v4127
      %v4155 = vadd.f32 %v4116, %v4127
      %v4156 = vadd.f32 %v4117, %v4127
      %v4157 = vadd.f32 %v4118, %v4127
      %v4158 = vadd.f32 %v4119, %v4127
      %v4159 = vadd.f32 %v4120, %v4127
      %v4160 = vadd.f32 %v4121, %v4127
      %v4161 = vmax.f32 %v4129, 0.0
      %v4162 = vmax.f32 %v4130, 0.0
      %v4163 = vmax.f32 %v4131, 0.0
      %v4164 = vmax.f32 %v4132, 0.0
      %v4165 = vmax.f32 %v4133, 0.0
      %v4166 = vmax.f32 %v4134, 0.0
      %v4167 = vmax.f32 %v4135, 0.0
      %v4168 = vmax.f32 %v4136, 0.0
      %v4169 = vmax.f32 %v4137, 0.0
      %v4170 = vmax.f32 %v4138, 0.0
      %v4171 = vmax.f32 %v4139, 0.0
      %v4172 = vmax.f32 %v4140, 0.0
      %v4173 = vmax.f32 %v4141, 0.0
      %v4174 = vmax.f32 %v4142, 0.0
      %v4175 = vmax.f32 %v4143, 0.0
      %v4176 = vmax.f32 %v4144, 0.0
      %v4177 = vmax.f32 %v4145, 0.0
      %v4178 = vmax.f32 %v4146, 0.0
      %v4179 = vmax.f32 %v4147, 0.0
      %v4180 = vmax.f32 %v4148, 0.0
      %v4181 = vmax.f32 %v4149, 0.0
      %v4182 = vmax.f32 %v4150, 0.0
      %v4183 = vmax.f32 %v4151, 0.0
      %v4184 = vmax.f32 %v4152, 0.0
      %v4185 = vmax.f32 %v4153, 0.0
      %v4186 = vmax.f32 %v4154, 0.0
      %v4187 = vmax.f32 %v4155, 0.0
      %v4188 = vmax.f32 %v4156, 0.0
      %v4189 = vmax.f32 %v4157, 0.0
      %v4190 = vmax.f32 %v4158, 0.0
      %v4191 = vmax.f32 %v4159, 0.0
      %v4192 = vmax.f32 %v4160, 0.0
      %4193 = vst.msk [vmem:[%s224] sm:$0xff] %vm3526, %v4161
      %4194 = vst.msk [vmem:[%s224 + $0x8] sm:$0xff] %vm3526, %v4162
      %4195 = vst.msk [vmem:[%s224 + $0x10] sm:$0xff] %vm3526, %v4163
      %4196 = vst.msk [vmem:[%s224 + $0x18] sm:$0xff] %vm3526, %v4164
      %4197 = vst.msk [vmem:[%s224 + $0x20] sm:$0xff] %vm3526, %v4165
      %4198 = vst.msk [vmem:[%s224 + $0x28] sm:$0xff] %vm3526, %v4166
      %4199 = vst.msk [vmem:[%s224 + $0x30] sm:$0xff] %vm3526, %v4167
      %4200 = vst.msk [vmem:[%s224 + $0x38] sm:$0xff] %vm3526, %v4168
      %4201 = vst.msk [vmem:[%s224 + $0x40] sm:$0xff] %vm3526, %v4169
      %4202 = vst.msk [vmem:[%s224 + $0x48] sm:$0xff] %vm3526, %v4170
      %4203 = vst.msk [vmem:[%s224 + $0x50] sm:$0xff] %vm3526, %v4171
      %4204 = vst.msk [vmem:[%s224 + $0x58] sm:$0xff] %vm3526, %v4172
      %4205 = vst.msk [vmem:[%s224 + $0x60] sm:$0xff] %vm3526, %v4173
      %4206 = vst.msk [vmem:[%s224 + $0x68] sm:$0xff] %vm3526, %v4174
      %4207 = vst.msk [vmem:[%s224 + $0x70] sm:$0xff] %vm3526, %v4175
      %4208 = vst.msk [vmem:[%s224 + $0x78] sm:$0xff] %vm3526, %v4176
      %4209 = vst.msk [vmem:[%s224 + $0x80] sm:$0xff] %vm3526, %v4177
      %4210 = vst.msk [vmem:[%s224 + $0x88] sm:$0xff] %vm3526, %v4178
      %4211 = vst.msk [vmem:[%s224 + $0x90] sm:$0xff] %vm3526, %v4179
      %4212 = vst.msk [vmem:[%s224 + $0x98] sm:$0xff] %vm3526, %v4180
      %4213 = vst.msk [vmem:[%s224 + $0xa0] sm:$0xff] %vm3526, %v4181
      %4214 = vst.msk [vmem:[%s224 + $0xa8] sm:$0xff] %vm3526, %v4182
      %4215 = vst.msk [vmem:[%s224 + $0xb0] sm:$0xff] %vm3526, %v4183
      %4216 = vst.msk [vmem:[%s224 + $0xb8] sm:$0xff] %vm3526, %v4184
      %4217 = vst.msk [vmem:[%s224 + $0xc0] sm:$0xff] %vm3526, %v4185
      %4218 = vst.msk [vmem:[%s224 + $0xc8] sm:$0xff] %vm3526, %v4186
      %4219 = vst.msk [vmem:[%s224 + $0xd0] sm:$0xff] %vm3526, %v4187
      %4220 = vst.msk [vmem:[%s224 + $0xd8] sm:$0xff] %vm3526, %v4188
      %4221 = vst.msk [vmem:[%s224 + $0xe0] sm:$0xff] %vm3526, %v4189
      %4222 = vst.msk [vmem:[%s224 + $0xe8] sm:$0xff] %vm3526, %v4190
      %4223 = vst.msk [vmem:[%s224 + $0xf0] sm:$0xff] %vm3526, %v4191
      %4224 = vst.msk [vmem:[%s224 + $0xf8] sm:$0xff] %vm3526, %v4192
      %p4225 = scmp.lt.s32.totalorder %s16, 1
      %s4226 = scalar_select %p4225, %s16, 1
      %s4227 = smul.addr %s4226, 32
      %s4228 = smul.addr %s4227, 8
      %s4229 = scalar_lea.vmem %s5, %s4228
      // Predicated region
      $region41: #{mixed_3b_forward.6} parent=39 // pred_check
        %p4230 = pneg %p144
      $region42: #{mixed_3b_forward.6} parent=39 // pred_check_branch
        %4232 = sbr.rel (%p4230) target = $region44
      $region43: #{mixed_3b_forward.6} parent=39 // pred_region
        _
      $region44: #{mixed_3b_forward.6} parent=39 // pred_fallthru
        _
    $region40: #{mixed_3b_forward.6} parent=5 // pred_fallthru
      _
    %p4233 = scmp.le.s32.totalorder 2, %s11
    // Predicated region
    $region45: #{mixed_3b_forward.6} parent=5 // pred_check
      %p4234 = pneg %p4233
    $region46: #{mixed_3b_forward.6} parent=5 // pred_check_branch
      %4236 = sbr.rel (%p4234) target = $region48
    $region47: #{mixed_3b_forward.6} parent=5 // pred_region
      %s4237 = ssub.s32 %s11, 2
      // Predicated region
      $region49: #{mixed_3b_forward.6} parent=47 // pred_check
        %p4238 = pneg %p150
      $region50: #{mixed_3b_forward.6} parent=47 // pred_check_branch
        %4240 = sbr.rel (%p4238) target = $region52
      $region51: #{mixed_3b_forward.6} parent=47 // pred_region
        %p4241 = scmp.lt.s32.totalorder %s17, 1
        %s4242 = scalar_select %p4241, %s17, 1
        %s4243 = smul.addr %s4242, 32
        %s4244 = smul.addr %s4243, 8
        %s4245 = scalar_lea.vmem %s5, %s4244
      $region52: #{mixed_3b_forward.6} parent=47 // pred_fallthru
        _
    $region48: #{mixed_3b_forward.6} parent=5 // pred_fallthru
      _
  $region6: #{mixed_3b_forward.6} parent=0 // loop_footer
    %s15 = sadd.s32 1, %s11
  $region7: #{mixed_3b_forward.6} parent=0 // loop_footer_branch
    %10 = sbr.rel target = $region3
  $region8: #{mixed_3b_forward.6} parent=0 // loop_exit
    _

// kernel: mixed_3b_forward.5
$region0: #{mixed_3b_forward.5}
  #allocation0 [shape = 'u32[]', space=smem, size = 0x4, offset = 0x4, fixed_abs, tag = 'smem constant byte address 0x4 - core index']
  #allocation1 [shape = 'u32[144,128]{1,0:T(1,128)}', space=vmem, size = 0x12000, scoped, tag = 'internal scratch']
  %s0 = inlined_call_operand.vmem [shape: bf16[2,4,10,10,96], index: 0, kind: input, shape index: {}]
  %s1 = inlined_call_operand.vmem [shape: bf16[3,3,96,128], index: 1, kind: input, shape index: {}]
  %s2 = inlined_call_operand.vmem [shape: f32[1,128], index: 2, kind: input, shape index: {}]
  %s3 = inlined_call_operand.vmem [shape: bf16[3,128,128], index: 3, kind: input, shape index: {}]
  %s4 = inlined_call_operand.vmem [shape: f32[1,128], index: 4, kind: input, shape index: {}]
  %s5 = inlined_call_operand.vmem [shape: f32[2,4,8,8,128], index: 5, kind: output, shape index: {}]
  %s6 = sld [smem:[#allocation0]]
  $region53: #{mixed_3b_forward.5} parent=0
    _
  %s8 = ssub.s32 1, %s6
  %s9 = scalar_select 0, %s8, %s6
  loop: start=0, step=1, limit=4
  $region2: #{mixed_3b_forward.5} parent=0 // loop_pre_header
    _
  $region3: #{mixed_3b_forward.5} parent=0 // loop_header
    %s11 = sphi 0, %s15
    %p12 = scmp.ge.s32.totalorder %s11, 4
    %s21 = sphi 0, %s23
    %s24 = sphi 0, %s21
    %s25 = sphi 0, %s24
    %s41 = sphi 0, %s25
    %s45 = sphi 0, %s45
    %s47 = sphi 0, %s45
    %s48 = sphi 0, %s47
    %s62 = sphi 0, %s48
    %s66 = sphi 0, %s66
    %s68 = sphi 0, %s66
    %s69 = sphi 0, %s68
    %s83 = sphi 0, %s69
    %s87 = sphi 0, %s87
    %s89 = sphi 0, %s87
    %s90 = sphi 0, %s89
    %s104 = sphi 0, %s90
    %s108 = sphi 0, %s108
    %s110 = sphi 0, %s108
    %s111 = sphi 0, %s110
    %s125 = sphi 0, %s111
    %s131 = sphi 0, %s133
    %s134 = sphi 0, %s131
    %s135 = sphi 0, %s134
    %s151 = sphi 0, %s135
  $region4: #{mixed_3b_forward.5} parent=0 // loop_header_branch
    %14 = sbr.rel (%p12) target = $region8
  $region5: #{mixed_3b_forward.5} parent=0 // loop_body
    %s16 = ssub.s32 %s11, 1
    %s17 = ssub.s32 %s11, 2
    %s18 = sadd.s32 %s11, 1
    %s19 = ssub.s32 %s11, %s18
    %p20 = scmp.eq.s32.totalorder %s19, 0
    %s22 = sadd.s32 %s21, 1
    %s23 = scalar_select %p20, %s21, %s22
    %p26 = pneg %p20
    %p27 = scmp.eq.s32.totalorder %s11, 1
    %p28 = por %p26, %p27
    %p29 = scmp.ne.s32.totalorder %s21, %s24
    %p30 = scmp.eq.s32.totalorder %s11, 0
    %p31 = por %p29, %p30
    %p32 = scmp.ne.s32.totalorder %s21, %s24
    %p33 = scmp.eq.s32.totalorder %s16, 1
    %p34 = por %p32, %p33
    %p35 = scmp.ne.s32.totalorder %s24, %s25
    %p36 = scmp.eq.s32.totalorder %s16, 0
    %p37 = por %p35, %p36
    %p38 = scmp.ne.s32.totalorder %s24, %s25
    %p39 = scmp.eq.s32.totalorder %s17, 1
    %p40 = por %p38, %p39
    %p42 = scmp.ne.s32.totalorder %s25, %s41
    %p43 = scmp.eq.s32.totalorder %s17, 0
    %p44 = por %p42, %p43
    %s46 = sadd.s32 %s45, 1
    %p49 = scmp.eq.s32.totalorder %s11, 1
    %p50 = scmp.ne.s32.totalorder %s45, %s47
    %p51 = scmp.eq.s32.totalorder %s11, 0
    %p52 = por %p50, %p51
    %p53 = scmp.ne.s32.totalorder %s45, %s47
    %p54 = scmp.eq.s32.totalorder %s16, 1
    %p55 = por %p53, %p54
    %p56 = scmp.ne.s32.totalorder %s47, %s48
    %p57 = scmp.eq.s32.totalorder %s16, 0
    %p58 = por %p56, %p57
    %p59 = scmp.ne.s32.totalorder %s47, %s48
    %p60 = scmp.eq.s32.totalorder %s17, 1
    %p61 = por %p59, %p60
    %p63 = scmp.ne.s32.totalorder %s48, %s62
    %p64 = scmp.eq.s32.totalorder %s17, 0
    %p65 = por %p63, %p64
    %s67 = sadd.s32 %s66, 1
    %p70 = scmp.eq.s32.totalorder %s11, 1
    %p71 = scmp.ne.s32.totalorder %s66, %s68
    %p72 = scmp.eq.s32.totalorder %s11, 0
    %p73 = por %p71, %p72
    %p74 = scmp.ne.s32.totalorder %s66, %s68
    %p75 = scmp.eq.s32.totalorder %s16, 1
    %p76 = por %p74, %p75
    %p77 = scmp.ne.s32.totalorder %s68, %s69
    %p78 = scmp.eq.s32.totalorder %s16, 0
    %p79 = por %p77, %p78
    %p80 = scmp.ne.s32.totalorder %s68, %s69
    %p81 = scmp.eq.s32.totalorder %s17, 1
    %p82 = por %p80, %p81
    %p84 = scmp.ne.s32.totalorder %s69, %s83
    %p85 = scmp.eq.s32.totalorder %s17, 0
    %p86 = por %p84, %p85
    %s88 = sadd.s32 %s87, 1
    %p91 = scmp.eq.s32.totalorder %s11, 1
    %p92 = scmp.ne.s32.totalorder %s87, %s89
    %p93 = scmp.eq.s32.totalorder %s11, 0
    %p94 = por %p92, %p93
    %p95 = scmp.ne.s32.totalorder %s87, %s89
    %p96 = scmp.eq.s32.totalorder %s16, 1
    %p97 = por %p95, %p96
    %p98 = scmp.ne.s32.totalorder %s89, %s90
    %p99 = scmp.eq.s32.totalorder %s16, 0
    %p100 = por %p98, %p99
    %p101 = scmp.ne.s32.totalorder %s89, %s90
    %p102 = scmp.eq.s32.totalorder %s17, 1
    %p103 = por %p101, %p102
    %p105 = scmp.ne.s32.totalorder %s90, %s104
    %p106 = scmp.eq.s32.totalorder %s17, 0
    %p107 = por %p105, %p106
    %s109 = sadd.s32 %s108, 1
    %p112 = scmp.eq.s32.totalorder %s11, 1
    %p113 = scmp.ne.s32.totalorder %s108, %s110
    %p114 = scmp.eq.s32.totalorder %s11, 0
    %p115 = por %p113, %p114
    %p116 = scmp.ne.s32.totalorder %s108, %s110
    %p117 = scmp.eq.s32.totalorder %s16, 1
    %p118 = por %p116, %p117
    %p119 = scmp.ne.s32.totalorder %s110, %s111
    %p120 = scmp.eq.s32.totalorder %s16, 0
    %p121 = por %p119, %p120
    %p122 = scmp.ne.s32.totalorder %s110, %s111
    %p123 = scmp.eq.s32.totalorder %s17, 1
    %p124 = por %p122, %p123
    %p126 = scmp.ne.s32.totalorder %s111, %s125
    %p127 = scmp.eq.s32.totalorder %s17, 0
    %p128 = por %p126, %p127
    %s129 = ssub.s32 %s11, %s18
    %p130 = scmp.eq.s32.totalorder %s129, 0
    %s132 = sadd.s32 %s131, 1
    %s133 = scalar_select %p130, %s131, %s132
    %p136 = pneg %p130
    %p137 = scmp.eq.s32.totalorder %s11, 1
    %p138 = por %p136, %p137
    %p139 = scmp.ne.s32.totalorder %s131, %s134
    %p140 = scmp.eq.s32.totalorder %s11, 0
    %p141 = por %p139, %p140
    %p142 = scmp.ne.s32.totalorder %s131, %s134
    %p143 = scmp.eq.s32.totalorder %s16, 1
    %p144 = por %p142, %p143
    %p145 = scmp.ne.s32.totalorder %s134, %s135
    %p146 = scmp.eq.s32.totalorder %s16, 0
    %p147 = por %p145, %p146
    %p148 = scmp.ne.s32.totalorder %s134, %s135
    %p149 = scmp.eq.s32.totalorder %s17, 1
    %p150 = por %p148, %p149
    %p152 = scmp.ne.s32.totalorder %s135, %s151
    %p153 = scmp.eq.s32.totalorder %s17, 0
    %p154 = por %p152, %p153
    %p155 = scmp.le.s32.totalorder 1, %s11
    %p156 = scmp.lt.s32.totalorder %s11, 3
    %p157 = pnand %p155, %p156
    %p158 = pneg %p157
    // Predicated region
    $region9: #{mixed_3b_forward.5} parent=5 // pred_check
      _
    $region10: #{mixed_3b_forward.5} parent=5 // pred_check_branch
      %160 = sbr.rel (%p157) target = $region12
    $region11: #{mixed_3b_forward.5} parent=5 // pred_region
      %s161 = ssub.s32 %s11, 1
      // Predicated region
      $region13: #{mixed_3b_forward.5} parent=11 // pred_check
        %p162 = pneg %p58
      $region14: #{mixed_3b_forward.5} parent=11 // pred_check_branch
        %164 = sbr.rel (%p162) target = $region16
      $region15: #{mixed_3b_forward.5} parent=11 // pred_region
        _
      $region16: #{mixed_3b_forward.5} parent=11 // pred_fallthru
        _
      // Predicated region
      $region17: #{mixed_3b_forward.5} parent=11 // pred_check
        %p165 = pneg %p79
      $region18: #{mixed_3b_forward.5} parent=11 // pred_check_branch
        %167 = sbr.rel (%p165) target = $region20
      $region19: #{mixed_3b_forward.5} parent=11 // pred_region
        _
      $region20: #{mixed_3b_forward.5} parent=11 // pred_fallthru
        _
      // Predicated region
      $region21: #{mixed_3b_forward.5} parent=11 // pred_check
        %p168 = pneg %p100
      $region22: #{mixed_3b_forward.5} parent=11 // pred_check_branch
        %170 = sbr.rel (%p168) target = $region24
      $region23: #{mixed_3b_forward.5} parent=11 // pred_region
        _
      $region24: #{mixed_3b_forward.5} parent=11 // pred_fallthru
        _
      // Predicated region
      $region25: #{mixed_3b_forward.5} parent=11 // pred_check
        %p171 = pneg %p121
      $region26: #{mixed_3b_forward.5} parent=11 // pred_check_branch
        %173 = sbr.rel (%p171) target = $region28
      $region27: #{mixed_3b_forward.5} parent=11 // pred_region
        _
      $region28: #{mixed_3b_forward.5} parent=11 // pred_fallthru
        _
    $region12: #{mixed_3b_forward.5} parent=5 // pred_fallthru
      _
    %p174 = scmp.lt.s32.totalorder %s11, 2
    // Predicated region
    $region29: #{mixed_3b_forward.5} parent=5 // pred_check
      %p175 = pneg %p174
    $region30: #{mixed_3b_forward.5} parent=5 // pred_check_branch
      %177 = sbr.rel (%p175) target = $region32
    $region31: #{mixed_3b_forward.5} parent=5 // pred_region
      // Predicated region
      $region33: #{mixed_3b_forward.5} parent=31 // pred_check
        %p178 = pneg %p31
      $region34: #{mixed_3b_forward.5} parent=31 // pred_check_branch
        %180 = sbr.rel (%p178) target = $region36
      $region35: #{mixed_3b_forward.5} parent=31 // pred_region
        %p181 = scmp.lt.s32.totalorder %s11, 1
        %s182 = scalar_select %p181, %s11, 1
        %s183 = smul.addr %s182, 80
        %s184 = smul.addr %s183, 4
        %s185 = scalar_lea.vmem %s0, %s184
      $region36: #{mixed_3b_forward.5} parent=31 // pred_fallthru
        _
    $region32: #{mixed_3b_forward.5} parent=5 // pred_fallthru
      _
    %p186 = scmp.le.s32.totalorder 1, %s11
    %p187 = scmp.lt.s32.totalorder %s11, 3
    %p188 = pnand %p186, %p187
    %p189 = pneg %p188
    // Predicated region
    $region37: #{mixed_3b_forward.5} parent=5 // pred_check
      _
    $region38: #{mixed_3b_forward.5} parent=5 // pred_check_branch
      %191 = sbr.rel (%p188) target = $region40
    $region39: #{mixed_3b_forward.5} parent=5 // pred_region
      %s192 = ssub.s32 %s11, 1
      %p193 = scmp.lt.s32.totalorder %s16, 1
      %s194 = scalar_select %p193, %s16, 1
      %s195 = smul.addr %s194, 80
      %s196 = smul.addr %s195, 4
      %s197 = scalar_lea.vmem %s0, %s196
      %p198 = pneg %p37
      %p199 = pneg %p34
      %p200 = pneg %p58
      %p201 = pneg %p55
      %p202 = pneg %p79
      %p203 = pneg %p76
      %p204 = pneg %p100
      %p205 = pneg %p97
      %p206 = pneg %p121
      %p207 = pneg %p118
      %p208 = pneg %p147
      %p209 = pneg %p144
      %p210 = scmp.lt.s32.totalorder %s16, 1
      %s211 = scalar_select %p210, %s16, 1
      %s212 = smul.addr %s211, 32
      %s213 = smul.addr %s212, 8
      %s214 = scalar_lea.vmem %s5, %s213
      %p215 = scmp.lt.s32.totalorder %s16, 1
      %s216 = scalar_select %p215, %s16, 1
      %s217 = smul.addr %s216, 80
      %s218 = smul.addr %s217, 4
      %s219 = scalar_lea.vmem %s0, %s218
      %p220 = scmp.lt.s32.totalorder %s16, 1
      %s221 = scalar_select %p220, %s16, 1
      %s222 = smul.addr %s221, 32
      %s223 = smul.addr %s222, 8
      %s224 = scalar_lea.vmem %s5, %s223
      %v226 = vld [vmem:[%s219] sm:$0xf]
      %v227 = vld [vmem:[%s219 + $0x4] sm:$0x1]
      %v228 = vld [vmem:[%s219 + $0x8] sm:$0xf]
      %v229 = vld [vmem:[%s219 + $0xc] sm:$0x1]
      %v230 = vld [vmem:[%s219 + $0x10] sm:$0xf]
      %v231 = vld [vmem:[%s219 + $0x14] sm:$0x1]
      %v232 = vld [vmem:[%s219 + $0x18] sm:$0xf]
      %v233 = vld [vmem:[%s219 + $0x1c] sm:$0x1]
      %v234 = vld [vmem:[%s219 + $0x20] sm:$0xf]
      %v235 = vld [vmem:[%s219 + $0x24] sm:$0x1]
      %v236 = vld [vmem:[%s219 + $0x28] sm:$0xf]
      %v237 = vld [vmem:[%s219 + $0x2c] sm:$0x1]
      %v238 = vld [vmem:[%s219 + $0x30] sm:$0xf]
      %v239 = vld [vmem:[%s219 + $0x34] sm:$0x1]
      %v240 = vld [vmem:[%s219 + $0x38] sm:$0xf]
      %v241 = vld [vmem:[%s219 + $0x3c] sm:$0x1]
      %v242 = vld [vmem:[%s219 + $0x40] sm:$0xf]
      %v243 = vld [vmem:[%s219 + $0x44] sm:$0x1]
      %v244 = vld [vmem:[%s219 + $0x48] sm:$0xf]
      %v245 = vld [vmem:[%s219 + $0x4c] sm:$0x1]
      %v246 = vld [vmem:[%s219 + $0x50] sm:$0xf]
      %v247 = vld [vmem:[%s219 + $0x54] sm:$0x1]
      %v248 = vld [vmem:[%s219 + $0x58] sm:$0xf]
      %v249 = vld [vmem:[%s219 + $0x5c] sm:$0x1]
      %v250 = vld [vmem:[%s219 + $0x60] sm:$0xf]
      %v251 = vld [vmem:[%s219 + $0x64] sm:$0x1]
      %v252 = vld [vmem:[%s219 + $0x68] sm:$0xf]
      %v253 = vld [vmem:[%s219 + $0x6c] sm:$0x1]
      %v254 = vld [vmem:[%s219 + $0x70] sm:$0xf]
      %v255 = vld [vmem:[%s219 + $0x74] sm:$0x1]
      %v256 = vld [vmem:[%s219 + $0x78] sm:$0xf]
      %v257 = vld [vmem:[%s219 + $0x7c] sm:$0x1]
      %v258 = vld [vmem:[%s219 + $0x80] sm:$0xf]
      %v259 = vld [vmem:[%s219 + $0x84] sm:$0x1]
      %v260 = vld [vmem:[%s219 + $0x88] sm:$0xf]
      %v261 = vld [vmem:[%s219 + $0x8c] sm:$0x1]
      %v262 = vld [vmem:[%s219 + $0x90] sm:$0xf]
      %v263 = vld [vmem:[%s219 + $0x94] sm:$0x1]
      %v264 = vld [vmem:[%s219 + $0x98] sm:$0xf]
      %v265 = vld [vmem:[%s219 + $0x9c] sm:$0x1]
      %v266 = vld [vmem:[%s219 + $0xa0] sm:$0xf]
      %v267 = vld [vmem:[%s219 + $0xa4] sm:$0x1]
      %v268 = vld [vmem:[%s219 + $0xa8] sm:$0xf]
      %v269 = vld [vmem:[%s219 + $0xac] sm:$0x1]
      %v270 = vld [vmem:[%s219 + $0xb0] sm:$0xf]
      %v271 = vld [vmem:[%s219 + $0xb4] sm:$0x1]
      %v272 = vld [vmem:[%s219 + $0xb8] sm:$0xf]
      %v273 = vld [vmem:[%s219 + $0xbc] sm:$0x1]
      %v274 = vld [vmem:[%s219 + $0xc0] sm:$0xf]
      %v275 = vld [vmem:[%s219 + $0xc4] sm:$0x1]
      %v276 = vld [vmem:[%s219 + $0xc8] sm:$0xf]
      %v277 = vld [vmem:[%s219 + $0xcc] sm:$0x1]
      %v278 = vld [vmem:[%s219 + $0xd0] sm:$0xf]
      %v279 = vld [vmem:[%s219 + $0xd4] sm:$0x1]
      %v280 = vld [vmem:[%s219 + $0xd8] sm:$0xf]
      %v281 = vld [vmem:[%s219 + $0xdc] sm:$0x1]
      %v282 = vld [vmem:[%s219 + $0xe0] sm:$0xf]
      %v283 = vld [vmem:[%s219 + $0xe4] sm:$0x1]
      %v284 = vld [vmem:[%s219 + $0xe8] sm:$0xf]
      %v285 = vld [vmem:[%s219 + $0xec] sm:$0x1]
      %v286 = vld [vmem:[%s219 + $0xf0] sm:$0xf]
      %v287 = vld [vmem:[%s219 + $0xf4] sm:$0x1]
      %v288 = vld [vmem:[%s219 + $0xf8] sm:$0xf]
      %v289 = vld [vmem:[%s219 + $0xfc] sm:$0x1]
      %v290 = vld [vmem:[%s219 + $0x100] sm:$0xf]
      %v291 = vld [vmem:[%s219 + $0x104] sm:$0x1]
      %v292 = vld [vmem:[%s219 + $0x108] sm:$0xf]
      %v293 = vld [vmem:[%s219 + $0x10c] sm:$0x1]
      %v294 = vld [vmem:[%s219 + $0x110] sm:$0xf]
      %v295 = vld [vmem:[%s219 + $0x114] sm:$0x1]
      %v296 = vld [vmem:[%s219 + $0x118] sm:$0xf]
      %v297 = vld [vmem:[%s219 + $0x11c] sm:$0x1]
      %v298 = vld [vmem:[%s219 + $0x120] sm:$0xf]
      %v299 = vld [vmem:[%s219 + $0x124] sm:$0x1]
      %v300 = vld [vmem:[%s219 + $0x128] sm:$0xf]
      %v301 = vld [vmem:[%s219 + $0x12c] sm:$0x1]
      %v302 = vld [vmem:[%s219 + $0x130] sm:$0xf]
      %v303 = vld [vmem:[%s219 + $0x134] sm:$0x1]
      %v304 = vld [vmem:[%s219 + $0x138] sm:$0xf]
      %v305 = vld [vmem:[%s219 + $0x13c] sm:$0x1]
      %v306 = vld [vmem:[%s1] sm:$0xf]
      %v307 = vld [vmem:[%s1 + $0x4] sm:$0xf]
      %v308 = vld [vmem:[%s1 + $0x8] sm:$0xf]
      %v309 = vld [vmem:[%s1 + $0xc] sm:$0xf]
      %v310 = vld [vmem:[%s1 + $0x10] sm:$0xf]
      %v311 = vld [vmem:[%s1 + $0x14] sm:$0xf]
      %v312 = vld [vmem:[%s1 + $0x18] sm:$0xf]
      %v313 = vld [vmem:[%s1 + $0x1c] sm:$0xf]
      %v314 = vld [vmem:[%s1 + $0x20] sm:$0xf]
      %v315 = vld [vmem:[%s1 + $0x24] sm:$0xf]
      %v316 = vld [vmem:[%s1 + $0x28] sm:$0xf]
      %v317 = vld [vmem:[%s1 + $0x2c] sm:$0xf]
      %vm318 = vsmask.f32 3328
      %vm319 = vsmask.f32 7440
      %vm320 = vmor %vm318, %vm319
      %v322 = vshrl.u32 %v226, 16
      %v324 = vrot.slane %v322, 4
      %v325 = vshll.u32 %v226, 16
      %v327 = vrot.slane %v325, 5
      %v328 = vor.u32 %v324, %v327
      %v329 = vrot.slane %v328, 4
      %v331 = vshll.u32 %v227, 16
      %v333 = vrot.slane %v331, 5
      %v334 = vsel %vm320, %v329, %v333
      %v336 = vshrl.u32 %v228, 16
      %v338 = vrot.slane %v336, 4
      %v339 = vshll.u32 %v228, 16
      %v341 = vrot.slane %v339, 5
      %v342 = vor.u32 %v338, %v341
      %v343 = vrot.slane %v342, 4
      %v345 = vshll.u32 %v229, 16
      %v347 = vrot.slane %v345, 5
      %v348 = vsel %vm320, %v343, %v347
      %v350 = vshrl.u32 %v230, 16
      %v352 = vrot.slane %v350, 4
      %v353 = vshll.u32 %v230, 16
      %v355 = vrot.slane %v353, 5
      %v356 = vor.u32 %v352, %v355
      %v357 = vrot.slane %v356, 4
      %v359 = vshll.u32 %v231, 16
      %v361 = vrot.slane %v359, 5
      %v362 = vsel %vm320, %v357, %v361
      %v364 = vshrl.u32 %v232, 16
      %v366 = vrot.slane %v364, 4
      %v367 = vshll.u32 %v232, 16
      %v369 = vrot.slane %v367, 5
      %v370 = vor.u32 %v366, %v369
      %v371 = vrot.slane %v370, 4
      %v373 = vshll.u32 %v233, 16
      %v375 = vrot.slane %v373, 5
      %v376 = vsel %vm320, %v371, %v375
      %v378 = vshrl.u32 %v234, 16
      %v380 = vrot.slane %v378, 4
      %v381 = vshll.u32 %v234, 16
      %v383 = vrot.slane %v381, 5
      %v384 = vor.u32 %v380, %v383
      %v385 = vrot.slane %v384, 4
      %v387 = vshll.u32 %v235, 16
      %v389 = vrot.slane %v387, 5
      %v390 = vsel %vm320, %v385, %v389
      %v392 = vshrl.u32 %v236, 16
      %v394 = vrot.slane %v392, 4
      %v395 = vshll.u32 %v236, 16
      %v397 = vrot.slane %v395, 5
      %v398 = vor.u32 %v394, %v397
      %v399 = vrot.slane %v398, 4
      %v401 = vshll.u32 %v237, 16
      %v403 = vrot.slane %v401, 5
      %v404 = vsel %vm320, %v399, %v403
      %v406 = vshrl.u32 %v238, 16
      %v408 = vrot.slane %v406, 4
      %v409 = vshll.u32 %v238, 16
      %v411 = vrot.slane %v409, 5
      %v412 = vor.u32 %v408, %v411
      %v413 = vrot.slane %v412, 4
      %v415 = vshll.u32 %v239, 16
      %v417 = vrot.slane %v415, 5
      %v418 = vsel %vm320, %v413, %v417
      %v420 = vshrl.u32 %v240, 16
      %v422 = vrot.slane %v420, 4
      %v423 = vshll.u32 %v240, 16
      %v425 = vrot.slane %v423, 5
      %v426 = vor.u32 %v422, %v425
      %v427 = vrot.slane %v426, 4
      %v429 = vshll.u32 %v241, 16
      %v431 = vrot.slane %v429, 5
      %v432 = vsel %vm320, %v427, %v431
      %v434 = vshrl.u32 %v246, 16
      %v436 = vrot.slane %v434, 4
      %v437 = vshll.u32 %v246, 16
      %v439 = vrot.slane %v437, 5
      %v440 = vor.u32 %v436, %v439
      %v441 = vrot.slane %v440, 4
      %v443 = vshll.u32 %v247, 16
      %v445 = vrot.slane %v443, 5
      %v446 = vsel %vm320, %v441, %v445
      %v448 = vshrl.u32 %v248, 16
      %v450 = vrot.slane %v448, 4
      %v451 = vshll.u32 %v248, 16
      %v453 = vrot.slane %v451, 5
      %v454 = vor.u32 %v450, %v453
      %v455 = vrot.slane %v454, 4
      %v457 = vshll.u32 %v249, 16
      %v459 = vrot.slane %v457, 5
      %v460 = vsel %vm320, %v455, %v459
      %v462 = vshrl.u32 %v250, 16
      %v464 = vrot.slane %v462, 4
      %v465 = vshll.u32 %v250, 16
      %v467 = vrot.slane %v465, 5
      %v468 = vor.u32 %v464, %v467
      %v469 = vrot.slane %v468, 4
      %v471 = vshll.u32 %v251, 16
      %v473 = vrot.slane %v471, 5
      %v474 = vsel %vm320, %v469, %v473
      %v476 = vshrl.u32 %v252, 16
      %v478 = vrot.slane %v476, 4
      %v479 = vshll.u32 %v252, 16
      %v481 = vrot.slane %v479, 5
      %v482 = vor.u32 %v478, %v481
      %v483 = vrot.slane %v482, 4
      %v485 = vshll.u32 %v253, 16
      %v487 = vrot.slane %v485, 5
      %v488 = vsel %vm320, %v483, %v487
      %v490 = vshrl.u32 %v254, 16
      %v492 = vrot.slane %v490, 4
      %v493 = vshll.u32 %v254, 16
      %v495 = vrot.slane %v493, 5
      %v496 = vor.u32 %v492, %v495
      %v497 = vrot.slane %v496, 4
      %v499 = vshll.u32 %v255, 16
      %v501 = vrot.slane %v499, 5
      %v502 = vsel %vm320, %v497, %v501
      %v504 = vshrl.u32 %v256, 16
      %v506 = vrot.slane %v504, 4
      %v507 = vshll.u32 %v256, 16
      %v509 = vrot.slane %v507, 5
      %v510 = vor.u32 %v506, %v509
      %v511 = vrot.slane %v510, 4
      %v513 = vshll.u32 %v257, 16
      %v515 = vrot.slane %v513, 5
      %v516 = vsel %vm320, %v511, %v515
      %v518 = vshrl.u32 %v258, 16
      %v520 = vrot.slane %v518, 4
      %v521 = vshll.u32 %v258, 16
      %v523 = vrot.slane %v521, 5
      %v524 = vor.u32 %v520, %v523
      %v525 = vrot.slane %v524, 4
      %v527 = vshll.u32 %v259, 16
      %v529 = vrot.slane %v527, 5
      %v530 = vsel %vm320, %v525, %v529
      %v532 = vshrl.u32 %v260, 16
      %v534 = vrot.slane %v532, 4
      %v535 = vshll.u32 %v260, 16
      %v537 = vrot.slane %v535, 5
      %v538 = vor.u32 %v534, %v537
      %v539 = vrot.slane %v538, 4
      %v541 = vshll.u32 %v261, 16
      %v543 = vrot.slane %v541, 5
      %v544 = vsel %vm320, %v539, %v543
      %v546 = vshrl.u32 %v266, 16
      %v548 = vrot.slane %v546, 4
      %v549 = vshll.u32 %v266, 16
      %v551 = vrot.slane %v549, 5
      %v552 = vor.u32 %v548, %v551
      %v553 = vrot.slane %v552, 4
      %v555 = vshll.u32 %v267, 16
      %v557 = vrot.slane %v555, 5
      %v558 = vsel %vm320, %v553, %v557
      %v560 = vshrl.u32 %v268, 16
      %v562 = vrot.slane %v560, 4
      %v563 = vshll.u32 %v268, 16
      %v565 = vrot.slane %v563, 5
      %v566 = vor.u32 %v562, %v565
      %v567 = vrot.slane %v566, 4
      %v569 = vshll.u32 %v269, 16
      %v571 = vrot.slane %v569, 5
      %v572 = vsel %vm320, %v567, %v571
      %v574 = vshrl.u32 %v270, 16
      %v576 = vrot.slane %v574, 4
      %v577 = vshll.u32 %v270, 16
      %v579 = vrot.slane %v577, 5
      %v580 = vor.u32 %v576, %v579
      %v581 = vrot.slane %v580, 4
      %v583 = vshll.u32 %v271, 16
      %v585 = vrot.slane %v583, 5
      %v586 = vsel %vm320, %v581, %v585
      %v588 = vshrl.u32 %v272, 16
      %v590 = vrot.slane %v588, 4
      %v591 = vshll.u32 %v272, 16
      %v593 = vrot.slane %v591, 5
      %v594 = vor.u32 %v590, %v593
      %v595 = vrot.slane %v594, 4
      %v597 = vshll.u32 %v273, 16
      %v599 = vrot.slane %v597, 5
      %v600 = vsel %vm320, %v595, %v599
      %v602 = vshrl.u32 %v274, 16
      %v604 = vrot.slane %v602, 4
      %v605 = vshll.u32 %v274, 16
      %v607 = vrot.slane %v605, 5
      %v608 = vor.u32 %v604, %v607
      %v609 = vrot.slane %v608, 4
      %v611 = vshll.u32 %v275, 16
      %v613 = vrot.slane %v611, 5
      %v614 = vsel %vm320, %v609, %v613
      %v616 = vshrl.u32 %v276, 16
      %v618 = vrot.slane %v616, 4
      %v619 = vshll.u32 %v276, 16
      %v621 = vrot.slane %v619, 5
      %v622 = vor.u32 %v618, %v621
      %v623 = vrot.slane %v622, 4
      %v625 = vshll.u32 %v277, 16
      %v627 = vrot.slane %v625, 5
      %v628 = vsel %vm320, %v623, %v627
      %v630 = vshrl.u32 %v278, 16
      %v632 = vrot.slane %v630, 4
      %v633 = vshll.u32 %v278, 16
      %v635 = vrot.slane %v633, 5
      %v636 = vor.u32 %v632, %v635
      %v637 = vrot.slane %v636, 4
      %v639 = vshll.u32 %v279, 16
      %v641 = vrot.slane %v639, 5
      %v642 = vsel %vm320, %v637, %v641
      %v644 = vshrl.u32 %v280, 16
      %v646 = vrot.slane %v644, 4
      %v647 = vshll.u32 %v280, 16
      %v649 = vrot.slane %v647, 5
      %v650 = vor.u32 %v646, %v649
      %v651 = vrot.slane %v650, 4
      %v653 = vshll.u32 %v281, 16
      %v655 = vrot.slane %v653, 5
      %v656 = vsel %vm320, %v651, %v655
      %v658 = vshrl.u32 %v286, 16
      %v660 = vrot.slane %v658, 4
      %v661 = vshll.u32 %v286, 16
      %v663 = vrot.slane %v661, 5
      %v664 = vor.u32 %v660, %v663
      %v665 = vrot.slane %v664, 4
      %v667 = vshll.u32 %v287, 16
      %v669 = vrot.slane %v667, 5
      %v670 = vsel %vm320, %v665, %v669
      %v672 = vshrl.u32 %v288, 16
      %v674 = vrot.slane %v672, 4
      %v675 = vshll.u32 %v288, 16
      %v677 = vrot.slane %v675, 5
      %v678 = vor.u32 %v674, %v677
      %v679 = vrot.slane %v678, 4
      %v681 = vshll.u32 %v289, 16
      %v683 = vrot.slane %v681, 5
      %v684 = vsel %vm320, %v679, %v683
      %v686 = vshrl.u32 %v290, 16
      %v688 = vrot.slane %v686, 4
      %v689 = vshll.u32 %v290, 16
      %v691 = vrot.slane %v689, 5
      %v692 = vor.u32 %v688, %v691
      %v693 = vrot.slane %v692, 4
      %v695 = vshll.u32 %v291, 16
      %v697 = vrot.slane %v695, 5
      %v698 = vsel %vm320, %v693, %v697
      %v700 = vshrl.u32 %v292, 16
      %v702 = vrot.slane %v700, 4
      %v703 = vshll.u32 %v292, 16
      %v705 = vrot.slane %v703, 5
      %v706 = vor.u32 %v702, %v705
      %v707 = vrot.slane %v706, 4
      %v709 = vshll.u32 %v293, 16
      %v711 = vrot.slane %v709, 5
      %v712 = vsel %vm320, %v707, %v711
      %v714 = vshrl.u32 %v294, 16
      %v716 = vrot.slane %v714, 4
      %v717 = vshll.u32 %v294, 16
      %v719 = vrot.slane %v717, 5
      %v720 = vor.u32 %v716, %v719
      %v721 = vrot.slane %v720, 4
      %v723 = vshll.u32 %v295, 16
      %v725 = vrot.slane %v723, 5
      %v726 = vsel %vm320, %v721, %v725
      %v728 = vshrl.u32 %v296, 16
      %v730 = vrot.slane %v728, 4
      %v731 = vshll.u32 %v296, 16
      %v733 = vrot.slane %v731, 5
      %v734 = vor.u32 %v730, %v733
      %v735 = vrot.slane %v734, 4
      %v737 = vshll.u32 %v297, 16
      %v739 = vrot.slane %v737, 5
      %v740 = vsel %vm320, %v735, %v739
      %v742 = vshrl.u32 %v298, 16
      %v744 = vrot.slane %v742, 4
      %v745 = vshll.u32 %v298, 16
      %v747 = vrot.slane %v745, 5
      %v748 = vor.u32 %v744, %v747
      %v749 = vrot.slane %v748, 4
      %v751 = vshll.u32 %v299, 16
      %v753 = vrot.slane %v751, 5
      %v754 = vsel %vm320, %v749, %v753
      %v756 = vshrl.u32 %v300, 16
      %v758 = vrot.slane %v756, 4
      %v759 = vshll.u32 %v300, 16
      %v761 = vrot.slane %v759, 5
      %v762 = vor.u32 %v758, %v761
      %v763 = vrot.slane %v762, 4
      %v765 = vshll.u32 %v301, 16
      %v767 = vrot.slane %v765, 5
      %v768 = vsel %vm320, %v763, %v767
      %s769 = scalar_lea.vmem %s1, 48
      %v770 = vld [vmem:[%s769] sm:$0xf]
      %v771 = vld [vmem:[%s769 + $0x4] sm:$0xf]
      %v772 = vld [vmem:[%s769 + $0x8] sm:$0xf]
      %v773 = vld [vmem:[%s769 + $0xc] sm:$0xf]
      %v774 = vld [vmem:[%s769 + $0x10] sm:$0xf]
      %v775 = vld [vmem:[%s769 + $0x14] sm:$0xf]
      %v776 = vld [vmem:[%s769 + $0x18] sm:$0xf]
      %v777 = vld [vmem:[%s769 + $0x1c] sm:$0xf]
      %v778 = vld [vmem:[%s769 + $0x20] sm:$0xf]
      %v779 = vld [vmem:[%s769 + $0x24] sm:$0xf]
      %v780 = vld [vmem:[%s769 + $0x28] sm:$0xf]
      %v781 = vld [vmem:[%s769 + $0x2c] sm:$0xf]
      %v782 = vunpack.c.l.b16 %v334
      %v783 = vunpack.c.l.b16 %v348
      %v784 = vunpack.c.l.b16 %v362
      %v785 = vunpack.c.l.b16 %v376
      %v786 = vunpack.c.l.b16 %v390
      %v787 = vunpack.c.l.b16 %v404
      %v788 = vunpack.c.l.b16 %v418
      %v789 = vunpack.c.l.b16 %v432
      %v790 = vunpack.c.l.b16 %v446
      %v791 = vunpack.c.l.b16 %v460
      %v792 = vunpack.c.l.b16 %v474
      %v793 = vunpack.c.l.b16 %v488
      %v794 = vunpack.c.l.b16 %v502
      %v795 = vunpack.c.l.b16 %v516
      %v796 = vunpack.c.l.b16 %v530
      %v797 = vunpack.c.l.b16 %v544
      %v798 = vunpack.c.l.b16 %v558
      %v799 = vunpack.c.l.b16 %v572
      %v800 = vunpack.c.l.b16 %v586
      %v801 = vunpack.c.l.b16 %v600
      %v802 = vunpack.c.l.b16 %v614
      %v803 = vunpack.c.l.b16 %v628
      %v804 = vunpack.c.l.b16 %v642
      %v805 = vunpack.c.l.b16 %v656
      %v806 = vunpack.c.l.b16 %v670
      %v807 = vunpack.c.l.b16 %v684
      %v808 = vunpack.c.l.b16 %v698
      %v809 = vunpack.c.l.b16 %v712
      %v810 = vunpack.c.l.b16 %v726
      %v811 = vunpack.c.l.b16 %v740
      %v812 = vunpack.c.l.b16 %v754
      %v813 = vunpack.c.l.b16 %v768
      %v814 = vpack.c.b16 %v783, %v782
      %v815 = vpack.c.b16 %v785, %v784
      %v816 = vpack.c.b16 %v787, %v786
      %v817 = vpack.c.b16 %v789, %v788
      %v818 = vpack.c.b16 %v791, %v790
      %v819 = vpack.c.b16 %v793, %v792
      %v820 = vpack.c.b16 %v795, %v794
      %v821 = vpack.c.b16 %v797, %v796
      %v822 = vpack.c.b16 %v799, %v798
      %v823 = vpack.c.b16 %v801, %v800
      %v824 = vpack.c.b16 %v803, %v802
      %v825 = vpack.c.b16 %v805, %v804
      %v826 = vpack.c.b16 %v807, %v806
      %v827 = vpack.c.b16 %v809, %v808
      %v828 = vpack.c.b16 %v811, %v810
      %v829 = vpack.c.b16 %v813, %v812
      %v842 = vunpack.c.l.b16 %v770
      %v843 = vunpack.c.l.b16 %v771
      %v844 = vunpack.c.l.b16 %v772
      %v845 = vunpack.c.l.b16 %v773
      %v846 = vunpack.c.l.b16 %v774
      %v847 = vunpack.c.l.b16 %v775
      %v848 = vunpack.c.l.b16 %v776
      %v849 = vunpack.c.l.b16 %v777
      %v850 = vunpack.c.l.b16 %v778
      %v851 = vunpack.c.l.b16 %v779
      %v852 = vunpack.c.l.b16 %v780
      %v853 = vunpack.c.l.b16 %v781
      %v854 = vpack.c.b16 %v843, %v842
      %v855 = vpack.c.b16 %v845, %v844
      %v856 = vpack.c.b16 %v847, %v846
      %v857 = vpack.c.b16 %v849, %v848
      %v858 = vpack.c.b16 %v851, %v850
      %v859 = vpack.c.b16 %v853, %v852
      %vm866 = vcmask 785408
      %v868 = vsel %vm866, %v814, 0
      %v871 = vsel %vm866, %v815, 0
      %v874 = vsel %vm866, %v816, 0
      %v877 = vsel %vm866, %v817, 0
      %v880 = vsel %vm866, %v818, 0
      %v883 = vsel %vm866, %v819, 0
      %v886 = vsel %vm866, %v820, 0
      %v889 = vsel %vm866, %v821, 0
      %v892 = vsel %vm866, %v822, 0
      %v895 = vsel %vm866, %v823, 0
      %v898 = vsel %vm866, %v824, 0
      %v901 = vsel %vm866, %v825, 0
      %v904 = vsel %vm866, %v826, 0
      %v907 = vsel %vm866, %v827, 0
      %v910 = vsel %vm866, %v828, 0
      %v913 = vsel %vm866, %v829, 0
      %915 = vmatprep.subr.bf16.mxu0 0
      %916 = vmatpush1.bf16.msra.mxu0 %v854
      %917 = vmatprep.subr.bf16.mxu0 0
      %918 = vmatpush1.bf16.msra.mxu0 %v855
      %919 = vmatprep.subr.bf16.mxu0 0
      %920 = vmatpush1.bf16.msra.mxu0 %v856
      %921 = vmatprep.subr.bf16.mxu0 0
      %922 = vmatpush1.bf16.msra.mxu0 %v857
      %923 = vmatprep.subr.bf16.mxu0 0
      %924 = vmatpush1.bf16.msra.mxu0 %v858
      %925 = vmatprep.subr.bf16.mxu0 0
      %926 = vmatpush1.bf16.msra.mxu0 %v859
      %927 = vmatprep.subr.bf16.mxu0 0
      %928 = vmatpush1.bf16.msra.mxu0 0
      %929 = vmatprep.subr.bf16.mxu0 0
      %930 = vmatpush1.bf16.msra.mxu0 0
      %931 = vmatprep.subr.bf16.mxu0 0
      %932 = vmatpush1.bf16.msra.mxu0 0
      %933 = vmatprep.subr.bf16.mxu0 0
      %934 = vmatpush1.bf16.msra.mxu0 0
      %935 = vmatprep.subr.bf16.mxu0 0
      %936 = vmatpush1.bf16.msra.mxu0 0
      %937 = vmatprep.subr.bf16.mxu0 0
      %938 = vmatpush1.bf16.msra.mxu0 0
      %939 = vmatprep.subr.bf16.mxu0 0
      %940 = vmatpush1.bf16.msra.mxu0 0
      %941 = vmatprep.subr.bf16.mxu0 0
      %942 = vmatpush1.bf16.msra.mxu0 0
      %943 = vmatprep.subr.bf16.mxu0 0
      %944 = vmatpush1.bf16.msra.mxu0 0
      %945 = vmatprep.subr.bf16.mxu0 0
      %946 = vmatpush1.bf16.msra.mxu0 0
      %947 = vmatprep.mubr.bf16.mxu0 0
      %948 = vmatmul.mubr.bf16.gmra.mrb[0].mxu0 %v868
      %v949 = vpop.f32.mrb[0].mxu0
      %v950 = vadd.f32 0.0, %v949
      %v951 = vpop.f32.mrb[0].mxu0
      %v952 = vpop.f32.mrb[0].mxu0
      %v953 = vadd.f32 0.0, %v952
      %v954 = vpop.f32.mrb[0].mxu0
      %955 = vmatprep.mubr.bf16.mxu0 0
      %956 = vmatmul.mubr.bf16.gmra.mrb[0].mxu0 %v871
      %v957 = vpop.f32.mrb[0].mxu0
      %v958 = vadd.f32 0.0, %v957
      %v959 = vpop.f32.mrb[0].mxu0
      %v960 = vpop.f32.mrb[0].mxu0
      %v961 = vadd.f32 0.0, %v960
      %v962 = vpop.f32.mrb[0].mxu0
      %963 = vmatprep.mubr.bf16.mxu0 0
      %964 = vmatmul.mubr.bf16.gmra.mrb[0].mxu0 %v874
      %v965 = vpop.f32.mrb[0].mxu0
      %v966 = vadd.f32 0.0, %v965
      %v967 = vpop.f32.mrb[0].mxu0
      %v968 = vpop.f32.mrb[0].mxu0
      %v969 = vadd.f32 0.0, %v968
      %v970 = vpop.f32.mrb[0].mxu0
      %971 = vmatprep.mubr.bf16.mxu0 0
      %972 = vmatmul.mubr.bf16.gmra.mrb[0].mxu0 %v877
      %v973 = vpop.f32.mrb[0].mxu0
      %v974 = vadd.f32 0.0, %v973
      %v975 = vpop.f32.mrb[0].mxu0
      %v976 = vpop.f32.mrb[0].mxu0
      %v977 = vadd.f32 0.0, %v976
      %v978 = vpop.f32.mrb[0].mxu0
      %979 = vmatprep.mubr.bf16.mxu0 0
      %980 = vmatmul.mubr.bf16.gmra.mrb[0].mxu0 %v880
      %v981 = vpop.f32.mrb[0].mxu0
      %v982 = vadd.f32 0.0, %v981
      %v983 = vpop.f32.mrb[0].mxu0
      %v984 = vpop.f32.mrb[0].mxu0
      %v985 = vadd.f32 0.0, %v984
      %v986 = vpop.f32.mrb[0].mxu0
      %987 = vmatprep.mubr.bf16.mxu0 0
      %988 = vmatmul.mubr.bf16.gmra.mrb[0].mxu0 %v883
      %v989 = vpop.f32.mrb[0].mxu0
      %v990 = vadd.f32 0.0, %v989
      %v991 = vpop.f32.mrb[0].mxu0
      %v992 = vpop.f32.mrb[0].mxu0
      %v993 = vadd.f32 0.0, %v992
      %v994 = vpop.f32.mrb[0].mxu0
      %995 = vmatprep.mubr.bf16.mxu0 0
      %996 = vmatmul.mubr.bf16.gmra.mrb[0].mxu0 %v886
      %v997 = vpop.f32.mrb[0].mxu0
      %v998 = vadd.f32 0.0, %v997
      %v999 = vpop.f32.mrb[0].mxu0
      %v1000 = vpop.f32.mrb[0].mxu0
      %v1001 = vadd.f32 0.0, %v1000
      %v1002 = vpop.f32.mrb[0].mxu0
      %1003 = vmatprep.mubr.bf16.mxu0 0
      %1004 = vmatmul.mubr.bf16.gmra.mrb[0].mxu0 %v889
      %v1005 = vpop.f32.mrb[0].mxu0
      %v1006 = vadd.f32 0.0, %v1005
      %v1007 = vpop.f32.mrb[0].mxu0
      %v1008 = vpop.f32.mrb[0].mxu0
      %v1009 = vadd.f32 0.0, %v1008
      %v1010 = vpop.f32.mrb[0].mxu0
      %1011 = vmatprep.mubr.bf16.mxu0 0
      %1012 = vmatmul.mubr.bf16.gmra.mrb[0].mxu0 %v892
      %v1013 = vpop.f32.mrb[0].mxu0
      %v1014 = vadd.f32 0.0, %v1013
      %v1015 = vpop.f32.mrb[0].mxu0
      %v1016 = vpop.f32.mrb[0].mxu0
      %v1017 = vadd.f32 0.0, %v1016
      %v1018 = vpop.f32.mrb[0].mxu0
      %1019 = vmatprep.mubr.bf16.mxu0 0
      %1020 = vmatmul.mubr.bf16.gmra.mrb[0].mxu0 %v895
      %v1021 = vpop.f32.mrb[0].mxu0
      %v1022 = vadd.f32 0.0, %v1021
      %v1023 = vpop.f32.mrb[0].mxu0
      %v1024 = vpop.f32.mrb[0].mxu0
      %v1025 = vadd.f32 0.0, %v1024
      %v1026 = vpop.f32.mrb[0].mxu0
      %1027 = vmatprep.mubr.bf16.mxu0 0
      %1028 = vmatmul.mubr.bf16.gmra.mrb[0].mxu0 %v898
      %v1029 = vpop.f32.mrb[0].mxu0
      %v1030 = vadd.f32 0.0, %v1029
      %v1031 = vpop.f32.mrb[0].mxu0
      %v1032 = vpop.f32.mrb[0].mxu0
      %v1033 = vadd.f32 0.0, %v1032
      %v1034 = vpop.f32.mrb[0].mxu0
      %1035 = vmatprep.mubr.bf16.mxu0 0
      %1036 = vmatmul.mubr.bf16.gmra.mrb[0].mxu0 %v901
      %v1037 = vpop.f32.mrb[0].mxu0
      %v1038 = vadd.f32 0.0, %v1037
      %v1039 = vpop.f32.mrb[0].mxu0
      %v1040 = vpop.f32.mrb[0].mxu0
      %v1041 = vadd.f32 0.0, %v1040
      %v1042 = vpop.f32.mrb[0].mxu0
      %1043 = vmatprep.mubr.bf16.mxu0 0
      %1044 = vmatmul.mubr.bf16.gmra.mrb[0].mxu0 %v904
      %v1045 = vpop.f32.mrb[0].mxu0
      %v1046 = vadd.f32 0.0, %v1045
      %v1047 = vpop.f32.mrb[0].mxu0
      %v1048 = vpop.f32.mrb[0].mxu0
      %v1049 = vadd.f32 0.0, %v1048
      %v1050 = vpop.f32.mrb[0].mxu0
      %1051 = vmatprep.mubr.bf16.mxu0 0
      %1052 = vmatmul.mubr.bf16.gmra.mrb[0].mxu0 %v907
      %v1053 = vpop.f32.mrb[0].mxu0
      %v1054 = vadd.f32 0.0, %v1053
      %v1055 = vpop.f32.mrb[0].mxu0
      %v1056 = vpop.f32.mrb[0].mxu0
      %v1057 = vadd.f32 0.0, %v1056
      %v1058 = vpop.f32.mrb[0].mxu0
      %1059 = vmatprep.mubr.bf16.mxu0 0
      %1060 = vmatmul.mubr.bf16.gmra.mrb[0].mxu0 %v910
      %v1061 = vpop.f32.mrb[0].mxu0
      %v1062 = vadd.f32 0.0, %v1061
      %v1063 = vpop.f32.mrb[0].mxu0
      %v1064 = vpop.f32.mrb[0].mxu0
      %v1065 = vadd.f32 0.0, %v1064
      %v1066 = vpop.f32.mrb[0].mxu0
      %1067 = vmatprep.mubr.bf16.mxu0 0
      %1068 = vmatmul.mubr.bf16.gmra.mrb[0].mxu0 %v913
      %v1069 = vpop.f32.mrb[0].mxu0
      %v1070 = vadd.f32 0.0, %v1069
      %v1071 = vpop.f32.mrb[0].mxu0
      %v1072 = vpop.f32.mrb[0].mxu0
      %v1073 = vadd.f32 0.0, %v1072
      %v1074 = vpop.f32.mrb[0].mxu0
      %1075 = vdwg.mxu0
      %v1108 = vunpack.c.l.b16 %v226
      %v1109 = vunpack.c.l.b16 %v228
      %v1110 = vunpack.c.l.b16 %v230
      %v1111 = vunpack.c.l.b16 %v232
      %v1112 = vunpack.c.l.b16 %v234
      %v1113 = vunpack.c.l.b16 %v236
      %v1114 = vunpack.c.l.b16 %v238
      %v1115 = vunpack.c.l.b16 %v240
      %v1116 = vunpack.c.l.b16 %v246
      %v1117 = vunpack.c.l.b16 %v248
      %v1118 = vunpack.c.l.b16 %v250
      %v1119 = vunpack.c.l.b16 %v252
      %v1120 = vunpack.c.l.b16 %v254
      %v1121 = vunpack.c.l.b16 %v256
      %v1122 = vunpack.c.l.b16 %v258
      %v1123 = vunpack.c.l.b16 %v260
      %v1124 = vunpack.c.l.b16 %v266
      %v1125 = vunpack.c.l.b16 %v268
      %v1126 = vunpack.c.l.b16 %v270
      %v1127 = vunpack.c.l.b16 %v272
      %v1128 = vunpack.c.l.b16 %v274
      %v1129 = vunpack.c.l.b16 %v276
      %v1130 = vunpack.c.l.b16 %v278
      %v1131 = vunpack.c.l.b16 %v280
      %v1132 = vunpack.c.l.b16 %v286
      %v1133 = vunpack.c.l.b16 %v288
      %v1134 = vunpack.c.l.b16 %v290
      %v1135 = vunpack.c.l.b16 %v292
      %v1136 = vunpack.c.l.b16 %v294
      %v1137 = vunpack.c.l.b16 %v296
      %v1138 = vunpack.c.l.b16 %v298
      %v1139 = vunpack.c.l.b16 %v300
      %v1140 = vpack.c.b16 %v1109, %v1108
      %v1141 = vpack.c.b16 %v1111, %v1110
      %v1142 = vpack.c.b16 %v1113, %v1112
      %v1143 = vpack.c.b16 %v1115, %v1114
      %v1144 = vpack.c.b16 %v1117, %v1116
      %v1145 = vpack.c.b16 %v1119, %v1118
      %v1146 = vpack.c.b16 %v1121, %v1120
      %v1147 = vpack.c.b16 %v1123, %v1122
      %v1148 = vpack.c.b16 %v1125, %v1124
      %v1149 = vpack.c.b16 %v1127, %v1126
      %v1150 = vpack.c.b16 %v1129, %v1128
      %v1151 = vpack.c.b16 %v1131, %v1130
      %v1152 = vpack.c.b16 %v1133, %v1132
      %v1153 = vpack.c.b16 %v1135, %v1134
      %v1154 = vpack.c.b16 %v1137, %v1136
      %v1155 = vpack.c.b16 %v1139, %v1138
      %v1168 = vunpack.c.l.b16 %v306
      %v1169 = vunpack.c.l.b16 %v307
      %v1170 = vunpack.c.l.b16 %v308
      %v1171 = vunpack.c.l.b16 %v309
      %v1172 = vunpack.c.l.b16 %v310
      %v1173 = vunpack.c.l.b16 %v311
      %v1174 = vunpack.c.l.b16 %v312
      %v1175 = vunpack.c.l.b16 %v313
      %v1176 = vunpack.c.l.b16 %v314
      %v1177 = vunpack.c.l.b16 %v315
      %v1178 = vunpack.c.l.b16 %v316
      %v1179 = vunpack.c.l.b16 %v317
      %v1180 = vpack.c.b16 %v1169, %v1168
      %v1181 = vpack.c.b16 %v1171, %v1170
      %v1182 = vpack.c.b16 %v1173, %v1172
      %v1183 = vpack.c.b16 %v1175, %v1174
      %v1184 = vpack.c.b16 %v1177, %v1176
      %v1185 = vpack.c.b16 %v1179, %v1178
      %v1193 = vsel %vm866, %v1140, 0
      %v1196 = vsel %vm866, %v1141, 0
      %v1199 = vsel %vm866, %v1142, 0
      %v1202 = vsel %vm866, %v1143, 0
      %v1205 = vsel %vm866, %v1144, 0
      %v1208 = vsel %vm866, %v1145, 0
      %v1211 = vsel %vm866, %v1146, 0
      %v1214 = vsel %vm866, %v1147, 0
      %v1217 = vsel %vm866, %v1148, 0
      %v1220 = vsel %vm866, %v1149, 0
      %v1223 = vsel %vm866, %v1150, 0
      %v1226 = vsel %vm866, %v1151, 0
      %v1229 = vsel %vm866, %v1152, 0
      %v1232 = vsel %vm866, %v1153, 0
      %v1235 = vsel %vm866, %v1154, 0
      %v1238 = vsel %vm866, %v1155, 0
      %1240 = vmatprep.subr.bf16.mxu0 0
      %1241 = vmatpush1.bf16.msra.mxu0 %v1180
      %1242 = vmatprep.subr.bf16.mxu0 0
      %1243 = vmatpush1.bf16.msra.mxu0 %v1181
      %1244 = vmatprep.subr.bf16.mxu0 0
      %1245 = vmatpush1.bf16.msra.mxu0 %v1182
      %1246 = vmatprep.subr.bf16.mxu0 0
      %1247 = vmatpush1.bf16.msra.mxu0 %v1183
      %1248 = vmatprep.subr.bf16.mxu0 0
      %1249 = vmatpush1.bf16.msra.mxu0 %v1184
      %1250 = vmatprep.subr.bf16.mxu0 0
      %1251 = vmatpush1.bf16.msra.mxu0 %v1185
      %1252 = vmatprep.subr.bf16.mxu0 0
      %1253 = vmatpush1.bf16.msra.mxu0 0
      %1254 = vmatprep.subr.bf16.mxu0 0
      %1255 = vmatpush1.bf16.msra.mxu0 0
      %1256 = vmatprep.subr.bf16.mxu0 0
      %1257 = vmatpush1.bf16.msra.mxu0 0
      %1258 = vmatprep.subr.bf16.mxu0 0
      %1259 = vmatpush1.bf16.msra.mxu0 0
      %1260 = vmatprep.subr.bf16.mxu0 0
      %1261 = vmatpush1.bf16.msra.mxu0 0
      %1262 = vmatprep.subr.bf16.mxu0 0
      %1263 = vmatpush1.bf16.msra.mxu0 0
      %1264 = vmatprep.subr.bf16.mxu0 0
      %1265 = vmatpush1.bf16.msra.mxu0 0
      %1266 = vmatprep.subr.bf16.mxu0 0
      %1267 = vmatpush1.bf16.msra.mxu0 0
      %1268 = vmatprep.subr.bf16.mxu0 0
      %1269 = vmatpush1.bf16.msra.mxu0 0
      %1270 = vmatprep.subr.bf16.mxu0 0
      %1271 = vmatpush1.bf16.msra.mxu0 0
      %1272 = vmatprep.mubr.bf16.mxu0 0
      %1273 = vmatmul.mubr.bf16.gmra.mrb[0].mxu0 %v1193
      %v1274 = vpop.f32.mrb[0].mxu0
      %v1275 = vadd.f32 %v950, %v1274
      %v1276 = vpop.f32.mrb[0].mxu0
      %v1277 = vpop.f32.mrb[0].mxu0
      %v1278 = vadd.f32 %v953, %v1277
      %v1279 = vpop.f32.mrb[0].mxu0
      %1280 = vmatprep.mubr.bf16.mxu0 0
      %1281 = vmatmul.mubr.bf16.gmra.mrb[0].mxu0 %v1196
      %v1282 = vpop.f32.mrb[0].mxu0
      %v1283 = vadd.f32 %v958, %v1282
      %v1284 = vpop.f32.mrb[0].mxu0
      %v1285 = vpop.f32.mrb[0].mxu0
      %v1286 = vadd.f32 %v961, %v1285
      %v1287 = vpop.f32.mrb[0].mxu0
      %1288 = vmatprep.mubr.bf16.mxu0 0
      %1289 = vmatmul.mubr.bf16.gmra.mrb[0].mxu0 %v1199
      %v1290 = vpop.f32.mrb[0].mxu0
      %v1291 = vadd.f32 %v966, %v1290
      %v1292 = vpop.f32.mrb[0].mxu0
      %v1293 = vpop.f32.mrb[0].mxu0
      %v1294 = vadd.f32 %v969, %v1293
      %v1295 = vpop.f32.mrb[0].mxu0
      %1296 = vmatprep.mubr.bf16.mxu0 0
      %1297 = vmatmul.mubr.bf16.gmra.mrb[0].mxu0 %v1202
      %v1298 = vpop.f32.mrb[0].mxu0
      %v1299 = vadd.f32 %v974, %v1298
      %v1300 = vpop.f32.mrb[0].mxu0
      %v1301 = vpop.f32.mrb[0].mxu0
      %v1302 = vadd.f32 %v977, %v1301
      %v1303 = vpop.f32.mrb[0].mxu0
      %1304 = vmatprep.mubr.bf16.mxu0 0
      %1305 = vmatmul.mubr.bf16.gmra.mrb[0].mxu0 %v1205
      %v1306 = vpop.f32.mrb[0].mxu0
      %v1307 = vadd.f32 %v982, %v1306
      %v1308 = vpop.f32.mrb[0].mxu0
      %v1309 = vpop.f32.mrb[0].mxu0
      %v1310 = vadd.f32 %v985, %v1309
      %v1311 = vpop.f32.mrb[0].mxu0
      %1312 = vmatprep.mubr.bf16.mxu0 0
      %1313 = vmatmul.mubr.bf16.gmra.mrb[0].mxu0 %v1208
      %v1314 = vpop.f32.mrb[0].mxu0
      %v1315 = vadd.f32 %v990, %v1314
      %v1316 = vpop.f32.mrb[0].mxu0
      %v1317 = vpop.f32.mrb[0].mxu0
      %v1318 = vadd.f32 %v993, %v1317
      %v1319 = vpop.f32.mrb[0].mxu0
      %1320 = vmatprep.mubr.bf16.mxu0 0
      %1321 = vmatmul.mubr.bf16.gmra.mrb[0].mxu0 %v1211
      %v1322 = vpop.f32.mrb[0].mxu0
      %v1323 = vadd.f32 %v998, %v1322
      %v1324 = vpop.f32.mrb[0].mxu0
      %v1325 = vpop.f32.mrb[0].mxu0
      %v1326 = vadd.f32 %v1001, %v1325
      %v1327 = vpop.f32.mrb[0].mxu0
      %1328 = vmatprep.mubr.bf16.mxu0 0
      %1329 = vmatmul.mubr.bf16.gmra.mrb[0].mxu0 %v1214
      %v1330 = vpop.f32.mrb[0].mxu0
      %v1331 = vadd.f32 %v1006, %v1330
      %v1332 = vpop.f32.mrb[0].mxu0
      %v1333 = vpop.f32.mrb[0].mxu0
      %v1334 = vadd.f32 %v1009, %v1333
      %v1335 = vpop.f32.mrb[0].mxu0
      %1336 = vmatprep.mubr.bf16.mxu0 0
      %1337 = vmatmul.mubr.bf16.gmra.mrb[0].mxu0 %v1217
      %v1338 = vpop.f32.mrb[0].mxu0
      %v1339 = vadd.f32 %v1014, %v1338
      %v1340 = vpop.f32.mrb[0].mxu0
      %v1341 = vpop.f32.mrb[0].mxu0
      %v1342 = vadd.f32 %v1017, %v1341
      %v1343 = vpop.f32.mrb[0].mxu0
      %1344 = vmatprep.mubr.bf16.mxu0 0
      %1345 = vmatmul.mubr.bf16.gmra.mrb[0].mxu0 %v1220
      %v1346 = vpop.f32.mrb[0].mxu0
      %v1347 = vadd.f32 %v1022, %v1346
      %v1348 = vpop.f32.mrb[0].mxu0
      %v1349 = vpop.f32.mrb[0].mxu0
      %v1350 = vadd.f32 %v1025, %v1349
      %v1351 = vpop.f32.mrb[0].mxu0
      %1352 = vmatprep.mubr.bf16.mxu0 0
      %1353 = vmatmul.mubr.bf16.gmra.mrb[0].mxu0 %v1223
      %v1354 = vpop.f32.mrb[0].mxu0
      %v1355 = vadd.f32 %v1030, %v1354
      %v1356 = vpop.f32.mrb[0].mxu0
      %v1357 = vpop.f32.mrb[0].mxu0
      %v1358 = vadd.f32 %v1033, %v1357
      %v1359 = vpop.f32.mrb[0].mxu0
      %1360 = vmatprep.mubr.bf16.mxu0 0
      %1361 = vmatmul.mubr.bf16.gmra.mrb[0].mxu0 %v1226
      %v1362 = vpop.f32.mrb[0].mxu0
      %v1363 = vadd.f32 %v1038, %v1362
      %v1364 = vpop.f32.mrb[0].mxu0
      %v1365 = vpop.f32.mrb[0].mxu0
      %v1366 = vadd.f32 %v1041, %v1365
      %v1367 = vpop.f32.mrb[0].mxu0
      %1368 = vmatprep.mubr.bf16.mxu0 0
      %1369 = vmatmul.mubr.bf16.gmra.mrb[0].mxu0 %v1229
      %v1370 = vpop.f32.mrb[0].mxu0
      %v1371 = vadd.f32 %v1046, %v1370
      %v1372 = vpop.f32.mrb[0].mxu0
      %v1373 = vpop.f32.mrb[0].mxu0
      %v1374 = vadd.f32 %v1049, %v1373
      %v1375 = vpop.f32.mrb[0].mxu0
      %1376 = vmatprep.mubr.bf16.mxu0 0
      %1377 = vmatmul.mubr.bf16.gmra.mrb[0].mxu0 %v1232
      %v1378 = vpop.f32.mrb[0].mxu0
      %v1379 = vadd.f32 %v1054, %v1378
      %v1380 = vpop.f32.mrb[0].mxu0
      %v1381 = vpop.f32.mrb[0].mxu0
      %v1382 = vadd.f32 %v1057, %v1381
      %v1383 = vpop.f32.mrb[0].mxu0
      %1384 = vmatprep.mubr.bf16.mxu0 0
      %1385 = vmatmul.mubr.bf16.gmra.mrb[0].mxu0 %v1235
      %v1386 = vpop.f32.mrb[0].mxu0
      %v1387 = vadd.f32 %v1062, %v1386
      %v1388 = vpop.f32.mrb[0].mxu0
      %v1389 = vpop.f32.mrb[0].mxu0
      %v1390 = vadd.f32 %v1065, %v1389
      %v1391 = vpop.f32.mrb[0].mxu0
      %1392 = vmatprep.mubr.bf16.mxu0 0
      %1393 = vmatmul.mubr.bf16.gmra.mrb[0].mxu0 %v1238
      %v1394 = vpop.f32.mrb[0].mxu0
      %v1395 = vadd.f32 %v1070, %v1394
      %v1396 = vpop.f32.mrb[0].mxu0
      %v1397 = vpop.f32.mrb[0].mxu0
      %v1398 = vadd.f32 %v1073, %v1397
      %v1399 = vpop.f32.mrb[0].mxu0
      %1400 = vdwg.mxu0
      %vm1433 = vcmask 1042432
      %vm1434 = vcmask 1046532
      %vm1435 = vmor %vm1433, %vm1434
      %v1436 = vrot.slane %v226, 5
      %v1437 = vrot.slane %v1436, 4
      %v1438 = vrot.slane %v227, 5
      %v1439 = vsel %vm1435, %v1437, %v1438
      %v1440 = vrot.slane %v228, 5
      %v1441 = vrot.slane %v1440, 4
      %v1442 = vrot.slane %v229, 5
      %v1443 = vsel %vm1435, %v1441, %v1442
      %v1444 = vrot.slane %v230, 5
      %v1445 = vrot.slane %v1444, 4
      %v1446 = vrot.slane %v231, 5
      %v1447 = vsel %vm1435, %v1445, %v1446
      %v1448 = vrot.slane %v232, 5
      %v1449 = vrot.slane %v1448, 4
      %v1450 = vrot.slane %v233, 5
      %v1451 = vsel %vm1435, %v1449, %v1450
      %v1452 = vrot.slane %v234, 5
      %v1453 = vrot.slane %v1452, 4
      %v1454 = vrot.slane %v235, 5
      %v1455 = vsel %vm1435, %v1453, %v1454
      %v1456 = vrot.slane %v236, 5
      %v1457 = vrot.slane %v1456, 4
      %v1458 = vrot.slane %v237, 5
      %v1459 = vsel %vm1435, %v1457, %v1458
      %v1460 = vrot.slane %v238, 5
      %v1461 = vrot.slane %v1460, 4
      %v1462 = vrot.slane %v239, 5
      %v1463 = vsel %vm1435, %v1461, %v1462
      %v1464 = vrot.slane %v240, 5
      %v1465 = vrot.slane %v1464, 4
      %v1466 = vrot.slane %v241, 5
      %v1467 = vsel %vm1435, %v1465, %v1466
      %v1468 = vrot.slane %v246, 5
      %v1469 = vrot.slane %v1468, 4
      %v1470 = vrot.slane %v247, 5
      %v1471 = vsel %vm1435, %v1469, %v1470
      %v1472 = vrot.slane %v248, 5
      %v1473 = vrot.slane %v1472, 4
      %v1474 = vrot.slane %v249, 5
      %v1475 = vsel %vm1435, %v1473, %v1474
      %v1476 = vrot.slane %v250, 5
      %v1477 = vrot.slane %v1476, 4
      %v1478 = vrot.slane %v251, 5
      %v1479 = vsel %vm1435, %v1477, %v1478
      %v1480 = vrot.slane %v252, 5
      %v1481 = vrot.slane %v1480, 4
      %v1482 = vrot.slane %v253, 5
      %v1483 = vsel %vm1435, %v1481, %v1482
      %v1484 = vrot.slane %v254, 5
      %v1485 = vrot.slane %v1484, 4
      %v1486 = vrot.slane %v255, 5
      %v1487 = vsel %vm1435, %v1485, %v1486
      %v1488 = vrot.slane %v256, 5
      %v1489 = vrot.slane %v1488, 4
      %v1490 = vrot.slane %v257, 5
      %v1491 = vsel %vm1435, %v1489, %v1490
      %v1492 = vrot.slane %v258, 5
      %v1493 = vrot.slane %v1492, 4
      %v1494 = vrot.slane %v259, 5
      %v1495 = vsel %vm1435, %v1493, %v1494
      %v1496 = vrot.slane %v260, 5
      %v1497 = vrot.slane %v1496, 4
      %v1498 = vrot.slane %v261, 5
      %v1499 = vsel %vm1435, %v1497, %v1498
      %v1500 = vrot.slane %v266, 5
      %v1501 = vrot.slane %v1500, 4
      %v1502 = vrot.slane %v267, 5
      %v1503 = vsel %vm1435, %v1501, %v1502
      %v1504 = vrot.slane %v268, 5
      %v1505 = vrot.slane %v1504, 4
      %v1506 = vrot.slane %v269, 5
      %v1507 = vsel %vm1435, %v1505, %v1506
      %v1508 = vrot.slane %v270, 5
      %v1509 = vrot.slane %v1508, 4
      %v1510 = vrot.slane %v271, 5
      %v1511 = vsel %vm1435, %v1509, %v1510
      %v1512 = vrot.slane %v272, 5
      %v1513 = vrot.slane %v1512, 4
      %v1514 = vrot.slane %v273, 5
      %v1515 = vsel %vm1435, %v1513, %v1514
      %v1516 = vrot.slane %v274, 5
      %v1517 = vrot.slane %v1516, 4
      %v1518 = vrot.slane %v275, 5
      %v1519 = vsel %vm1435, %v1517, %v1518
      %v1520 = vrot.slane %v276, 5
      %v1521 = vrot.slane %v1520, 4
      %v1522 = vrot.slane %v277, 5
      %v1523 = vsel %vm1435, %v1521, %v1522
      %v1524 = vrot.slane %v278, 5
      %v1525 = vrot.slane %v1524, 4
      %v1526 = vrot.slane %v279, 5
      %v1527 = vsel %vm1435, %v1525, %v1526
      %v1528 = vrot.slane %v280, 5
      %v1529 = vrot.slane %v1528, 4
      %v1530 = vrot.slane %v281, 5
      %v1531 = vsel %vm1435, %v1529, %v1530
      %v1532 = vrot.slane %v286, 5
      %v1533 = vrot.slane %v1532, 4
      %v1534 = vrot.slane %v287, 5
      %v1535 = vsel %vm1435, %v1533, %v1534
      %v1536 = vrot.slane %v288, 5
      %v1537 = vrot.slane %v1536, 4
      %v1538 = vrot.slane %v289, 5
      %v1539 = vsel %vm1435, %v1537, %v1538
      %v1540 = vrot.slane %v290, 5
      %v1541 = vrot.slane %v1540, 4
      %v1542 = vrot.slane %v291, 5
      %v1543 = vsel %vm1435, %v1541, %v1542
      %v1544 = vrot.slane %v292, 5
      %v1545 = vrot.slane %v1544, 4
      %v1546 = vrot.slane %v293, 5
      %v1547 = vsel %vm1435, %v1545, %v1546
      %v1548 = vrot.slane %v294, 5
      %v1549 = vrot.slane %v1548, 4
      %v1550 = vrot.slane %v295, 5
      %v1551 = vsel %vm1435, %v1549, %v1550
      %v1552 = vrot.slane %v296, 5
      %v1553 = vrot.slane %v1552, 4
      %v1554 = vrot.slane %v297, 5
      %v1555 = vsel %vm1435, %v1553, %v1554
      %v1556 = vrot.slane %v298, 5
      %v1557 = vrot.slane %v1556, 4
      %v1558 = vrot.slane %v299, 5
      %v1559 = vsel %vm1435, %v1557, %v1558
      %v1560 = vrot.slane %v300, 5
      %v1561 = vrot.slane %v1560, 4
      %v1562 = vrot.slane %v301, 5
      %v1563 = vsel %vm1435, %v1561, %v1562
      %s1564 = scalar_lea.vmem %s1, 96
      %v1565 = vld [vmem:[%s1564] sm:$0xf]
      %v1566 = vld [vmem:[%s1564 + $0x4] sm:$0xf]
      %v1567 = vld [vmem:[%s1564 + $0x8] sm:$0xf]
      %v1568 = vld [vmem:[%s1564 + $0xc] sm:$0xf]
      %v1569 = vld [vmem:[%s1564 + $0x10] sm:$0xf]
      %v1570 = vld [vmem:[%s1564 + $0x14] sm:$0xf]
      %v1571 = vld [vmem:[%s1564 + $0x18] sm:$0xf]
      %v1572 = vld [vmem:[%s1564 + $0x1c] sm:$0xf]
      %v1573 = vld [vmem:[%s1564 + $0x20] sm:$0xf]
      %v1574 = vld [vmem:[%s1564 + $0x24] sm:$0xf]
      %v1575 = vld [vmem:[%s1564 + $0x28] sm:$0xf]
      %v1576 = vld [vmem:[%s1564 + $0x2c] sm:$0xf]
      %v1577 = vunpack.c.l.b16 %v1439
      %v1578 = vunpack.c.l.b16 %v1443
      %v1579 = vunpack.c.l.b16 %v1447
      %v1580 = vunpack.c.l.b16 %v1451
      %v1581 = vunpack.c.l.b16 %v1455
      %v1582 = vunpack.c.l.b16 %v1459
      %v1583 = vunpack.c.l.b16 %v1463
      %v1584 = vunpack.c.l.b16 %v1467
      %v1585 = vunpack.c.l.b16 %v1471
      %v1586 = vunpack.c.l.b16 %v1475
      %v1587 = vunpack.c.l.b16 %v1479
      %v1588 = vunpack.c.l.b16 %v1483
      %v1589 = vunpack.c.l.b16 %v1487
      %v1590 = vunpack.c.l.b16 %v1491
      %v1591 = vunpack.c.l.b16 %v1495
      %v1592 = vunpack.c.l.b16 %v1499
      %v1593 = vunpack.c.l.b16 %v1503
      %v1594 = vunpack.c.l.b16 %v1507
      %v1595 = vunpack.c.l.b16 %v1511
      %v1596 = vunpack.c.l.b16 %v1515
      %v1597 = vunpack.c.l.b16 %v1519
      %v1598 = vunpack.c.l.b16 %v1523
      %v1599 = vunpack.c.l.b16 %v1527
      %v1600 = vunpack.c.l.b16 %v1531
      %v1601 = vunpack.c.l.b16 %v1535
      %v1602 = vunpack.c.l.b16 %v1539
      %v1603 = vunpack.c.l.b16 %v1543
      %v1604 = vunpack.c.l.b16 %v1547
      %v1605 = vunpack.c.l.b16 %v1551
      %v1606 = vunpack.c.l.b16 %v1555
      %v1607 = vunpack.c.l.b16 %v1559
      %v1608 = vunpack.c.l.b16 %v1563
      %v1609 = vpack.c.b16 %v1578, %v1577
      %v1610 = vpack.c.b16 %v1580, %v1579
      %v1611 = vpack.c.b16 %v1582, %v1581
      %v1612 = vpack.c.b16 %v1584, %v1583
      %v1613 = vpack.c.b16 %v1586, %v1585
      %v1614 = vpack.c.b16 %v1588, %v1587
      %v1615 = vpack.c.b16 %v1590, %v1589
      %v1616 = vpack.c.b16 %v1592, %v1591
      %v1617 = vpack.c.b16 %v1594, %v1593
      %v1618 = vpack.c.b16 %v1596, %v1595
      %v1619 = vpack.c.b16 %v1598, %v1597
      %v1620 = vpack.c.b16 %v1600, %v1599
      %v1621 = vpack.c.b16 %v1602, %v1601
      %v1622 = vpack.c.b16 %v1604, %v1603
      %v1623 = vpack.c.b16 %v1606, %v1605
      %v1624 = vpack.c.b16 %v1608, %v1607
      %v1637 = vunpack.c.l.b16 %v1565
      %v1638 = vunpack.c.l.b16 %v1566
      %v1639 = vunpack.c.l.b16 %v1567
      %v1640 = vunpack.c.l.b16 %v1568
      %v1641 = vunpack.c.l.b16 %v1569
      %v1642 = vunpack.c.l.b16 %v1570
      %v1643 = vunpack.c.l.b16 %v1571
      %v1644 = vunpack.c.l.b16 %v1572
      %v1645 = vunpack.c.l.b16 %v1573
      %v1646 = vunpack.c.l.b16 %v1574
      %v1647 = vunpack.c.l.b16 %v1575
      %v1648 = vunpack.c.l.b16 %v1576
      %v1649 = vpack.c.b16 %v1638, %v1637
      %v1650 = vpack.c.b16 %v1640, %v1639
      %v1651 = vpack.c.b16 %v1642, %v1641
      %v1652 = vpack.c.b16 %v1644, %v1643
      %v1653 = vpack.c.b16 %v1646, %v1645
      %v1654 = vpack.c.b16 %v1648, %v1647
      %v1662 = vsel %vm866, %v1609, 0
      %v1665 = vsel %vm866, %v1610, 0
      %v1668 = vsel %vm866, %v1611, 0
      %v1671 = vsel %vm866, %v1612, 0
      %v1674 = vsel %vm866, %v1613, 0
      %v1677 = vsel %vm866, %v1614, 0
      %v1680 = vsel %vm866, %v1615, 0
      %v1683 = vsel %vm866, %v1616, 0
      %v1686 = vsel %vm866, %v1617, 0
      %v1689 = vsel %vm866, %v1618, 0
      %v1692 = vsel %vm866, %v1619, 0
      %v1695 = vsel %vm866, %v1620, 0
      %v1698 = vsel %vm866, %v1621, 0
      %v1701 = vsel %vm866, %v1622, 0
      %v1704 = vsel %vm866, %v1623, 0
      %v1707 = vsel %vm866, %v1624, 0
      %1709 = vmatprep.subr.bf16.mxu0 0
      %1710 = vmatpush1.bf16.msra.mxu0 %v1649
      %1711 = vmatprep.subr.bf16.mxu0 0
      %1712 = vmatpush1.bf16.msra.mxu0 %v1650
      %1713 = vmatprep.subr.bf16.mxu0 0
      %1714 = vmatpush1.bf16.msra.mxu0 %v1651
      %1715 = vmatprep.subr.bf16.mxu0 0
      %1716 = vmatpush1.bf16.msra.mxu0 %v1652
      %1717 = vmatprep.subr.bf16.mxu0 0
      %1718 = vmatpush1.bf16.msra.mxu0 %v1653
      %1719 = vmatprep.subr.bf16.mxu0 0
      %1720 = vmatpush1.bf16.msra.mxu0 %v1654
      %1721 = vmatprep.subr.bf16.mxu0 0
      %1722 = vmatpush1.bf16.msra.mxu0 0
      %1723 = vmatprep.subr.bf16.mxu0 0
      %1724 = vmatpush1.bf16.msra.mxu0 0
      %1725 = vmatprep.subr.bf16.mxu0 0
      %1726 = vmatpush1.bf16.msra.mxu0 0
      %1727 = vmatprep.subr.bf16.mxu0 0
      %1728 = vmatpush1.bf16.msra.mxu0 0
      %1729 = vmatprep.subr.bf16.mxu0 0
      %1730 = vmatpush1.bf16.msra.mxu0 0
      %1731 = vmatprep.subr.bf16.mxu0 0
      %1732 = vmatpush1.bf16.msra.mxu0 0
      %1733 = vmatprep.subr.bf16.mxu0 0
      %1734 = vmatpush1.bf16.msra.mxu0 0
      %1735 = vmatprep.subr.bf16.mxu0 0
      %1736 = vmatpush1.bf16.msra.mxu0 0
      %1737 = vmatprep.subr.bf16.mxu0 0
      %1738 = vmatpush1.bf16.msra.mxu0 0
      %1739 = vmatprep.subr.bf16.mxu0 0
      %1740 = vmatpush1.bf16.msra.mxu0 0
      %1741 = vmatprep.mubr.bf16.mxu0 0
      %1742 = vmatmul.mubr.bf16.gmra.mrb[0].mxu0 %v1662
      %v1743 = vpop.f32.mrb[0].mxu0
      %v1744 = vadd.f32 0.0, %v1743
      %v1745 = vpop.f32.mrb[0].mxu0
      %v1746 = vpop.f32.mrb[0].mxu0
      %v1747 = vadd.f32 0.0, %v1746
      %v1748 = vpop.f32.mrb[0].mxu0
      %1749 = vmatprep.mubr.bf16.mxu0 0
      %1750 = vmatmul.mubr.bf16.gmra.mrb[0].mxu0 %v1665
      %v1751 = vpop.f32.mrb[0].mxu0
      %v1752 = vadd.f32 0.0, %v1751
      %v1753 = vpop.f32.mrb[0].mxu0
      %v1754 = vpop.f32.mrb[0].mxu0
      %v1755 = vadd.f32 0.0, %v1754
      %v1756 = vpop.f32.mrb[0].mxu0
      %1757 = vmatprep.mubr.bf16.mxu0 0
      %1758 = vmatmul.mubr.bf16.gmra.mrb[0].mxu0 %v1668
      %v1759 = vpop.f32.mrb[0].mxu0
      %v1760 = vadd.f32 0.0, %v1759
      %v1761 = vpop.f32.mrb[0].mxu0
      %v1762 = vpop.f32.mrb[0].mxu0
      %v1763 = vadd.f32 0.0, %v1762
      %v1764 = vpop.f32.mrb[0].mxu0
      %1765 = vmatprep.mubr.bf16.mxu0 0
      %1766 = vmatmul.mubr.bf16.gmra.mrb[0].mxu0 %v1671
      %v1767 = vpop.f32.mrb[0].mxu0
      %v1768 = vadd.f32 0.0, %v1767
      %v1769 = vpop.f32.mrb[0].mxu0
      %v1770 = vpop.f32.mrb[0].mxu0
      %v1771 = vadd.f32 0.0, %v1770
      %v1772 = vpop.f32.mrb[0].mxu0
      %1773 = vmatprep.mubr.bf16.mxu0 0
      %1774 = vmatmul.mubr.bf16.gmra.mrb[0].mxu0 %v1674
      %v1775 = vpop.f32.mrb[0].mxu0
      %v1776 = vadd.f32 0.0, %v1775
      %v1777 = vpop.f32.mrb[0].mxu0
      %v1778 = vpop.f32.mrb[0].mxu0
      %v1779 = vadd.f32 0.0, %v1778
      %v1780 = vpop.f32.mrb[0].mxu0
      %1781 = vmatprep.mubr.bf16.mxu0 0
      %1782 = vmatmul.mubr.bf16.gmra.mrb[0].mxu0 %v1677
      %v1783 = vpop.f32.mrb[0].mxu0
      %v1784 = vadd.f32 0.0, %v1783
      %v1785 = vpop.f32.mrb[0].mxu0
      %v1786 = vpop.f32.mrb[0].mxu0
      %v1787 = vadd.f32 0.0, %v1786
      %v1788 = vpop.f32.mrb[0].mxu0
      %1789 = vmatprep.mubr.bf16.mxu0 0
      %1790 = vmatmul.mubr.bf16.gmra.mrb[0].mxu0 %v1680
      %v1791 = vpop.f32.mrb[0].mxu0
      %v1792 = vadd.f32 0.0, %v1791
      %v1793 = vpop.f32.mrb[0].mxu0
      %v1794 = vpop.f32.mrb[0].mxu0
      %v1795 = vadd.f32 0.0, %v1794
      %v1796 = vpop.f32.mrb[0].mxu0
      %1797 = vmatprep.mubr.bf16.mxu0 0
      %1798 = vmatmul.mubr.bf16.gmra.mrb[0].mxu0 %v1683
      %v1799 = vpop.f32.mrb[0].mxu0
      %v1800 = vadd.f32 0.0, %v1799
      %v1801 = vpop.f32.mrb[0].mxu0
      %v1802 = vpop.f32.mrb[0].mxu0
      %v1803 = vadd.f32 0.0, %v1802
      %v1804 = vpop.f32.mrb[0].mxu0
      %1805 = vmatprep.mubr.bf16.mxu0 0
      %1806 = vmatmul.mubr.bf16.gmra.mrb[0].mxu0 %v1686
      %v1807 = vpop.f32.mrb[0].mxu0
      %v1808 = vadd.f32 0.0, %v1807
      %v1809 = vpop.f32.mrb[0].mxu0
      %v1810 = vpop.f32.mrb[0].mxu0
      %v1811 = vadd.f32 0.0, %v1810
      %v1812 = vpop.f32.mrb[0].mxu0
      %1813 = vmatprep.mubr.bf16.mxu0 0
      %1814 = vmatmul.mubr.bf16.gmra.mrb[0].mxu0 %v1689
      %v1815 = vpop.f32.mrb[0].mxu0
      %v1816 = vadd.f32 0.0, %v1815
      %v1817 = vpop.f32.mrb[0].mxu0
      %v1818 = vpop.f32.mrb[0].mxu0
      %v1819 = vadd.f32 0.0, %v1818
      %v1820 = vpop.f32.mrb[0].mxu0
      %1821 = vmatprep.mubr.bf16.mxu0 0
      %1822 = vmatmul.mubr.bf16.gmra.mrb[0].mxu0 %v1692
      %v1823 = vpop.f32.mrb[0].mxu0
      %v1824 = vadd.f32 0.0, %v1823
      %v1825 = vpop.f32.mrb[0].mxu0
      %v1826 = vpop.f32.mrb[0].mxu0
      %v1827 = vadd.f32 0.0, %v1826
      %v1828 = vpop.f32.mrb[0].mxu0
      %1829 = vmatprep.mubr.bf16.mxu0 0
      %1830 = vmatmul.mubr.bf16.gmra.mrb[0].mxu0 %v1695
      %v1831 = vpop.f32.mrb[0].mxu0
      %v1832 = vadd.f32 0.0, %v1831
      %v1833 = vpop.f32.mrb[0].mxu0
      %v1834 = vpop.f32.mrb[0].mxu0
      %v1835 = vadd.f32 0.0, %v1834
      %v1836 = vpop.f32.mrb[0].mxu0
      %1837 = vmatprep.mubr.bf16.mxu0 0
      %1838 = vmatmul.mubr.bf16.gmra.mrb[0].mxu0 %v1698
      %v1839 = vpop.f32.mrb[0].mxu0
      %v1840 = vadd.f32 0.0, %v1839
      %v1841 = vpop.f32.mrb[0].mxu0
      %v1842 = vpop.f32.mrb[0].mxu0
      %v1843 = vadd.f32 0.0, %v1842
      %v1844 = vpop.f32.mrb[0].mxu0
      %1845 = vmatprep.mubr.bf16.mxu0 0
      %1846 = vmatmul.mubr.bf16.gmra.mrb[0].mxu0 %v1701
      %v1847 = vpop.f32.mrb[0].mxu0
      %v1848 = vadd.f32 0.0, %v1847
      %v1849 = vpop.f32.mrb[0].mxu0
      %v1850 = vpop.f32.mrb[0].mxu0
      %v1851 = vadd.f32 0.0, %v1850
      %v1852 = vpop.f32.mrb[0].mxu0
      %1853 = vmatprep.mubr.bf16.mxu0 0
      %1854 = vmatmul.mubr.bf16.gmra.mrb[0].mxu0 %v1704
      %v1855 = vpop.f32.mrb[0].mxu0
      %v1856 = vadd.f32 0.0, %v1855
      %v1857 = vpop.f32.mrb[0].mxu0
      %v1858 = vpop.f32.mrb[0].mxu0
      %v1859 = vadd.f32 0.0, %v1858
      %v1860 = vpop.f32.mrb[0].mxu0
      %1861 = vmatprep.mubr.bf16.mxu0 0
      %1862 = vmatmul.mubr.bf16.gmra.mrb[0].mxu0 %v1707
      %v1863 = vpop.f32.mrb[0].mxu0
      %v1864 = vadd.f32 0.0, %v1863
      %v1865 = vpop.f32.mrb[0].mxu0
      %v1866 = vpop.f32.mrb[0].mxu0
      %v1867 = vadd.f32 0.0, %v1866
      %v1868 = vpop.f32.mrb[0].mxu0
      %1869 = vdwg.mxu0
      %v1870 = vadd.f32 %v1275, %v1744
      %v1871 = vadd.f32 %v1278, %v1747
      %v1872 = vadd.f32 %v1283, %v1752
      %v1873 = vadd.f32 %v1286, %v1755
      %v1874 = vadd.f32 %v1291, %v1760
      %v1875 = vadd.f32 %v1294, %v1763
      %v1876 = vadd.f32 %v1299, %v1768
      %v1877 = vadd.f32 %v1302, %v1771
      %v1878 = vadd.f32 %v1307, %v1776
      %v1879 = vadd.f32 %v1310, %v1779
      %v1880 = vadd.f32 %v1315, %v1784
      %v1881 = vadd.f32 %v1318, %v1787
      %v1882 = vadd.f32 %v1323, %v1792
      %v1883 = vadd.f32 %v1326, %v1795
      %v1884 = vadd.f32 %v1331, %v1800
      %v1885 = vadd.f32 %v1334, %v1803
      %v1886 = vadd.f32 %v1339, %v1808
      %v1887 = vadd.f32 %v1342, %v1811
      %v1888 = vadd.f32 %v1347, %v1816
      %v1889 = vadd.f32 %v1350, %v1819
      %v1890 = vadd.f32 %v1355, %v1824
      %v1891 = vadd.f32 %v1358, %v1827
      %v1892 = vadd.f32 %v1363, %v1832
      %v1893 = vadd.f32 %v1366, %v1835
      %v1894 = vadd.f32 %v1371, %v1840
      %v1895 = vadd.f32 %v1374, %v1843
      %v1896 = vadd.f32 %v1379, %v1848
      %v1897 = vadd.f32 %v1382, %v1851
      %v1898 = vadd.f32 %v1387, %v1856
      %v1899 = vadd.f32 %v1390, %v1859
      %v1900 = vadd.f32 %v1395, %v1864
      %v1901 = vadd.f32 %v1398, %v1867
      %s1902 = scalar_lea.vmem %s1, 144
      %v1903 = vld [vmem:[%s1902] sm:$0xf]
      %v1904 = vld [vmem:[%s1902 + $0x4] sm:$0xf]
      %v1905 = vld [vmem:[%s1902 + $0x8] sm:$0xf]
      %v1906 = vld [vmem:[%s1902 + $0xc] sm:$0xf]
      %v1907 = vld [vmem:[%s1902 + $0x10] sm:$0xf]
      %v1908 = vld [vmem:[%s1902 + $0x14] sm:$0xf]
      %v1909 = vld [vmem:[%s1902 + $0x18] sm:$0xf]
      %v1910 = vld [vmem:[%s1902 + $0x1c] sm:$0xf]
      %v1911 = vld [vmem:[%s1902 + $0x20] sm:$0xf]
      %v1912 = vld [vmem:[%s1902 + $0x24] sm:$0xf]
      %v1913 = vld [vmem:[%s1902 + $0x28] sm:$0xf]
      %v1914 = vld [vmem:[%s1902 + $0x2c] sm:$0xf]
      %v1919 = vunpack.c.l.b16 %v242
      %v1920 = vunpack.c.l.b16 %v262
      %v1921 = vunpack.c.l.b16 %v282
      %v1922 = vunpack.c.l.b16 %v302
      %v1923 = vpack.c.b16 %v1110, %v1109
      %v1924 = vpack.c.b16 %v1112, %v1111
      %v1925 = vpack.c.b16 %v1114, %v1113
      %v1926 = vpack.c.b16 %v1919, %v1115
      %v1927 = vpack.c.b16 %v1118, %v1117
      %v1928 = vpack.c.b16 %v1120, %v1119
      %v1929 = vpack.c.b16 %v1122, %v1121
      %v1930 = vpack.c.b16 %v1920, %v1123
      %v1931 = vpack.c.b16 %v1126, %v1125
      %v1932 = vpack.c.b16 %v1128, %v1127
      %v1933 = vpack.c.b16 %v1130, %v1129
      %v1934 = vpack.c.b16 %v1921, %v1131
      %v1935 = vpack.c.b16 %v1134, %v1133
      %v1936 = vpack.c.b16 %v1136, %v1135
      %v1937 = vpack.c.b16 %v1138, %v1137
      %v1938 = vpack.c.b16 %v1922, %v1139
      %v1951 = vunpack.c.l.b16 %v1903
      %v1952 = vunpack.c.l.b16 %v1904
      %v1953 = vunpack.c.l.b16 %v1905
      %v1954 = vunpack.c.l.b16 %v1906
      %v1955 = vunpack.c.l.b16 %v1907
      %v1956 = vunpack.c.l.b16 %v1908
      %v1957 = vunpack.c.l.b16 %v1909
      %v1958 = vunpack.c.l.b16 %v1910
      %v1959 = vunpack.c.l.b16 %v1911
      %v1960 = vunpack.c.l.b16 %v1912
      %v1961 = vunpack.c.l.b16 %v1913
      %v1962 = vunpack.c.l.b16 %v1914
      %v1963 = vpack.c.b16 %v1952, %v1951
      %v1964 = vpack.c.b16 %v1954, %v1953
      %v1965 = vpack.c.b16 %v1956, %v1955
      %v1966 = vpack.c.b16 %v1958, %v1957
      %v1967 = vpack.c.b16 %v1960, %v1959
      %v1968 = vpack.c.b16 %v1962, %v1961
      %v1976 = vsel %vm866, %v1923, 0
      %v1979 = vsel %vm866, %v1924, 0
      %v1982 = vsel %vm866, %v1925, 0
      %v1985 = vsel %vm866, %v1926, 0
      %v1988 = vsel %vm866, %v1927, 0
      %v1991 = vsel %vm866, %v1928, 0
      %v1994 = vsel %vm866, %v1929, 0
      %v1997 = vsel %vm866, %v1930, 0
      %v2000 = vsel %vm866, %v1931, 0
      %v2003 = vsel %vm866, %v1932, 0
      %v2006 = vsel %vm866, %v1933, 0
      %v2009 = vsel %vm866, %v1934, 0
      %v2012 = vsel %vm866, %v1935, 0
      %v2015 = vsel %vm866, %v1936, 0
      %v2018 = vsel %vm866, %v1937, 0
      %v2021 = vsel %vm866, %v1938, 0
      %2023 = vmatprep.subr.bf16.mxu0 0
      %2024 = vmatpush1.bf16.msra.mxu0 %v1963
      %2025 = vmatprep.subr.bf16.mxu0 0
      %2026 = vmatpush1.bf16.msra.mxu0 %v1964
      %2027 = vmatprep.subr.bf16.mxu0 0
      %2028 = vmatpush1.bf16.msra.mxu0 %v1965
      %2029 = vmatprep.subr.bf16.mxu0 0
      %2030 = vmatpush1.bf16.msra.mxu0 %v1966
      %2031 = vmatprep.subr.bf16.mxu0 0
      %2032 = vmatpush1.bf16.msra.mxu0 %v1967
      %2033 = vmatprep.subr.bf16.mxu0 0
      %2034 = vmatpush1.bf16.msra.mxu0 %v1968
      %2035 = vmatprep.subr.bf16.mxu0 0
      %2036 = vmatpush1.bf16.msra.mxu0 0
      %2037 = vmatprep.subr.bf16.mxu0 0
      %2038 = vmatpush1.bf16.msra.mxu0 0
      %2039 = vmatprep.subr.bf16.mxu0 0
      %2040 = vmatpush1.bf16.msra.mxu0 0
      %2041 = vmatprep.subr.bf16.mxu0 0
      %2042 = vmatpush1.bf16.msra.mxu0 0
      %2043 = vmatprep.subr.bf16.mxu0 0
      %2044 = vmatpush1.bf16.msra.mxu0 0
      %2045 = vmatprep.subr.bf16.mxu0 0
      %2046 = vmatpush1.bf16.msra.mxu0 0
      %2047 = vmatprep.subr.bf16.mxu0 0
      %2048 = vmatpush1.bf16.msra.mxu0 0
      %2049 = vmatprep.subr.bf16.mxu0 0
      %2050 = vmatpush1.bf16.msra.mxu0 0
      %2051 = vmatprep.subr.bf16.mxu0 0
      %2052 = vmatpush1.bf16.msra.mxu0 0
      %2053 = vmatprep.subr.bf16.mxu0 0
      %2054 = vmatpush1.bf16.msra.mxu0 0
      %2055 = vmatprep.mubr.bf16.mxu0 0
      %2056 = vmatmul.mubr.bf16.gmra.mrb[0].mxu0 %v1976
      %v2057 = vpop.f32.mrb[0].mxu0
      %v2058 = vadd.f32 0.0, %v2057
      %v2059 = vpop.f32.mrb[0].mxu0
      %v2060 = vpop.f32.mrb[0].mxu0
      %v2061 = vadd.f32 0.0, %v2060
      %v2062 = vpop.f32.mrb[0].mxu0
      %2063 = vmatprep.mubr.bf16.mxu0 0
      %2064 = vmatmul.mubr.bf16.gmra.mrb[0].mxu0 %v1979
      %v2065 = vpop.f32.mrb[0].mxu0
      %v2066 = vadd.f32 0.0, %v2065
      %v2067 = vpop.f32.mrb[0].mxu0
      %v2068 = vpop.f32.mrb[0].mxu0
      %v2069 = vadd.f32 0.0, %v2068
      %v2070 = vpop.f32.mrb[0].mxu0
      %2071 = vmatprep.mubr.bf16.mxu0 0
      %2072 = vmatmul.mubr.bf16.gmra.mrb[0].mxu0 %v1982
      %v2073 = vpop.f32.mrb[0].mxu0
      %v2074 = vadd.f32 0.0, %v2073
      %v2075 = vpop.f32.mrb[0].mxu0
      %v2076 = vpop.f32.mrb[0].mxu0
      %v2077 = vadd.f32 0.0, %v2076
      %v2078 = vpop.f32.mrb[0].mxu0
      %2079 = vmatprep.mubr.bf16.mxu0 0
      %2080 = vmatmul.mubr.bf16.gmra.mrb[0].mxu0 %v1985
      %v2081 = vpop.f32.mrb[0].mxu0
      %v2082 = vadd.f32 0.0, %v2081
      %v2083 = vpop.f32.mrb[0].mxu0
      %v2084 = vpop.f32.mrb[0].mxu0
      %v2085 = vadd.f32 0.0, %v2084
      %v2086 = vpop.f32.mrb[0].mxu0
      %2087 = vmatprep.mubr.bf16.mxu0 0
      %2088 = vmatmul.mubr.bf16.gmra.mrb[0].mxu0 %v1988
      %v2089 = vpop.f32.mrb[0].mxu0
      %v2090 = vadd.f32 0.0, %v2089
      %v2091 = vpop.f32.mrb[0].mxu0
      %v2092 = vpop.f32.mrb[0].mxu0
      %v2093 = vadd.f32 0.0, %v2092
      %v2094 = vpop.f32.mrb[0].mxu0
      %2095 = vmatprep.mubr.bf16.mxu0 0
      %2096 = vmatmul.mubr.bf16.gmra.mrb[0].mxu0 %v1991
      %v2097 = vpop.f32.mrb[0].mxu0
      %v2098 = vadd.f32 0.0, %v2097
      %v2099 = vpop.f32.mrb[0].mxu0
      %v2100 = vpop.f32.mrb[0].mxu0
      %v2101 = vadd.f32 0.0, %v2100
      %v2102 = vpop.f32.mrb[0].mxu0
      %2103 = vmatprep.mubr.bf16.mxu0 0
      %2104 = vmatmul.mubr.bf16.gmra.mrb[0].mxu0 %v1994
      %v2105 = vpop.f32.mrb[0].mxu0
      %v2106 = vadd.f32 0.0, %v2105
      %v2107 = vpop.f32.mrb[0].mxu0
      %v2108 = vpop.f32.mrb[0].mxu0
      %v2109 = vadd.f32 0.0, %v2108
      %v2110 = vpop.f32.mrb[0].mxu0
      %2111 = vmatprep.mubr.bf16.mxu0 0
      %2112 = vmatmul.mubr.bf16.gmra.mrb[0].mxu0 %v1997
      %v2113 = vpop.f32.mrb[0].mxu0
      %v2114 = vadd.f32 0.0, %v2113
      %v2115 = vpop.f32.mrb[0].mxu0
      %v2116 = vpop.f32.mrb[0].mxu0
      %v2117 = vadd.f32 0.0, %v2116
      %v2118 = vpop.f32.mrb[0].mxu0
      %2119 = vmatprep.mubr.bf16.mxu0 0
      %2120 = vmatmul.mubr.bf16.gmra.mrb[0].mxu0 %v2000
      %v2121 = vpop.f32.mrb[0].mxu0
      %v2122 = vadd.f32 0.0, %v2121
      %v2123 = vpop.f32.mrb[0].mxu0
      %v2124 = vpop.f32.mrb[0].mxu0
      %v2125 = vadd.f32 0.0, %v2124
      %v2126 = vpop.f32.mrb[0].mxu0
      %2127 = vmatprep.mubr.bf16.mxu0 0
      %2128 = vmatmul.mubr.bf16.gmra.mrb[0].mxu0 %v2003
      %v2129 = vpop.f32.mrb[0].mxu0
      %v2130 = vadd.f32 0.0, %v2129
      %v2131 = vpop.f32.mrb[0].mxu0
      %v2132 = vpop.f32.mrb[0].mxu0
      %v2133 = vadd.f32 0.0, %v2132
      %v2134 = vpop.f32.mrb[0].mxu0
      %2135 = vmatprep.mubr.bf16.mxu0 0
      %2136 = vmatmul.mubr.bf16.gmra.mrb[0].mxu0 %v2006
      %v2137 = vpop.f32.mrb[0].mxu0
      %v2138 = vadd.f32 0.0, %v2137
      %v2139 = vpop.f32.mrb[0].mxu0
      %v2140 = vpop.f32.mrb[0].mxu0
      %v2141 = vadd.f32 0.0, %v2140
      %v2142 = vpop.f32.mrb[0].mxu0
      %2143 = vmatprep.mubr.bf16.mxu0 0
      %2144 = vmatmul.mubr.bf16.gmra.mrb[0].mxu0 %v2009
      %v2145 = vpop.f32.mrb[0].mxu0
      %v2146 = vadd.f32 0.0, %v2145
      %v2147 = vpop.f32.mrb[0].mxu0
      %v2148 = vpop.f32.mrb[0].mxu0
      %v2149 = vadd.f32 0.0, %v2148
      %v2150 = vpop.f32.mrb[0].mxu0
      %2151 = vmatprep.mubr.bf16.mxu0 0
      %2152 = vmatmul.mubr.bf16.gmra.mrb[0].mxu0 %v2012
      %v2153 = vpop.f32.mrb[0].mxu0
      %v2154 = vadd.f32 0.0, %v2153
      %v2155 = vpop.f32.mrb[0].mxu0
      %v2156 = vpop.f32.mrb[0].mxu0
      %v2157 = vadd.f32 0.0, %v2156
      %v2158 = vpop.f32.mrb[0].mxu0
      %2159 = vmatprep.mubr.bf16.mxu0 0
      %2160 = vmatmul.mubr.bf16.gmra.mrb[0].mxu0 %v2015
      %v2161 = vpop.f32.mrb[0].mxu0
      %v2162 = vadd.f32 0.0, %v2161
      %v2163 = vpop.f32.mrb[0].mxu0
      %v2164 = vpop.f32.mrb[0].mxu0
      %v2165 = vadd.f32 0.0, %v2164
      %v2166 = vpop.f32.mrb[0].mxu0
      %2167 = vmatprep.mubr.bf16.mxu0 0
      %2168 = vmatmul.mubr.bf16.gmra.mrb[0].mxu0 %v2018
      %v2169 = vpop.f32.mrb[0].mxu0
      %v2170 = vadd.f32 0.0, %v2169
      %v2171 = vpop.f32.mrb[0].mxu0
      %v2172 = vpop.f32.mrb[0].mxu0
      %v2173 = vadd.f32 0.0, %v2172
      %v2174 = vpop.f32.mrb[0].mxu0
      %2175 = vmatprep.mubr.bf16.mxu0 0
      %2176 = vmatmul.mubr.bf16.gmra.mrb[0].mxu0 %v2021
      %v2177 = vpop.f32.mrb[0].mxu0
      %v2178 = vadd.f32 0.0, %v2177
      %v2179 = vpop.f32.mrb[0].mxu0
      %v2180 = vpop.f32.mrb[0].mxu0
      %v2181 = vadd.f32 0.0, %v2180
      %v2182 = vpop.f32.mrb[0].mxu0
      %2183 = vdwg.mxu0
      %v2184 = vadd.f32 %v1870, %v2058
      %v2185 = vadd.f32 %v1871, %v2061
      %v2186 = vadd.f32 %v1872, %v2066
      %v2187 = vadd.f32 %v1873, %v2069
      %v2188 = vadd.f32 %v1874, %v2074
      %v2189 = vadd.f32 %v1875, %v2077
      %v2190 = vadd.f32 %v1876, %v2082
      %v2191 = vadd.f32 %v1877, %v2085
      %v2192 = vadd.f32 %v1878, %v2090
      %v2193 = vadd.f32 %v1879, %v2093
      %v2194 = vadd.f32 %v1880, %v2098
      %v2195 = vadd.f32 %v1881, %v2101
      %v2196 = vadd.f32 %v1882, %v2106
      %v2197 = vadd.f32 %v1883, %v2109
      %v2198 = vadd.f32 %v1884, %v2114
      %v2199 = vadd.f32 %v1885, %v2117
      %v2200 = vadd.f32 %v1886, %v2122
      %v2201 = vadd.f32 %v1887, %v2125
      %v2202 = vadd.f32 %v1888, %v2130
      %v2203 = vadd.f32 %v1889, %v2133
      %v2204 = vadd.f32 %v1890, %v2138
      %v2205 = vadd.f32 %v1891, %v2141
      %v2206 = vadd.f32 %v1892, %v2146
      %v2207 = vadd.f32 %v1893, %v2149
      %v2208 = vadd.f32 %v1894, %v2154
      %v2209 = vadd.f32 %v1895, %v2157
      %v2210 = vadd.f32 %v1896, %v2162
      %v2211 = vadd.f32 %v1897, %v2165
      %v2212 = vadd.f32 %v1898, %v2170
      %v2213 = vadd.f32 %v1899, %v2173
      %v2214 = vadd.f32 %v1900, %v2178
      %v2215 = vadd.f32 %v1901, %v2181
      %v2217 = vshrl.u32 %v242, 16
      %v2219 = vrot.slane %v2217, 4
      %v2220 = vshll.u32 %v242, 16
      %v2222 = vrot.slane %v2220, 5
      %v2223 = vor.u32 %v2219, %v2222
      %v2224 = vrot.slane %v2223, 4
      %v2226 = vshll.u32 %v243, 16
      %v2228 = vrot.slane %v2226, 5
      %v2229 = vsel %vm320, %v2224, %v2228
      %v2231 = vshrl.u32 %v262, 16
      %v2233 = vrot.slane %v2231, 4
      %v2234 = vshll.u32 %v262, 16
      %v2236 = vrot.slane %v2234, 5
      %v2237 = vor.u32 %v2233, %v2236
      %v2238 = vrot.slane %v2237, 4
      %v2240 = vshll.u32 %v263, 16
      %v2242 = vrot.slane %v2240, 5
      %v2243 = vsel %vm320, %v2238, %v2242
      %v2245 = vshrl.u32 %v282, 16
      %v2247 = vrot.slane %v2245, 4
      %v2248 = vshll.u32 %v282, 16
      %v2250 = vrot.slane %v2248, 5
      %v2251 = vor.u32 %v2247, %v2250
      %v2252 = vrot.slane %v2251, 4
      %v2254 = vshll.u32 %v283, 16
      %v2256 = vrot.slane %v2254, 5
      %v2257 = vsel %vm320, %v2252, %v2256
      %v2259 = vshrl.u32 %v302, 16
      %v2261 = vrot.slane %v2259, 4
      %v2262 = vshll.u32 %v302, 16
      %v2264 = vrot.slane %v2262, 5
      %v2265 = vor.u32 %v2261, %v2264
      %v2266 = vrot.slane %v2265, 4
      %v2268 = vshll.u32 %v303, 16
      %v2270 = vrot.slane %v2268, 5
      %v2271 = vsel %vm320, %v2266, %v2270
      %s2272 = scalar_lea.vmem %s1, 192
      %v2273 = vld [vmem:[%s2272] sm:$0xf]
      %v2274 = vld [vmem:[%s2272 + $0x4] sm:$0xf]
      %v2275 = vld [vmem:[%s2272 + $0x8] sm:$0xf]
      %v2276 = vld [vmem:[%s2272 + $0xc] sm:$0xf]
      %v2277 = vld [vmem:[%s2272 + $0x10] sm:$0xf]
      %v2278 = vld [vmem:[%s2272 + $0x14] sm:$0xf]
      %v2279 = vld [vmem:[%s2272 + $0x18] sm:$0xf]
      %v2280 = vld [vmem:[%s2272 + $0x1c] sm:$0xf]
      %v2281 = vld [vmem:[%s2272 + $0x20] sm:$0xf]
      %v2282 = vld [vmem:[%s2272 + $0x24] sm:$0xf]
      %v2283 = vld [vmem:[%s2272 + $0x28] sm:$0xf]
      %v2284 = vld [vmem:[%s2272 + $0x2c] sm:$0xf]
      %v2285 = vunpack.c.l.b16 %v2229
      %v2286 = vunpack.c.l.b16 %v2243
      %v2287 = vunpack.c.l.b16 %v2257
      %v2288 = vunpack.c.l.b16 %v2271
      %v2289 = vpack.c.b16 %v784, %v783
      %v2290 = vpack.c.b16 %v786, %v785
      %v2291 = vpack.c.b16 %v788, %v787
      %v2292 = vpack.c.b16 %v2285, %v789
      %v2293 = vpack.c.b16 %v792, %v791
      %v2294 = vpack.c.b16 %v794, %v793
      %v2295 = vpack.c.b16 %v796, %v795
      %v2296 = vpack.c.b16 %v2286, %v797
      %v2297 = vpack.c.b16 %v800, %v799
      %v2298 = vpack.c.b16 %v802, %v801
      %v2299 = vpack.c.b16 %v804, %v803
      %v2300 = vpack.c.b16 %v2287, %v805
      %v2301 = vpack.c.b16 %v808, %v807
      %v2302 = vpack.c.b16 %v810, %v809
      %v2303 = vpack.c.b16 %v812, %v811
      %v2304 = vpack.c.b16 %v2288, %v813
      %v2317 = vunpack.c.l.b16 %v2273
      %v2318 = vunpack.c.l.b16 %v2274
      %v2319 = vunpack.c.l.b16 %v2275
      %v2320 = vunpack.c.l.b16 %v2276
      %v2321 = vunpack.c.l.b16 %v2277
      %v2322 = vunpack.c.l.b16 %v2278
      %v2323 = vunpack.c.l.b16 %v2279
      %v2324 = vunpack.c.l.b16 %v2280
      %v2325 = vunpack.c.l.b16 %v2281
      %v2326 = vunpack.c.l.b16 %v2282
      %v2327 = vunpack.c.l.b16 %v2283
      %v2328 = vunpack.c.l.b16 %v2284
      %v2329 = vpack.c.b16 %v2318, %v2317
      %v2330 = vpack.c.b16 %v2320, %v2319
      %v2331 = vpack.c.b16 %v2322, %v2321
      %v2332 = vpack.c.b16 %v2324, %v2323
      %v2333 = vpack.c.b16 %v2326, %v2325
      %v2334 = vpack.c.b16 %v2328, %v2327
      %v2342 = vsel %vm866, %v2289, 0
      %v2345 = vsel %vm866, %v2290, 0
      %v2348 = vsel %vm866, %v2291, 0
      %v2351 = vsel %vm866, %v2292, 0
      %v2354 = vsel %vm866, %v2293, 0
      %v2357 = vsel %vm866, %v2294, 0
      %v2360 = vsel %vm866, %v2295, 0
      %v2363 = vsel %vm866, %v2296, 0
      %v2366 = vsel %vm866, %v2297, 0
      %v2369 = vsel %vm866, %v2298, 0
      %v2372 = vsel %vm866, %v2299, 0
      %v2375 = vsel %vm866, %v2300, 0
      %v2378 = vsel %vm866, %v2301, 0
      %v2381 = vsel %vm866, %v2302, 0
      %v2384 = vsel %vm866, %v2303, 0
      %v2387 = vsel %vm866, %v2304, 0
      %2389 = vmatprep.subr.bf16.mxu0 0
      %2390 = vmatpush1.bf16.msra.mxu0 %v2329
      %2391 = vmatprep.subr.bf16.mxu0 0
      %2392 = vmatpush1.bf16.msra.mxu0 %v2330
      %2393 = vmatprep.subr.bf16.mxu0 0
      %2394 = vmatpush1.bf16.msra.mxu0 %v2331
      %2395 = vmatprep.subr.bf16.mxu0 0
      %2396 = vmatpush1.bf16.msra.mxu0 %v2332
      %2397 = vmatprep.subr.bf16.mxu0 0
      %2398 = vmatpush1.bf16.msra.mxu0 %v2333
      %2399 = vmatprep.subr.bf16.mxu0 0
      %2400 = vmatpush1.bf16.msra.mxu0 %v2334
      %2401 = vmatprep.subr.bf16.mxu0 0
      %2402 = vmatpush1.bf16.msra.mxu0 0
      %2403 = vmatprep.subr.bf16.mxu0 0
      %2404 = vmatpush1.bf16.msra.mxu0 0
      %2405 = vmatprep.subr.bf16.mxu0 0
      %2406 = vmatpush1.bf16.msra.mxu0 0
      %2407 = vmatprep.subr.bf16.mxu0 0
      %2408 = vmatpush1.bf16.msra.mxu0 0
      %2409 = vmatprep.subr.bf16.mxu0 0
      %2410 = vmatpush1.bf16.msra.mxu0 0
      %2411 = vmatprep.subr.bf16.mxu0 0
      %2412 = vmatpush1.bf16.msra.mxu0 0
      %2413 = vmatprep.subr.bf16.mxu0 0
      %2414 = vmatpush1.bf16.msra.mxu0 0
      %2415 = vmatprep.subr.bf16.mxu0 0
      %2416 = vmatpush1.bf16.msra.mxu0 0
      %2417 = vmatprep.subr.bf16.mxu0 0
      %2418 = vmatpush1.bf16.msra.mxu0 0
      %2419 = vmatprep.subr.bf16.mxu0 0
      %2420 = vmatpush1.bf16.msra.mxu0 0
      %2421 = vmatprep.mubr.bf16.mxu0 0
      %2422 = vmatmul.mubr.bf16.gmra.mrb[0].mxu0 %v2342
      %v2423 = vpop.f32.mrb[0].mxu0
      %v2424 = vadd.f32 0.0, %v2423
      %v2425 = vpop.f32.mrb[0].mxu0
      %v2426 = vpop.f32.mrb[0].mxu0
      %v2427 = vadd.f32 0.0, %v2426
      %v2428 = vpop.f32.mrb[0].mxu0
      %2429 = vmatprep.mubr.bf16.mxu0 0
      %2430 = vmatmul.mubr.bf16.gmra.mrb[0].mxu0 %v2345
      %v2431 = vpop.f32.mrb[0].mxu0
      %v2432 = vadd.f32 0.0, %v2431
      %v2433 = vpop.f32.mrb[0].mxu0
      %v2434 = vpop.f32.mrb[0].mxu0
      %v2435 = vadd.f32 0.0, %v2434
      %v2436 = vpop.f32.mrb[0].mxu0
      %2437 = vmatprep.mubr.bf16.mxu0 0
      %2438 = vmatmul.mubr.bf16.gmra.mrb[0].mxu0 %v2348
      %v2439 = vpop.f32.mrb[0].mxu0
      %v2440 = vadd.f32 0.0, %v2439
      %v2441 = vpop.f32.mrb[0].mxu0
      %v2442 = vpop.f32.mrb[0].mxu0
      %v2443 = vadd.f32 0.0, %v2442
      %v2444 = vpop.f32.mrb[0].mxu0
      %2445 = vmatprep.mubr.bf16.mxu0 0
      %2446 = vmatmul.mubr.bf16.gmra.mrb[0].mxu0 %v2351
      %v2447 = vpop.f32.mrb[0].mxu0
      %v2448 = vadd.f32 0.0, %v2447
      %v2449 = vpop.f32.mrb[0].mxu0
      %v2450 = vpop.f32.mrb[0].mxu0
      %v2451 = vadd.f32 0.0, %v2450
      %v2452 = vpop.f32.mrb[0].mxu0
      %2453 = vmatprep.mubr.bf16.mxu0 0
      %2454 = vmatmul.mubr.bf16.gmra.mrb[0].mxu0 %v2354
      %v2455 = vpop.f32.mrb[0].mxu0
      %v2456 = vadd.f32 0.0, %v2455
      %v2457 = vpop.f32.mrb[0].mxu0
      %v2458 = vpop.f32.mrb[0].mxu0
      %v2459 = vadd.f32 0.0, %v2458
      %v2460 = vpop.f32.mrb[0].mxu0
      %2461 = vmatprep.mubr.bf16.mxu0 0
      %2462 = vmatmul.mubr.bf16.gmra.mrb[0].mxu0 %v2357
      %v2463 = vpop.f32.mrb[0].mxu0
      %v2464 = vadd.f32 0.0, %v2463
      %v2465 = vpop.f32.mrb[0].mxu0
      %v2466 = vpop.f32.mrb[0].mxu0
      %v2467 = vadd.f32 0.0, %v2466
      %v2468 = vpop.f32.mrb[0].mxu0
      %2469 = vmatprep.mubr.bf16.mxu0 0
      %2470 = vmatmul.mubr.bf16.gmra.mrb[0].mxu0 %v2360
      %v2471 = vpop.f32.mrb[0].mxu0
      %v2472 = vadd.f32 0.0, %v2471
      %v2473 = vpop.f32.mrb[0].mxu0
      %v2474 = vpop.f32.mrb[0].mxu0
      %v2475 = vadd.f32 0.0, %v2474
      %v2476 = vpop.f32.mrb[0].mxu0
      %2477 = vmatprep.mubr.bf16.mxu0 0
      %2478 = vmatmul.mubr.bf16.gmra.mrb[0].mxu0 %v2363
      %v2479 = vpop.f32.mrb[0].mxu0
      %v2480 = vadd.f32 0.0, %v2479
      %v2481 = vpop.f32.mrb[0].mxu0
      %v2482 = vpop.f32.mrb[0].mxu0
      %v2483 = vadd.f32 0.0, %v2482
      %v2484 = vpop.f32.mrb[0].mxu0
      %2485 = vmatprep.mubr.bf16.mxu0 0
      %2486 = vmatmul.mubr.bf16.gmra.mrb[0].mxu0 %v2366
      %v2487 = vpop.f32.mrb[0].mxu0
      %v2488 = vadd.f32 0.0, %v2487
      %v2489 = vpop.f32.mrb[0].mxu0
      %v2490 = vpop.f32.mrb[0].mxu0
      %v2491 = vadd.f32 0.0, %v2490
      %v2492 = vpop.f32.mrb[0].mxu0
      %2493 = vmatprep.mubr.bf16.mxu0 0
      %2494 = vmatmul.mubr.bf16.gmra.mrb[0].mxu0 %v2369
      %v2495 = vpop.f32.mrb[0].mxu0
      %v2496 = vadd.f32 0.0, %v2495
      %v2497 = vpop.f32.mrb[0].mxu0
      %v2498 = vpop.f32.mrb[0].mxu0
      %v2499 = vadd.f32 0.0, %v2498
      %v2500 = vpop.f32.mrb[0].mxu0
      %2501 = vmatprep.mubr.bf16.mxu0 0
      %2502 = vmatmul.mubr.bf16.gmra.mrb[0].mxu0 %v2372
      %v2503 = vpop.f32.mrb[0].mxu0
      %v2504 = vadd.f32 0.0, %v2503
      %v2505 = vpop.f32.mrb[0].mxu0
      %v2506 = vpop.f32.mrb[0].mxu0
      %v2507 = vadd.f32 0.0, %v2506
      %v2508 = vpop.f32.mrb[0].mxu0
      %2509 = vmatprep.mubr.bf16.mxu0 0
      %2510 = vmatmul.mubr.bf16.gmra.mrb[0].mxu0 %v2375
      %v2511 = vpop.f32.mrb[0].mxu0
      %v2512 = vadd.f32 0.0, %v2511
      %v2513 = vpop.f32.mrb[0].mxu0
      %v2514 = vpop.f32.mrb[0].mxu0
      %v2515 = vadd.f32 0.0, %v2514
      %v2516 = vpop.f32.mrb[0].mxu0
      %2517 = vmatprep.mubr.bf16.mxu0 0
      %2518 = vmatmul.mubr.bf16.gmra.mrb[0].mxu0 %v2378
      %v2519 = vpop.f32.mrb[0].mxu0
      %v2520 = vadd.f32 0.0, %v2519
      %v2521 = vpop.f32.mrb[0].mxu0
      %v2522 = vpop.f32.mrb[0].mxu0
      %v2523 = vadd.f32 0.0, %v2522
      %v2524 = vpop.f32.mrb[0].mxu0
      %2525 = vmatprep.mubr.bf16.mxu0 0
      %2526 = vmatmul.mubr.bf16.gmra.mrb[0].mxu0 %v2381
      %v2527 = vpop.f32.mrb[0].mxu0
      %v2528 = vadd.f32 0.0, %v2527
      %v2529 = vpop.f32.mrb[0].mxu0
      %v2530 = vpop.f32.mrb[0].mxu0
      %v2531 = vadd.f32 0.0, %v2530
      %v2532 = vpop.f32.mrb[0].mxu0
      %2533 = vmatprep.mubr.bf16.mxu0 0
      %2534 = vmatmul.mubr.bf16.gmra.mrb[0].mxu0 %v2384
      %v2535 = vpop.f32.mrb[0].mxu0
      %v2536 = vadd.f32 0.0, %v2535
      %v2537 = vpop.f32.mrb[0].mxu0
      %v2538 = vpop.f32.mrb[0].mxu0
      %v2539 = vadd.f32 0.0, %v2538
      %v2540 = vpop.f32.mrb[0].mxu0
      %2541 = vmatprep.mubr.bf16.mxu0 0
      %2542 = vmatmul.mubr.bf16.gmra.mrb[0].mxu0 %v2387
      %v2543 = vpop.f32.mrb[0].mxu0
      %v2544 = vadd.f32 0.0, %v2543
      %v2545 = vpop.f32.mrb[0].mxu0
      %v2546 = vpop.f32.mrb[0].mxu0
      %v2547 = vadd.f32 0.0, %v2546
      %v2548 = vpop.f32.mrb[0].mxu0
      %2549 = vdwg.mxu0
      %v2550 = vadd.f32 %v2184, %v2424
      %v2551 = vadd.f32 %v2185, %v2427
      %v2552 = vadd.f32 %v2186, %v2432
      %v2553 = vadd.f32 %v2187, %v2435
      %v2554 = vadd.f32 %v2188, %v2440
      %v2555 = vadd.f32 %v2189, %v2443
      %v2556 = vadd.f32 %v2190, %v2448
      %v2557 = vadd.f32 %v2191, %v2451
      %v2558 = vadd.f32 %v2192, %v2456
      %v2559 = vadd.f32 %v2193, %v2459
      %v2560 = vadd.f32 %v2194, %v2464
      %v2561 = vadd.f32 %v2195, %v2467
      %v2562 = vadd.f32 %v2196, %v2472
      %v2563 = vadd.f32 %v2197, %v2475
      %v2564 = vadd.f32 %v2198, %v2480
      %v2565 = vadd.f32 %v2199, %v2483
      %v2566 = vadd.f32 %v2200, %v2488
      %v2567 = vadd.f32 %v2201, %v2491
      %v2568 = vadd.f32 %v2202, %v2496
      %v2569 = vadd.f32 %v2203, %v2499
      %v2570 = vadd.f32 %v2204, %v2504
      %v2571 = vadd.f32 %v2205, %v2507
      %v2572 = vadd.f32 %v2206, %v2512
      %v2573 = vadd.f32 %v2207, %v2515
      %v2574 = vadd.f32 %v2208, %v2520
      %v2575 = vadd.f32 %v2209, %v2523
      %v2576 = vadd.f32 %v2210, %v2528
      %v2577 = vadd.f32 %v2211, %v2531
      %v2578 = vadd.f32 %v2212, %v2536
      %v2579 = vadd.f32 %v2213, %v2539
      %v2580 = vadd.f32 %v2214, %v2544
      %v2581 = vadd.f32 %v2215, %v2547
      %v2586 = vrot.slane %v242, 5
      %v2587 = vrot.slane %v2586, 4
      %v2588 = vrot.slane %v243, 5
      %v2589 = vsel %vm1435, %v2587, %v2588
      %v2590 = vrot.slane %v262, 5
      %v2591 = vrot.slane %v2590, 4
      %v2592 = vrot.slane %v263, 5
      %v2593 = vsel %vm1435, %v2591, %v2592
      %v2594 = vrot.slane %v282, 5
      %v2595 = vrot.slane %v2594, 4
      %v2596 = vrot.slane %v283, 5
      %v2597 = vsel %vm1435, %v2595, %v2596
      %v2598 = vrot.slane %v302, 5
      %v2599 = vrot.slane %v2598, 4
      %v2600 = vrot.slane %v303, 5
      %v2601 = vsel %vm1435, %v2599, %v2600
      %s2602 = scalar_lea.vmem %s1, 240
      %v2603 = vld [vmem:[%s2602] sm:$0xf]
      %v2604 = vld [vmem:[%s2602 + $0x4] sm:$0xf]
      %v2605 = vld [vmem:[%s2602 + $0x8] sm:$0xf]
      %v2606 = vld [vmem:[%s2602 + $0xc] sm:$0xf]
      %v2607 = vld [vmem:[%s2602 + $0x10] sm:$0xf]
      %v2608 = vld [vmem:[%s2602 + $0x14] sm:$0xf]
      %v2609 = vld [vmem:[%s2602 + $0x18] sm:$0xf]
      %v2610 = vld [vmem:[%s2602 + $0x1c] sm:$0xf]
      %v2611 = vld [vmem:[%s2602 + $0x20] sm:$0xf]
      %v2612 = vld [vmem:[%s2602 + $0x24] sm:$0xf]
      %v2613 = vld [vmem:[%s2602 + $0x28] sm:$0xf]
      %v2614 = vld [vmem:[%s2602 + $0x2c] sm:$0xf]
      %v2615 = vunpack.c.l.b16 %v2589
      %v2616 = vunpack.c.l.b16 %v2593
      %v2617 = vunpack.c.l.b16 %v2597
      %v2618 = vunpack.c.l.b16 %v2601
      %v2619 = vpack.c.b16 %v1579, %v1578
      %v2620 = vpack.c.b16 %v1581, %v1580
      %v2621 = vpack.c.b16 %v1583, %v1582
      %v2622 = vpack.c.b16 %v2615, %v1584
      %v2623 = vpack.c.b16 %v1587, %v1586
      %v2624 = vpack.c.b16 %v1589, %v1588
      %v2625 = vpack.c.b16 %v1591, %v1590
      %v2626 = vpack.c.b16 %v2616, %v1592
      %v2627 = vpack.c.b16 %v1595, %v1594
      %v2628 = vpack.c.b16 %v1597, %v1596
      %v2629 = vpack.c.b16 %v1599, %v1598
      %v2630 = vpack.c.b16 %v2617, %v1600
      %v2631 = vpack.c.b16 %v1603, %v1602
      %v2632 = vpack.c.b16 %v1605, %v1604
      %v2633 = vpack.c.b16 %v1607, %v1606
      %v2634 = vpack.c.b16 %v2618, %v1608
      %v2647 = vunpack.c.l.b16 %v2603
      %v2648 = vunpack.c.l.b16 %v2604
      %v2649 = vunpack.c.l.b16 %v2605
      %v2650 = vunpack.c.l.b16 %v2606
      %v2651 = vunpack.c.l.b16 %v2607
      %v2652 = vunpack.c.l.b16 %v2608
      %v2653 = vunpack.c.l.b16 %v2609
      %v2654 = vunpack.c.l.b16 %v2610
      %v2655 = vunpack.c.l.b16 %v2611
      %v2656 = vunpack.c.l.b16 %v2612
      %v2657 = vunpack.c.l.b16 %v2613
      %v2658 = vunpack.c.l.b16 %v2614
      %v2659 = vpack.c.b16 %v2648, %v2647
      %v2660 = vpack.c.b16 %v2650, %v2649
      %v2661 = vpack.c.b16 %v2652, %v2651
      %v2662 = vpack.c.b16 %v2654, %v2653
      %v2663 = vpack.c.b16 %v2656, %v2655
      %v2664 = vpack.c.b16 %v2658, %v2657
      %v2672 = vsel %vm866, %v2619, 0
      %v2675 = vsel %vm866, %v2620, 0
      %v2678 = vsel %vm866, %v2621, 0
      %v2681 = vsel %vm866, %v2622, 0
      %v2684 = vsel %vm866, %v2623, 0
      %v2687 = vsel %vm866, %v2624, 0
      %v2690 = vsel %vm866, %v2625, 0
      %v2693 = vsel %vm866, %v2626, 0
      %v2696 = vsel %vm866, %v2627, 0
      %v2699 = vsel %vm866, %v2628, 0
      %v2702 = vsel %vm866, %v2629, 0
      %v2705 = vsel %vm866, %v2630, 0
      %v2708 = vsel %vm866, %v2631, 0
      %v2711 = vsel %vm866, %v2632, 0
      %v2714 = vsel %vm866, %v2633, 0
      %v2717 = vsel %vm866, %v2634, 0
      %2719 = vmatprep.subr.bf16.mxu0 0
      %2720 = vmatpush1.bf16.msra.mxu0 %v2659
      %2721 = vmatprep.subr.bf16.mxu0 0
      %2722 = vmatpush1.bf16.msra.mxu0 %v2660
      %2723 = vmatprep.subr.bf16.mxu0 0
      %2724 = vmatpush1.bf16.msra.mxu0 %v2661
      %2725 = vmatprep.subr.bf16.mxu0 0
      %2726 = vmatpush1.bf16.msra.mxu0 %v2662
      %2727 = vmatprep.subr.bf16.mxu0 0
      %2728 = vmatpush1.bf16.msra.mxu0 %v2663
      %2729 = vmatprep.subr.bf16.mxu0 0
      %2730 = vmatpush1.bf16.msra.mxu0 %v2664
      %2731 = vmatprep.subr.bf16.mxu0 0
      %2732 = vmatpush1.bf16.msra.mxu0 0
      %2733 = vmatprep.subr.bf16.mxu0 0
      %2734 = vmatpush1.bf16.msra.mxu0 0
      %2735 = vmatprep.subr.bf16.mxu0 0
      %2736 = vmatpush1.bf16.msra.mxu0 0
      %2737 = vmatprep.subr.bf16.mxu0 0
      %2738 = vmatpush1.bf16.msra.mxu0 0
      %2739 = vmatprep.subr.bf16.mxu0 0
      %2740 = vmatpush1.bf16.msra.mxu0 0
      %2741 = vmatprep.subr.bf16.mxu0 0
      %2742 = vmatpush1.bf16.msra.mxu0 0
      %2743 = vmatprep.subr.bf16.mxu0 0
      %2744 = vmatpush1.bf16.msra.mxu0 0
      %2745 = vmatprep.subr.bf16.mxu0 0
      %2746 = vmatpush1.bf16.msra.mxu0 0
      %2747 = vmatprep.subr.bf16.mxu0 0
      %2748 = vmatpush1.bf16.msra.mxu0 0
      %2749 = vmatprep.subr.bf16.mxu0 0
      %2750 = vmatpush1.bf16.msra.mxu0 0
      %2751 = vmatprep.mubr.bf16.mxu0 0
      %2752 = vmatmul.mubr.bf16.gmra.mrb[0].mxu0 %v2672
      %v2753 = vpop.f32.mrb[0].mxu0
      %v2754 = vadd.f32 0.0, %v2753
      %v2755 = vpop.f32.mrb[0].mxu0
      %v2756 = vpop.f32.mrb[0].mxu0
      %v2757 = vadd.f32 0.0, %v2756
      %v2758 = vpop.f32.mrb[0].mxu0
      %2759 = vmatprep.mubr.bf16.mxu0 0
      %2760 = vmatmul.mubr.bf16.gmra.mrb[0].mxu0 %v2675
      %v2761 = vpop.f32.mrb[0].mxu0
      %v2762 = vadd.f32 0.0, %v2761
      %v2763 = vpop.f32.mrb[0].mxu0
      %v2764 = vpop.f32.mrb[0].mxu0
      %v2765 = vadd.f32 0.0, %v2764
      %v2766 = vpop.f32.mrb[0].mxu0
      %2767 = vmatprep.mubr.bf16.mxu0 0
      %2768 = vmatmul.mubr.bf16.gmra.mrb[0].mxu0 %v2678
      %v2769 = vpop.f32.mrb[0].mxu0
      %v2770 = vadd.f32 0.0, %v2769
      %v2771 = vpop.f32.mrb[0].mxu0
      %v2772 = vpop.f32.mrb[0].mxu0
      %v2773 = vadd.f32 0.0, %v2772
      %v2774 = vpop.f32.mrb[0].mxu0
      %2775 = vmatprep.mubr.bf16.mxu0 0
      %2776 = vmatmul.mubr.bf16.gmra.mrb[0].mxu0 %v2681
      %v2777 = vpop.f32.mrb[0].mxu0
      %v2778 = vadd.f32 0.0, %v2777
      %v2779 = vpop.f32.mrb[0].mxu0
      %v2780 = vpop.f32.mrb[0].mxu0
      %v2781 = vadd.f32 0.0, %v2780
      %v2782 = vpop.f32.mrb[0].mxu0
      %2783 = vmatprep.mubr.bf16.mxu0 0
      %2784 = vmatmul.mubr.bf16.gmra.mrb[0].mxu0 %v2684
      %v2785 = vpop.f32.mrb[0].mxu0
      %v2786 = vadd.f32 0.0, %v2785
      %v2787 = vpop.f32.mrb[0].mxu0
      %v2788 = vpop.f32.mrb[0].mxu0
      %v2789 = vadd.f32 0.0, %v2788
      %v2790 = vpop.f32.mrb[0].mxu0
      %2791 = vmatprep.mubr.bf16.mxu0 0
      %2792 = vmatmul.mubr.bf16.gmra.mrb[0].mxu0 %v2687
      %v2793 = vpop.f32.mrb[0].mxu0
      %v2794 = vadd.f32 0.0, %v2793
      %v2795 = vpop.f32.mrb[0].mxu0
      %v2796 = vpop.f32.mrb[0].mxu0
      %v2797 = vadd.f32 0.0, %v2796
      %v2798 = vpop.f32.mrb[0].mxu0
      %2799 = vmatprep.mubr.bf16.mxu0 0
      %2800 = vmatmul.mubr.bf16.gmra.mrb[0].mxu0 %v2690
      %v2801 = vpop.f32.mrb[0].mxu0
      %v2802 = vadd.f32 0.0, %v2801
      %v2803 = vpop.f32.mrb[0].mxu0
      %v2804 = vpop.f32.mrb[0].mxu0
      %v2805 = vadd.f32 0.0, %v2804
      %v2806 = vpop.f32.mrb[0].mxu0
      %2807 = vmatprep.mubr.bf16.mxu0 0
      %2808 = vmatmul.mubr.bf16.gmra.mrb[0].mxu0 %v2693
      %v2809 = vpop.f32.mrb[0].mxu0
      %v2810 = vadd.f32 0.0, %v2809
      %v2811 = vpop.f32.mrb[0].mxu0
      %v2812 = vpop.f32.mrb[0].mxu0
      %v2813 = vadd.f32 0.0, %v2812
      %v2814 = vpop.f32.mrb[0].mxu0
      %2815 = vmatprep.mubr.bf16.mxu0 0
      %2816 = vmatmul.mubr.bf16.gmra.mrb[0].mxu0 %v2696
      %v2817 = vpop.f32.mrb[0].mxu0
      %v2818 = vadd.f32 0.0, %v2817
      %v2819 = vpop.f32.mrb[0].mxu0
      %v2820 = vpop.f32.mrb[0].mxu0
      %v2821 = vadd.f32 0.0, %v2820
      %v2822 = vpop.f32.mrb[0].mxu0
      %2823 = vmatprep.mubr.bf16.mxu0 0
      %2824 = vmatmul.mubr.bf16.gmra.mrb[0].mxu0 %v2699
      %v2825 = vpop.f32.mrb[0].mxu0
      %v2826 = vadd.f32 0.0, %v2825
      %v2827 = vpop.f32.mrb[0].mxu0
      %v2828 = vpop.f32.mrb[0].mxu0
      %v2829 = vadd.f32 0.0, %v2828
      %v2830 = vpop.f32.mrb[0].mxu0
      %2831 = vmatprep.mubr.bf16.mxu0 0
      %2832 = vmatmul.mubr.bf16.gmra.mrb[0].mxu0 %v2702
      %v2833 = vpop.f32.mrb[0].mxu0
      %v2834 = vadd.f32 0.0, %v2833
      %v2835 = vpop.f32.mrb[0].mxu0
      %v2836 = vpop.f32.mrb[0].mxu0
      %v2837 = vadd.f32 0.0, %v2836
      %v2838 = vpop.f32.mrb[0].mxu0
      %2839 = vmatprep.mubr.bf16.mxu0 0
      %2840 = vmatmul.mubr.bf16.gmra.mrb[0].mxu0 %v2705
      %v2841 = vpop.f32.mrb[0].mxu0
      %v2842 = vadd.f32 0.0, %v2841
      %v2843 = vpop.f32.mrb[0].mxu0
      %v2844 = vpop.f32.mrb[0].mxu0
      %v2845 = vadd.f32 0.0, %v2844
      %v2846 = vpop.f32.mrb[0].mxu0
      %2847 = vmatprep.mubr.bf16.mxu0 0
      %2848 = vmatmul.mubr.bf16.gmra.mrb[0].mxu0 %v2708
      %v2849 = vpop.f32.mrb[0].mxu0
      %v2850 = vadd.f32 0.0, %v2849
      %v2851 = vpop.f32.mrb[0].mxu0
      %v2852 = vpop.f32.mrb[0].mxu0
      %v2853 = vadd.f32 0.0, %v2852
      %v2854 = vpop.f32.mrb[0].mxu0
      %2855 = vmatprep.mubr.bf16.mxu0 0
      %2856 = vmatmul.mubr.bf16.gmra.mrb[0].mxu0 %v2711
      %v2857 = vpop.f32.mrb[0].mxu0
      %v2858 = vadd.f32 0.0, %v2857
      %v2859 = vpop.f32.mrb[0].mxu0
      %v2860 = vpop.f32.mrb[0].mxu0
      %v2861 = vadd.f32 0.0, %v2860
      %v2862 = vpop.f32.mrb[0].mxu0
      %2863 = vmatprep.mubr.bf16.mxu0 0
      %2864 = vmatmul.mubr.bf16.gmra.mrb[0].mxu0 %v2714
      %v2865 = vpop.f32.mrb[0].mxu0
      %v2866 = vadd.f32 0.0, %v2865
      %v2867 = vpop.f32.mrb[0].mxu0
      %v2868 = vpop.f32.mrb[0].mxu0
      %v2869 = vadd.f32 0.0, %v2868
      %v2870 = vpop.f32.mrb[0].mxu0
      %2871 = vmatprep.mubr.bf16.mxu0 0
      %2872 = vmatmul.mubr.bf16.gmra.mrb[0].mxu0 %v2717
      %v2873 = vpop.f32.mrb[0].mxu0
      %v2874 = vadd.f32 0.0, %v2873
      %v2875 = vpop.f32.mrb[0].mxu0
      %v2876 = vpop.f32.mrb[0].mxu0
      %v2877 = vadd.f32 0.0, %v2876
      %v2878 = vpop.f32.mrb[0].mxu0
      %2879 = vdwg.mxu0
      %v2880 = vadd.f32 %v2550, %v2754
      %v2881 = vadd.f32 %v2551, %v2757
      %v2882 = vadd.f32 %v2552, %v2762
      %v2883 = vadd.f32 %v2553, %v2765
      %v2884 = vadd.f32 %v2554, %v2770
      %v2885 = vadd.f32 %v2555, %v2773
      %v2886 = vadd.f32 %v2556, %v2778
      %v2887 = vadd.f32 %v2557, %v2781
      %v2888 = vadd.f32 %v2558, %v2786
      %v2889 = vadd.f32 %v2559, %v2789
      %v2890 = vadd.f32 %v2560, %v2794
      %v2891 = vadd.f32 %v2561, %v2797
      %v2892 = vadd.f32 %v2562, %v2802
      %v2893 = vadd.f32 %v2563, %v2805
      %v2894 = vadd.f32 %v2564, %v2810
      %v2895 = vadd.f32 %v2565, %v2813
      %v2896 = vadd.f32 %v2566, %v2818
      %v2897 = vadd.f32 %v2567, %v2821
      %v2898 = vadd.f32 %v2568, %v2826
      %v2899 = vadd.f32 %v2569, %v2829
      %v2900 = vadd.f32 %v2570, %v2834
      %v2901 = vadd.f32 %v2571, %v2837
      %v2902 = vadd.f32 %v2572, %v2842
      %v2903 = vadd.f32 %v2573, %v2845
      %v2904 = vadd.f32 %v2574, %v2850
      %v2905 = vadd.f32 %v2575, %v2853
      %v2906 = vadd.f32 %v2576, %v2858
      %v2907 = vadd.f32 %v2577, %v2861
      %v2908 = vadd.f32 %v2578, %v2866
      %v2909 = vadd.f32 %v2579, %v2869
      %v2910 = vadd.f32 %v2580, %v2874
      %v2911 = vadd.f32 %v2581, %v2877
      %s2912 = scalar_lea.vmem %s1, 288
      %v2913 = vld [vmem:[%s2912] sm:$0xf]
      %v2914 = vld [vmem:[%s2912 + $0x4] sm:$0xf]
      %v2915 = vld [vmem:[%s2912 + $0x8] sm:$0xf]
      %v2916 = vld [vmem:[%s2912 + $0xc] sm:$0xf]
      %v2917 = vld [vmem:[%s2912 + $0x10] sm:$0xf]
      %v2918 = vld [vmem:[%s2912 + $0x14] sm:$0xf]
      %v2919 = vld [vmem:[%s2912 + $0x18] sm:$0xf]
      %v2920 = vld [vmem:[%s2912 + $0x1c] sm:$0xf]
      %v2921 = vld [vmem:[%s2912 + $0x20] sm:$0xf]
      %v2922 = vld [vmem:[%s2912 + $0x24] sm:$0xf]
      %v2923 = vld [vmem:[%s2912 + $0x28] sm:$0xf]
      %v2924 = vld [vmem:[%s2912 + $0x2c] sm:$0xf]
      %v2929 = vunpack.c.l.b16 %v244
      %v2930 = vunpack.c.l.b16 %v264
      %v2931 = vunpack.c.l.b16 %v284
      %v2932 = vunpack.c.l.b16 %v304
      %v2933 = vpack.c.b16 %v2929, %v1919
      %v2934 = vpack.c.b16 %v2930, %v1920
      %v2935 = vpack.c.b16 %v2931, %v1921
      %v2936 = vpack.c.b16 %v2932, %v1922
      %v2949 = vunpack.c.l.b16 %v2913
      %v2950 = vunpack.c.l.b16 %v2914
      %v2951 = vunpack.c.l.b16 %v2915
      %v2952 = vunpack.c.l.b16 %v2916
      %v2953 = vunpack.c.l.b16 %v2917
      %v2954 = vunpack.c.l.b16 %v2918
      %v2955 = vunpack.c.l.b16 %v2919
      %v2956 = vunpack.c.l.b16 %v2920
      %v2957 = vunpack.c.l.b16 %v2921
      %v2958 = vunpack.c.l.b16 %v2922
      %v2959 = vunpack.c.l.b16 %v2923
      %v2960 = vunpack.c.l.b16 %v2924
      %v2961 = vpack.c.b16 %v2950, %v2949
      %v2962 = vpack.c.b16 %v2952, %v2951
      %v2963 = vpack.c.b16 %v2954, %v2953
      %v2964 = vpack.c.b16 %v2956, %v2955
      %v2965 = vpack.c.b16 %v2958, %v2957
      %v2966 = vpack.c.b16 %v2960, %v2959
      %v2974 = vsel %vm866, %v2933, 0
      %v2977 = vsel %vm866, %v2934, 0
      %v2980 = vsel %vm866, %v2935, 0
      %v2983 = vsel %vm866, %v2936, 0
      %2985 = vmatprep.subr.bf16.mxu0 0
      %2986 = vmatpush1.bf16.msra.mxu0 %v2961
      %2987 = vmatprep.subr.bf16.mxu0 0
      %2988 = vmatpush1.bf16.msra.mxu0 %v2962
      %2989 = vmatprep.subr.bf16.mxu0 0
      %2990 = vmatpush1.bf16.msra.mxu0 %v2963
      %2991 = vmatprep.subr.bf16.mxu0 0
      %2992 = vmatpush1.bf16.msra.mxu0 %v2964
      %2993 = vmatprep.subr.bf16.mxu0 0
      %2994 = vmatpush1.bf16.msra.mxu0 %v2965
      %2995 = vmatprep.subr.bf16.mxu0 0
      %2996 = vmatpush1.bf16.msra.mxu0 %v2966
      %2997 = vmatprep.subr.bf16.mxu0 0
      %2998 = vmatpush1.bf16.msra.mxu0 0
      %2999 = vmatprep.subr.bf16.mxu0 0
      %3000 = vmatpush1.bf16.msra.mxu0 0
      %3001 = vmatprep.subr.bf16.mxu0 0
      %3002 = vmatpush1.bf16.msra.mxu0 0
      %3003 = vmatprep.subr.bf16.mxu0 0
      %3004 = vmatpush1.bf16.msra.mxu0 0
      %3005 = vmatprep.subr.bf16.mxu0 0
      %3006 = vmatpush1.bf16.msra.mxu0 0
      %3007 = vmatprep.subr.bf16.mxu0 0
      %3008 = vmatpush1.bf16.msra.mxu0 0
      %3009 = vmatprep.subr.bf16.mxu0 0
      %3010 = vmatpush1.bf16.msra.mxu0 0
      %3011 = vmatprep.subr.bf16.mxu0 0
      %3012 = vmatpush1.bf16.msra.mxu0 0
      %3013 = vmatprep.subr.bf16.mxu0 0
      %3014 = vmatpush1.bf16.msra.mxu0 0
      %3015 = vmatprep.subr.bf16.mxu0 0
      %3016 = vmatpush1.bf16.msra.mxu0 0
      %3017 = vmatprep.mubr.bf16.mxu0 0
      %3018 = vmatmul.mubr.bf16.gmra.mrb[0].mxu0 %v1196
      %v3019 = vpop.f32.mrb[0].mxu0
      %v3020 = vadd.f32 0.0, %v3019
      %v3021 = vpop.f32.mrb[0].mxu0
      %v3022 = vpop.f32.mrb[0].mxu0
      %v3023 = vadd.f32 0.0, %v3022
      %v3024 = vpop.f32.mrb[0].mxu0
      %3025 = vmatprep.mubr.bf16.mxu0 0
      %3026 = vmatmul.mubr.bf16.gmra.mrb[0].mxu0 %v1199
      %v3027 = vpop.f32.mrb[0].mxu0
      %v3028 = vadd.f32 0.0, %v3027
      %v3029 = vpop.f32.mrb[0].mxu0
      %v3030 = vpop.f32.mrb[0].mxu0
      %v3031 = vadd.f32 0.0, %v3030
      %v3032 = vpop.f32.mrb[0].mxu0
      %3033 = vmatprep.mubr.bf16.mxu0 0
      %3034 = vmatmul.mubr.bf16.gmra.mrb[0].mxu0 %v1202
      %v3035 = vpop.f32.mrb[0].mxu0
      %v3036 = vadd.f32 0.0, %v3035
      %v3037 = vpop.f32.mrb[0].mxu0
      %v3038 = vpop.f32.mrb[0].mxu0
      %v3039 = vadd.f32 0.0, %v3038
      %v3040 = vpop.f32.mrb[0].mxu0
      %3041 = vmatprep.mubr.bf16.mxu0 0
      %3042 = vmatmul.mubr.bf16.gmra.mrb[0].mxu0 %v2974
      %v3043 = vpop.f32.mrb[0].mxu0
      %v3044 = vadd.f32 0.0, %v3043
      %v3045 = vpop.f32.mrb[0].mxu0
      %v3046 = vpop.f32.mrb[0].mxu0
      %v3047 = vadd.f32 0.0, %v3046
      %v3048 = vpop.f32.mrb[0].mxu0
      %3049 = vmatprep.mubr.bf16.mxu0 0
      %3050 = vmatmul.mubr.bf16.gmra.mrb[0].mxu0 %v1208
      %v3051 = vpop.f32.mrb[0].mxu0
      %v3052 = vadd.f32 0.0, %v3051
      %v3053 = vpop.f32.mrb[0].mxu0
      %v3054 = vpop.f32.mrb[0].mxu0
      %v3055 = vadd.f32 0.0, %v3054
      %v3056 = vpop.f32.mrb[0].mxu0
      %3057 = vmatprep.mubr.bf16.mxu0 0
      %3058 = vmatmul.mubr.bf16.gmra.mrb[0].mxu0 %v1211
      %v3059 = vpop.f32.mrb[0].mxu0
      %v3060 = vadd.f32 0.0, %v3059
      %v3061 = vpop.f32.mrb[0].mxu0
      %v3062 = vpop.f32.mrb[0].mxu0
      %v3063 = vadd.f32 0.0, %v3062
      %v3064 = vpop.f32.mrb[0].mxu0
      %3065 = vmatprep.mubr.bf16.mxu0 0
      %3066 = vmatmul.mubr.bf16.gmra.mrb[0].mxu0 %v1214
      %v3067 = vpop.f32.mrb[0].mxu0
      %v3068 = vadd.f32 0.0, %v3067
      %v3069 = vpop.f32.mrb[0].mxu0
      %v3070 = vpop.f32.mrb[0].mxu0
      %v3071 = vadd.f32 0.0, %v3070
      %v3072 = vpop.f32.mrb[0].mxu0
      %3073 = vmatprep.mubr.bf16.mxu0 0
      %3074 = vmatmul.mubr.bf16.gmra.mrb[0].mxu0 %v2977
      %v3075 = vpop.f32.mrb[0].mxu0
      %v3076 = vadd.f32 0.0, %v3075
      %v3077 = vpop.f32.mrb[0].mxu0
      %v3078 = vpop.f32.mrb[0].mxu0
      %v3079 = vadd.f32 0.0, %v3078
      %v3080 = vpop.f32.mrb[0].mxu0
      %3081 = vmatprep.mubr.bf16.mxu0 0
      %3082 = vmatmul.mubr.bf16.gmra.mrb[0].mxu0 %v1220
      %v3083 = vpop.f32.mrb[0].mxu0
      %v3084 = vadd.f32 0.0, %v3083
      %v3085 = vpop.f32.mrb[0].mxu0
      %v3086 = vpop.f32.mrb[0].mxu0
      %v3087 = vadd.f32 0.0, %v3086
      %v3088 = vpop.f32.mrb[0].mxu0
      %3089 = vmatprep.mubr.bf16.mxu0 0
      %3090 = vmatmul.mubr.bf16.gmra.mrb[0].mxu0 %v1223
      %v3091 = vpop.f32.mrb[0].mxu0
      %v3092 = vadd.f32 0.0, %v3091
      %v3093 = vpop.f32.mrb[0].mxu0
      %v3094 = vpop.f32.mrb[0].mxu0
      %v3095 = vadd.f32 0.0, %v3094
      %v3096 = vpop.f32.mrb[0].mxu0
      %3097 = vmatprep.mubr.bf16.mxu0 0
      %3098 = vmatmul.mubr.bf16.gmra.mrb[0].mxu0 %v1226
      %v3099 = vpop.f32.mrb[0].mxu0
      %v3100 = vadd.f32 0.0, %v3099
      %v3101 = vpop.f32.mrb[0].mxu0
      %v3102 = vpop.f32.mrb[0].mxu0
      %v3103 = vadd.f32 0.0, %v3102
      %v3104 = vpop.f32.mrb[0].mxu0
      %3105 = vmatprep.mubr.bf16.mxu0 0
      %3106 = vmatmul.mubr.bf16.gmra.mrb[0].mxu0 %v2980
      %v3107 = vpop.f32.mrb[0].mxu0
      %v3108 = vadd.f32 0.0, %v3107
      %v3109 = vpop.f32.mrb[0].mxu0
      %v3110 = vpop.f32.mrb[0].mxu0
      %v3111 = vadd.f32 0.0, %v3110
      %v3112 = vpop.f32.mrb[0].mxu0
      %3113 = vmatprep.mubr.bf16.mxu0 0
      %3114 = vmatmul.mubr.bf16.gmra.mrb[0].mxu0 %v1232
      %v3115 = vpop.f32.mrb[0].mxu0
      %v3116 = vadd.f32 0.0, %v3115
      %v3117 = vpop.f32.mrb[0].mxu0
      %v3118 = vpop.f32.mrb[0].mxu0
      %v3119 = vadd.f32 0.0, %v3118
      %v3120 = vpop.f32.mrb[0].mxu0
      %3121 = vmatprep.mubr.bf16.mxu0 0
      %3122 = vmatmul.mubr.bf16.gmra.mrb[0].mxu0 %v1235
      %v3123 = vpop.f32.mrb[0].mxu0
      %v3124 = vadd.f32 0.0, %v3123
      %v3125 = vpop.f32.mrb[0].mxu0
      %v3126 = vpop.f32.mrb[0].mxu0
      %v3127 = vadd.f32 0.0, %v3126
      %v3128 = vpop.f32.mrb[0].mxu0
      %3129 = vmatprep.mubr.bf16.mxu0 0
      %3130 = vmatmul.mubr.bf16.gmra.mrb[0].mxu0 %v1238
      %v3131 = vpop.f32.mrb[0].mxu0
      %v3132 = vadd.f32 0.0, %v3131
      %v3133 = vpop.f32.mrb[0].mxu0
      %v3134 = vpop.f32.mrb[0].mxu0
      %v3135 = vadd.f32 0.0, %v3134
      %v3136 = vpop.f32.mrb[0].mxu0
      %3137 = vmatprep.mubr.bf16.mxu0 0
      %3138 = vmatmul.mubr.bf16.gmra.mrb[0].mxu0 %v2983
      %v3139 = vpop.f32.mrb[0].mxu0
      %v3140 = vadd.f32 0.0, %v3139
      %v3141 = vpop.f32.mrb[0].mxu0
      %v3142 = vpop.f32.mrb[0].mxu0
      %v3143 = vadd.f32 0.0, %v3142
      %v3144 = vpop.f32.mrb[0].mxu0
      %3145 = vdwg.mxu0
      %v3146 = vadd.f32 %v2880, %v3020
      %v3147 = vadd.f32 %v2881, %v3023
      %v3148 = vadd.f32 %v2882, %v3028
      %v3149 = vadd.f32 %v2883, %v3031
      %v3150 = vadd.f32 %v2884, %v3036
      %v3151 = vadd.f32 %v2885, %v3039
      %v3152 = vadd.f32 %v2886, %v3044
      %v3153 = vadd.f32 %v2887, %v3047
      %v3154 = vadd.f32 %v2888, %v3052
      %v3155 = vadd.f32 %v2889, %v3055
      %v3156 = vadd.f32 %v2890, %v3060
      %v3157 = vadd.f32 %v2891, %v3063
      %v3158 = vadd.f32 %v2892, %v3068
      %v3159 = vadd.f32 %v2893, %v3071
      %v3160 = vadd.f32 %v2894, %v3076
      %v3161 = vadd.f32 %v2895, %v3079
      %v3162 = vadd.f32 %v2896, %v3084
      %v3163 = vadd.f32 %v2897, %v3087
      %v3164 = vadd.f32 %v2898, %v3092
      %v3165 = vadd.f32 %v2899, %v3095
      %v3166 = vadd.f32 %v2900, %v3100
      %v3167 = vadd.f32 %v2901, %v3103
      %v3168 = vadd.f32 %v2902, %v3108
      %v3169 = vadd.f32 %v2903, %v3111
      %v3170 = vadd.f32 %v2904, %v3116
      %v3171 = vadd.f32 %v2905, %v3119
      %v3172 = vadd.f32 %v2906, %v3124
      %v3173 = vadd.f32 %v2907, %v3127
      %v3174 = vadd.f32 %v2908, %v3132
      %v3175 = vadd.f32 %v2909, %v3135
      %v3176 = vadd.f32 %v2910, %v3140
      %v3177 = vadd.f32 %v2911, %v3143
      %v3179 = vshrl.u32 %v244, 16
      %v3181 = vrot.slane %v3179, 4
      %v3182 = vshll.u32 %v244, 16
      %v3184 = vrot.slane %v3182, 5
      %v3185 = vor.u32 %v3181, %v3184
      %v3186 = vrot.slane %v3185, 4
      %v3188 = vshll.u32 %v245, 16
      %v3190 = vrot.slane %v3188, 5
      %v3191 = vsel %vm320, %v3186, %v3190
      %v3193 = vshrl.u32 %v264, 16
      %v3195 = vrot.slane %v3193, 4
      %v3196 = vshll.u32 %v264, 16
      %v3198 = vrot.slane %v3196, 5
      %v3199 = vor.u32 %v3195, %v3198
      %v3200 = vrot.slane %v3199, 4
      %v3202 = vshll.u32 %v265, 16
      %v3204 = vrot.slane %v3202, 5
      %v3205 = vsel %vm320, %v3200, %v3204
      %v3207 = vshrl.u32 %v284, 16
      %v3209 = vrot.slane %v3207, 4
      %v3210 = vshll.u32 %v284, 16
      %v3212 = vrot.slane %v3210, 5
      %v3213 = vor.u32 %v3209, %v3212
      %v3214 = vrot.slane %v3213, 4
      %v3216 = vshll.u32 %v285, 16
      %v3218 = vrot.slane %v3216, 5
      %v3219 = vsel %vm320, %v3214, %v3218
      %v3221 = vshrl.u32 %v304, 16
      %v3223 = vrot.slane %v3221, 4
      %v3224 = vshll.u32 %v304, 16
      %v3226 = vrot.slane %v3224, 5
      %v3227 = vor.u32 %v3223, %v3226
      %v3228 = vrot.slane %v3227, 4
      %v3230 = vshll.u32 %v305, 16
      %v3232 = vrot.slane %v3230, 5
      %v3233 = vsel %vm320, %v3228, %v3232
      %s3234 = scalar_lea.vmem %s1, 336
      %v3235 = vld [vmem:[%s3234] sm:$0xf]
      %v3236 = vld [vmem:[%s3234 + $0x4] sm:$0xf]
      %v3237 = vld [vmem:[%s3234 + $0x8] sm:$0xf]
      %v3238 = vld [vmem:[%s3234 + $0xc] sm:$0xf]
      %v3239 = vld [vmem:[%s3234 + $0x10] sm:$0xf]
      %v3240 = vld [vmem:[%s3234 + $0x14] sm:$0xf]
      %v3241 = vld [vmem:[%s3234 + $0x18] sm:$0xf]
      %v3242 = vld [vmem:[%s3234 + $0x1c] sm:$0xf]
      %v3243 = vld [vmem:[%s3234 + $0x20] sm:$0xf]
      %v3244 = vld [vmem:[%s3234 + $0x24] sm:$0xf]
      %v3245 = vld [vmem:[%s3234 + $0x28] sm:$0xf]
      %v3246 = vld [vmem:[%s3234 + $0x2c] sm:$0xf]
      %v3247 = vunpack.c.l.b16 %v3191
      %v3248 = vunpack.c.l.b16 %v3205
      %v3249 = vunpack.c.l.b16 %v3219
      %v3250 = vunpack.c.l.b16 %v3233
      %v3251 = vpack.c.b16 %v3247, %v2285
      %v3252 = vpack.c.b16 %v3248, %v2286
      %v3253 = vpack.c.b16 %v3249, %v2287
      %v3254 = vpack.c.b16 %v3250, %v2288
      %v3267 = vunpack.c.l.b16 %v3235
      %v3268 = vunpack.c.l.b16 %v3236
      %v3269 = vunpack.c.l.b16 %v3237
      %v3270 = vunpack.c.l.b16 %v3238
      %v3271 = vunpack.c.l.b16 %v3239
      %v3272 = vunpack.c.l.b16 %v3240
      %v3273 = vunpack.c.l.b16 %v3241
      %v3274 = vunpack.c.l.b16 %v3242
      %v3275 = vunpack.c.l.b16 %v3243
      %v3276 = vunpack.c.l.b16 %v3244
      %v3277 = vunpack.c.l.b16 %v3245
      %v3278 = vunpack.c.l.b16 %v3246
      %v3279 = vpack.c.b16 %v3268, %v3267
      %v3280 = vpack.c.b16 %v3270, %v3269
      %v3281 = vpack.c.b16 %v3272, %v3271
      %v3282 = vpack.c.b16 %v3274, %v3273
      %v3283 = vpack.c.b16 %v3276, %v3275
      %v3284 = vpack.c.b16 %v3278, %v3277
      %v3292 = vsel %vm866, %v3251, 0
      %v3295 = vsel %vm866, %v3252, 0
      %v3298 = vsel %vm866, %v3253, 0
      %v3301 = vsel %vm866, %v3254, 0
      %3303 = vmatprep.subr.bf16.mxu0 0
      %3304 = vmatpush1.bf16.msra.mxu0 %v3279
      %3305 = vmatprep.subr.bf16.mxu0 0
      %3306 = vmatpush1.bf16.msra.mxu0 %v3280
      %3307 = vmatprep.subr.bf16.mxu0 0
      %3308 = vmatpush1.bf16.msra.mxu0 %v3281
      %3309 = vmatprep.subr.bf16.mxu0 0
      %3310 = vmatpush1.bf16.msra.mxu0 %v3282
      %3311 = vmatprep.subr.bf16.mxu0 0
      %3312 = vmatpush1.bf16.msra.mxu0 %v3283
      %3313 = vmatprep.subr.bf16.mxu0 0
      %3314 = vmatpush1.bf16.msra.mxu0 %v3284
      %3315 = vmatprep.subr.bf16.mxu0 0
      %3316 = vmatpush1.bf16.msra.mxu0 0
      %3317 = vmatprep.subr.bf16.mxu0 0
      %3318 = vmatpush1.bf16.msra.mxu0 0
      %3319 = vmatprep.subr.bf16.mxu0 0
      %3320 = vmatpush1.bf16.msra.mxu0 0
      %3321 = vmatprep.subr.bf16.mxu0 0
      %3322 = vmatpush1.bf16.msra.mxu0 0
      %3323 = vmatprep.subr.bf16.mxu0 0
      %3324 = vmatpush1.bf16.msra.mxu0 0
      %3325 = vmatprep.subr.bf16.mxu0 0
      %3326 = vmatpush1.bf16.msra.mxu0 0
      %3327 = vmatprep.subr.bf16.mxu0 0
      %3328 = vmatpush1.bf16.msra.mxu0 0
      %3329 = vmatprep.subr.bf16.mxu0 0
      %3330 = vmatpush1.bf16.msra.mxu0 0
      %3331 = vmatprep.subr.bf16.mxu0 0
      %3332 = vmatpush1.bf16.msra.mxu0 0
      %3333 = vmatprep.subr.bf16.mxu0 0
      %3334 = vmatpush1.bf16.msra.mxu0 0
      %3335 = vmatprep.mubr.bf16.mxu0 0
      %3336 = vmatmul.mubr.bf16.gmra.mrb[0].mxu0 %v871
      %v3337 = vpop.f32.mrb[0].mxu0
      %v3338 = vadd.f32 0.0, %v3337
      %v3339 = vpop.f32.mrb[0].mxu0
      %v3340 = vpop.f32.mrb[0].mxu0
      %v3341 = vadd.f32 0.0, %v3340
      %v3342 = vpop.f32.mrb[0].mxu0
      %3343 = vmatprep.mubr.bf16.mxu0 0
      %3344 = vmatmul.mubr.bf16.gmra.mrb[0].mxu0 %v874
      %v3345 = vpop.f32.mrb[0].mxu0
      %v3346 = vadd.f32 0.0, %v3345
      %v3347 = vpop.f32.mrb[0].mxu0
      %v3348 = vpop.f32.mrb[0].mxu0
      %v3349 = vadd.f32 0.0, %v3348
      %v3350 = vpop.f32.mrb[0].mxu0
      %3351 = vmatprep.mubr.bf16.mxu0 0
      %3352 = vmatmul.mubr.bf16.gmra.mrb[0].mxu0 %v877
      %v3353 = vpop.f32.mrb[0].mxu0
      %v3354 = vadd.f32 0.0, %v3353
      %v3355 = vpop.f32.mrb[0].mxu0
      %v3356 = vpop.f32.mrb[0].mxu0
      %v3357 = vadd.f32 0.0, %v3356
      %v3358 = vpop.f32.mrb[0].mxu0
      %3359 = vmatprep.mubr.bf16.mxu0 0
      %3360 = vmatmul.mubr.bf16.gmra.mrb[0].mxu0 %v3292
      %v3361 = vpop.f32.mrb[0].mxu0
      %v3362 = vadd.f32 0.0, %v3361
      %v3363 = vpop.f32.mrb[0].mxu0
      %v3364 = vpop.f32.mrb[0].mxu0
      %v3365 = vadd.f32 0.0, %v3364
      %v3366 = vpop.f32.mrb[0].mxu0
      %3367 = vmatprep.mubr.bf16.mxu0 0
      %3368 = vmatmul.mubr.bf16.gmra.mrb[0].mxu0 %v883
      %v3369 = vpop.f32.mrb[0].mxu0
      %v3370 = vadd.f32 0.0, %v3369
      %v3371 = vpop.f32.mrb[0].mxu0
      %v3372 = vpop.f32.mrb[0].mxu0
      %v3373 = vadd.f32 0.0, %v3372
      %v3374 = vpop.f32.mrb[0].mxu0
      %3375 = vmatprep.mubr.bf16.mxu0 0
      %3376 = vmatmul.mubr.bf16.gmra.mrb[0].mxu0 %v886
      %v3377 = vpop.f32.mrb[0].mxu0
      %v3378 = vadd.f32 0.0, %v3377
      %v3379 = vpop.f32.mrb[0].mxu0
      %v3380 = vpop.f32.mrb[0].mxu0
      %v3381 = vadd.f32 0.0, %v3380
      %v3382 = vpop.f32.mrb[0].mxu0
      %3383 = vmatprep.mubr.bf16.mxu0 0
      %3384 = vmatmul.mubr.bf16.gmra.mrb[0].mxu0 %v889
      %v3385 = vpop.f32.mrb[0].mxu0
      %v3386 = vadd.f32 0.0, %v3385
      %v3387 = vpop.f32.mrb[0].mxu0
      %v3388 = vpop.f32.mrb[0].mxu0
      %v3389 = vadd.f32 0.0, %v3388
      %v3390 = vpop.f32.mrb[0].mxu0
      %3391 = vmatprep.mubr.bf16.mxu0 0
      %3392 = vmatmul.mubr.bf16.gmra.mrb[0].mxu0 %v3295
      %v3393 = vpop.f32.mrb[0].mxu0
      %v3394 = vadd.f32 0.0, %v3393
      %v3395 = vpop.f32.mrb[0].mxu0
      %v3396 = vpop.f32.mrb[0].mxu0
      %v3397 = vadd.f32 0.0, %v3396
      %v3398 = vpop.f32.mrb[0].mxu0
      %3399 = vmatprep.mubr.bf16.mxu0 0
      %3400 = vmatmul.mubr.bf16.gmra.mrb[0].mxu0 %v895
      %v3401 = vpop.f32.mrb[0].mxu0
      %v3402 = vadd.f32 0.0, %v3401
      %v3403 = vpop.f32.mrb[0].mxu0
      %v3404 = vpop.f32.mrb[0].mxu0
      %v3405 = vadd.f32 0.0, %v3404
      %v3406 = vpop.f32.mrb[0].mxu0
      %3407 = vmatprep.mubr.bf16.mxu0 0
      %3408 = vmatmul.mubr.bf16.gmra.mrb[0].mxu0 %v898
      %v3409 = vpop.f32.mrb[0].mxu0
      %v3410 = vadd.f32 0.0, %v3409
      %v3411 = vpop.f32.mrb[0].mxu0
      %v3412 = vpop.f32.mrb[0].mxu0
      %v3413 = vadd.f32 0.0, %v3412
      %v3414 = vpop.f32.mrb[0].mxu0
      %3415 = vmatprep.mubr.bf16.mxu0 0
      %3416 = vmatmul.mubr.bf16.gmra.mrb[0].mxu0 %v901
      %v3417 = vpop.f32.mrb[0].mxu0
      %v3418 = vadd.f32 0.0, %v3417
      %v3419 = vpop.f32.mrb[0].mxu0
      %v3420 = vpop.f32.mrb[0].mxu0
      %v3421 = vadd.f32 0.0, %v3420
      %v3422 = vpop.f32.mrb[0].mxu0
      %3423 = vmatprep.mubr.bf16.mxu0 0
      %3424 = vmatmul.mubr.bf16.gmra.mrb[0].mxu0 %v3298
      %v3425 = vpop.f32.mrb[0].mxu0
      %v3426 = vadd.f32 0.0, %v3425
      %v3427 = vpop.f32.mrb[0].mxu0
      %v3428 = vpop.f32.mrb[0].mxu0
      %v3429 = vadd.f32 0.0, %v3428
      %v3430 = vpop.f32.mrb[0].mxu0
      %3431 = vmatprep.mubr.bf16.mxu0 0
      %3432 = vmatmul.mubr.bf16.gmra.mrb[0].mxu0 %v907
      %v3433 = vpop.f32.mrb[0].mxu0
      %v3434 = vadd.f32 0.0, %v3433
      %v3435 = vpop.f32.mrb[0].mxu0
      %v3436 = vpop.f32.mrb[0].mxu0
      %v3437 = vadd.f32 0.0, %v3436
      %v3438 = vpop.f32.mrb[0].mxu0
      %3439 = vmatprep.mubr.bf16.mxu0 0
      %3440 = vmatmul.mubr.bf16.gmra.mrb[0].mxu0 %v910
      %v3441 = vpop.f32.mrb[0].mxu0
      %v3442 = vadd.f32 0.0, %v3441
      %v3443 = vpop.f32.mrb[0].mxu0
      %v3444 = vpop.f32.mrb[0].mxu0
      %v3445 = vadd.f32 0.0, %v3444
      %v3446 = vpop.f32.mrb[0].mxu0
      %3447 = vmatprep.mubr.bf16.mxu0 0
      %3448 = vmatmul.mubr.bf16.gmra.mrb[0].mxu0 %v913
      %v3449 = vpop.f32.mrb[0].mxu0
      %v3450 = vadd.f32 0.0, %v3449
      %v3451 = vpop.f32.mrb[0].mxu0
      %v3452 = vpop.f32.mrb[0].mxu0
      %v3453 = vadd.f32 0.0, %v3452
      %v3454 = vpop.f32.mrb[0].mxu0
      %3455 = vmatprep.mubr.bf16.mxu0 0
      %3456 = vmatmul.mubr.bf16.gmra.mrb[0].mxu0 %v3301
      %v3457 = vpop.f32.mrb[0].mxu0
      %v3458 = vadd.f32 0.0, %v3457
      %v3459 = vpop.f32.mrb[0].mxu0
      %v3460 = vpop.f32.mrb[0].mxu0
      %v3461 = vadd.f32 0.0, %v3460
      %v3462 = vpop.f32.mrb[0].mxu0
      %3463 = vdwg.mxu0
      %v3464 = vadd.f32 %v3146, %v3338
      %v3465 = vadd.f32 %v3147, %v3341
      %v3466 = vadd.f32 %v3148, %v3346
      %v3467 = vadd.f32 %v3149, %v3349
      %v3468 = vadd.f32 %v3150, %v3354
      %v3469 = vadd.f32 %v3151, %v3357
      %v3470 = vadd.f32 %v3152, %v3362
      %v3471 = vadd.f32 %v3153, %v3365
      %v3472 = vadd.f32 %v3154, %v3370
      %v3473 = vadd.f32 %v3155, %v3373
      %v3474 = vadd.f32 %v3156, %v3378
      %v3475 = vadd.f32 %v3157, %v3381
      %v3476 = vadd.f32 %v3158, %v3386
      %v3477 = vadd.f32 %v3159, %v3389
      %v3478 = vadd.f32 %v3160, %v3394
      %v3479 = vadd.f32 %v3161, %v3397
      %v3480 = vadd.f32 %v3162, %v3402
      %v3481 = vadd.f32 %v3163, %v3405
      %v3482 = vadd.f32 %v3164, %v3410
      %v3483 = vadd.f32 %v3165, %v3413
      %v3484 = vadd.f32 %v3166, %v3418
      %v3485 = vadd.f32 %v3167, %v3421
      %v3486 = vadd.f32 %v3168, %v3426
      %v3487 = vadd.f32 %v3169, %v3429
      %v3488 = vadd.f32 %v3170, %v3434
      %v3489 = vadd.f32 %v3171, %v3437
      %v3490 = vadd.f32 %v3172, %v3442
      %v3491 = vadd.f32 %v3173, %v3445
      %v3492 = vadd.f32 %v3174, %v3450
      %v3493 = vadd.f32 %v3175, %v3453
      %v3494 = vadd.f32 %v3176, %v3458
      %v3495 = vadd.f32 %v3177, %v3461
      %v3500 = vrot.slane %v244, 5
      %v3501 = vrot.slane %v3500, 4
      %v3502 = vrot.slane %v245, 5
      %v3503 = vsel %vm1435, %v3501, %v3502
      %v3504 = vrot.slane %v264, 5
      %v3505 = vrot.slane %v3504, 4
      %v3506 = vrot.slane %v265, 5
      %v3507 = vsel %vm1435, %v3505, %v3506
      %v3508 = vrot.slane %v284, 5
      %v3509 = vrot.slane %v3508, 4
      %v3510 = vrot.slane %v285, 5
      %v3511 = vsel %vm1435, %v3509, %v3510
      %v3512 = vrot.slane %v304, 5
      %v3513 = vrot.slane %v3512, 4
      %v3514 = vrot.slane %v305, 5
      %v3515 = vsel %vm1435, %v3513, %v3514
      %s3516 = scalar_lea.vmem %s1, 384
      %v3517 = vld [vmem:[%s3516] sm:$0xf]
      %v3518 = vld [vmem:[%s3516 + $0x4] sm:$0xf]
      %v3519 = vld [vmem:[%s3516 + $0x8] sm:$0xf]
      %v3520 = vld [vmem:[%s3516 + $0xc] sm:$0xf]
      %v3521 = vld [vmem:[%s3516 + $0x10] sm:$0xf]
      %v3522 = vld [vmem:[%s3516 + $0x14] sm:$0xf]
      %v3523 = vld [vmem:[%s3516 + $0x18] sm:$0xf]
      %v3524 = vld [vmem:[%s3516 + $0x1c] sm:$0xf]
      %v3525 = vld [vmem:[%s3516 + $0x20] sm:$0xf]
      %v3526 = vld [vmem:[%s3516 + $0x24] sm:$0xf]
      %v3527 = vld [vmem:[%s3516 + $0x28] sm:$0xf]
      %v3528 = vld [vmem:[%s3516 + $0x2c] sm:$0xf]
      %v3529 = vunpack.c.l.b16 %v3503
      %v3530 = vunpack.c.l.b16 %v3507
      %v3531 = vunpack.c.l.b16 %v3511
      %v3532 = vunpack.c.l.b16 %v3515
      %v3533 = vpack.c.b16 %v3529, %v2615
      %v3534 = vpack.c.b16 %v3530, %v2616
      %v3535 = vpack.c.b16 %v3531, %v2617
      %v3536 = vpack.c.b16 %v3532, %v2618
      %v3549 = vunpack.c.l.b16 %v3517
      %v3550 = vunpack.c.l.b16 %v3518
      %v3551 = vunpack.c.l.b16 %v3519
      %v3552 = vunpack.c.l.b16 %v3520
      %v3553 = vunpack.c.l.b16 %v3521
      %v3554 = vunpack.c.l.b16 %v3522
      %v3555 = vunpack.c.l.b16 %v3523
      %v3556 = vunpack.c.l.b16 %v3524
      %v3557 = vunpack.c.l.b16 %v3525
      %v3558 = vunpack.c.l.b16 %v3526
      %v3559 = vunpack.c.l.b16 %v3527
      %v3560 = vunpack.c.l.b16 %v3528
      %v3561 = vpack.c.b16 %v3550, %v3549
      %v3562 = vpack.c.b16 %v3552, %v3551
      %v3563 = vpack.c.b16 %v3554, %v3553
      %v3564 = vpack.c.b16 %v3556, %v3555
      %v3565 = vpack.c.b16 %v3558, %v3557
      %v3566 = vpack.c.b16 %v3560, %v3559
      %v3574 = vsel %vm866, %v3533, 0
      %v3577 = vsel %vm866, %v3534, 0
      %v3580 = vsel %vm866, %v3535, 0
      %v3583 = vsel %vm866, %v3536, 0
      %3585 = vmatprep.subr.bf16.mxu0 0
      %3586 = vmatpush1.bf16.msra.mxu0 %v3561
      %3587 = vmatprep.subr.bf16.mxu0 0
      %3588 = vmatpush1.bf16.msra.mxu0 %v3562
      %3589 = vmatprep.subr.bf16.mxu0 0
      %3590 = vmatpush1.bf16.msra.mxu0 %v3563
      %3591 = vmatprep.subr.bf16.mxu0 0
      %3592 = vmatpush1.bf16.msra.mxu0 %v3564
      %3593 = vmatprep.subr.bf16.mxu0 0
      %3594 = vmatpush1.bf16.msra.mxu0 %v3565
      %3595 = vmatprep.subr.bf16.mxu0 0
      %3596 = vmatpush1.bf16.msra.mxu0 %v3566
      %3597 = vmatprep.subr.bf16.mxu0 0
      %3598 = vmatpush1.bf16.msra.mxu0 0
      %3599 = vmatprep.subr.bf16.mxu0 0
      %3600 = vmatpush1.bf16.msra.mxu0 0
      %3601 = vmatprep.subr.bf16.mxu0 0
      %3602 = vmatpush1.bf16.msra.mxu0 0
      %3603 = vmatprep.subr.bf16.mxu0 0
      %3604 = vmatpush1.bf16.msra.mxu0 0
      %3605 = vmatprep.subr.bf16.mxu0 0
      %3606 = vmatpush1.bf16.msra.mxu0 0
      %3607 = vmatprep.subr.bf16.mxu0 0
      %3608 = vmatpush1.bf16.msra.mxu0 0
      %3609 = vmatprep.subr.bf16.mxu0 0
      %3610 = vmatpush1.bf16.msra.mxu0 0
      %3611 = vmatprep.subr.bf16.mxu0 0
      %3612 = vmatpush1.bf16.msra.mxu0 0
      %3613 = vmatprep.subr.bf16.mxu0 0
      %3614 = vmatpush1.bf16.msra.mxu0 0
      %3615 = vmatprep.subr.bf16.mxu0 0
      %3616 = vmatpush1.bf16.msra.mxu0 0
      %3617 = vmatprep.mubr.bf16.mxu0 0
      %3618 = vmatmul.mubr.bf16.gmra.mrb[0].mxu0 %v1665
      %v3619 = vpop.f32.mrb[0].mxu0
      %v3620 = vadd.f32 0.0, %v3619
      %v3621 = vpop.f32.mrb[0].mxu0
      %v3622 = vpop.f32.mrb[0].mxu0
      %v3623 = vadd.f32 0.0, %v3622
      %v3624 = vpop.f32.mrb[0].mxu0
      %3625 = vmatprep.mubr.bf16.mxu0 0
      %3626 = vmatmul.mubr.bf16.gmra.mrb[0].mxu0 %v1668
      %v3627 = vpop.f32.mrb[0].mxu0
      %v3628 = vadd.f32 0.0, %v3627
      %v3629 = vpop.f32.mrb[0].mxu0
      %v3630 = vpop.f32.mrb[0].mxu0
      %v3631 = vadd.f32 0.0, %v3630
      %v3632 = vpop.f32.mrb[0].mxu0
      %3633 = vmatprep.mubr.bf16.mxu0 0
      %3634 = vmatmul.mubr.bf16.gmra.mrb[0].mxu0 %v1671
      %v3635 = vpop.f32.mrb[0].mxu0
      %v3636 = vadd.f32 0.0, %v3635
      %v3637 = vpop.f32.mrb[0].mxu0
      %v3638 = vpop.f32.mrb[0].mxu0
      %v3639 = vadd.f32 0.0, %v3638
      %v3640 = vpop.f32.mrb[0].mxu0
      %3641 = vmatprep.mubr.bf16.mxu0 0
      %3642 = vmatmul.mubr.bf16.gmra.mrb[0].mxu0 %v3574
      %v3643 = vpop.f32.mrb[0].mxu0
      %v3644 = vadd.f32 0.0, %v3643
      %v3645 = vpop.f32.mrb[0].mxu0
      %v3646 = vpop.f32.mrb[0].mxu0
      %v3647 = vadd.f32 0.0, %v3646
      %v3648 = vpop.f32.mrb[0].mxu0
      %3649 = vmatprep.mubr.bf16.mxu0 0
      %3650 = vmatmul.mubr.bf16.gmra.mrb[0].mxu0 %v1677
      %v3651 = vpop.f32.mrb[0].mxu0
      %v3652 = vadd.f32 0.0, %v3651
      %v3653 = vpop.f32.mrb[0].mxu0
      %v3654 = vpop.f32.mrb[0].mxu0
      %v3655 = vadd.f32 0.0, %v3654
      %v3656 = vpop.f32.mrb[0].mxu0
      %3657 = vmatprep.mubr.bf16.mxu0 0
      %3658 = vmatmul.mubr.bf16.gmra.mrb[0].mxu0 %v1680
      %v3659 = vpop.f32.mrb[0].mxu0
      %v3660 = vadd.f32 0.0, %v3659
      %v3661 = vpop.f32.mrb[0].mxu0
      %v3662 = vpop.f32.mrb[0].mxu0
      %v3663 = vadd.f32 0.0, %v3662
      %v3664 = vpop.f32.mrb[0].mxu0
      %3665 = vmatprep.mubr.bf16.mxu0 0
      %3666 = vmatmul.mubr.bf16.gmra.mrb[0].mxu0 %v1683
      %v3667 = vpop.f32.mrb[0].mxu0
      %v3668 = vadd.f32 0.0, %v3667
      %v3669 = vpop.f32.mrb[0].mxu0
      %v3670 = vpop.f32.mrb[0].mxu0
      %v3671 = vadd.f32 0.0, %v3670
      %v3672 = vpop.f32.mrb[0].mxu0
      %3673 = vmatprep.mubr.bf16.mxu0 0
      %3674 = vmatmul.mubr.bf16.gmra.mrb[0].mxu0 %v3577
      %v3675 = vpop.f32.mrb[0].mxu0
      %v3676 = vadd.f32 0.0, %v3675
      %v3677 = vpop.f32.mrb[0].mxu0
      %v3678 = vpop.f32.mrb[0].mxu0
      %v3679 = vadd.f32 0.0, %v3678
      %v3680 = vpop.f32.mrb[0].mxu0
      %3681 = vmatprep.mubr.bf16.mxu0 0
      %3682 = vmatmul.mubr.bf16.gmra.mrb[0].mxu0 %v1689
      %v3683 = vpop.f32.mrb[0].mxu0
      %v3684 = vadd.f32 0.0, %v3683
      %v3685 = vpop.f32.mrb[0].mxu0
      %v3686 = vpop.f32.mrb[0].mxu0
      %v3687 = vadd.f32 0.0, %v3686
      %v3688 = vpop.f32.mrb[0].mxu0
      %3689 = vmatprep.mubr.bf16.mxu0 0
      %3690 = vmatmul.mubr.bf16.gmra.mrb[0].mxu0 %v1692
      %v3691 = vpop.f32.mrb[0].mxu0
      %v3692 = vadd.f32 0.0, %v3691
      %v3693 = vpop.f32.mrb[0].mxu0
      %v3694 = vpop.f32.mrb[0].mxu0
      %v3695 = vadd.f32 0.0, %v3694
      %v3696 = vpop.f32.mrb[0].mxu0
      %3697 = vmatprep.mubr.bf16.mxu0 0
      %3698 = vmatmul.mubr.bf16.gmra.mrb[0].mxu0 %v1695
      %v3699 = vpop.f32.mrb[0].mxu0
      %v3700 = vadd.f32 0.0, %v3699
      %v3701 = vpop.f32.mrb[0].mxu0
      %v3702 = vpop.f32.mrb[0].mxu0
      %v3703 = vadd.f32 0.0, %v3702
      %v3704 = vpop.f32.mrb[0].mxu0
      %3705 = vmatprep.mubr.bf16.mxu0 0
      %3706 = vmatmul.mubr.bf16.gmra.mrb[0].mxu0 %v3580
      %v3707 = vpop.f32.mrb[0].mxu0
      %v3708 = vadd.f32 0.0, %v3707
      %v3709 = vpop.f32.mrb[0].mxu0
      %v3710 = vpop.f32.mrb[0].mxu0
      %v3711 = vadd.f32 0.0, %v3710
      %v3712 = vpop.f32.mrb[0].mxu0
      %3713 = vmatprep.mubr.bf16.mxu0 0
      %3714 = vmatmul.mubr.bf16.gmra.mrb[0].mxu0 %v1701
      %v3715 = vpop.f32.mrb[0].mxu0
      %v3716 = vadd.f32 0.0, %v3715
      %v3717 = vpop.f32.mrb[0].mxu0
      %v3718 = vpop.f32.mrb[0].mxu0
      %v3719 = vadd.f32 0.0, %v3718
      %v3720 = vpop.f32.mrb[0].mxu0
      %3721 = vmatprep.mubr.bf16.mxu0 0
      %3722 = vmatmul.mubr.bf16.gmra.mrb[0].mxu0 %v1704
      %v3723 = vpop.f32.mrb[0].mxu0
      %v3724 = vadd.f32 0.0, %v3723
      %v3725 = vpop.f32.mrb[0].mxu0
      %v3726 = vpop.f32.mrb[0].mxu0
      %v3727 = vadd.f32 0.0, %v3726
      %v3728 = vpop.f32.mrb[0].mxu0
      %3729 = vmatprep.mubr.bf16.mxu0 0
      %3730 = vmatmul.mubr.bf16.gmra.mrb[0].mxu0 %v1707
      %v3731 = vpop.f32.mrb[0].mxu0
      %v3732 = vadd.f32 0.0, %v3731
      %v3733 = vpop.f32.mrb[0].mxu0
      %v3734 = vpop.f32.mrb[0].mxu0
      %v3735 = vadd.f32 0.0, %v3734
      %v3736 = vpop.f32.mrb[0].mxu0
      %3737 = vmatprep.mubr.bf16.mxu0 0
      %3738 = vmatmul.mubr.bf16.gmra.mrb[0].mxu0 %v3583
      %v3739 = vpop.f32.mrb[0].mxu0
      %v3740 = vadd.f32 0.0, %v3739
      %v3741 = vpop.f32.mrb[0].mxu0
      %v3742 = vpop.f32.mrb[0].mxu0
      %v3743 = vadd.f32 0.0, %v3742
      %v3744 = vpop.f32.mrb[0].mxu0
      %3745 = vdwg.mxu0
      %v3746 = vadd.f32 %v3464, %v3620
      %v3747 = vadd.f32 %v3465, %v3623
      %v3748 = vadd.f32 %v3466, %v3628
      %v3749 = vadd.f32 %v3467, %v3631
      %v3750 = vadd.f32 %v3468, %v3636
      %v3751 = vadd.f32 %v3469, %v3639
      %v3752 = vadd.f32 %v3470, %v3644
      %v3753 = vadd.f32 %v3471, %v3647
      %v3754 = vadd.f32 %v3472, %v3652
      %v3755 = vadd.f32 %v3473, %v3655
      %v3756 = vadd.f32 %v3474, %v3660
      %v3757 = vadd.f32 %v3475, %v3663
      %v3758 = vadd.f32 %v3476, %v3668
      %v3759 = vadd.f32 %v3477, %v3671
      %v3760 = vadd.f32 %v3478, %v3676
      %v3761 = vadd.f32 %v3479, %v3679
      %v3762 = vadd.f32 %v3480, %v3684
      %v3763 = vadd.f32 %v3481, %v3687
      %v3764 = vadd.f32 %v3482, %v3692
      %v3765 = vadd.f32 %v3483, %v3695
      %v3766 = vadd.f32 %v3484, %v3700
      %v3767 = vadd.f32 %v3485, %v3703
      %v3768 = vadd.f32 %v3486, %v3708
      %v3769 = vadd.f32 %v3487, %v3711
      %v3770 = vadd.f32 %v3488, %v3716
      %v3771 = vadd.f32 %v3489, %v3719
      %v3772 = vadd.f32 %v3490, %v3724
      %v3773 = vadd.f32 %v3491, %v3727
      %v3774 = vadd.f32 %v3492, %v3732
      %v3775 = vadd.f32 %v3493, %v3735
      %v3776 = vadd.f32 %v3494, %v3740
      %v3777 = vadd.f32 %v3495, %v3743
      %v3778 = vld [vmem:[%s2] sm:$0x1]
      %v3780 = vlaneseq
      %v3781 = vshrl.u32 %v3780, 7
      %v3782 = vsub.s32 0, %v3781
      %v3783 = vrot.slane %v3778, %v3782
      %v3785 = vadd.f32 %v3746, %v3783
      %v3786 = vadd.f32 %v3747, %v3783
      %v3787 = vadd.f32 %v3748, %v3783
      %v3788 = vadd.f32 %v3749, %v3783
      %v3789 = vadd.f32 %v3750, %v3783
      %v3790 = vadd.f32 %v3751, %v3783
      %v3791 = vadd.f32 %v3752, %v3783
      %v3792 = vadd.f32 %v3753, %v3783
      %v3793 = vadd.f32 %v3754, %v3783
      %v3794 = vadd.f32 %v3755, %v3783
      %v3795 = vadd.f32 %v3756, %v3783
      %v3796 = vadd.f32 %v3757, %v3783
      %v3797 = vadd.f32 %v3758, %v3783
      %v3798 = vadd.f32 %v3759, %v3783
      %v3799 = vadd.f32 %v3760, %v3783
      %v3800 = vadd.f32 %v3761, %v3783
      %v3801 = vadd.f32 %v3762, %v3783
      %v3802 = vadd.f32 %v3763, %v3783
      %v3803 = vadd.f32 %v3764, %v3783
      %v3804 = vadd.f32 %v3765, %v3783
      %v3805 = vadd.f32 %v3766, %v3783
      %v3806 = vadd.f32 %v3767, %v3783
      %v3807 = vadd.f32 %v3768, %v3783
      %v3808 = vadd.f32 %v3769, %v3783
      %v3809 = vadd.f32 %v3770, %v3783
      %v3810 = vadd.f32 %v3771, %v3783
      %v3811 = vadd.f32 %v3772, %v3783
      %v3812 = vadd.f32 %v3773, %v3783
      %v3813 = vadd.f32 %v3774, %v3783
      %v3814 = vadd.f32 %v3775, %v3783
      %v3815 = vadd.f32 %v3776, %v3783
      %v3816 = vadd.f32 %v3777, %v3783
      %v3817 = vmax.f32 %v3785, 0.0
      %v3818 = vmax.f32 %v3786, 0.0
      %v3819 = vmax.f32 %v3787, 0.0
      %v3820 = vmax.f32 %v3788, 0.0
      %v3821 = vmax.f32 %v3789, 0.0
      %v3822 = vmax.f32 %v3790, 0.0
      %v3823 = vmax.f32 %v3791, 0.0
      %v3824 = vmax.f32 %v3792, 0.0
      %v3825 = vmax.f32 %v3793, 0.0
      %v3826 = vmax.f32 %v3794, 0.0
      %v3827 = vmax.f32 %v3795, 0.0
      %v3828 = vmax.f32 %v3796, 0.0
      %v3829 = vmax.f32 %v3797, 0.0
      %v3830 = vmax.f32 %v3798, 0.0
      %v3831 = vmax.f32 %v3799, 0.0
      %v3832 = vmax.f32 %v3800, 0.0
      %v3833 = vmax.f32 %v3801, 0.0
      %v3834 = vmax.f32 %v3802, 0.0
      %v3835 = vmax.f32 %v3803, 0.0
      %v3836 = vmax.f32 %v3804, 0.0
      %v3837 = vmax.f32 %v3805, 0.0
      %v3838 = vmax.f32 %v3806, 0.0
      %v3839 = vmax.f32 %v3807, 0.0
      %v3840 = vmax.f32 %v3808, 0.0
      %v3841 = vmax.f32 %v3809, 0.0
      %v3842 = vmax.f32 %v3810, 0.0
      %v3843 = vmax.f32 %v3811, 0.0
      %v3844 = vmax.f32 %v3812, 0.0
      %v3845 = vmax.f32 %v3813, 0.0
      %v3846 = vmax.f32 %v3814, 0.0
      %v3847 = vmax.f32 %v3815, 0.0
      %v3848 = vmax.f32 %v3816, 0.0
      %v3849 = vpack.c.bf16 %v3818, %v3817
      %v3850 = vpack.c.bf16 %v3820, %v3819
      %v3851 = vpack.c.bf16 %v3822, %v3821
      %v3852 = vpack.c.bf16 %v3824, %v3823
      %v3853 = vpack.c.bf16 %v3826, %v3825
      %v3854 = vpack.c.bf16 %v3828, %v3827
      %v3855 = vpack.c.bf16 %v3830, %v3829
      %v3856 = vpack.c.bf16 %v3832, %v3831
      %v3857 = vpack.c.bf16 %v3834, %v3833
      %v3858 = vpack.c.bf16 %v3836, %v3835
      %v3859 = vpack.c.bf16 %v3838, %v3837
      %v3860 = vpack.c.bf16 %v3840, %v3839
      %v3861 = vpack.c.bf16 %v3842, %v3841
      %v3862 = vpack.c.bf16 %v3844, %v3843
      %v3863 = vpack.c.bf16 %v3846, %v3845
      %v3864 = vpack.c.bf16 %v3848, %v3847
      %v3865 = vld [vmem:[%s3] sm:$0xf]
      %v3866 = vld [vmem:[%s3 + $0x4] sm:$0xf]
      %v3867 = vld [vmem:[%s3 + $0x8] sm:$0xf]
      %v3868 = vld [vmem:[%s3 + $0xc] sm:$0xf]
      %v3869 = vld [vmem:[%s3 + $0x10] sm:$0xf]
      %v3870 = vld [vmem:[%s3 + $0x14] sm:$0xf]
      %v3871 = vld [vmem:[%s3 + $0x18] sm:$0xf]
      %v3872 = vld [vmem:[%s3 + $0x1c] sm:$0xf]
      %v3873 = vld [vmem:[%s3 + $0x20] sm:$0xf]
      %v3874 = vld [vmem:[%s3 + $0x24] sm:$0xf]
      %v3875 = vld [vmem:[%s3 + $0x28] sm:$0xf]
      %v3876 = vld [vmem:[%s3 + $0x2c] sm:$0xf]
      %v3877 = vld [vmem:[%s3 + $0x30] sm:$0xf]
      %v3878 = vld [vmem:[%s3 + $0x34] sm:$0xf]
      %v3879 = vld [vmem:[%s3 + $0x38] sm:$0xf]
      %v3880 = vld [vmem:[%s3 + $0x3c] sm:$0xf]
      %s3881 = scalar_lea.vmem %s3, 64
      %v3882 = vld [vmem:[%s3881] sm:$0xf]
      %v3883 = vld [vmem:[%s3881 + $0x4] sm:$0xf]
      %v3884 = vld [vmem:[%s3881 + $0x8] sm:$0xf]
      %v3885 = vld [vmem:[%s3881 + $0xc] sm:$0xf]
      %v3886 = vld [vmem:[%s3881 + $0x10] sm:$0xf]
      %v3887 = vld [vmem:[%s3881 + $0x14] sm:$0xf]
      %v3888 = vld [vmem:[%s3881 + $0x18] sm:$0xf]
      %v3889 = vld [vmem:[%s3881 + $0x1c] sm:$0xf]
      %v3890 = vld [vmem:[%s3881 + $0x20] sm:$0xf]
      %v3891 = vld [vmem:[%s3881 + $0x24] sm:$0xf]
      %v3892 = vld [vmem:[%s3881 + $0x28] sm:$0xf]
      %v3893 = vld [vmem:[%s3881 + $0x2c] sm:$0xf]
      %v3894 = vld [vmem:[%s3881 + $0x30] sm:$0xf]
      %v3895 = vld [vmem:[%s3881 + $0x34] sm:$0xf]
      %v3896 = vld [vmem:[%s3881 + $0x38] sm:$0xf]
      %v3897 = vld [vmem:[%s3881 + $0x3c] sm:$0xf]
      %v3914 = vunpack.c.l.b16 %v3882
      %v3915 = vunpack.c.l.b16 %v3883
      %v3916 = vunpack.c.l.b16 %v3884
      %v3917 = vunpack.c.l.b16 %v3885
      %v3918 = vunpack.c.l.b16 %v3886
      %v3919 = vunpack.c.l.b16 %v3887
      %v3920 = vunpack.c.l.b16 %v3888
      %v3921 = vunpack.c.l.b16 %v3889
      %v3922 = vunpack.c.l.b16 %v3890
      %v3923 = vunpack.c.l.b16 %v3891
      %v3924 = vunpack.c.l.b16 %v3892
      %v3925 = vunpack.c.l.b16 %v3893
      %v3926 = vunpack.c.l.b16 %v3894
      %v3927 = vunpack.c.l.b16 %v3895
      %v3928 = vunpack.c.l.b16 %v3896
      %v3929 = vunpack.c.l.b16 %v3897
      %v3930 = vpack.c.b16 %v3915, %v3914
      %v3931 = vpack.c.b16 %v3917, %v3916
      %v3932 = vpack.c.b16 %v3919, %v3918
      %v3933 = vpack.c.b16 %v3921, %v3920
      %v3934 = vpack.c.b16 %v3923, %v3922
      %v3935 = vpack.c.b16 %v3925, %v3924
      %v3936 = vpack.c.b16 %v3927, %v3926
      %v3937 = vpack.c.b16 %v3929, %v3928
      %3946 = vmatprep.subr.bf16.mxu0 0
      %3947 = vmatpush1.bf16.msra.mxu0 %v3930
      %3948 = vmatprep.subr.bf16.mxu0 0
      %3949 = vmatpush1.bf16.msra.mxu0 %v3931
      %3950 = vmatprep.subr.bf16.mxu0 0
      %3951 = vmatpush1.bf16.msra.mxu0 %v3932
      %3952 = vmatprep.subr.bf16.mxu0 0
      %3953 = vmatpush1.bf16.msra.mxu0 %v3933
      %3954 = vmatprep.subr.bf16.mxu0 0
      %3955 = vmatpush1.bf16.msra.mxu0 %v3934
      %3956 = vmatprep.subr.bf16.mxu0 0
      %3957 = vmatpush1.bf16.msra.mxu0 %v3935
      %3958 = vmatprep.subr.bf16.mxu0 0
      %3959 = vmatpush1.bf16.msra.mxu0 %v3936
      %3960 = vmatprep.subr.bf16.mxu0 0
      %3961 = vmatpush1.bf16.msra.mxu0 %v3937
      %3962 = vmatprep.subr.bf16.mxu0 0
      %3963 = vmatpush1.bf16.msra.mxu0 0
      %3964 = vmatprep.subr.bf16.mxu0 0
      %3965 = vmatpush1.bf16.msra.mxu0 0
      %3966 = vmatprep.subr.bf16.mxu0 0
      %3967 = vmatpush1.bf16.msra.mxu0 0
      %3968 = vmatprep.subr.bf16.mxu0 0
      %3969 = vmatpush1.bf16.msra.mxu0 0
      %3970 = vmatprep.subr.bf16.mxu0 0
      %3971 = vmatpush1.bf16.msra.mxu0 0
      %3972 = vmatprep.subr.bf16.mxu0 0
      %3973 = vmatpush1.bf16.msra.mxu0 0
      %3974 = vmatprep.subr.bf16.mxu0 0
      %3975 = vmatpush1.bf16.msra.mxu0 0
      %3976 = vmatprep.subr.bf16.mxu0 0
      %3977 = vmatpush1.bf16.msra.mxu0 0
      %3978 = vmatprep.mubr.bf16.mxu0 0
      %3979 = vmatmul.mubr.bf16.gmra.mrb[0].mxu0 %v3849
      %v3980 = vpop.f32.mrb[0].mxu0
      %v3981 = vadd.f32 0.0, %v3980
      %v3982 = vpop.f32.mrb[0].mxu0
      %v3983 = vpop.f32.mrb[0].mxu0
      %v3984 = vadd.f32 0.0, %v3983
      %v3985 = vpop.f32.mrb[0].mxu0
      %3986 = vmatprep.mubr.bf16.mxu0 0
      %3987 = vmatmul.mubr.bf16.gmra.mrb[0].mxu0 %v3850
      %v3988 = vpop.f32.mrb[0].mxu0
      %v3989 = vadd.f32 0.0, %v3988
      %v3990 = vpop.f32.mrb[0].mxu0
      %v3991 = vpop.f32.mrb[0].mxu0
      %v3992 = vadd.f32 0.0, %v3991
      %v3993 = vpop.f32.mrb[0].mxu0
      %3994 = vmatprep.mubr.bf16.mxu0 0
      %3995 = vmatmul.mubr.bf16.gmra.mrb[0].mxu0 %v3851
      %v3996 = vpop.f32.mrb[0].mxu0
      %v3997 = vadd.f32 0.0, %v3996
      %v3998 = vpop.f32.mrb[0].mxu0
      %v3999 = vpop.f32.mrb[0].mxu0
      %v4000 = vadd.f32 0.0, %v3999
      %v4001 = vpop.f32.mrb[0].mxu0
      %4002 = vmatprep.mubr.bf16.mxu0 0
      %4003 = vmatmul.mubr.bf16.gmra.mrb[0].mxu0 %v3852
      %v4004 = vpop.f32.mrb[0].mxu0
      %v4005 = vadd.f32 0.0, %v4004
      %v4006 = vpop.f32.mrb[0].mxu0
      %v4007 = vpop.f32.mrb[0].mxu0
      %v4008 = vadd.f32 0.0, %v4007
      %v4009 = vpop.f32.mrb[0].mxu0
      %4010 = vmatprep.mubr.bf16.mxu0 0
      %4011 = vmatmul.mubr.bf16.gmra.mrb[0].mxu0 %v3853
      %v4012 = vpop.f32.mrb[0].mxu0
      %v4013 = vadd.f32 0.0, %v4012
      %v4014 = vpop.f32.mrb[0].mxu0
      %v4015 = vpop.f32.mrb[0].mxu0
      %v4016 = vadd.f32 0.0, %v4015
      %v4017 = vpop.f32.mrb[0].mxu0
      %4018 = vmatprep.mubr.bf16.mxu0 0
      %4019 = vmatmul.mubr.bf16.gmra.mrb[0].mxu0 %v3854
      %v4020 = vpop.f32.mrb[0].mxu0
      %v4021 = vadd.f32 0.0, %v4020
      %v4022 = vpop.f32.mrb[0].mxu0
      %v4023 = vpop.f32.mrb[0].mxu0
      %v4024 = vadd.f32 0.0, %v4023
      %v4025 = vpop.f32.mrb[0].mxu0
      %4026 = vmatprep.mubr.bf16.mxu0 0
      %4027 = vmatmul.mubr.bf16.gmra.mrb[0].mxu0 %v3855
      %v4028 = vpop.f32.mrb[0].mxu0
      %v4029 = vadd.f32 0.0, %v4028
      %v4030 = vpop.f32.mrb[0].mxu0
      %v4031 = vpop.f32.mrb[0].mxu0
      %v4032 = vadd.f32 0.0, %v4031
      %v4033 = vpop.f32.mrb[0].mxu0
      %4034 = vmatprep.mubr.bf16.mxu0 0
      %4035 = vmatmul.mubr.bf16.gmra.mrb[0].mxu0 %v3856
      %v4036 = vpop.f32.mrb[0].mxu0
      %v4037 = vadd.f32 0.0, %v4036
      %v4038 = vpop.f32.mrb[0].mxu0
      %v4039 = vpop.f32.mrb[0].mxu0
      %v4040 = vadd.f32 0.0, %v4039
      %v4041 = vpop.f32.mrb[0].mxu0
      %4042 = vmatprep.mubr.bf16.mxu0 0
      %4043 = vmatmul.mubr.bf16.gmra.mrb[0].mxu0 %v3857
      %v4044 = vpop.f32.mrb[0].mxu0
      %v4045 = vadd.f32 0.0, %v4044
      %v4046 = vpop.f32.mrb[0].mxu0
      %v4047 = vpop.f32.mrb[0].mxu0
      %v4048 = vadd.f32 0.0, %v4047
      %v4049 = vpop.f32.mrb[0].mxu0
      %4050 = vmatprep.mubr.bf16.mxu0 0
      %4051 = vmatmul.mubr.bf16.gmra.mrb[0].mxu0 %v3858
      %v4052 = vpop.f32.mrb[0].mxu0
      %v4053 = vadd.f32 0.0, %v4052
      %v4054 = vpop.f32.mrb[0].mxu0
      %v4055 = vpop.f32.mrb[0].mxu0
      %v4056 = vadd.f32 0.0, %v4055
      %v4057 = vpop.f32.mrb[0].mxu0
      %4058 = vmatprep.mubr.bf16.mxu0 0
      %4059 = vmatmul.mubr.bf16.gmra.mrb[0].mxu0 %v3859
      %v4060 = vpop.f32.mrb[0].mxu0
      %v4061 = vadd.f32 0.0, %v4060
      %v4062 = vpop.f32.mrb[0].mxu0
      %v4063 = vpop.f32.mrb[0].mxu0
      %v4064 = vadd.f32 0.0, %v4063
      %v4065 = vpop.f32.mrb[0].mxu0
      %4066 = vmatprep.mubr.bf16.mxu0 0
      %4067 = vmatmul.mubr.bf16.gmra.mrb[0].mxu0 %v3860
      %v4068 = vpop.f32.mrb[0].mxu0
      %v4069 = vadd.f32 0.0, %v4068
      %v4070 = vpop.f32.mrb[0].mxu0
      %v4071 = vpop.f32.mrb[0].mxu0
      %v4072 = vadd.f32 0.0, %v4071
      %v4073 = vpop.f32.mrb[0].mxu0
      %4074 = vmatprep.mubr.bf16.mxu0 0
      %4075 = vmatmul.mubr.bf16.gmra.mrb[0].mxu0 %v3861
      %v4076 = vpop.f32.mrb[0].mxu0
      %v4077 = vadd.f32 0.0, %v4076
      %v4078 = vpop.f32.mrb[0].mxu0
      %v4079 = vpop.f32.mrb[0].mxu0
      %v4080 = vadd.f32 0.0, %v4079
      %v4081 = vpop.f32.mrb[0].mxu0
      %4082 = vmatprep.mubr.bf16.mxu0 0
      %4083 = vmatmul.mubr.bf16.gmra.mrb[0].mxu0 %v3862
      %v4084 = vpop.f32.mrb[0].mxu0
      %v4085 = vadd.f32 0.0, %v4084
      %v4086 = vpop.f32.mrb[0].mxu0
      %v4087 = vpop.f32.mrb[0].mxu0
      %v4088 = vadd.f32 0.0, %v4087
      %v4089 = vpop.f32.mrb[0].mxu0
      %4090 = vmatprep.mubr.bf16.mxu0 0
      %4091 = vmatmul.mubr.bf16.gmra.mrb[0].mxu0 %v3863
      %v4092 = vpop.f32.mrb[0].mxu0
      %v4093 = vadd.f32 0.0, %v4092
      %v4094 = vpop.f32.mrb[0].mxu0
      %v4095 = vpop.f32.mrb[0].mxu0
      %v4096 = vadd.f32 0.0, %v4095
      %v4097 = vpop.f32.mrb[0].mxu0
      %4098 = vmatprep.mubr.bf16.mxu0 0
      %4099 = vmatmul.mubr.bf16.gmra.mrb[0].mxu0 %v3864
      %v4100 = vpop.f32.mrb[0].mxu0
      %v4101 = vadd.f32 0.0, %v4100
      %v4102 = vpop.f32.mrb[0].mxu0
      %v4103 = vpop.f32.mrb[0].mxu0
      %v4104 = vadd.f32 0.0, %v4103
      %v4105 = vpop.f32.mrb[0].mxu0
      %4106 = vdwg.mxu0
      %v4123 = vunpack.c.l.b16 %v3865
      %v4124 = vunpack.c.l.b16 %v3866
      %v4125 = vunpack.c.l.b16 %v3867
      %v4126 = vunpack.c.l.b16 %v3868
      %v4127 = vunpack.c.l.b16 %v3869
      %v4128 = vunpack.c.l.b16 %v3870
      %v4129 = vunpack.c.l.b16 %v3871
      %v4130 = vunpack.c.l.b16 %v3872
      %v4131 = vunpack.c.l.b16 %v3873
      %v4132 = vunpack.c.l.b16 %v3874
      %v4133 = vunpack.c.l.b16 %v3875
      %v4134 = vunpack.c.l.b16 %v3876
      %v4135 = vunpack.c.l.b16 %v3877
      %v4136 = vunpack.c.l.b16 %v3878
      %v4137 = vunpack.c.l.b16 %v3879
      %v4138 = vunpack.c.l.b16 %v3880
      %v4139 = vpack.c.b16 %v4124, %v4123
      %v4140 = vpack.c.b16 %v4126, %v4125
      %v4141 = vpack.c.b16 %v4128, %v4127
      %v4142 = vpack.c.b16 %v4130, %v4129
      %v4143 = vpack.c.b16 %v4132, %v4131
      %v4144 = vpack.c.b16 %v4134, %v4133
      %v4145 = vpack.c.b16 %v4136, %v4135
      %v4146 = vpack.c.b16 %v4138, %v4137
      %4155 = vmatprep.subr.bf16.mxu0 0
      %4156 = vmatpush1.bf16.msra.mxu0 %v4139
      %4157 = vmatprep.subr.bf16.mxu0 0
      %4158 = vmatpush1.bf16.msra.mxu0 %v4140
      %4159 = vmatprep.subr.bf16.mxu0 0
      %4160 = vmatpush1.bf16.msra.mxu0 %v4141
      %4161 = vmatprep.subr.bf16.mxu0 0
      %4162 = vmatpush1.bf16.msra.mxu0 %v4142
      %4163 = vmatprep.subr.bf16.mxu0 0
      %4164 = vmatpush1.bf16.msra.mxu0 %v4143
      %4165 = vmatprep.subr.bf16.mxu0 0
      %4166 = vmatpush1.bf16.msra.mxu0 %v4144
      %4167 = vmatprep.subr.bf16.mxu0 0
      %4168 = vmatpush1.bf16.msra.mxu0 %v4145
      %4169 = vmatprep.subr.bf16.mxu0 0
      %4170 = vmatpush1.bf16.msra.mxu0 %v4146
      %4171 = vmatprep.subr.bf16.mxu0 0
      %4172 = vmatpush1.bf16.msra.mxu0 0
      %4173 = vmatprep.subr.bf16.mxu0 0
      %4174 = vmatpush1.bf16.msra.mxu0 0
      %4175 = vmatprep.subr.bf16.mxu0 0
      %4176 = vmatpush1.bf16.msra.mxu0 0
      %4177 = vmatprep.subr.bf16.mxu0 0
      %4178 = vmatpush1.bf16.msra.mxu0 0
      %4179 = vmatprep.subr.bf16.mxu0 0
      %4180 = vmatpush1.bf16.msra.mxu0 0
      %4181 = vmatprep.subr.bf16.mxu0 0
      %4182 = vmatpush1.bf16.msra.mxu0 0
      %4183 = vmatprep.subr.bf16.mxu0 0
      %4184 = vmatpush1.bf16.msra.mxu0 0
      %4185 = vmatprep.subr.bf16.mxu0 0
      %4186 = vmatpush1.bf16.msra.mxu0 0
      %4187 = vmatprep.mubr.bf16.mxu0 0
      %4188 = vmatmul.mubr.bf16.gmra.mrb[0].mxu0 0
      %v4189 = vpop.f32.mrb[0].mxu0
      %v4190 = vadd.f32 %v3981, %v4189
      %v4191 = vpop.f32.mrb[0].mxu0
      %v4192 = vpop.f32.mrb[0].mxu0
      %v4193 = vadd.f32 %v3984, %v4192
      %v4194 = vpop.f32.mrb[0].mxu0
      %4195 = vmatprep.mubr.bf16.mxu0 0
      %4196 = vmatmul.mubr.bf16.gmra.mrb[0].mxu0 0
      %v4197 = vpop.f32.mrb[0].mxu0
      %v4198 = vadd.f32 %v3989, %v4197
      %v4199 = vpop.f32.mrb[0].mxu0
      %v4200 = vpop.f32.mrb[0].mxu0
      %v4201 = vadd.f32 %v3992, %v4200
      %v4202 = vpop.f32.mrb[0].mxu0
      %4203 = vmatprep.mubr.bf16.mxu0 0
      %4204 = vmatmul.mubr.bf16.gmra.mrb[0].mxu0 0
      %v4205 = vpop.f32.mrb[0].mxu0
      %v4206 = vadd.f32 %v3997, %v4205
      %v4207 = vpop.f32.mrb[0].mxu0
      %v4208 = vpop.f32.mrb[0].mxu0
      %v4209 = vadd.f32 %v4000, %v4208
      %v4210 = vpop.f32.mrb[0].mxu0
      %4211 = vmatprep.mubr.bf16.mxu0 0
      %4212 = vmatmul.mubr.bf16.gmra.mrb[0].mxu0 0
      %v4213 = vpop.f32.mrb[0].mxu0
      %v4214 = vadd.f32 %v4005, %v4213
      %v4215 = vpop.f32.mrb[0].mxu0
      %v4216 = vpop.f32.mrb[0].mxu0
      %v4217 = vadd.f32 %v4008, %v4216
      %v4218 = vpop.f32.mrb[0].mxu0
      %4219 = vmatprep.mubr.bf16.mxu0 0
      %4220 = vmatmul.mubr.bf16.gmra.mrb[0].mxu0 %v3849
      %v4221 = vpop.f32.mrb[0].mxu0
      %v4222 = vadd.f32 %v4013, %v4221
      %v4223 = vpop.f32.mrb[0].mxu0
      %v4224 = vpop.f32.mrb[0].mxu0
      %v4225 = vadd.f32 %v4016, %v4224
      %v4226 = vpop.f32.mrb[0].mxu0
      %4227 = vmatprep.mubr.bf16.mxu0 0
      %4228 = vmatmul.mubr.bf16.gmra.mrb[0].mxu0 %v3850
      %v4229 = vpop.f32.mrb[0].mxu0
      %v4230 = vadd.f32 %v4021, %v4229
      %v4231 = vpop.f32.mrb[0].mxu0
      %v4232 = vpop.f32.mrb[0].mxu0
      %v4233 = vadd.f32 %v4024, %v4232
      %v4234 = vpop.f32.mrb[0].mxu0
      %4235 = vmatprep.mubr.bf16.mxu0 0
      %4236 = vmatmul.mubr.bf16.gmra.mrb[0].mxu0 %v3851
      %v4237 = vpop.f32.mrb[0].mxu0
      %v4238 = vadd.f32 %v4029, %v4237
      %v4239 = vpop.f32.mrb[0].mxu0
      %v4240 = vpop.f32.mrb[0].mxu0
      %v4241 = vadd.f32 %v4032, %v4240
      %v4242 = vpop.f32.mrb[0].mxu0
      %4243 = vmatprep.mubr.bf16.mxu0 0
      %4244 = vmatmul.mubr.bf16.gmra.mrb[0].mxu0 %v3852
      %v4245 = vpop.f32.mrb[0].mxu0
      %v4246 = vadd.f32 %v4037, %v4245
      %v4247 = vpop.f32.mrb[0].mxu0
      %v4248 = vpop.f32.mrb[0].mxu0
      %v4249 = vadd.f32 %v4040, %v4248
      %v4250 = vpop.f32.mrb[0].mxu0
      %4251 = vmatprep.mubr.bf16.mxu0 0
      %4252 = vmatmul.mubr.bf16.gmra.mrb[0].mxu0 %v3853
      %v4253 = vpop.f32.mrb[0].mxu0
      %v4254 = vadd.f32 %v4045, %v4253
      %v4255 = vpop.f32.mrb[0].mxu0
      %v4256 = vpop.f32.mrb[0].mxu0
      %v4257 = vadd.f32 %v4048, %v4256
      %v4258 = vpop.f32.mrb[0].mxu0
      %4259 = vmatprep.mubr.bf16.mxu0 0
      %4260 = vmatmul.mubr.bf16.gmra.mrb[0].mxu0 %v3854
      %v4261 = vpop.f32.mrb[0].mxu0
      %v4262 = vadd.f32 %v4053, %v4261
      %v4263 = vpop.f32.mrb[0].mxu0
      %v4264 = vpop.f32.mrb[0].mxu0
      %v4265 = vadd.f32 %v4056, %v4264
      %v4266 = vpop.f32.mrb[0].mxu0
      %4267 = vmatprep.mubr.bf16.mxu0 0
      %4268 = vmatmul.mubr.bf16.gmra.mrb[0].mxu0 %v3855
      %v4269 = vpop.f32.mrb[0].mxu0
      %v4270 = vadd.f32 %v4061, %v4269
      %v4271 = vpop.f32.mrb[0].mxu0
      %v4272 = vpop.f32.mrb[0].mxu0
      %v4273 = vadd.f32 %v4064, %v4272
      %v4274 = vpop.f32.mrb[0].mxu0
      %4275 = vmatprep.mubr.bf16.mxu0 0
      %4276 = vmatmul.mubr.bf16.gmra.mrb[0].mxu0 %v3856
      %v4277 = vpop.f32.mrb[0].mxu0
      %v4278 = vadd.f32 %v4069, %v4277
      %v4279 = vpop.f32.mrb[0].mxu0
      %v4280 = vpop.f32.mrb[0].mxu0
      %v4281 = vadd.f32 %v4072, %v4280
      %v4282 = vpop.f32.mrb[0].mxu0
      %4283 = vmatprep.mubr.bf16.mxu0 0
      %4284 = vmatmul.mubr.bf16.gmra.mrb[0].mxu0 %v3857
      %v4285 = vpop.f32.mrb[0].mxu0
      %v4286 = vadd.f32 %v4077, %v4285
      %v4287 = vpop.f32.mrb[0].mxu0
      %v4288 = vpop.f32.mrb[0].mxu0
      %v4289 = vadd.f32 %v4080, %v4288
      %v4290 = vpop.f32.mrb[0].mxu0
      %4291 = vmatprep.mubr.bf16.mxu0 0
      %4292 = vmatmul.mubr.bf16.gmra.mrb[0].mxu0 %v3858
      %v4293 = vpop.f32.mrb[0].mxu0
      %v4294 = vadd.f32 %v4085, %v4293
      %v4295 = vpop.f32.mrb[0].mxu0
      %v4296 = vpop.f32.mrb[0].mxu0
      %v4297 = vadd.f32 %v4088, %v4296
      %v4298 = vpop.f32.mrb[0].mxu0
      %4299 = vmatprep.mubr.bf16.mxu0 0
      %4300 = vmatmul.mubr.bf16.gmra.mrb[0].mxu0 %v3859
      %v4301 = vpop.f32.mrb[0].mxu0
      %v4302 = vadd.f32 %v4093, %v4301
      %v4303 = vpop.f32.mrb[0].mxu0
      %v4304 = vpop.f32.mrb[0].mxu0
      %v4305 = vadd.f32 %v4096, %v4304
      %v4306 = vpop.f32.mrb[0].mxu0
      %4307 = vmatprep.mubr.bf16.mxu0 0
      %4308 = vmatmul.mubr.bf16.gmra.mrb[0].mxu0 %v3860
      %v4309 = vpop.f32.mrb[0].mxu0
      %v4310 = vadd.f32 %v4101, %v4309
      %v4311 = vpop.f32.mrb[0].mxu0
      %v4312 = vpop.f32.mrb[0].mxu0
      %v4313 = vadd.f32 %v4104, %v4312
      %v4314 = vpop.f32.mrb[0].mxu0
      %4315 = vdwg.mxu0
      %s4316 = scalar_lea.vmem %s3, 128
      %v4317 = vld [vmem:[%s4316] sm:$0xf]
      %v4318 = vld [vmem:[%s4316 + $0x4] sm:$0xf]
      %v4319 = vld [vmem:[%s4316 + $0x8] sm:$0xf]
      %v4320 = vld [vmem:[%s4316 + $0xc] sm:$0xf]
      %v4321 = vld [vmem:[%s4316 + $0x10] sm:$0xf]
      %v4322 = vld [vmem:[%s4316 + $0x14] sm:$0xf]
      %v4323 = vld [vmem:[%s4316 + $0x18] sm:$0xf]
      %v4324 = vld [vmem:[%s4316 + $0x1c] sm:$0xf]
      %v4325 = vld [vmem:[%s4316 + $0x20] sm:$0xf]
      %v4326 = vld [vmem:[%s4316 + $0x24] sm:$0xf]
      %v4327 = vld [vmem:[%s4316 + $0x28] sm:$0xf]
      %v4328 = vld [vmem:[%s4316 + $0x2c] sm:$0xf]
      %v4329 = vld [vmem:[%s4316 + $0x30] sm:$0xf]
      %v4330 = vld [vmem:[%s4316 + $0x34] sm:$0xf]
      %v4331 = vld [vmem:[%s4316 + $0x38] sm:$0xf]
      %v4332 = vld [vmem:[%s4316 + $0x3c] sm:$0xf]
      %v4349 = vunpack.c.l.b16 %v4317
      %v4350 = vunpack.c.l.b16 %v4318
      %v4351 = vunpack.c.l.b16 %v4319
      %v4352 = vunpack.c.l.b16 %v4320
      %v4353 = vunpack.c.l.b16 %v4321
      %v4354 = vunpack.c.l.b16 %v4322
      %v4355 = vunpack.c.l.b16 %v4323
      %v4356 = vunpack.c.l.b16 %v4324
      %v4357 = vunpack.c.l.b16 %v4325
      %v4358 = vunpack.c.l.b16 %v4326
      %v4359 = vunpack.c.l.b16 %v4327
      %v4360 = vunpack.c.l.b16 %v4328
      %v4361 = vunpack.c.l.b16 %v4329
      %v4362 = vunpack.c.l.b16 %v4330
      %v4363 = vunpack.c.l.b16 %v4331
      %v4364 = vunpack.c.l.b16 %v4332
      %v4365 = vpack.c.b16 %v4350, %v4349
      %v4366 = vpack.c.b16 %v4352, %v4351
      %v4367 = vpack.c.b16 %v4354, %v4353
      %v4368 = vpack.c.b16 %v4356, %v4355
      %v4369 = vpack.c.b16 %v4358, %v4357
      %v4370 = vpack.c.b16 %v4360, %v4359
      %v4371 = vpack.c.b16 %v4362, %v4361
      %v4372 = vpack.c.b16 %v4364, %v4363
      %4381 = vmatprep.subr.bf16.mxu0 0
      %4382 = vmatpush1.bf16.msra.mxu0 %v4365
      %4383 = vmatprep.subr.bf16.mxu0 0
      %4384 = vmatpush1.bf16.msra.mxu0 %v4366
      %4385 = vmatprep.subr.bf16.mxu0 0
      %4386 = vmatpush1.bf16.msra.mxu0 %v4367
      %4387 = vmatprep.subr.bf16.mxu0 0
      %4388 = vmatpush1.bf16.msra.mxu0 %v4368
      %4389 = vmatprep.subr.bf16.mxu0 0
      %4390 = vmatpush1.bf16.msra.mxu0 %v4369
      %4391 = vmatprep.subr.bf16.mxu0 0
      %4392 = vmatpush1.bf16.msra.mxu0 %v4370
      %4393 = vmatprep.subr.bf16.mxu0 0
      %4394 = vmatpush1.bf16.msra.mxu0 %v4371
      %4395 = vmatprep.subr.bf16.mxu0 0
      %4396 = vmatpush1.bf16.msra.mxu0 %v4372
      %4397 = vmatprep.subr.bf16.mxu0 0
      %4398 = vmatpush1.bf16.msra.mxu0 0
      %4399 = vmatprep.subr.bf16.mxu0 0
      %4400 = vmatpush1.bf16.msra.mxu0 0
      %4401 = vmatprep.subr.bf16.mxu0 0
      %4402 = vmatpush1.bf16.msra.mxu0 0
      %4403 = vmatprep.subr.bf16.mxu0 0
      %4404 = vmatpush1.bf16.msra.mxu0 0
      %4405 = vmatprep.subr.bf16.mxu0 0
      %4406 = vmatpush1.bf16.msra.mxu0 0
      %4407 = vmatprep.subr.bf16.mxu0 0
      %4408 = vmatpush1.bf16.msra.mxu0 0
      %4409 = vmatprep.subr.bf16.mxu0 0
      %4410 = vmatpush1.bf16.msra.mxu0 0
      %4411 = vmatprep.subr.bf16.mxu0 0
      %4412 = vmatpush1.bf16.msra.mxu0 0
      %4413 = vmatprep.mubr.bf16.mxu0 0
      %4414 = vmatmul.mubr.bf16.gmra.mrb[0].mxu0 %v3853
      %v4415 = vpop.f32.mrb[0].mxu0
      %v4416 = vadd.f32 0.0, %v4415
      %v4417 = vpop.f32.mrb[0].mxu0
      %v4418 = vpop.f32.mrb[0].mxu0
      %v4419 = vadd.f32 0.0, %v4418
      %v4420 = vpop.f32.mrb[0].mxu0
      %4421 = vmatprep.mubr.bf16.mxu0 0
      %4422 = vmatmul.mubr.bf16.gmra.mrb[0].mxu0 %v3854
      %v4423 = vpop.f32.mrb[0].mxu0
      %v4424 = vadd.f32 0.0, %v4423
      %v4425 = vpop.f32.mrb[0].mxu0
      %v4426 = vpop.f32.mrb[0].mxu0
      %v4427 = vadd.f32 0.0, %v4426
      %v4428 = vpop.f32.mrb[0].mxu0
      %4429 = vmatprep.mubr.bf16.mxu0 0
      %4430 = vmatmul.mubr.bf16.gmra.mrb[0].mxu0 %v3855
      %v4431 = vpop.f32.mrb[0].mxu0
      %v4432 = vadd.f32 0.0, %v4431
      %v4433 = vpop.f32.mrb[0].mxu0
      %v4434 = vpop.f32.mrb[0].mxu0
      %v4435 = vadd.f32 0.0, %v4434
      %v4436 = vpop.f32.mrb[0].mxu0
      %4437 = vmatprep.mubr.bf16.mxu0 0
      %4438 = vmatmul.mubr.bf16.gmra.mrb[0].mxu0 %v3856
      %v4439 = vpop.f32.mrb[0].mxu0
      %v4440 = vadd.f32 0.0, %v4439
      %v4441 = vpop.f32.mrb[0].mxu0
      %v4442 = vpop.f32.mrb[0].mxu0
      %v4443 = vadd.f32 0.0, %v4442
      %v4444 = vpop.f32.mrb[0].mxu0
      %4445 = vmatprep.mubr.bf16.mxu0 0
      %4446 = vmatmul.mubr.bf16.gmra.mrb[0].mxu0 %v3857
      %v4447 = vpop.f32.mrb[0].mxu0
      %v4448 = vadd.f32 0.0, %v4447
      %v4449 = vpop.f32.mrb[0].mxu0
      %v4450 = vpop.f32.mrb[0].mxu0
      %v4451 = vadd.f32 0.0, %v4450
      %v4452 = vpop.f32.mrb[0].mxu0
      %4453 = vmatprep.mubr.bf16.mxu0 0
      %4454 = vmatmul.mubr.bf16.gmra.mrb[0].mxu0 %v3858
      %v4455 = vpop.f32.mrb[0].mxu0
      %v4456 = vadd.f32 0.0, %v4455
      %v4457 = vpop.f32.mrb[0].mxu0
      %v4458 = vpop.f32.mrb[0].mxu0
      %v4459 = vadd.f32 0.0, %v4458
      %v4460 = vpop.f32.mrb[0].mxu0
      %4461 = vmatprep.mubr.bf16.mxu0 0
      %4462 = vmatmul.mubr.bf16.gmra.mrb[0].mxu0 %v3859
      %v4463 = vpop.f32.mrb[0].mxu0
      %v4464 = vadd.f32 0.0, %v4463
      %v4465 = vpop.f32.mrb[0].mxu0
      %v4466 = vpop.f32.mrb[0].mxu0
      %v4467 = vadd.f32 0.0, %v4466
      %v4468 = vpop.f32.mrb[0].mxu0
      %4469 = vmatprep.mubr.bf16.mxu0 0
      %4470 = vmatmul.mubr.bf16.gmra.mrb[0].mxu0 %v3860
      %v4471 = vpop.f32.mrb[0].mxu0
      %v4472 = vadd.f32 0.0, %v4471
      %v4473 = vpop.f32.mrb[0].mxu0
      %v4474 = vpop.f32.mrb[0].mxu0
      %v4475 = vadd.f32 0.0, %v4474
      %v4476 = vpop.f32.mrb[0].mxu0
      %4477 = vmatprep.mubr.bf16.mxu0 0
      %4478 = vmatmul.mubr.bf16.gmra.mrb[0].mxu0 %v3861
      %v4479 = vpop.f32.mrb[0].mxu0
      %v4480 = vadd.f32 0.0, %v4479
      %v4481 = vpop.f32.mrb[0].mxu0
      %v4482 = vpop.f32.mrb[0].mxu0
      %v4483 = vadd.f32 0.0, %v4482
      %v4484 = vpop.f32.mrb[0].mxu0
      %4485 = vmatprep.mubr.bf16.mxu0 0
      %4486 = vmatmul.mubr.bf16.gmra.mrb[0].mxu0 %v3862
      %v4487 = vpop.f32.mrb[0].mxu0
      %v4488 = vadd.f32 0.0, %v4487
      %v4489 = vpop.f32.mrb[0].mxu0
      %v4490 = vpop.f32.mrb[0].mxu0
      %v4491 = vadd.f32 0.0, %v4490
      %v4492 = vpop.f32.mrb[0].mxu0
      %4493 = vmatprep.mubr.bf16.mxu0 0
      %4494 = vmatmul.mubr.bf16.gmra.mrb[0].mxu0 %v3863
      %v4495 = vpop.f32.mrb[0].mxu0
      %v4496 = vadd.f32 0.0, %v4495
      %v4497 = vpop.f32.mrb[0].mxu0
      %v4498 = vpop.f32.mrb[0].mxu0
      %v4499 = vadd.f32 0.0, %v4498
      %v4500 = vpop.f32.mrb[0].mxu0
      %4501 = vmatprep.mubr.bf16.mxu0 0
      %4502 = vmatmul.mubr.bf16.gmra.mrb[0].mxu0 %v3864
      %v4503 = vpop.f32.mrb[0].mxu0
      %v4504 = vadd.f32 0.0, %v4503
      %v4505 = vpop.f32.mrb[0].mxu0
      %v4506 = vpop.f32.mrb[0].mxu0
      %v4507 = vadd.f32 0.0, %v4506
      %v4508 = vpop.f32.mrb[0].mxu0
      %4509 = vmatprep.mubr.bf16.mxu0 0
      %4510 = vmatmul.mubr.bf16.gmra.mrb[0].mxu0 0
      %v4511 = vpop.f32.mrb[0].mxu0
      %v4512 = vadd.f32 0.0, %v4511
      %v4513 = vpop.f32.mrb[0].mxu0
      %v4514 = vpop.f32.mrb[0].mxu0
      %v4515 = vadd.f32 0.0, %v4514
      %v4516 = vpop.f32.mrb[0].mxu0
      %4517 = vmatprep.mubr.bf16.mxu0 0
      %4518 = vmatmul.mubr.bf16.gmra.mrb[0].mxu0 0
      %v4519 = vpop.f32.mrb[0].mxu0
      %v4520 = vadd.f32 0.0, %v4519
      %v4521 = vpop.f32.mrb[0].mxu0
      %v4522 = vpop.f32.mrb[0].mxu0
      %v4523 = vadd.f32 0.0, %v4522
      %v4524 = vpop.f32.mrb[0].mxu0
      %4525 = vmatprep.mubr.bf16.mxu0 0
      %4526 = vmatmul.mubr.bf16.gmra.mrb[0].mxu0 0
      %v4527 = vpop.f32.mrb[0].mxu0
      %v4528 = vadd.f32 0.0, %v4527
      %v4529 = vpop.f32.mrb[0].mxu0
      %v4530 = vpop.f32.mrb[0].mxu0
      %v4531 = vadd.f32 0.0, %v4530
      %v4532 = vpop.f32.mrb[0].mxu0
      %4533 = vmatprep.mubr.bf16.mxu0 0
      %4534 = vmatmul.mubr.bf16.gmra.mrb[0].mxu0 0
      %v4535 = vpop.f32.mrb[0].mxu0
      %v4536 = vadd.f32 0.0, %v4535
      %v4537 = vpop.f32.mrb[0].mxu0
      %v4538 = vpop.f32.mrb[0].mxu0
      %v4539 = vadd.f32 0.0, %v4538
      %v4540 = vpop.f32.mrb[0].mxu0
      %4541 = vdwg.mxu0
      %v4542 = vadd.f32 %v4190, %v4416
      %v4543 = vadd.f32 %v4193, %v4419
      %v4544 = vadd.f32 %v4198, %v4424
      %v4545 = vadd.f32 %v4201, %v4427
      %v4546 = vadd.f32 %v4206, %v4432
      %v4547 = vadd.f32 %v4209, %v4435
      %v4548 = vadd.f32 %v4214, %v4440
      %v4549 = vadd.f32 %v4217, %v4443
      %v4550 = vadd.f32 %v4222, %v4448
      %v4551 = vadd.f32 %v4225, %v4451
      %v4552 = vadd.f32 %v4230, %v4456
      %v4553 = vadd.f32 %v4233, %v4459
      %v4554 = vadd.f32 %v4238, %v4464
      %v4555 = vadd.f32 %v4241, %v4467
      %v4556 = vadd.f32 %v4246, %v4472
      %v4557 = vadd.f32 %v4249, %v4475
      %v4558 = vadd.f32 %v4254, %v4480
      %v4559 = vadd.f32 %v4257, %v4483
      %v4560 = vadd.f32 %v4262, %v4488
      %v4561 = vadd.f32 %v4265, %v4491
      %v4562 = vadd.f32 %v4270, %v4496
      %v4563 = vadd.f32 %v4273, %v4499
      %v4564 = vadd.f32 %v4278, %v4504
      %v4565 = vadd.f32 %v4281, %v4507
      %v4566 = vadd.f32 %v4286, %v4512
      %v4567 = vadd.f32 %v4289, %v4515
      %v4568 = vadd.f32 %v4294, %v4520
      %v4569 = vadd.f32 %v4297, %v4523
      %v4570 = vadd.f32 %v4302, %v4528
      %v4571 = vadd.f32 %v4305, %v4531
      %v4572 = vadd.f32 %v4310, %v4536
      %v4573 = vadd.f32 %v4313, %v4539
      %v4574 = vld [vmem:[%s4] sm:$0x1]
      %v4576 = vlaneseq
      %v4577 = vshrl.u32 %v4576, 7
      %v4578 = vsub.s32 0, %v4577
      %v4579 = vrot.slane %v4574, %v4578
      %v4581 = vadd.f32 %v4542, %v4579
      %v4582 = vadd.f32 %v4543, %v4579
      %v4583 = vadd.f32 %v4544, %v4579
      %v4584 = vadd.f32 %v4545, %v4579
      %v4585 = vadd.f32 %v4546, %v4579
      %v4586 = vadd.f32 %v4547, %v4579
      %v4587 = vadd.f32 %v4548, %v4579
      %v4588 = vadd.f32 %v4549, %v4579
      %v4589 = vadd.f32 %v4550, %v4579
      %v4590 = vadd.f32 %v4551, %v4579
      %v4591 = vadd.f32 %v4552, %v4579
      %v4592 = vadd.f32 %v4553, %v4579
      %v4593 = vadd.f32 %v4554, %v4579
      %v4594 = vadd.f32 %v4555, %v4579
      %v4595 = vadd.f32 %v4556, %v4579
      %v4596 = vadd.f32 %v4557, %v4579
      %v4597 = vadd.f32 %v4558, %v4579
      %v4598 = vadd.f32 %v4559, %v4579
      %v4599 = vadd.f32 %v4560, %v4579
      %v4600 = vadd.f32 %v4561, %v4579
      %v4601 = vadd.f32 %v4562, %v4579
      %v4602 = vadd.f32 %v4563, %v4579
      %v4603 = vadd.f32 %v4564, %v4579
      %v4604 = vadd.f32 %v4565, %v4579
      %v4605 = vadd.f32 %v4566, %v4579
      %v4606 = vadd.f32 %v4567, %v4579
      %v4607 = vadd.f32 %v4568, %v4579
      %v4608 = vadd.f32 %v4569, %v4579
      %v4609 = vadd.f32 %v4570, %v4579
      %v4610 = vadd.f32 %v4571, %v4579
      %v4611 = vadd.f32 %v4572, %v4579
      %v4612 = vadd.f32 %v4573, %v4579
      %v4613 = vmax.f32 %v4581, 0.0
      %v4614 = vmax.f32 %v4582, 0.0
      %v4615 = vmax.f32 %v4583, 0.0
      %v4616 = vmax.f32 %v4584, 0.0
      %v4617 = vmax.f32 %v4585, 0.0
      %v4618 = vmax.f32 %v4586, 0.0
      %v4619 = vmax.f32 %v4587, 0.0
      %v4620 = vmax.f32 %v4588, 0.0
      %v4621 = vmax.f32 %v4589, 0.0
      %v4622 = vmax.f32 %v4590, 0.0
      %v4623 = vmax.f32 %v4591, 0.0
      %v4624 = vmax.f32 %v4592, 0.0
      %v4625 = vmax.f32 %v4593, 0.0
      %v4626 = vmax.f32 %v4594, 0.0
      %v4627 = vmax.f32 %v4595, 0.0
      %v4628 = vmax.f32 %v4596, 0.0
      %v4629 = vmax.f32 %v4597, 0.0
      %v4630 = vmax.f32 %v4598, 0.0
      %v4631 = vmax.f32 %v4599, 0.0
      %v4632 = vmax.f32 %v4600, 0.0
      %v4633 = vmax.f32 %v4601, 0.0
      %v4634 = vmax.f32 %v4602, 0.0
      %v4635 = vmax.f32 %v4603, 0.0
      %v4636 = vmax.f32 %v4604, 0.0
      %v4637 = vmax.f32 %v4605, 0.0
      %v4638 = vmax.f32 %v4606, 0.0
      %v4639 = vmax.f32 %v4607, 0.0
      %v4640 = vmax.f32 %v4608, 0.0
      %v4641 = vmax.f32 %v4609, 0.0
      %v4642 = vmax.f32 %v4610, 0.0
      %v4643 = vmax.f32 %v4611, 0.0
      %v4644 = vmax.f32 %v4612, 0.0
      %4645 = vst [vmem:[%s224] sm:$0xff] %v4613
      %4646 = vst [vmem:[%s224 + $0x8] sm:$0xff] %v4614
      %4647 = vst [vmem:[%s224 + $0x10] sm:$0xff] %v4615
      %4648 = vst [vmem:[%s224 + $0x18] sm:$0xff] %v4616
      %4649 = vst [vmem:[%s224 + $0x20] sm:$0xff] %v4617
      %4650 = vst [vmem:[%s224 + $0x28] sm:$0xff] %v4618
      %4651 = vst [vmem:[%s224 + $0x30] sm:$0xff] %v4619
      %4652 = vst [vmem:[%s224 + $0x38] sm:$0xff] %v4620
      %4653 = vst [vmem:[%s224 + $0x40] sm:$0xff] %v4621
      %4654 = vst [vmem:[%s224 + $0x48] sm:$0xff] %v4622
      %4655 = vst [vmem:[%s224 + $0x50] sm:$0xff] %v4623
      %4656 = vst [vmem:[%s224 + $0x58] sm:$0xff] %v4624
      %4657 = vst [vmem:[%s224 + $0x60] sm:$0xff] %v4625
      %4658 = vst [vmem:[%s224 + $0x68] sm:$0xff] %v4626
      %4659 = vst [vmem:[%s224 + $0x70] sm:$0xff] %v4627
      %4660 = vst [vmem:[%s224 + $0x78] sm:$0xff] %v4628
      %4661 = vst [vmem:[%s224 + $0x80] sm:$0xff] %v4629
      %4662 = vst [vmem:[%s224 + $0x88] sm:$0xff] %v4630
      %4663 = vst [vmem:[%s224 + $0x90] sm:$0xff] %v4631
      %4664 = vst [vmem:[%s224 + $0x98] sm:$0xff] %v4632
      %4665 = vst [vmem:[%s224 + $0xa0] sm:$0xff] %v4633
      %4666 = vst [vmem:[%s224 + $0xa8] sm:$0xff] %v4634
      %4667 = vst [vmem:[%s224 + $0xb0] sm:$0xff] %v4635
      %4668 = vst [vmem:[%s224 + $0xb8] sm:$0xff] %v4636
      %4669 = vst [vmem:[%s224 + $0xc0] sm:$0xff] %v4637
      %4670 = vst [vmem:[%s224 + $0xc8] sm:$0xff] %v4638
      %4671 = vst [vmem:[%s224 + $0xd0] sm:$0xff] %v4639
      %4672 = vst [vmem:[%s224 + $0xd8] sm:$0xff] %v4640
      %4673 = vst [vmem:[%s224 + $0xe0] sm:$0xff] %v4641
      %4674 = vst [vmem:[%s224 + $0xe8] sm:$0xff] %v4642
      %4675 = vst [vmem:[%s224 + $0xf0] sm:$0xff] %v4643
      %4676 = vst [vmem:[%s224 + $0xf8] sm:$0xff] %v4644
      %p4677 = scmp.lt.s32.totalorder %s16, 1
      %s4678 = scalar_select %p4677, %s16, 1
      %s4679 = smul.addr %s4678, 32
      %s4680 = smul.addr %s4679, 8
      %s4681 = scalar_lea.vmem %s5, %s4680
      // Predicated region
      $region41: #{mixed_3b_forward.5} parent=39 // pred_check
        %p4682 = pneg %p144
      $region42: #{mixed_3b_forward.5} parent=39 // pred_check_branch
        %4684 = sbr.rel (%p4682) target = $region44
      $region43: #{mixed_3b_forward.5} parent=39 // pred_region
        _
      $region44: #{mixed_3b_forward.5} parent=39 // pred_fallthru
        _
    $region40: #{mixed_3b_forward.5} parent=5 // pred_fallthru
      _
    %p4685 = scmp.le.s32.totalorder 2, %s11
    // Predicated region
    $region45: #{mixed_3b_forward.5} parent=5 // pred_check
      %p4686 = pneg %p4685
    $region46: #{mixed_3b_forward.5} parent=5 // pred_check_branch
      %4688 = sbr.rel (%p4686) target = $region48
    $region47: #{mixed_3b_forward.5} parent=5 // pred_region
      %s4689 = ssub.s32 %s11, 2
      // Predicated region
      $region49: #{mixed_3b_forward.5} parent=47 // pred_check
        %p4690 = pneg %p150
      $region50: #{mixed_3b_forward.5} parent=47 // pred_check_branch
        %4692 = sbr.rel (%p4690) target = $region52
      $region51: #{mixed_3b_forward.5} parent=47 // pred_region
        %p4693 = scmp.lt.s32.totalorder %s17, 1
        %s4694 = scalar_select %p4693, %s17, 1
        %s4695 = smul.addr %s4694, 32
        %s4696 = smul.addr %s4695, 8
        %s4697 = scalar_lea.vmem %s5, %s4696
      $region52: #{mixed_3b_forward.5} parent=47 // pred_fallthru
        _
    $region48: #{mixed_3b_forward.5} parent=5 // pred_fallthru
      _
  $region6: #{mixed_3b_forward.5} parent=0 // loop_footer
    %s15 = sadd.s32 1, %s11
  $region7: #{mixed_3b_forward.5} parent=0 // loop_footer_branch
    %10 = sbr.rel target = $region3
  $region8: #{mixed_3b_forward.5} parent=0 // loop_exit
    _

</llo_original>
